<compile_context>
chip_gen: v7x
topology: tpu7x:2x2x1
jax: 0.10.0
libtpu: 0.0.40
codegen_flags: <defaults>
</compile_context>

<pallas_src>
import functools

import jax
import jax.numpy as jnp
from jax import lax
from jax.experimental import pallas as pl
from jax.experimental.pallas import tpu as pltpu

_BF16 = jnp.bfloat16
_F32 = jnp.float32


# ---------------------------------------------------------------------------
# Kernel
# ---------------------------------------------------------------------------
def _sirens_kernel(
    x_ref,          # (in_dim, TP)        f32 coordinate tile (channels on sublanes)
    m_ref,          # (mod_dim, TP)       f32 ori_modulations tile
    w_mproj_ref,    # ((L+1)*C, mod_dim)  bf16 [w_first_mod ; inner_mods m-columns]
    b_fm_ref,       # (C, 1)              f32
    w_fc_ref,       # (C, in_dim)         bf16 first_coord weight
    b_fc_ref,       # (C, 1)              f32
    w_im_mh_ref,    # (L, C, 2C)          bf16 inner_mods [modulations | x] columns
    b_im_ref,       # (L, C, 1)           f32
    w_ic_ref,       # (L, C, C)           bf16 inner_coords weights
    b_ic_ref,       # (L, C, 1)           f32
    w_lc_ref,       # (out_dim, C)        bf16 last_coord weight
    b_lc_ref,       # (out_dim, 1)        f32
    o_ref,          # (out_dim, TP)
    mproj_ref,      # scratch ((L+1)*C, TP) f32
    *,
    base_channels: int,
    num_inner_layers: int,
    is_residual: bool,
    unroll: bool,
):
    C = base_channels
    L = num_inner_layers

    # bf16 operands for every MXU matmul; accumulation and the sin/relu
    # epilogue stay in f32.
    x = x_ref[...].astype(_BF16)
    m = m_ref[...].astype(_BF16)

    # All K=mod_dim (tiny-K) matmuls of the whole network fused into ONE
    # stacked dot: rows [0, C) -> first_mod, rows [(1+i)C, (2+i)C) ->
    # inner_mods[i]'s ori_modulations block.  Removes L nearly-idle MXU
    # passes (and their drains) per pixel tile.
    mproj_ref[...] = jnp.dot(w_mproj_ref[...], m, preferred_element_type=_F32)

    # first_mod: Conv1x1 + ReLU
    mods = jnp.maximum(mproj_ref[0:C, :] + b_fm_ref[...], 0.0)

    # first_coord: Conv1x1 (K = in_dim), add modulations, sin
    h = jnp.dot(w_fc_ref[...], x, preferred_element_type=_F32) + b_fc_ref[...]
    h = jnp.sin(h + mods)

    def layer(i, mods, h):
        mods_bf = mods.astype(_BF16)
        h_bf = h.astype(_BF16)
        # cat((ori_modulations, modulations, x)) @ W_cat ==
        #   [stacked m-projection (precomputed)] + W_[mods|x] @ [mods; h]
        # -> one K=2C MXU dot per layer instead of three dots.
        mh = jnp.concatenate([mods_bf, h_bf], axis=0)            # (2C, TP) bf16
        new_mods = (
            jnp.dot(w_im_mh_ref[i], mh, preferred_element_type=_F32)
            + mproj_ref[pl.ds((i + 1) * C, C), :]
            + b_im_ref[i]
        )
        new_mods = jnp.maximum(new_mods, 0.0)
        res = (
            jnp.dot(w_ic_ref[i], h_bf, preferred_element_type=_F32)
            + b_ic_ref[i]
            + new_mods
        )
        res = jnp.sin(res)
        new_h = h + res if is_residual else res
        return new_mods, new_h

    if unroll:
        # Shallow stacks: full unroll (cheapest, no dynamic indexing).
        for i in range(L):
            mods, h = layer(i, mods, h)
    else:
        # Deep stacks: bound vreg live ranges / code size with a real loop;
        # weight refs are indexed dynamically along their leading (L) axis.
        mods, h = lax.fori_loop(0, L, lambda i, c: layer(i, c[0], c[1]),
                                (mods, h))

    out = (jnp.dot(w_lc_ref[...], h.astype(_BF16), preferred_element_type=_F32)
           + b_lc_ref[...])
    o_ref[...] = out.astype(o_ref.dtype)


# ---------------------------------------------------------------------------
# Wrapper
# ---------------------------------------------------------------------------
def _vmem_limit_bytes():
    # Leave headroom under physical VMEM (v7x: 64 MiB/TC -> ~51 MiB;
    # v5e/v6e: 128 MiB -> ~102 MiB).  Conservative fallback if the query
    # is unavailable.
    try:
        cap = int(pltpu.get_tpu_info().vmem_capacity_bytes)
        return int(cap * 0.8)
    except Exception:
        return 48 * 1024 * 1024


def pack_params(params):
    """Repack PyTorch-layout params into the kernel's fused bf16 stacks."""
    C, mod_dim = params["w_fm"].shape
    L = params["w_im"].shape[0]
    out_dim = params["w_lc"].shape[0]
    w_im_m = params["w_im"][:, :, :mod_dim].reshape(L * C, mod_dim)
    return {
        # stacked mod_dim-contraction weights: [first_mod ; inner_mods m-cols]
        "w_mproj": jnp.concatenate([params["w_fm"], w_im_m], axis=0).astype(_BF16),
        "b_fm": params["b_fm"].reshape(C, 1).astype(_F32),
        "w_fc": params["w_fc"].astype(_BF16),
        "b_fc": params["b_fc"].reshape(C, 1).astype(_F32),
        # merged [modulations | x] columns -> single K=2C dot per layer
        "w_im_mh": params["w_im"][:, :, mod_dim:].astype(_BF16),     # (L, C, 2C)
        "b_im": params["b_im"].reshape(L, C, 1).astype(_F32),
        "w_ic": params["w_ic"].astype(_BF16),
        "b_ic": params["b_ic"].reshape(L, C, 1).astype(_F32),
        "w_lc": params["w_lc"].astype(_BF16),
        "b_lc": params["b_lc"].reshape(out_dim, 1).astype(_F32),
    }


def sirens_forward(x_nchw, mods_nchw, packed, *, is_residual, tile_p=2048):
    """x_nchw: (N, in_dim, H, W); mods_nchw: (N, mod_dim, H, W).  Returns NCHW."""
    N, in_dim, H, W = x_nchw.shape
    _, mod_dim, _, _ = mods_nchw.shape
    C = packed["w_fc"].shape[0]
    out_dim = packed["w_lc"].shape[0]
    L = packed["w_ic"].shape[0]
    HW = H * W

    # Lane-dense pixel tiles (multiples of 128).  No wrapper-side pad/slice:
    # a ragged last tile is handled by Pallas' masked block DMA (all matmuls
    # contract over channels, so garbage lanes stay in their own lanes and
    # out-of-bounds output lanes are dropped on write).
    hw128 = ((HW + 127) // 128) * 128
    tile_p = max(128, (tile_p // 128) * 128)
    tile_p = min(tile_p, hw128)
    n_tiles = pl.cdiv(HW, tile_p)
    # v7x has 2 TensorCores sharing the parallel grid: ensure >= 2 steps.
    if N * n_tiles < 2 and tile_p > 128:
        tile_p = max(128, (tile_p // 2 // 128) * 128)
        n_tiles = pl.cdiv(HW, tile_p)
    grid = (N, n_tiles)

    # NCHW is channel-major already: flattening the spatial dims is free.
    x3 = x_nchw.reshape(N, in_dim, HW)
    m3 = mods_nchw.reshape(N, mod_dim, HW)

    kernel = functools.partial(
        _sirens_kernel,
        base_channels=C,
        num_inner_layers=L,
        is_residual=is_residual,
        unroll=L <= 4,
    )

    weight_args = (
        packed["w_mproj"], packed["b_fm"], packed["w_fc"], packed["b_fc"],
        packed["w_im_mh"], packed["b_im"], packed["w_ic"], packed["b_ic"],
        packed["w_lc"], packed["b_lc"],
    )

    def run(single_buffer_weights):
        def const_spec(shape):
            nd = len(shape)
            idx = lambda n, j, _nd=nd: (0,) * _nd
            if single_buffer_weights:
                # Weights are grid-invariant: one resident VMEM copy suffices
                # (default double-buffering would waste VMEM).
                return pl.BlockSpec(shape, idx, pipeline_mode=pl.Buffered(1))
            return pl.BlockSpec(shape, idx)

        in_specs = [
            pl.BlockSpec((None, in_dim, tile_p), lambda n, j: (n, 0, j)),
            pl.BlockSpec((None, mod_dim, tile_p), lambda n, j: (n, 0, j)),
        ] + [const_spec(w.shape) for w in weight_args]
        out_specs = pl.BlockSpec((None, out_dim, tile_p), lambda n, j: (n, 0, j))

        return pl.pallas_call(
            kernel,
            out_shape=jax.ShapeDtypeStruct((N, out_dim, HW), x_nchw.dtype),
            grid_spec=pltpu.PrefetchScalarGridSpec(
                num_scalar_prefetch=0,
                grid=grid,
                in_specs=in_specs,
                out_specs=out_specs,
                scratch_shapes=[pltpu.VMEM(((L + 1) * C, tile_p), _F32)],
            ),
            compiler_params=pltpu.CompilerParams(
                dimension_semantics=("parallel", "parallel"),
                vmem_limit_bytes=_vmem_limit_bytes(),
            ),
        )(x3, m3, *weight_args)

    try:
        out3 = jax.block_until_ready(run(True))
    except Exception:
        # pl.Buffered(1) unsupported on this jax version: fall back to the
        # default (double-buffered) weight BlockSpecs.
        out3 = run(False)

    return out3.reshape(N, out_dim, H, W)


# ---------------------------------------------------------------------------
# Deterministic PyTorch-layout parameter init
# ---------------------------------------------------------------------------
def init_params(key, num_inner_layers, in_dim, mod_dim, out_dim, C):
    """Conv2d(1x1) params: weight (C_out, C_in), bias (C_out,)."""
    def uniform(k, shape, fan_in):
        bound = 1.0 / jnp.sqrt(jnp.float32(fan_in))
        return jax.random.uniform(k, shape, jnp.float32, -bound, bound)

    L = num_inner_layers
    cat_in = mod_dim + 2 * C
    keys = jax.random.split(key, 12)
    return {
        "w_fm": uniform(keys[0], (C, mod_dim), mod_dim),
        "b_fm": uniform(keys[1], (C,), mod_dim),
        "w_fc": uniform(keys[2], (C, in_dim), in_dim),
        "b_fc": uniform(keys[3], (C,), in_dim),
        "w_im": uniform(keys[4], (L, C, cat_in), cat_in),
        "b_im": uniform(keys[5], (L, C), cat_in),
        "w_ic": uniform(keys[6], (L, C, C), C),
        "b_ic": uniform(keys[7], (L, C), C),
        "w_lc": uniform(keys[8], (out_dim, C), C),
        "b_lc": uniform(keys[9], (out_dim,), C),
    }


# ---------------------------------------------------------------------------
# Pure-JAX reference (mirrors the PyTorch forward).  matmul_dtype=bfloat16
# reproduces the kernel's operand rounding for a tight structural check.
# ---------------------------------------------------------------------------
def sirens_reference(x_nchw, mods_nchw, params, *, is_residual,
                     matmul_dtype=jnp.float32):
    N, in_dim, H, W = x_nchw.shape
    mod_dim = mods_nchw.shape[1]
    out_dim = params["w_lc"].shape[0]
    L = params["w_im"].shape[0]
    P = H * W

    x = x_nchw.reshape(N, in_dim, P)
    m = mods_nchw.reshape(N, mod_dim, P)

    def conv1x1(w, b, a):  # w: (Cout, Cin), b: (Cout,), a: (N, Cin, P)
        y = jnp.einsum("oc,ncp->nop", w.astype(matmul_dtype),
                       a.astype(matmul_dtype),
                       preferred_element_type=jnp.float32)
        return y + b[None, :, None]

    mods = jax.nn.relu(conv1x1(params["w_fm"], params["b_fm"], m))
    h = jnp.sin(conv1x1(params["w_fc"], params["b_fc"], x) + mods)
    for i in range(L):
        cat = jnp.concatenate([m, mods, h], axis=1)
        mods = jax.nn.relu(conv1x1(params["w_im"][i], params["b_im"][i], cat))
        res = jnp.sin(conv1x1(params["w_ic"][i], params["b_ic"][i], h) + mods)
        h = h + res if is_residual else res
    out = conv1x1(params["w_lc"], params["b_lc"], h)
    return out.reshape(N, out_dim, H, W)


if __name__ == "__main__":
    num_inner_layers = 2
    in_dim = 2          # (x, y) coordinates
    mod_dim = 4
    out_dim = 3
    base_channels = 32
    is_residual = False
    N, H, W = 2, 16, 16

    key = jax.random.PRNGKey(0)
    k_params, k_x, k_m = jax.random.split(key, 3)

    params = init_params(k_params, num_inner_layers, in_dim, mod_dim,
                         out_dim, base_channels)
    packed = pack_params(params)

    x = jax.random.normal(k_x, (N, in_dim, H, W), jnp.float32)
    ori_modulations = jax.random.normal(k_m, (N, mod_dim, H, W), jnp.float32)

    out = sirens_forward(x, ori_modulations, packed, is_residual=is_residual)
    out = jax.block_until_ready(out)
    assert out.shape == (N, out_dim, H, W), out.shape

    # Tight structural check vs a reference using the same bf16 operand
    # rounding as the kernel.
    ref_bf16 = jax.block_until_ready(sirens_reference(
        x, ori_modulations, params, is_residual=is_residual,
        matmul_dtype=jnp.bfloat16))
    err_bf16 = float(jnp.max(jnp.abs(out - ref_bf16)))
    # Loose sanity bound vs the pure-f32 module semantics (bf16 operand noise).
    ref_f32 = jax.block_until_ready(sirens_reference(
        x, ori_modulations, params, is_residual=is_residual,
        matmul_dtype=jnp.float32))
    err_f32 = float(jnp.max(jnp.abs(out - ref_f32)))

    if err_bf16 > 2e-2:
        raise AssertionError(f"mismatch vs bf16-matched reference: {err_bf16}")
    if err_f32 > 1.5e-1:
        raise AssertionError(f"mismatch vs f32 reference: {err_f32}")

    print("KERNEL_OK")
</pallas_src>

<mosaic_0001>
module attributes {stable_mosaic.version = 11 : i64} {
  func.func @_sirens_kernel(%arg0: i32, %arg1: i32, %arg2: memref<1x2x256xf32, #tpu.memory_space<vmem>>, %arg3: memref<1x4x256xf32, #tpu.memory_space<vmem>>, %arg4: memref<96x4xbf16, #tpu.memory_space<vmem>>, %arg5: memref<32x1xf32, #tpu.memory_space<vmem>>, %arg6: memref<32x2xbf16, #tpu.memory_space<vmem>>, %arg7: memref<32x1xf32, #tpu.memory_space<vmem>>, %arg8: memref<2x32x64xbf16, #tpu.memory_space<vmem>>, %arg9: memref<2x32x1xf32, #tpu.memory_space<vmem>>, %arg10: memref<2x32x32xbf16, #tpu.memory_space<vmem>>, %arg11: memref<2x32x1xf32, #tpu.memory_space<vmem>>, %arg12: memref<3x32xbf16, #tpu.memory_space<vmem>>, %arg13: memref<3x1xf32, #tpu.memory_space<vmem>>, %arg14: memref<1x3x256xf32, #tpu.memory_space<vmem>>, %arg15: memref<96x256xf32, #tpu.memory_space<vmem>>) attributes {dimension_semantics = [#tpu.dimension_semantics<parallel>, #tpu.dimension_semantics<parallel>], iteration_bounds = array<i64: 2, 1>, scalar_prefetch = 0 : i64, scratch_operands = 1 : i64, tpu.core_type = #tpu.core_type<tc>, window_params = [{transform_indices = @transform_0, window_bounds = array<i64: 1, 2, 256>}, {transform_indices = @transform_1, window_bounds = array<i64: 1, 4, 256>}, {pipeline_mode = #tpu.pipeline_mode<synchronous>, transform_indices = @transform_2, window_bounds = array<i64: 96, 4>}, {pipeline_mode = #tpu.pipeline_mode<synchronous>, transform_indices = @transform_3, window_bounds = array<i64: 32, 1>}, {pipeline_mode = #tpu.pipeline_mode<synchronous>, transform_indices = @transform_4, window_bounds = array<i64: 32, 2>}, {pipeline_mode = #tpu.pipeline_mode<synchronous>, transform_indices = @transform_5, window_bounds = array<i64: 32, 1>}, {pipeline_mode = #tpu.pipeline_mode<synchronous>, transform_indices = @transform_6, window_bounds = array<i64: 2, 32, 64>}, {pipeline_mode = #tpu.pipeline_mode<synchronous>, transform_indices = @transform_7, window_bounds = array<i64: 2, 32, 1>}, {pipeline_mode = #tpu.pipeline_mode<synchronous>, transform_indices = @transform_8, window_bounds = array<i64: 2, 32, 32>}, {pipeline_mode = #tpu.pipeline_mode<synchronous>, transform_indices = @transform_9, window_bounds = array<i64: 2, 32, 1>}, {pipeline_mode = #tpu.pipeline_mode<synchronous>, transform_indices = @transform_10, window_bounds = array<i64: 3, 32>}, {pipeline_mode = #tpu.pipeline_mode<synchronous>, transform_indices = @transform_11, window_bounds = array<i64: 3, 1>}, {transform_indices = @transform_12, window_bounds = array<i64: 1, 3, 256>}]} {
    %c0 = arith.constant 0 : index
    %c0_0 = arith.constant 0 : index
    %c0_1 = arith.constant 0 : index
    %0 = vector.load %arg2[%c0, %c0_0, %c0_1] : memref<1x2x256xf32, #tpu.memory_space<vmem>>, vector<1x2x256xf32>
    %1 = vector.shape_cast %0 : vector<1x2x256xf32> to vector<2x256xf32>
    %2 = arith.truncf %1 : vector<2x256xf32> to vector<2x256xbf16>
    %c0_2 = arith.constant 0 : index
    %c0_3 = arith.constant 0 : index
    %c0_4 = arith.constant 0 : index
    %3 = vector.load %arg3[%c0_2, %c0_3, %c0_4] : memref<1x4x256xf32, #tpu.memory_space<vmem>>, vector<1x4x256xf32>
    %4 = vector.shape_cast %3 : vector<1x4x256xf32> to vector<4x256xf32>
    %5 = arith.truncf %4 : vector<4x256xf32> to vector<4x256xbf16>
    %c0_5 = arith.constant 0 : index
    %c0_6 = arith.constant 0 : index
    %6 = vector.load %arg4[%c0_5, %c0_6] : memref<96x4xbf16, #tpu.memory_space<vmem>>, vector<96x4xbf16>
    %cst = arith.constant dense<0.000000e+00> : vector<96x256xf32>
    %7 = tpu.matmul %6, %5, %cst {dimension_numbers = #tpu.dot_dimension_numbers<[1], [0], [0], [1], [0, 0, 1, 1], [], []>} : vector<96x4xbf16>, vector<4x256xbf16>, vector<96x256xf32> -> vector<96x256xf32>
    %c0_7 = arith.constant 0 : index
    %c0_8 = arith.constant 0 : index
    %8 = vector.load %arg15[%c0_7, %c0_8] : memref<96x256xf32, #tpu.memory_space<vmem>>, vector<96x256xf32>
    tpu.vector_store %arg15[%c0_7, %c0_8], %7 {strides = array<i32>} : memref<96x256xf32, #tpu.memory_space<vmem>>, vector<96x256xf32>,
    %c0_9 = arith.constant 0 : index
    %c0_10 = arith.constant 0 : index
    %9 = vector.load %arg15[%c0_9, %c0_10] : memref<96x256xf32, #tpu.memory_space<vmem>>, vector<32x256xf32>
    %c0_11 = arith.constant 0 : index
    %c0_12 = arith.constant 0 : index
    %10 = vector.load %arg5[%c0_11, %c0_12] : memref<32x1xf32, #tpu.memory_space<vmem>>, vector<32x1xf32>
    %11 = vector.broadcast %10 : vector<32x1xf32> to vector<32x256xf32>
    %12 = arith.addf %9, %11 : vector<32x256xf32>
    %cst_13 = arith.constant 0.000000e+00 : f32
    %13 = vector.broadcast %cst_13 : f32 to vector<32x256xf32>
    %14 = arith.maximumf %12, %13 : vector<32x256xf32>
    %c0_14 = arith.constant 0 : index
    %c0_15 = arith.constant 0 : index
    %15 = vector.load %arg6[%c0_14, %c0_15] : memref<32x2xbf16, #tpu.memory_space<vmem>>, vector<32x2xbf16>
    %cst_16 = arith.constant dense<0.000000e+00> : vector<32x256xf32>
    %16 = tpu.matmul %15, %2, %cst_16 {dimension_numbers = #tpu.dot_dimension_numbers<[1], [0], [0], [1], [0, 0, 1, 1], [], []>} : vector<32x2xbf16>, vector<2x256xbf16>, vector<32x256xf32> -> vector<32x256xf32>
    %c0_17 = arith.constant 0 : index
    %c0_18 = arith.constant 0 : index
    %17 = vector.load %arg7[%c0_17, %c0_18] : memref<32x1xf32, #tpu.memory_space<vmem>>, vector<32x1xf32>
    %18 = vector.broadcast %17 : vector<32x1xf32> to vector<32x256xf32>
    %19 = arith.addf %16, %18 : vector<32x256xf32>
    %20 = arith.addf %19, %14 : vector<32x256xf32>
    %21 = math.sin %20 : vector<32x256xf32>
    %22 = arith.truncf %14 : vector<32x256xf32> to vector<32x256xbf16>
    %23 = arith.truncf %21 : vector<32x256xf32> to vector<32x256xbf16>
    %24 = tpu.concatenate %22, %23 in 0 : vector<32x256xbf16>, vector<32x256xbf16> -> vector<64x256xbf16>
    %c0_19 = arith.constant 0 : index
    %c0_20 = arith.constant 0 : index
    %c0_21 = arith.constant 0 : index
    %25 = vector.load %arg8[%c0_19, %c0_20, %c0_21] : memref<2x32x64xbf16, #tpu.memory_space<vmem>>, vector<1x32x64xbf16>
    %26 = vector.shape_cast %25 : vector<1x32x64xbf16> to vector<32x64xbf16>
    %cst_22 = arith.constant dense<0.000000e+00> : vector<32x256xf32>
    %27 = tpu.matmul %26, %24, %cst_22 {dimension_numbers = #tpu.dot_dimension_numbers<[1], [0], [0], [1], [0, 0, 1, 1], [], []>} : vector<32x64xbf16>, vector<64x256xbf16>, vector<32x256xf32> -> vector<32x256xf32>
    %c32 = arith.constant 32 : index
    %c0_23 = arith.constant 0 : index
    %28 = vector.load %arg15[%c32, %c0_23] : memref<96x256xf32, #tpu.memory_space<vmem>>, vector<32x256xf32>
    %29 = arith.addf %27, %28 : vector<32x256xf32>
    %c0_24 = arith.constant 0 : index
    %c0_25 = arith.constant 0 : index
    %c0_26 = arith.constant 0 : index
    %30 = vector.load %arg9[%c0_24, %c0_25, %c0_26] : memref<2x32x1xf32, #tpu.memory_space<vmem>>, vector<1x32x1xf32>
    %31 = vector.shape_cast %30 : vector<1x32x1xf32> to vector<32x1xf32>
    %32 = vector.broadcast %31 : vector<32x1xf32> to vector<32x256xf32>
    %33 = arith.addf %29, %32 : vector<32x256xf32>
    %cst_27 = arith.constant 0.000000e+00 : f32
    %34 = vector.broadcast %cst_27 : f32 to vector<32x256xf32>
    %35 = arith.maximumf %33, %34 : vector<32x256xf32>
    %c0_28 = arith.constant 0 : index
    %c0_29 = arith.constant 0 : index
    %c0_30 = arith.constant 0 : index
    %36 = vector.load %arg10[%c0_28, %c0_29, %c0_30] : memref<2x32x32xbf16, #tpu.memory_space<vmem>>, vector<1x32x32xbf16>
    %37 = vector.shape_cast %36 : vector<1x32x32xbf16> to vector<32x32xbf16>
    %cst_31 = arith.constant dense<0.000000e+00> : vector<32x256xf32>
    %38 = tpu.matmul %37, %23, %cst_31 {dimension_numbers = #tpu.dot_dimension_numbers<[1], [0], [0], [1], [0, 0, 1, 1], [], []>} : vector<32x32xbf16>, vector<32x256xbf16>, vector<32x256xf32> -> vector<32x256xf32>
    %c0_32 = arith.constant 0 : index
    %c0_33 = arith.constant 0 : index
    %c0_34 = arith.constant 0 : index
    %39 = vector.load %arg11[%c0_32, %c0_33, %c0_34] : memref<2x32x1xf32, #tpu.memory_space<vmem>>, vector<1x32x1xf32>
    %40 = vector.shape_cast %39 : vector<1x32x1xf32> to vector<32x1xf32>
    %41 = vector.broadcast %40 : vector<32x1xf32> to vector<32x256xf32>
    %42 = arith.addf %38, %41 : vector<32x256xf32>
    %43 = arith.addf %42, %35 : vector<32x256xf32>
    %44 = math.sin %43 : vector<32x256xf32>
    %45 = arith.truncf %35 : vector<32x256xf32> to vector<32x256xbf16>
    %46 = arith.truncf %44 : vector<32x256xf32> to vector<32x256xbf16>
    %47 = tpu.concatenate %45, %46 in 0 : vector<32x256xbf16>, vector<32x256xbf16> -> vector<64x256xbf16>
    %c1 = arith.constant 1 : index
    %c0_35 = arith.constant 0 : index
    %c0_36 = arith.constant 0 : index
    %48 = vector.load %arg8[%c1, %c0_35, %c0_36] : memref<2x32x64xbf16, #tpu.memory_space<vmem>>, vector<1x32x64xbf16>
    %49 = vector.shape_cast %48 : vector<1x32x64xbf16> to vector<32x64xbf16>
    %cst_37 = arith.constant dense<0.000000e+00> : vector<32x256xf32>
    %50 = tpu.matmul %49, %47, %cst_37 {dimension_numbers = #tpu.dot_dimension_numbers<[1], [0], [0], [1], [0, 0, 1, 1], [], []>} : vector<32x64xbf16>, vector<64x256xbf16>, vector<32x256xf32> -> vector<32x256xf32>
    %c64 = arith.constant 64 : index
    %c0_38 = arith.constant 0 : index
    %51 = vector.load %arg15[%c64, %c0_38] : memref<96x256xf32, #tpu.memory_space<vmem>>, vector<32x256xf32>
    %52 = arith.addf %50, %51 : vector<32x256xf32>
    %c1_39 = arith.constant 1 : index
    %c0_40 = arith.constant 0 : index
    %c0_41 = arith.constant 0 : index
    %53 = vector.load %arg9[%c1_39, %c0_40, %c0_41] : memref<2x32x1xf32, #tpu.memory_space<vmem>>, vector<1x32x1xf32>
    %54 = vector.shape_cast %53 : vector<1x32x1xf32> to vector<32x1xf32>
    %55 = vector.broadcast %54 : vector<32x1xf32> to vector<32x256xf32>
    %56 = arith.addf %52, %55 : vector<32x256xf32>
    %cst_42 = arith.constant 0.000000e+00 : f32
    %57 = vector.broadcast %cst_42 : f32 to vector<32x256xf32>
    %58 = arith.maximumf %56, %57 : vector<32x256xf32>
    %c1_43 = arith.constant 1 : index
    %c0_44 = arith.constant 0 : index
    %c0_45 = arith.constant 0 : index
    %59 = vector.load %arg10[%c1_43, %c0_44, %c0_45] : memref<2x32x32xbf16, #tpu.memory_space<vmem>>, vector<1x32x32xbf16>
    %60 = vector.shape_cast %59 : vector<1x32x32xbf16> to vector<32x32xbf16>
    %cst_46 = arith.constant dense<0.000000e+00> : vector<32x256xf32>
    %61 = tpu.matmul %60, %46, %cst_46 {dimension_numbers = #tpu.dot_dimension_numbers<[1], [0], [0], [1], [0, 0, 1, 1], [], []>} : vector<32x32xbf16>, vector<32x256xbf16>, vector<32x256xf32> -> vector<32x256xf32>
    %c1_47 = arith.constant 1 : index
    %c0_48 = arith.constant 0 : index
    %c0_49 = arith.constant 0 : index
    %62 = vector.load %arg11[%c1_47, %c0_48, %c0_49] : memref<2x32x1xf32, #tpu.memory_space<vmem>>, vector<1x32x1xf32>
    %63 = vector.shape_cast %62 : vector<1x32x1xf32> to vector<32x1xf32>
    %64 = vector.broadcast %63 : vector<32x1xf32> to vector<32x256xf32>
    %65 = arith.addf %61, %64 : vector<32x256xf32>
    %66 = arith.addf %65, %58 : vector<32x256xf32>
    %67 = math.sin %66 : vector<32x256xf32>
    %c0_50 = arith.constant 0 : index
    %c0_51 = arith.constant 0 : index
    %68 = vector.load %arg12[%c0_50, %c0_51] : memref<3x32xbf16, #tpu.memory_space<vmem>>, vector<3x32xbf16>
    %69 = arith.truncf %67 : vector<32x256xf32> to vector<32x256xbf16>
    %cst_52 = arith.constant dense<0.000000e+00> : vector<3x256xf32>
    %70 = tpu.matmul %68, %69, %cst_52 {dimension_numbers = #tpu.dot_dimension_numbers<[1], [0], [0], [1], [0, 0, 1, 1], [], []>} : vector<3x32xbf16>, vector<32x256xbf16>, vector<3x256xf32> -> vector<3x256xf32>
    %c0_53 = arith.constant 0 : index
    %c0_54 = arith.constant 0 : index
    %71 = vector.load %arg13[%c0_53, %c0_54] : memref<3x1xf32, #tpu.memory_space<vmem>>, vector<3x1xf32>
    %72 = vector.broadcast %71 : vector<3x1xf32> to vector<3x256xf32>
    %73 = arith.addf %70, %72 : vector<3x256xf32>
    %c0_55 = arith.constant 0 : index
    %c0_56 = arith.constant 0 : index
    %c0_57 = arith.constant 0 : index
    %74 = vector.load %arg14[%c0_55, %c0_56, %c0_57] : memref<1x3x256xf32, #tpu.memory_space<vmem>>, vector<1x3x256xf32>
    %75 = vector.shape_cast %74 : vector<1x3x256xf32> to vector<3x256xf32>
    %76 = vector.shape_cast %73 : vector<3x256xf32> to vector<1x3x256xf32>
    tpu.vector_store %arg14[%c0_55, %c0_56, %c0_57], %76 {strides = array<i32>} : memref<1x3x256xf32, #tpu.memory_space<vmem>>, vector<1x3x256xf32>,
    return
  }
  func.func @transform_0(%arg0: i32, %arg1: i32) -> (i32, i32, i32) {
    %c0_i32 = arith.constant 0 : i32
    %c0_i32_0 = arith.constant 0 : i32
    return %arg0, %c0_i32, %arg1 : i32, i32, i32
  }
  func.func @transform_1(%arg0: i32, %arg1: i32) -> (i32, i32, i32) {
    %c0_i32 = arith.constant 0 : i32
    %c0_i32_0 = arith.constant 0 : i32
    return %arg0, %c0_i32, %arg1 : i32, i32, i32
  }
  func.func @transform_2(%arg0: i32, %arg1: i32) -> (i32, i32) {
    %c0_i32 = arith.constant 0 : i32
    %c0_i32_0 = arith.constant 0 : i32
    %c0_i32_1 = arith.constant 0 : i32
    return %c0_i32, %c0_i32_0 : i32, i32
  }
  func.func @transform_3(%arg0: i32, %arg1: i32) -> (i32, i32) {
    %c0_i32 = arith.constant 0 : i32
    %c0_i32_0 = arith.constant 0 : i32
    %c0_i32_1 = arith.constant 0 : i32
    return %c0_i32, %c0_i32_0 : i32, i32
  }
  func.func @transform_4(%arg0: i32, %arg1: i32) -> (i32, i32) {
    %c0_i32 = arith.constant 0 : i32
    %c0_i32_0 = arith.constant 0 : i32
    %c0_i32_1 = arith.constant 0 : i32
    return %c0_i32, %c0_i32_0 : i32, i32
  }
  func.func @transform_5(%arg0: i32, %arg1: i32) -> (i32, i32) {
    %c0_i32 = arith.constant 0 : i32
    %c0_i32_0 = arith.constant 0 : i32
    %c0_i32_1 = arith.constant 0 : i32
    return %c0_i32, %c0_i32_0 : i32, i32
  }
  func.func @transform_6(%arg0: i32, %arg1: i32) -> (i32, i32, i32) {
    %c0_i32 = arith.constant 0 : i32
    %c0_i32_0 = arith.constant 0 : i32
    %c0_i32_1 = arith.constant 0 : i32
    %c0_i32_2 = arith.constant 0 : i32
    return %c0_i32, %c0_i32_0, %c0_i32_1 : i32, i32, i32
  }
  func.func @transform_7(%arg0: i32, %arg1: i32) -> (i32, i32, i32) {
    %c0_i32 = arith.constant 0 : i32
    %c0_i32_0 = arith.constant 0 : i32
    %c0_i32_1 = arith.constant 0 : i32
    %c0_i32_2 = arith.constant 0 : i32
    return %c0_i32, %c0_i32_0, %c0_i32_1 : i32, i32, i32
  }
  func.func @transform_8(%arg0: i32, %arg1: i32) -> (i32, i32, i32) {
    %c0_i32 = arith.constant 0 : i32
    %c0_i32_0 = arith.constant 0 : i32
    %c0_i32_1 = arith.constant 0 : i32
    %c0_i32_2 = arith.constant 0 : i32
    return %c0_i32, %c0_i32_0, %c0_i32_1 : i32, i32, i32
  }
  func.func @transform_9(%arg0: i32, %arg1: i32) -> (i32, i32, i32) {
    %c0_i32 = arith.constant 0 : i32
    %c0_i32_0 = arith.constant 0 : i32
    %c0_i32_1 = arith.constant 0 : i32
    %c0_i32_2 = arith.constant 0 : i32
    return %c0_i32, %c0_i32_0, %c0_i32_1 : i32, i32, i32
  }
  func.func @transform_10(%arg0: i32, %arg1: i32) -> (i32, i32) {
    %c0_i32 = arith.constant 0 : i32
    %c0_i32_0 = arith.constant 0 : i32
    %c0_i32_1 = arith.constant 0 : i32
    return %c0_i32, %c0_i32_0 : i32, i32
  }
  func.func @transform_11(%arg0: i32, %arg1: i32) -> (i32, i32) {
    %c0_i32 = arith.constant 0 : i32
    %c0_i32_0 = arith.constant 0 : i32
    %c0_i32_1 = arith.constant 0 : i32
    return %c0_i32, %c0_i32_0 : i32, i32
  }
  func.func @transform_12(%arg0: i32, %arg1: i32) -> (i32, i32, i32) {
    %c0_i32 = arith.constant 0 : i32
    %c0_i32_0 = arith.constant 0 : i32
    return %arg0, %c0_i32, %arg1 : i32, i32, i32
  }
}

module attributes {stable_mosaic.version = 11 : i64} {
  func.func @_sirens_kernel(%arg0: i32, %arg1: i32, %arg2: memref<1x2x256xf32, #tpu.memory_space<vmem>>, %arg3: memref<1x4x256xf32, #tpu.memory_space<vmem>>, %arg4: memref<96x4xbf16, #tpu.memory_space<vmem>>, %arg5: memref<32x1xf32, #tpu.memory_space<vmem>>, %arg6: memref<32x2xbf16, #tpu.memory_space<vmem>>, %arg7: memref<32x1xf32, #tpu.memory_space<vmem>>, %arg8: memref<2x32x64xbf16, #tpu.memory_space<vmem>>, %arg9: memref<2x32x1xf32, #tpu.memory_space<vmem>>, %arg10: memref<2x32x32xbf16, #tpu.memory_space<vmem>>, %arg11: memref<2x32x1xf32, #tpu.memory_space<vmem>>, %arg12: memref<3x32xbf16, #tpu.memory_space<vmem>>, %arg13: memref<3x1xf32, #tpu.memory_space<vmem>>, %arg14: memref<1x3x256xf32, #tpu.memory_space<vmem>>, %arg15: memref<96x256xf32, #tpu.memory_space<vmem>>) attributes {dimension_semantics = [#tpu.dimension_semantics<parallel>, #tpu.dimension_semantics<parallel>], iteration_bounds = array<i64: 2, 1>, scalar_prefetch = 0 : i64, scratch_operands = 1 : i64, tpu.core_type = #tpu.core_type<tc>, window_params = [{transform_indices = @transform_0, window_bounds = array<i64: 1, 2, 256>}, {transform_indices = @transform_1, window_bounds = array<i64: 1, 4, 256>}, {pipeline_mode = #tpu.pipeline_mode<synchronous>, transform_indices = @transform_2, window_bounds = array<i64: 96, 4>}, {pipeline_mode = #tpu.pipeline_mode<synchronous>, transform_indices = @transform_3, window_bounds = array<i64: 32, 1>}, {pipeline_mode = #tpu.pipeline_mode<synchronous>, transform_indices = @transform_4, window_bounds = array<i64: 32, 2>}, {pipeline_mode = #tpu.pipeline_mode<synchronous>, transform_indices = @transform_5, window_bounds = array<i64: 32, 1>}, {pipeline_mode = #tpu.pipeline_mode<synchronous>, transform_indices = @transform_6, window_bounds = array<i64: 2, 32, 64>}, {pipeline_mode = #tpu.pipeline_mode<synchronous>, transform_indices = @transform_7, window_bounds = array<i64: 2, 32, 1>}, {pipeline_mode = #tpu.pipeline_mode<synchronous>, transform_indices = @transform_8, window_bounds = array<i64: 2, 32, 32>}, {pipeline_mode = #tpu.pipeline_mode<synchronous>, transform_indices = @transform_9, window_bounds = array<i64: 2, 32, 1>}, {pipeline_mode = #tpu.pipeline_mode<synchronous>, transform_indices = @transform_10, window_bounds = array<i64: 3, 32>}, {pipeline_mode = #tpu.pipeline_mode<synchronous>, transform_indices = @transform_11, window_bounds = array<i64: 3, 1>}, {transform_indices = @transform_12, window_bounds = array<i64: 1, 3, 256>}]} {
    %c0 = arith.constant 0 : index
    %c0_0 = arith.constant 0 : index
    %c0_1 = arith.constant 0 : index
    %0 = vector.load %arg2[%c0, %c0_0, %c0_1] : memref<1x2x256xf32, #tpu.memory_space<vmem>>, vector<1x2x256xf32>
    %1 = vector.shape_cast %0 : vector<1x2x256xf32> to vector<2x256xf32>
    %2 = arith.truncf %1 : vector<2x256xf32> to vector<2x256xbf16>
    %c0_2 = arith.constant 0 : index
    %c0_3 = arith.constant 0 : index
    %c0_4 = arith.constant 0 : index
    %3 = vector.load %arg3[%c0_2, %c0_3, %c0_4] : memref<1x4x256xf32, #tpu.memory_space<vmem>>, vector<1x4x256xf32>
    %4 = vector.shape_cast %3 : vector<1x4x256xf32> to vector<4x256xf32>
    %5 = arith.truncf %4 : vector<4x256xf32> to vector<4x256xbf16>
    %c0_5 = arith.constant 0 : index
    %c0_6 = arith.constant 0 : index
    %6 = vector.load %arg4[%c0_5, %c0_6] : memref<96x4xbf16, #tpu.memory_space<vmem>>, vector<96x4xbf16>
    %cst = arith.constant dense<0.000000e+00> : vector<96x256xf32>
    %7 = tpu.matmul %6, %5, %cst {dimension_numbers = #tpu.dot_dimension_numbers<[1], [0], [0], [1], [0, 0, 1, 1], [], []>} : vector<96x4xbf16>, vector<4x256xbf16>, vector<96x256xf32> -> vector<96x256xf32>
    %c0_7 = arith.constant 0 : index
    %c0_8 = arith.constant 0 : index
    %8 = vector.load %arg15[%c0_7, %c0_8] : memref<96x256xf32, #tpu.memory_space<vmem>>, vector<96x256xf32>
    tpu.vector_store %arg15[%c0_7, %c0_8], %7 {strides = array<i32>} : memref<96x256xf32, #tpu.memory_space<vmem>>, vector<96x256xf32>,
    %c0_9 = arith.constant 0 : index
    %c0_10 = arith.constant 0 : index
    %9 = vector.load %arg15[%c0_9, %c0_10] : memref<96x256xf32, #tpu.memory_space<vmem>>, vector<32x256xf32>
    %c0_11 = arith.constant 0 : index
    %c0_12 = arith.constant 0 : index
    %10 = vector.load %arg5[%c0_11, %c0_12] : memref<32x1xf32, #tpu.memory_space<vmem>>, vector<32x1xf32>
    %11 = vector.broadcast %10 : vector<32x1xf32> to vector<32x256xf32>
    %12 = arith.addf %9, %11 : vector<32x256xf32>
    %cst_13 = arith.constant 0.000000e+00 : f32
    %13 = vector.broadcast %cst_13 : f32 to vector<32x256xf32>
    %14 = arith.maximumf %12, %13 : vector<32x256xf32>
    %c0_14 = arith.constant 0 : index
    %c0_15 = arith.constant 0 : index
    %15 = vector.load %arg6[%c0_14, %c0_15] : memref<32x2xbf16, #tpu.memory_space<vmem>>, vector<32x2xbf16>
    %cst_16 = arith.constant dense<0.000000e+00> : vector<32x256xf32>
    %16 = tpu.matmul %15, %2, %cst_16 {dimension_numbers = #tpu.dot_dimension_numbers<[1], [0], [0], [1], [0, 0, 1, 1], [], []>} : vector<32x2xbf16>, vector<2x256xbf16>, vector<32x256xf32> -> vector<32x256xf32>
    %c0_17 = arith.constant 0 : index
    %c0_18 = arith.constant 0 : index
    %17 = vector.load %arg7[%c0_17, %c0_18] : memref<32x1xf32, #tpu.memory_space<vmem>>, vector<32x1xf32>
    %18 = vector.broadcast %17 : vector<32x1xf32> to vector<32x256xf32>
    %19 = arith.addf %16, %18 : vector<32x256xf32>
    %20 = arith.addf %19, %14 : vector<32x256xf32>
    %21 = math.sin %20 : vector<32x256xf32>
    %22 = arith.truncf %14 : vector<32x256xf32> to vector<32x256xbf16>
    %23 = arith.truncf %21 : vector<32x256xf32> to vector<32x256xbf16>
    %24 = tpu.concatenate %22, %23 in 0 : vector<32x256xbf16>, vector<32x256xbf16> -> vector<64x256xbf16>
    %c0_19 = arith.constant 0 : index
    %c0_20 = arith.constant 0 : index
    %c0_21 = arith.constant 0 : index
    %25 = vector.load %arg8[%c0_19, %c0_20, %c0_21] : memref<2x32x64xbf16, #tpu.memory_space<vmem>>, vector<1x32x64xbf16>
    %26 = vector.shape_cast %25 : vector<1x32x64xbf16> to vector<32x64xbf16>
    %cst_22 = arith.constant dense<0.000000e+00> : vector<32x256xf32>
    %27 = tpu.matmul %26, %24, %cst_22 {dimension_numbers = #tpu.dot_dimension_numbers<[1], [0], [0], [1], [0, 0, 1, 1], [], []>} : vector<32x64xbf16>, vector<64x256xbf16>, vector<32x256xf32> -> vector<32x256xf32>
    %c32 = arith.constant 32 : index
    %c0_23 = arith.constant 0 : index
    %28 = vector.load %arg15[%c32, %c0_23] : memref<96x256xf32, #tpu.memory_space<vmem>>, vector<32x256xf32>
    %29 = arith.addf %27, %28 : vector<32x256xf32>
    %c0_24 = arith.constant 0 : index
    %c0_25 = arith.constant 0 : index
    %c0_26 = arith.constant 0 : index
    %30 = vector.load %arg9[%c0_24, %c0_25, %c0_26] : memref<2x32x1xf32, #tpu.memory_space<vmem>>, vector<1x32x1xf32>
    %31 = vector.shape_cast %30 : vector<1x32x1xf32> to vector<32x1xf32>
    %32 = vector.broadcast %31 : vector<32x1xf32> to vector<32x256xf32>
    %33 = arith.addf %29, %32 : vector<32x256xf32>
    %cst_27 = arith.constant 0.000000e+00 : f32
    %34 = vector.broadcast %cst_27 : f32 to vector<32x256xf32>
    %35 = arith.maximumf %33, %34 : vector<32x256xf32>
    %c0_28 = arith.constant 0 : index
    %c0_29 = arith.constant 0 : index
    %c0_30 = arith.constant 0 : index
    %36 = vector.load %arg10[%c0_28, %c0_29, %c0_30] : memref<2x32x32xbf16, #tpu.memory_space<vmem>>, vector<1x32x32xbf16>
    %37 = vector.shape_cast %36 : vector<1x32x32xbf16> to vector<32x32xbf16>
    %cst_31 = arith.constant dense<0.000000e+00> : vector<32x256xf32>
    %38 = tpu.matmul %37, %23, %cst_31 {dimension_numbers = #tpu.dot_dimension_numbers<[1], [0], [0], [1], [0, 0, 1, 1], [], []>} : vector<32x32xbf16>, vector<32x256xbf16>, vector<32x256xf32> -> vector<32x256xf32>
    %c0_32 = arith.constant 0 : index
    %c0_33 = arith.constant 0 : index
    %c0_34 = arith.constant 0 : index
    %39 = vector.load %arg11[%c0_32, %c0_33, %c0_34] : memref<2x32x1xf32, #tpu.memory_space<vmem>>, vector<1x32x1xf32>
    %40 = vector.shape_cast %39 : vector<1x32x1xf32> to vector<32x1xf32>
    %41 = vector.broadcast %40 : vector<32x1xf32> to vector<32x256xf32>
    %42 = arith.addf %38, %41 : vector<32x256xf32>
    %43 = arith.addf %42, %35 : vector<32x256xf32>
    %44 = math.sin %43 : vector<32x256xf32>
    %45 = arith.truncf %35 : vector<32x256xf32> to vector<32x256xbf16>
    %46 = arith.truncf %44 : vector<32x256xf32> to vector<32x256xbf16>
    %47 = tpu.concatenate %45, %46 in 0 : vector<32x256xbf16>, vector<32x256xbf16> -> vector<64x256xbf16>
    %c1 = arith.constant 1 : index
    %c0_35 = arith.constant 0 : index
    %c0_36 = arith.constant 0 : index
    %48 = vector.load %arg8[%c1, %c0_35, %c0_36] : memref<2x32x64xbf16, #tpu.memory_space<vmem>>, vector<1x32x64xbf16>
    %49 = vector.shape_cast %48 : vector<1x32x64xbf16> to vector<32x64xbf16>
    %cst_37 = arith.constant dense<0.000000e+00> : vector<32x256xf32>
    %50 = tpu.matmul %49, %47, %cst_37 {dimension_numbers = #tpu.dot_dimension_numbers<[1], [0], [0], [1], [0, 0, 1, 1], [], []>} : vector<32x64xbf16>, vector<64x256xbf16>, vector<32x256xf32> -> vector<32x256xf32>
    %c64 = arith.constant 64 : index
    %c0_38 = arith.constant 0 : index
    %51 = vector.load %arg15[%c64, %c0_38] : memref<96x256xf32, #tpu.memory_space<vmem>>, vector<32x256xf32>
    %52 = arith.addf %50, %51 : vector<32x256xf32>
    %c1_39 = arith.constant 1 : index
    %c0_40 = arith.constant 0 : index
    %c0_41 = arith.constant 0 : index
    %53 = vector.load %arg9[%c1_39, %c0_40, %c0_41] : memref<2x32x1xf32, #tpu.memory_space<vmem>>, vector<1x32x1xf32>
    %54 = vector.shape_cast %53 : vector<1x32x1xf32> to vector<32x1xf32>
    %55 = vector.broadcast %54 : vector<32x1xf32> to vector<32x256xf32>
    %56 = arith.addf %52, %55 : vector<32x256xf32>
    %cst_42 = arith.constant 0.000000e+00 : f32
    %57 = vector.broadcast %cst_42 : f32 to vector<32x256xf32>
    %58 = arith.maximumf %56, %57 : vector<32x256xf32>
    %c1_43 = arith.constant 1 : index
    %c0_44 = arith.constant 0 : index
    %c0_45 = arith.constant 0 : index
    %59 = vector.load %arg10[%c1_43, %c0_44, %c0_45] : memref<2x32x32xbf16, #tpu.memory_space<vmem>>, vector<1x32x32xbf16>
    %60 = vector.shape_cast %59 : vector<1x32x32xbf16> to vector<32x32xbf16>
    %cst_46 = arith.constant dense<0.000000e+00> : vector<32x256xf32>
    %61 = tpu.matmul %60, %46, %cst_46 {dimension_numbers = #tpu.dot_dimension_numbers<[1], [0], [0], [1], [0, 0, 1, 1], [], []>} : vector<32x32xbf16>, vector<32x256xbf16>, vector<32x256xf32> -> vector<32x256xf32>
    %c1_47 = arith.constant 1 : index
    %c0_48 = arith.constant 0 : index
    %c0_49 = arith.constant 0 : index
    %62 = vector.load %arg11[%c1_47, %c0_48, %c0_49] : memref<2x32x1xf32, #tpu.memory_space<vmem>>, vector<1x32x1xf32>
    %63 = vector.shape_cast %62 : vector<1x32x1xf32> to vector<32x1xf32>
    %64 = vector.broadcast %63 : vector<32x1xf32> to vector<32x256xf32>
    %65 = arith.addf %61, %64 : vector<32x256xf32>
    %66 = arith.addf %65, %58 : vector<32x256xf32>
    %67 = math.sin %66 : vector<32x256xf32>
    %c0_50 = arith.constant 0 : index
    %c0_51 = arith.constant 0 : index
    %68 = vector.load %arg12[%c0_50, %c0_51] : memref<3x32xbf16, #tpu.memory_space<vmem>>, vector<3x32xbf16>
    %69 = arith.truncf %67 : vector<32x256xf32> to vector<32x256xbf16>
    %cst_52 = arith.constant dense<0.000000e+00> : vector<3x256xf32>
    %70 = tpu.matmul %68, %69, %cst_52 {dimension_numbers = #tpu.dot_dimension_numbers<[1], [0], [0], [1], [0, 0, 1, 1], [], []>} : vector<3x32xbf16>, vector<32x256xbf16>, vector<3x256xf32> -> vector<3x256xf32>
    %c0_53 = arith.constant 0 : index
    %c0_54 = arith.constant 0 : index
    %71 = vector.load %arg13[%c0_53, %c0_54] : memref<3x1xf32, #tpu.memory_space<vmem>>, vector<3x1xf32>
    %72 = vector.broadcast %71 : vector<3x1xf32> to vector<3x256xf32>
    %73 = arith.addf %70, %72 : vector<3x256xf32>
    %c0_55 = arith.constant 0 : index
    %c0_56 = arith.constant 0 : index
    %c0_57 = arith.constant 0 : index
    %74 = vector.load %arg14[%c0_55, %c0_56, %c0_57] : memref<1x3x256xf32, #tpu.memory_space<vmem>>, vector<1x3x256xf32>
    %75 = vector.shape_cast %74 : vector<1x3x256xf32> to vector<3x256xf32>
    %76 = vector.shape_cast %73 : vector<3x256xf32> to vector<1x3x256xf32>
    tpu.vector_store %arg14[%c0_55, %c0_56, %c0_57], %76 {strides = array<i32>} : memref<1x3x256xf32, #tpu.memory_space<vmem>>, vector<1x3x256xf32>,
    return
  }
  func.func @transform_0(%arg0: i32, %arg1: i32) -> (i32, i32, i32) {
    %c0_i32 = arith.constant 0 : i32
    %c0_i32_0 = arith.constant 0 : i32
    return %arg0, %c0_i32, %arg1 : i32, i32, i32
  }
  func.func @transform_1(%arg0: i32, %arg1: i32) -> (i32, i32, i32) {
    %c0_i32 = arith.constant 0 : i32
    %c0_i32_0 = arith.constant 0 : i32
    return %arg0, %c0_i32, %arg1 : i32, i32, i32
  }
  func.func @transform_2(%arg0: i32, %arg1: i32) -> (i32, i32) {
    %c0_i32 = arith.constant 0 : i32
    %c0_i32_0 = arith.constant 0 : i32
    %c0_i32_1 = arith.constant 0 : i32
    return %c0_i32, %c0_i32_0 : i32, i32
  }
  func.func @transform_3(%arg0: i32, %arg1: i32) -> (i32, i32) {
    %c0_i32 = arith.constant 0 : i32
    %c0_i32_0 = arith.constant 0 : i32
    %c0_i32_1 = arith.constant 0 : i32
    return %c0_i32, %c0_i32_0 : i32, i32
  }
  func.func @transform_4(%arg0: i32, %arg1: i32) -> (i32, i32) {
    %c0_i32 = arith.constant 0 : i32
    %c0_i32_0 = arith.constant 0 : i32
    %c0_i32_1 = arith.constant 0 : i32
    return %c0_i32, %c0_i32_0 : i32, i32
  }
  func.func @transform_5(%arg0: i32, %arg1: i32) -> (i32, i32) {
    %c0_i32 = arith.constant 0 : i32
    %c0_i32_0 = arith.constant 0 : i32
    %c0_i32_1 = arith.constant 0 : i32
    return %c0_i32, %c0_i32_0 : i32, i32
  }
  func.func @transform_6(%arg0: i32, %arg1: i32) -> (i32, i32, i32) {
    %c0_i32 = arith.constant 0 : i32
    %c0_i32_0 = arith.constant 0 : i32
    %c0_i32_1 = arith.constant 0 : i32
    %c0_i32_2 = arith.constant 0 : i32
    return %c0_i32, %c0_i32_0, %c0_i32_1 : i32, i32, i32
  }
  func.func @transform_7(%arg0: i32, %arg1: i32) -> (i32, i32, i32) {
    %c0_i32 = arith.constant 0 : i32
    %c0_i32_0 = arith.constant 0 : i32
    %c0_i32_1 = arith.constant 0 : i32
    %c0_i32_2 = arith.constant 0 : i32
    return %c0_i32, %c0_i32_0, %c0_i32_1 : i32, i32, i32
  }
  func.func @transform_8(%arg0: i32, %arg1: i32) -> (i32, i32, i32) {
    %c0_i32 = arith.constant 0 : i32
    %c0_i32_0 = arith.constant 0 : i32
    %c0_i32_1 = arith.constant 0 : i32
    %c0_i32_2 = arith.constant 0 : i32
    return %c0_i32, %c0_i32_0, %c0_i32_1 : i32, i32, i32
  }
  func.func @transform_9(%arg0: i32, %arg1: i32) -> (i32, i32, i32) {
    %c0_i32 = arith.constant 0 : i32
    %c0_i32_0 = arith.constant 0 : i32
    %c0_i32_1 = arith.constant 0 : i32
    %c0_i32_2 = arith.constant 0 : i32
    return %c0_i32, %c0_i32_0, %c0_i32_1 : i32, i32, i32
  }
  func.func @transform_10(%arg0: i32, %arg1: i32) -> (i32, i32) {
    %c0_i32 = arith.constant 0 : i32
    %c0_i32_0 = arith.constant 0 : i32
    %c0_i32_1 = arith.constant 0 : i32
    return %c0_i32, %c0_i32_0 : i32, i32
  }
  func.func @transform_11(%arg0: i32, %arg1: i32) -> (i32, i32) {
    %c0_i32 = arith.constant 0 : i32
    %c0_i32_0 = arith.constant 0 : i32
    %c0_i32_1 = arith.constant 0 : i32
    return %c0_i32, %c0_i32_0 : i32, i32
  }
  func.func @transform_12(%arg0: i32, %arg1: i32) -> (i32, i32, i32) {
    %c0_i32 = arith.constant 0 : i32
    %c0_i32_0 = arith.constant 0 : i32
    return %arg0, %c0_i32, %arg1 : i32, i32, i32
  }
}

</mosaic_0001>

<llo_original>
// kernel: tpu_custom_call.1
$region0: #{tpu_custom_call.1}
  #allocation0 [shape = 'u32[]', space=smem, size = 0x4, offset = 0x4, fixed_abs, tag = 'smem constant byte address 0x4 - core index']
  #allocation1 [shape = 'u32[144,128]{1,0:T(1,128)}', space=vmem, size = 0x12000, scoped, tag = 'internal scratch']
  #allocation2 [shape = 'f32[96,256]{1,0:T(8,128)}', space=vmem, size = 0x18000, scoped, tag = 'scratch operand']
  %s0 = inlined_call_operand.vmem [shape: f32[2,2,256], index: 0, kind: input, shape index: {}]
  %s1 = inlined_call_operand.vmem [shape: f32[2,4,256], index: 1, kind: input, shape index: {}]
  %s2 = inlined_call_operand.vmem [shape: bf16[96,4], index: 2, kind: input, shape index: {}]
  %s3 = inlined_call_operand.vmem [shape: f32[32,1], index: 3, kind: input, shape index: {}]
  %s4 = inlined_call_operand.vmem [shape: bf16[32,2], index: 4, kind: input, shape index: {}]
  %s5 = inlined_call_operand.vmem [shape: f32[32,1], index: 5, kind: input, shape index: {}]
  %s6 = inlined_call_operand.vmem [shape: bf16[2,32,64], index: 6, kind: input, shape index: {}]
  %s7 = inlined_call_operand.vmem [shape: f32[2,32,1], index: 7, kind: input, shape index: {}]
  %s8 = inlined_call_operand.vmem [shape: bf16[2,32,32], index: 8, kind: input, shape index: {}]
  %s9 = inlined_call_operand.vmem [shape: f32[2,32,1], index: 9, kind: input, shape index: {}]
  %s10 = inlined_call_operand.vmem [shape: bf16[3,32], index: 10, kind: input, shape index: {}]
  %s11 = inlined_call_operand.vmem [shape: f32[3,1], index: 11, kind: input, shape index: {}]
  %s12 = inlined_call_operand.vmem [shape: f32[2,3,256], index: 12, kind: output, shape index: {}]
  %s13 = sld [smem:[#allocation0]]
  $region81: #{tpu_custom_call.1} parent=0
    _
  %s15 = ssub.s32 1, %s13
  %s16 = scalar_select 0, %s15, %s13
  loop: start=0, step=1, limit=4
  $region2: #{tpu_custom_call.1} parent=0 // loop_pre_header
    _
  $region3: #{tpu_custom_call.1} parent=0 // loop_header
    %s18 = sphi 0, %s22
    %p19 = scmp.ge.s32.totalorder %s18, 4
    %s25 = sphi 0, %s37
    %s26 = sphi 0, %s33
    %s27 = sphi 0, %s25
    %s28 = sphi 0, %s26
    %s29 = sphi 0, %s27
    %s30 = sphi 0, %s28
    %s42 = sphi 0, %s44
    %s45 = sphi 0, %s42
    %s46 = sphi 0, %s45
    %s62 = sphi 0, %s46
    %s70 = sphi 0, %s72
    %s73 = sphi 0, %s70
    %s74 = sphi 0, %s73
    %s90 = sphi 0, %s74
    %s94 = sphi 0, %s94
    %s96 = sphi 0, %s94
    %s97 = sphi 0, %s96
    %s111 = sphi 0, %s97
    %s115 = sphi 0, %s115
    %s117 = sphi 0, %s115
    %s118 = sphi 0, %s117
    %s132 = sphi 0, %s118
    %s136 = sphi 0, %s136
    %s138 = sphi 0, %s136
    %s139 = sphi 0, %s138
    %s153 = sphi 0, %s139
    %s157 = sphi 0, %s157
    %s159 = sphi 0, %s157
    %s160 = sphi 0, %s159
    %s174 = sphi 0, %s160
    %s178 = sphi 0, %s178
    %s180 = sphi 0, %s178
    %s181 = sphi 0, %s180
    %s195 = sphi 0, %s181
    %s199 = sphi 0, %s199
    %s201 = sphi 0, %s199
    %s202 = sphi 0, %s201
    %s216 = sphi 0, %s202
    %s220 = sphi 0, %s220
    %s222 = sphi 0, %s220
    %s223 = sphi 0, %s222
    %s237 = sphi 0, %s223
    %s241 = sphi 0, %s241
    %s243 = sphi 0, %s241
    %s244 = sphi 0, %s243
    %s258 = sphi 0, %s244
    %s262 = sphi 0, %s262
    %s264 = sphi 0, %s262
    %s265 = sphi 0, %s264
    %s279 = sphi 0, %s265
    %s283 = sphi 0, %s283
    %s285 = sphi 0, %s283
    %s286 = sphi 0, %s285
    %s300 = sphi 0, %s286
    %s308 = sphi 0, %s310
    %s311 = sphi 0, %s308
    %s312 = sphi 0, %s311
    %s328 = sphi 0, %s312
  $region4: #{tpu_custom_call.1} parent=0 // loop_header_branch
    %21 = sbr.rel (%p19) target = $region8
  $region5: #{tpu_custom_call.1} parent=0 // loop_body
    %s23 = ssub.s32 %s18, 1
    %s24 = ssub.s32 %s18, 2
    %s31 = sadd.s32 1, %s26
    %p32 = scmp.ge.s32.totalorder %s31, 1
    %s33 = scalar_select %p32, 0, %s31
    %s34 = sadd.s32 1, %s25
    %s35 = scalar_select %p32, %s34, %s25
    %p36 = scmp.ge.s32.totalorder %s35, 2
    %s37 = scalar_select %p36, 0, %s35
    %s38 = ssub.s32 %s25, %s37
    %s39 = ssub.s32 %s26, %s33
    %s40 = sor.u32 %s38, %s39
    %p41 = scmp.eq.s32.totalorder %s40, 0
    %s43 = sadd.s32 %s42, 1
    %s44 = scalar_select %p41, %s42, %s43
    %p47 = pneg %p41
    %p48 = scmp.eq.s32.totalorder %s18, 1
    %p49 = por %p47, %p48
    %p50 = scmp.ne.s32.totalorder %s42, %s45
    %p51 = scmp.eq.s32.totalorder %s18, 0
    %p52 = por %p50, %p51
    %p53 = scmp.ne.s32.totalorder %s42, %s45
    %p54 = scmp.eq.s32.totalorder %s23, 1
    %p55 = por %p53, %p54
    %p56 = scmp.ne.s32.totalorder %s45, %s46
    %p57 = scmp.eq.s32.totalorder %s23, 0
    %p58 = por %p56, %p57
    %p59 = scmp.ne.s32.totalorder %s45, %s46
    %p60 = scmp.eq.s32.totalorder %s24, 1
    %p61 = por %p59, %p60
    %p63 = scmp.ne.s32.totalorder %s46, %s62
    %p64 = scmp.eq.s32.totalorder %s24, 0
    %p65 = por %p63, %p64
    %s66 = ssub.s32 %s25, %s37
    %s67 = ssub.s32 %s26, %s33
    %s68 = sor.u32 %s66, %s67
    %p69 = scmp.eq.s32.totalorder %s68, 0
    %s71 = sadd.s32 %s70, 1
    %s72 = scalar_select %p69, %s70, %s71
    %p75 = pneg %p69
    %p76 = scmp.eq.s32.totalorder %s18, 1
    %p77 = por %p75, %p76
    %p78 = scmp.ne.s32.totalorder %s70, %s73
    %p79 = scmp.eq.s32.totalorder %s18, 0
    %p80 = por %p78, %p79
    %p81 = scmp.ne.s32.totalorder %s70, %s73
    %p82 = scmp.eq.s32.totalorder %s23, 1
    %p83 = por %p81, %p82
    %p84 = scmp.ne.s32.totalorder %s73, %s74
    %p85 = scmp.eq.s32.totalorder %s23, 0
    %p86 = por %p84, %p85
    %p87 = scmp.ne.s32.totalorder %s73, %s74
    %p88 = scmp.eq.s32.totalorder %s24, 1
    %p89 = por %p87, %p88
    %p91 = scmp.ne.s32.totalorder %s74, %s90
    %p92 = scmp.eq.s32.totalorder %s24, 0
    %p93 = por %p91, %p92
    %s95 = sadd.s32 %s94, 1
    %p98 = scmp.eq.s32.totalorder %s18, 1
    %p99 = scmp.ne.s32.totalorder %s94, %s96
    %p100 = scmp.eq.s32.totalorder %s18, 0
    %p101 = por %p99, %p100
    %p102 = scmp.ne.s32.totalorder %s94, %s96
    %p103 = scmp.eq.s32.totalorder %s23, 1
    %p104 = por %p102, %p103
    %p105 = scmp.ne.s32.totalorder %s96, %s97
    %p106 = scmp.eq.s32.totalorder %s23, 0
    %p107 = por %p105, %p106
    %p108 = scmp.ne.s32.totalorder %s96, %s97
    %p109 = scmp.eq.s32.totalorder %s24, 1
    %p110 = por %p108, %p109
    %p112 = scmp.ne.s32.totalorder %s97, %s111
    %p113 = scmp.eq.s32.totalorder %s24, 0
    %p114 = por %p112, %p113
    %s116 = sadd.s32 %s115, 1
    %p119 = scmp.eq.s32.totalorder %s18, 1
    %p120 = scmp.ne.s32.totalorder %s115, %s117
    %p121 = scmp.eq.s32.totalorder %s18, 0
    %p122 = por %p120, %p121
    %p123 = scmp.ne.s32.totalorder %s115, %s117
    %p124 = scmp.eq.s32.totalorder %s23, 1
    %p125 = por %p123, %p124
    %p126 = scmp.ne.s32.totalorder %s117, %s118
    %p127 = scmp.eq.s32.totalorder %s23, 0
    %p128 = por %p126, %p127
    %p129 = scmp.ne.s32.totalorder %s117, %s118
    %p130 = scmp.eq.s32.totalorder %s24, 1
    %p131 = por %p129, %p130
    %p133 = scmp.ne.s32.totalorder %s118, %s132
    %p134 = scmp.eq.s32.totalorder %s24, 0
    %p135 = por %p133, %p134
    %s137 = sadd.s32 %s136, 1
    %p140 = scmp.eq.s32.totalorder %s18, 1
    %p141 = scmp.ne.s32.totalorder %s136, %s138
    %p142 = scmp.eq.s32.totalorder %s18, 0
    %p143 = por %p141, %p142
    %p144 = scmp.ne.s32.totalorder %s136, %s138
    %p145 = scmp.eq.s32.totalorder %s23, 1
    %p146 = por %p144, %p145
    %p147 = scmp.ne.s32.totalorder %s138, %s139
    %p148 = scmp.eq.s32.totalorder %s23, 0
    %p149 = por %p147, %p148
    %p150 = scmp.ne.s32.totalorder %s138, %s139
    %p151 = scmp.eq.s32.totalorder %s24, 1
    %p152 = por %p150, %p151
    %p154 = scmp.ne.s32.totalorder %s139, %s153
    %p155 = scmp.eq.s32.totalorder %s24, 0
    %p156 = por %p154, %p155
    %s158 = sadd.s32 %s157, 1
    %p161 = scmp.eq.s32.totalorder %s18, 1
    %p162 = scmp.ne.s32.totalorder %s157, %s159
    %p163 = scmp.eq.s32.totalorder %s18, 0
    %p164 = por %p162, %p163
    %p165 = scmp.ne.s32.totalorder %s157, %s159
    %p166 = scmp.eq.s32.totalorder %s23, 1
    %p167 = por %p165, %p166
    %p168 = scmp.ne.s32.totalorder %s159, %s160
    %p169 = scmp.eq.s32.totalorder %s23, 0
    %p170 = por %p168, %p169
    %p171 = scmp.ne.s32.totalorder %s159, %s160
    %p172 = scmp.eq.s32.totalorder %s24, 1
    %p173 = por %p171, %p172
    %p175 = scmp.ne.s32.totalorder %s160, %s174
    %p176 = scmp.eq.s32.totalorder %s24, 0
    %p177 = por %p175, %p176
    %s179 = sadd.s32 %s178, 1
    %p182 = scmp.eq.s32.totalorder %s18, 1
    %p183 = scmp.ne.s32.totalorder %s178, %s180
    %p184 = scmp.eq.s32.totalorder %s18, 0
    %p185 = por %p183, %p184
    %p186 = scmp.ne.s32.totalorder %s178, %s180
    %p187 = scmp.eq.s32.totalorder %s23, 1
    %p188 = por %p186, %p187
    %p189 = scmp.ne.s32.totalorder %s180, %s181
    %p190 = scmp.eq.s32.totalorder %s23, 0
    %p191 = por %p189, %p190
    %p192 = scmp.ne.s32.totalorder %s180, %s181
    %p193 = scmp.eq.s32.totalorder %s24, 1
    %p194 = por %p192, %p193
    %p196 = scmp.ne.s32.totalorder %s181, %s195
    %p197 = scmp.eq.s32.totalorder %s24, 0
    %p198 = por %p196, %p197
    %s200 = sadd.s32 %s199, 1
    %p203 = scmp.eq.s32.totalorder %s18, 1
    %p204 = scmp.ne.s32.totalorder %s199, %s201
    %p205 = scmp.eq.s32.totalorder %s18, 0
    %p206 = por %p204, %p205
    %p207 = scmp.ne.s32.totalorder %s199, %s201
    %p208 = scmp.eq.s32.totalorder %s23, 1
    %p209 = por %p207, %p208
    %p210 = scmp.ne.s32.totalorder %s201, %s202
    %p211 = scmp.eq.s32.totalorder %s23, 0
    %p212 = por %p210, %p211
    %p213 = scmp.ne.s32.totalorder %s201, %s202
    %p214 = scmp.eq.s32.totalorder %s24, 1
    %p215 = por %p213, %p214
    %p217 = scmp.ne.s32.totalorder %s202, %s216
    %p218 = scmp.eq.s32.totalorder %s24, 0
    %p219 = por %p217, %p218
    %s221 = sadd.s32 %s220, 1
    %p224 = scmp.eq.s32.totalorder %s18, 1
    %p225 = scmp.ne.s32.totalorder %s220, %s222
    %p226 = scmp.eq.s32.totalorder %s18, 0
    %p227 = por %p225, %p226
    %p228 = scmp.ne.s32.totalorder %s220, %s222
    %p229 = scmp.eq.s32.totalorder %s23, 1
    %p230 = por %p228, %p229
    %p231 = scmp.ne.s32.totalorder %s222, %s223
    %p232 = scmp.eq.s32.totalorder %s23, 0
    %p233 = por %p231, %p232
    %p234 = scmp.ne.s32.totalorder %s222, %s223
    %p235 = scmp.eq.s32.totalorder %s24, 1
    %p236 = por %p234, %p235
    %p238 = scmp.ne.s32.totalorder %s223, %s237
    %p239 = scmp.eq.s32.totalorder %s24, 0
    %p240 = por %p238, %p239
    %s242 = sadd.s32 %s241, 1
    %p245 = scmp.eq.s32.totalorder %s18, 1
    %p246 = scmp.ne.s32.totalorder %s241, %s243
    %p247 = scmp.eq.s32.totalorder %s18, 0
    %p248 = por %p246, %p247
    %p249 = scmp.ne.s32.totalorder %s241, %s243
    %p250 = scmp.eq.s32.totalorder %s23, 1
    %p251 = por %p249, %p250
    %p252 = scmp.ne.s32.totalorder %s243, %s244
    %p253 = scmp.eq.s32.totalorder %s23, 0
    %p254 = por %p252, %p253
    %p255 = scmp.ne.s32.totalorder %s243, %s244
    %p256 = scmp.eq.s32.totalorder %s24, 1
    %p257 = por %p255, %p256
    %p259 = scmp.ne.s32.totalorder %s244, %s258
    %p260 = scmp.eq.s32.totalorder %s24, 0
    %p261 = por %p259, %p260
    %s263 = sadd.s32 %s262, 1
    %p266 = scmp.eq.s32.totalorder %s18, 1
    %p267 = scmp.ne.s32.totalorder %s262, %s264
    %p268 = scmp.eq.s32.totalorder %s18, 0
    %p269 = por %p267, %p268
    %p270 = scmp.ne.s32.totalorder %s262, %s264
    %p271 = scmp.eq.s32.totalorder %s23, 1
    %p272 = por %p270, %p271
    %p273 = scmp.ne.s32.totalorder %s264, %s265
    %p274 = scmp.eq.s32.totalorder %s23, 0
    %p275 = por %p273, %p274
    %p276 = scmp.ne.s32.totalorder %s264, %s265
    %p277 = scmp.eq.s32.totalorder %s24, 1
    %p278 = por %p276, %p277
    %p280 = scmp.ne.s32.totalorder %s265, %s279
    %p281 = scmp.eq.s32.totalorder %s24, 0
    %p282 = por %p280, %p281
    %s284 = sadd.s32 %s283, 1
    %p287 = scmp.eq.s32.totalorder %s18, 1
    %p288 = scmp.ne.s32.totalorder %s283, %s285
    %p289 = scmp.eq.s32.totalorder %s18, 0
    %p290 = por %p288, %p289
    %p291 = scmp.ne.s32.totalorder %s283, %s285
    %p292 = scmp.eq.s32.totalorder %s23, 1
    %p293 = por %p291, %p292
    %p294 = scmp.ne.s32.totalorder %s285, %s286
    %p295 = scmp.eq.s32.totalorder %s23, 0
    %p296 = por %p294, %p295
    %p297 = scmp.ne.s32.totalorder %s285, %s286
    %p298 = scmp.eq.s32.totalorder %s24, 1
    %p299 = por %p297, %p298
    %p301 = scmp.ne.s32.totalorder %s286, %s300
    %p302 = scmp.eq.s32.totalorder %s24, 0
    %p303 = por %p301, %p302
    %s304 = ssub.s32 %s25, %s37
    %s305 = ssub.s32 %s26, %s33
    %s306 = sor.u32 %s304, %s305
    %p307 = scmp.eq.s32.totalorder %s306, 0
    %s309 = sadd.s32 %s308, 1
    %s310 = scalar_select %p307, %s308, %s309
    %p313 = pneg %p307
    %p314 = scmp.eq.s32.totalorder %s18, 1
    %p315 = por %p313, %p314
    %p316 = scmp.ne.s32.totalorder %s308, %s311
    %p317 = scmp.eq.s32.totalorder %s18, 0
    %p318 = por %p316, %p317
    %p319 = scmp.ne.s32.totalorder %s308, %s311
    %p320 = scmp.eq.s32.totalorder %s23, 1
    %p321 = por %p319, %p320
    %p322 = scmp.ne.s32.totalorder %s311, %s312
    %p323 = scmp.eq.s32.totalorder %s23, 0
    %p324 = por %p322, %p323
    %p325 = scmp.ne.s32.totalorder %s311, %s312
    %p326 = scmp.eq.s32.totalorder %s24, 1
    %p327 = por %p325, %p326
    %p329 = scmp.ne.s32.totalorder %s312, %s328
    %p330 = scmp.eq.s32.totalorder %s24, 0
    %p331 = por %p329, %p330
    %p332 = scmp.le.s32.totalorder 1, %s18
    %p333 = scmp.lt.s32.totalorder %s18, 3
    %p334 = pnand %p332, %p333
    %p335 = pneg %p334
    // Predicated region
    $region9: #{tpu_custom_call.1} parent=5 // pred_check
      _
    $region10: #{tpu_custom_call.1} parent=5 // pred_check_branch
      %337 = sbr.rel (%p334) target = $region12
    $region11: #{tpu_custom_call.1} parent=5 // pred_region
      %s338 = ssub.s32 %s18, 1
      // Predicated region
      $region13: #{tpu_custom_call.1} parent=11 // pred_check
        %p339 = pneg %p107
      $region14: #{tpu_custom_call.1} parent=11 // pred_check_branch
        %341 = sbr.rel (%p339) target = $region16
      $region15: #{tpu_custom_call.1} parent=11 // pred_region
        _
      $region16: #{tpu_custom_call.1} parent=11 // pred_fallthru
        _
      // Predicated region
      $region17: #{tpu_custom_call.1} parent=11 // pred_check
        %p342 = pneg %p128
      $region18: #{tpu_custom_call.1} parent=11 // pred_check_branch
        %344 = sbr.rel (%p342) target = $region20
      $region19: #{tpu_custom_call.1} parent=11 // pred_region
        _
      $region20: #{tpu_custom_call.1} parent=11 // pred_fallthru
        _
      // Predicated region
      $region21: #{tpu_custom_call.1} parent=11 // pred_check
        %p345 = pneg %p149
      $region22: #{tpu_custom_call.1} parent=11 // pred_check_branch
        %347 = sbr.rel (%p345) target = $region24
      $region23: #{tpu_custom_call.1} parent=11 // pred_region
        _
      $region24: #{tpu_custom_call.1} parent=11 // pred_fallthru
        _
      // Predicated region
      $region25: #{tpu_custom_call.1} parent=11 // pred_check
        %p348 = pneg %p170
      $region26: #{tpu_custom_call.1} parent=11 // pred_check_branch
        %350 = sbr.rel (%p348) target = $region28
      $region27: #{tpu_custom_call.1} parent=11 // pred_region
        _
      $region28: #{tpu_custom_call.1} parent=11 // pred_fallthru
        _
      // Predicated region
      $region29: #{tpu_custom_call.1} parent=11 // pred_check
        %p351 = pneg %p191
      $region30: #{tpu_custom_call.1} parent=11 // pred_check_branch
        %353 = sbr.rel (%p351) target = $region32
      $region31: #{tpu_custom_call.1} parent=11 // pred_region
        _
      $region32: #{tpu_custom_call.1} parent=11 // pred_fallthru
        _
      // Predicated region
      $region33: #{tpu_custom_call.1} parent=11 // pred_check
        %p354 = pneg %p212
      $region34: #{tpu_custom_call.1} parent=11 // pred_check_branch
        %356 = sbr.rel (%p354) target = $region36
      $region35: #{tpu_custom_call.1} parent=11 // pred_region
        _
      $region36: #{tpu_custom_call.1} parent=11 // pred_fallthru
        _
      // Predicated region
      $region37: #{tpu_custom_call.1} parent=11 // pred_check
        %p357 = pneg %p233
      $region38: #{tpu_custom_call.1} parent=11 // pred_check_branch
        %359 = sbr.rel (%p357) target = $region40
      $region39: #{tpu_custom_call.1} parent=11 // pred_region
        _
      $region40: #{tpu_custom_call.1} parent=11 // pred_fallthru
        _
      // Predicated region
      $region41: #{tpu_custom_call.1} parent=11 // pred_check
        %p360 = pneg %p254
      $region42: #{tpu_custom_call.1} parent=11 // pred_check_branch
        %362 = sbr.rel (%p360) target = $region44
      $region43: #{tpu_custom_call.1} parent=11 // pred_region
        _
      $region44: #{tpu_custom_call.1} parent=11 // pred_fallthru
        _
      // Predicated region
      $region45: #{tpu_custom_call.1} parent=11 // pred_check
        %p363 = pneg %p275
      $region46: #{tpu_custom_call.1} parent=11 // pred_check_branch
        %365 = sbr.rel (%p363) target = $region48
      $region47: #{tpu_custom_call.1} parent=11 // pred_region
        _
      $region48: #{tpu_custom_call.1} parent=11 // pred_fallthru
        _
      // Predicated region
      $region49: #{tpu_custom_call.1} parent=11 // pred_check
        %p366 = pneg %p296
      $region50: #{tpu_custom_call.1} parent=11 // pred_check_branch
        %368 = sbr.rel (%p366) target = $region52
      $region51: #{tpu_custom_call.1} parent=11 // pred_region
        _
      $region52: #{tpu_custom_call.1} parent=11 // pred_fallthru
        _
    $region12: #{tpu_custom_call.1} parent=5 // pred_fallthru
      _
    %p369 = scmp.lt.s32.totalorder %s18, 2
    // Predicated region
    $region53: #{tpu_custom_call.1} parent=5 // pred_check
      %p370 = pneg %p369
    $region54: #{tpu_custom_call.1} parent=5 // pred_check_branch
      %372 = sbr.rel (%p370) target = $region56
    $region55: #{tpu_custom_call.1} parent=5 // pred_region
      // Predicated region
      $region57: #{tpu_custom_call.1} parent=55 // pred_check
        %p373 = pneg %p52
      $region58: #{tpu_custom_call.1} parent=55 // pred_check_branch
        %375 = sbr.rel (%p373) target = $region60
      $region59: #{tpu_custom_call.1} parent=55 // pred_region
        %s376 = smul.u32 2, %s26
        %p377 = scmp.lt.s32.totalorder %s25, 1
        %s378 = scalar_select %p377, %s25, 1
        %p379 = scmp.lt.s32.totalorder %s376, 1
        %s380 = scalar_select %p379, %s376, 1
        %s381 = smul.addr %s378, 2
        %s382 = sadd.s32 %s380, %s381
        %s383 = smul.addr %s382, 2
        %s384 = scalar_lea.vmem %s0, %s383
        %s385 = smul.u32 2, %s26
      $region60: #{tpu_custom_call.1} parent=55 // pred_fallthru
        _
      // Predicated region
      $region61: #{tpu_custom_call.1} parent=55 // pred_check
        %p386 = pneg %p80
      $region62: #{tpu_custom_call.1} parent=55 // pred_check_branch
        %388 = sbr.rel (%p386) target = $region64
      $region63: #{tpu_custom_call.1} parent=55 // pred_region
        %s389 = smul.u32 2, %s26
        %p390 = scmp.lt.s32.totalorder %s25, 1
        %s391 = scalar_select %p390, %s25, 1
        %p392 = scmp.lt.s32.totalorder %s389, 1
        %s393 = scalar_select %p392, %s389, 1
        %s394 = smul.addr %s391, 2
        %s395 = sadd.s32 %s393, %s394
        %s396 = smul.addr %s395, 4
        %s397 = scalar_lea.vmem %s1, %s396
        %s398 = smul.u32 2, %s26
      $region64: #{tpu_custom_call.1} parent=55 // pred_fallthru
        _
    $region56: #{tpu_custom_call.1} parent=5 // pred_fallthru
      _
    %p399 = scmp.le.s32.totalorder 1, %s18
    %p400 = scmp.lt.s32.totalorder %s18, 3
    %p401 = pnand %p399, %p400
    %p402 = pneg %p401
    // Predicated region
    $region65: #{tpu_custom_call.1} parent=5 // pred_check
      _
    $region66: #{tpu_custom_call.1} parent=5 // pred_check_branch
      %404 = sbr.rel (%p401) target = $region68
    $region67: #{tpu_custom_call.1} parent=5 // pred_region
      %s405 = ssub.s32 %s18, 1
      %s406 = smul.u32 2, %s28
      %p407 = scmp.lt.s32.totalorder %s27, 1
      %s408 = scalar_select %p407, %s27, 1
      %p409 = scmp.lt.s32.totalorder %s406, 1
      %s410 = scalar_select %p409, %s406, 1
      %s411 = smul.addr %s408, 2
      %s412 = sadd.s32 %s410, %s411
      %s413 = smul.addr %s412, 2
      %s414 = scalar_lea.vmem %s0, %s413
      %p415 = pneg %p58
      %p416 = pneg %p55
      %s417 = smul.u32 2, %s28
      %p418 = scmp.lt.s32.totalorder %s27, 1
      %s419 = scalar_select %p418, %s27, 1
      %p420 = scmp.lt.s32.totalorder %s417, 1
      %s421 = scalar_select %p420, %s417, 1
      %s422 = smul.addr %s419, 2
      %s423 = sadd.s32 %s421, %s422
      %s424 = smul.addr %s423, 4
      %s425 = scalar_lea.vmem %s1, %s424
      %p426 = pneg %p86
      %p427 = pneg %p83
      %p428 = pneg %p107
      %p429 = pneg %p104
      %p430 = pneg %p128
      %p431 = pneg %p125
      %p432 = pneg %p149
      %p433 = pneg %p146
      %p434 = pneg %p170
      %p435 = pneg %p167
      %p436 = pneg %p191
      %p437 = pneg %p188
      %p438 = pneg %p212
      %p439 = pneg %p209
      %p440 = pneg %p233
      %p441 = pneg %p230
      %p442 = pneg %p254
      %p443 = pneg %p251
      %p444 = pneg %p275
      %p445 = pneg %p272
      %p446 = pneg %p296
      %p447 = pneg %p293
      %p448 = pneg %p324
      %p449 = pneg %p321
      %s450 = smul.u32 2, %s28
      %p451 = scmp.lt.s32.totalorder %s27, 1
      %s452 = scalar_select %p451, %s27, 1
      %p453 = scmp.lt.s32.totalorder %s450, 1
      %s454 = scalar_select %p453, %s450, 1
      %s455 = smul.addr %s452, 2
      %s456 = sadd.s32 %s454, %s455
      %s457 = smul.addr %s456, 4
      %s458 = scalar_lea.vmem %s12, %s457
      %s459 = smul.u32 2, %s28
      %p460 = scmp.lt.s32.totalorder %s27, 1
      %s461 = scalar_select %p460, %s27, 1
      %p462 = scmp.lt.s32.totalorder %s459, 1
      %s463 = scalar_select %p462, %s459, 1
      %s464 = smul.addr %s461, 2
      %s465 = sadd.s32 %s463, %s464
      %s466 = smul.addr %s465, 2
      %s467 = scalar_lea.vmem %s0, %s466
      %s468 = smul.u32 2, %s28
      %s469 = smul.u32 2, %s28
      %p470 = scmp.lt.s32.totalorder %s27, 1
      %s471 = scalar_select %p470, %s27, 1
      %p472 = scmp.lt.s32.totalorder %s469, 1
      %s473 = scalar_select %p472, %s469, 1
      %s474 = smul.addr %s471, 2
      %s475 = sadd.s32 %s473, %s474
      %s476 = smul.addr %s475, 4
      %s477 = scalar_lea.vmem %s1, %s476
      %s478 = smul.u32 2, %s28
      %s479 = smul.u32 2, %s28
      %p480 = scmp.lt.s32.totalorder %s27, 1
      %s481 = scalar_select %p480, %s27, 1
      %p482 = scmp.lt.s32.totalorder %s479, 1
      %s483 = scalar_select %p482, %s479, 1
      %s484 = smul.addr %s481, 2
      %s485 = sadd.s32 %s483, %s484
      %s486 = smul.addr %s485, 4
      %s487 = scalar_lea.vmem %s12, %s486
      %s488 = smul.u32 2, %s28
      %v490 = vld [vmem:[%s467] sm:$0xf]
      %v493 = vunpack.c.l.s4 1983009808
      %v494 = vunpack.c.0.s8 %v493
      %v495 = vlaneseq
      %v496 = vshrl.u32 %v495, 7
      %v497 = vsub.s32 %v494, %v496
      %v498 = vrot.slane %v490, %v497
      %v499 = vcombine.high %v498, %v498
      %v502 = vpack.c.bf16 %v498, %v498
      %v503 = vpack.c.bf16 %v499, %v499
      %v504 = vld [vmem:[%s477] sm:$0xff]
      %v506 = vcombine.high %v504, %v504
      %v508 = vpack.c.bf16 %v504, %v504
      %v509 = vpack.c.bf16 %v506, %v506
      %v510 = vld [vmem:[%s2] sm:$0xf]
      %v511 = vld [vmem:[%s2 + $0x4] sm:$0xf]
      %v512 = vld [vmem:[%s2 + $0x8] sm:$0xf]
      %v513 = vld [vmem:[%s2 + $0xc] sm:$0xf]
      %v514 = vld [vmem:[%s2 + $0x10] sm:$0xf]
      %v515 = vld [vmem:[%s2 + $0x14] sm:$0xf]
      %v516 = vld [vmem:[%s2 + $0x18] sm:$0xf]
      %v517 = vld [vmem:[%s2 + $0x1c] sm:$0xf]
      %v518 = vld [vmem:[%s2 + $0x20] sm:$0xf]
      %v519 = vld [vmem:[%s2 + $0x24] sm:$0xf]
      %v520 = vld [vmem:[%s2 + $0x28] sm:$0xf]
      %v521 = vld [vmem:[%s2 + $0x2c] sm:$0xf]
      %v534 = vunpack.c.l.b16 %v510
      %v535 = vunpack.c.l.b16 %v511
      %v536 = vunpack.c.l.b16 %v512
      %v537 = vunpack.c.l.b16 %v513
      %v538 = vunpack.c.l.b16 %v514
      %v539 = vunpack.c.l.b16 %v515
      %v540 = vunpack.c.l.b16 %v516
      %v541 = vunpack.c.l.b16 %v517
      %v542 = vunpack.c.l.b16 %v518
      %v543 = vunpack.c.l.b16 %v519
      %v544 = vunpack.c.l.b16 %v520
      %v545 = vunpack.c.l.b16 %v521
      %v546 = vpack.c.b16 %v535, %v534
      %v547 = vpack.c.b16 %v537, %v536
      %v548 = vpack.c.b16 %v539, %v538
      %v549 = vpack.c.b16 %v541, %v540
      %v550 = vpack.c.b16 %v543, %v542
      %v551 = vpack.c.b16 %v545, %v544
      %vm552 = vcmask 31744
      %v554 = vsel %vm552, %v546, 0
      %v557 = vsel %vm552, %v547, 0
      %v560 = vsel %vm552, %v548, 0
      %v563 = vsel %vm552, %v549, 0
      %v566 = vsel %vm552, %v550, 0
      %v569 = vsel %vm552, %v551, 0
      %vm571 = vcmask 1041408
      %v573 = vsel %vm571, %v508, 0
      %v576 = vsel %vm571, %v509, 0
      %578 = vmatprep.subr.bf16.mxu0 %v576
      %579 = vmatpush1.bf16.msra.mxu0 %v573
      %580 = vmatprep.subr.bf16.mxu0 0
      %581 = vmatpush1.bf16.msra.mxu0 0
      %582 = vmatprep.subr.bf16.mxu0 0
      %583 = vmatpush1.bf16.msra.mxu0 0
      %584 = vmatprep.subr.bf16.mxu0 0
      %585 = vmatpush1.bf16.msra.mxu0 0
      %586 = vmatprep.subr.bf16.mxu0 0
      %587 = vmatpush1.bf16.msra.mxu0 0
      %588 = vmatprep.subr.bf16.mxu0 0
      %589 = vmatpush1.bf16.msra.mxu0 0
      %590 = vmatprep.subr.bf16.mxu0 0
      %591 = vmatpush1.bf16.msra.mxu0 0
      %592 = vmatprep.subr.bf16.mxu0 0
      %593 = vmatpush1.bf16.msra.mxu0 0
      %594 = vmatprep.subr.bf16.mxu0 0
      %595 = vmatpush1.bf16.msra.mxu0 0
      %596 = vmatprep.subr.bf16.mxu0 0
      %597 = vmatpush1.bf16.msra.mxu0 0
      %598 = vmatprep.subr.bf16.mxu0 0
      %599 = vmatpush1.bf16.msra.mxu0 0
      %600 = vmatprep.subr.bf16.mxu0 0
      %601 = vmatpush1.bf16.msra.mxu0 0
      %602 = vmatprep.subr.bf16.mxu0 0
      %603 = vmatpush1.bf16.msra.mxu0 0
      %604 = vmatprep.subr.bf16.mxu0 0
      %605 = vmatpush1.bf16.msra.mxu0 0
      %606 = vmatprep.subr.bf16.mxu0 0
      %607 = vmatpush1.bf16.msra.mxu0 0
      %608 = vmatprep.subr.bf16.mxu0 0
      %609 = vmatpush1.bf16.msra.mxu0 0
      %610 = vmatprep.mubr.bf16.mxu0 0
      %611 = vmatmul.mubr.bf16.gmra.mrb[0].mxu0 %v554
      %v612 = vpop.f32.mrb[0].mxu0
      %v613 = vadd.f32 0.0, %v612
      %v614 = vpop.f32.mrb[0].mxu0
      %v615 = vadd.f32 0.0, %v614
      %v616 = vpop.f32.mrb[0].mxu0
      %v617 = vadd.f32 0.0, %v616
      %v618 = vpop.f32.mrb[0].mxu0
      %v619 = vadd.f32 0.0, %v618
      %620 = vmatprep.mubr.bf16.mxu0 0
      %621 = vmatmul.mubr.bf16.gmra.mrb[0].mxu0 %v557
      %v622 = vpop.f32.mrb[0].mxu0
      %v623 = vadd.f32 0.0, %v622
      %v624 = vpop.f32.mrb[0].mxu0
      %v625 = vadd.f32 0.0, %v624
      %v626 = vpop.f32.mrb[0].mxu0
      %v627 = vadd.f32 0.0, %v626
      %v628 = vpop.f32.mrb[0].mxu0
      %v629 = vadd.f32 0.0, %v628
      %630 = vmatprep.mubr.bf16.mxu0 0
      %631 = vmatmul.mubr.bf16.gmra.mrb[0].mxu0 %v560
      %v632 = vpop.f32.mrb[0].mxu0
      %v633 = vadd.f32 0.0, %v632
      %v634 = vpop.f32.mrb[0].mxu0
      %v635 = vadd.f32 0.0, %v634
      %v636 = vpop.f32.mrb[0].mxu0
      %v637 = vadd.f32 0.0, %v636
      %v638 = vpop.f32.mrb[0].mxu0
      %v639 = vadd.f32 0.0, %v638
      %640 = vmatprep.mubr.bf16.mxu0 0
      %641 = vmatmul.mubr.bf16.gmra.mrb[0].mxu0 %v563
      %v642 = vpop.f32.mrb[0].mxu0
      %v643 = vadd.f32 0.0, %v642
      %v644 = vpop.f32.mrb[0].mxu0
      %v645 = vadd.f32 0.0, %v644
      %v646 = vpop.f32.mrb[0].mxu0
      %v647 = vadd.f32 0.0, %v646
      %v648 = vpop.f32.mrb[0].mxu0
      %v649 = vadd.f32 0.0, %v648
      %650 = vmatprep.mubr.bf16.mxu0 0
      %651 = vmatmul.mubr.bf16.gmra.mrb[0].mxu0 %v566
      %v652 = vpop.f32.mrb[0].mxu0
      %v653 = vadd.f32 0.0, %v652
      %v654 = vpop.f32.mrb[0].mxu0
      %v655 = vadd.f32 0.0, %v654
      %v656 = vpop.f32.mrb[0].mxu0
      %v657 = vadd.f32 0.0, %v656
      %v658 = vpop.f32.mrb[0].mxu0
      %v659 = vadd.f32 0.0, %v658
      %660 = vmatprep.mubr.bf16.mxu0 0
      %661 = vmatmul.mubr.bf16.gmra.mrb[0].mxu0 %v569
      %v662 = vpop.f32.mrb[0].mxu0
      %v663 = vadd.f32 0.0, %v662
      %v664 = vpop.f32.mrb[0].mxu0
      %v665 = vadd.f32 0.0, %v664
      %v666 = vpop.f32.mrb[0].mxu0
      %v667 = vadd.f32 0.0, %v666
      %v668 = vpop.f32.mrb[0].mxu0
      %v669 = vadd.f32 0.0, %v668
      %670 = vdwg.mxu0
      %671 = vst [vmem:[#allocation2] sm:$0xff] %v613
      %672 = vst [vmem:[#allocation2 + $0x8] sm:$0xff] %v615
      %673 = vst [vmem:[#allocation2 + $0x10] sm:$0xff] %v617
      %674 = vst [vmem:[#allocation2 + $0x18] sm:$0xff] %v619
      %675 = vst [vmem:[#allocation2 + $0x20] sm:$0xff] %v623
      %676 = vst [vmem:[#allocation2 + $0x28] sm:$0xff] %v625
      %677 = vst [vmem:[#allocation2 + $0x30] sm:$0xff] %v627
      %678 = vst [vmem:[#allocation2 + $0x38] sm:$0xff] %v629
      %679 = vst [vmem:[#allocation2 + $0x40] sm:$0xff] %v633
      %680 = vst [vmem:[#allocation2 + $0x48] sm:$0xff] %v635
      %681 = vst [vmem:[#allocation2 + $0x50] sm:$0xff] %v637
      %682 = vst [vmem:[#allocation2 + $0x58] sm:$0xff] %v639
      %683 = vst [vmem:[#allocation2 + $0x60] sm:$0xff] %v643
      %684 = vst [vmem:[#allocation2 + $0x68] sm:$0xff] %v645
      %685 = vst [vmem:[#allocation2 + $0x70] sm:$0xff] %v647
      %686 = vst [vmem:[#allocation2 + $0x78] sm:$0xff] %v649
      %687 = vst [vmem:[#allocation2 + $0x80] sm:$0xff] %v653
      %688 = vst [vmem:[#allocation2 + $0x88] sm:$0xff] %v655
      %689 = vst [vmem:[#allocation2 + $0x90] sm:$0xff] %v657
      %690 = vst [vmem:[#allocation2 + $0x98] sm:$0xff] %v659
      %691 = vst [vmem:[#allocation2 + $0xa0] sm:$0xff] %v663
      %692 = vst [vmem:[#allocation2 + $0xa8] sm:$0xff] %v665
      %693 = vst [vmem:[#allocation2 + $0xb0] sm:$0xff] %v667
      %694 = vst [vmem:[#allocation2 + $0xb8] sm:$0xff] %v669
      %v695 = vld [vmem:[#allocation2] sm:$0xff]
      %v696 = vld [vmem:[#allocation2 + $0x8] sm:$0xff]
      %v697 = vld [vmem:[#allocation2 + $0x10] sm:$0xff]
      %v698 = vld [vmem:[#allocation2 + $0x18] sm:$0xff]
      %v699 = vld [vmem:[#allocation2 + $0x20] sm:$0xff]
      %v700 = vld [vmem:[#allocation2 + $0x28] sm:$0xff]
      %v701 = vld [vmem:[#allocation2 + $0x30] sm:$0xff]
      %v702 = vld [vmem:[#allocation2 + $0x38] sm:$0xff]
      %v703 = vld [vmem:[%s3] sm:$0xff]
      %v704 = vld [vmem:[%s3 + $0x8] sm:$0xff]
      %v705 = vld [vmem:[%s3 + $0x10] sm:$0xff]
      %v706 = vld [vmem:[%s3 + $0x18] sm:$0xff]
      %708 = vset.pattern.permute.xlu0 0
      %709 = vperm.xlu0 %708, %v703
      %v710 = vpop.permute.xlu0 %709
      %713 = vset.pattern.permute.xlu0 0
      %714 = vperm.xlu0 %713, %v704
      %v715 = vpop.permute.xlu0 %714
      %718 = vset.pattern.permute.xlu0 0
      %719 = vperm.xlu0 %718, %v705
      %v720 = vpop.permute.xlu0 %719
      %723 = vset.pattern.permute.xlu0 0
      %724 = vperm.xlu0 %723, %v706
      %v725 = vpop.permute.xlu0 %724
      %v727 = vadd.f32 %v695, %v710
      %v728 = vadd.f32 %v696, %v710
      %v729 = vadd.f32 %v697, %v715
      %v730 = vadd.f32 %v698, %v715
      %v731 = vadd.f32 %v699, %v720
      %v732 = vadd.f32 %v700, %v720
      %v733 = vadd.f32 %v701, %v725
      %v734 = vadd.f32 %v702, %v725
      %v735 = vmax.f32 %v727, 0.0
      %v736 = vmax.f32 %v728, 0.0
      %v737 = vmax.f32 %v729, 0.0
      %v738 = vmax.f32 %v730, 0.0
      %v739 = vmax.f32 %v731, 0.0
      %v740 = vmax.f32 %v732, 0.0
      %v741 = vmax.f32 %v733, 0.0
      %v742 = vmax.f32 %v734, 0.0
      %v743 = vld [vmem:[%s4] sm:$0xf]
      %v744 = vld [vmem:[%s4 + $0x4] sm:$0xf]
      %v745 = vld [vmem:[%s4 + $0x8] sm:$0xf]
      %v746 = vld [vmem:[%s4 + $0xc] sm:$0xf]
      %v747 = vld [vmem:[%s5] sm:$0xff]
      %v748 = vld [vmem:[%s5 + $0x8] sm:$0xff]
      %v749 = vld [vmem:[%s5 + $0x10] sm:$0xff]
      %v750 = vld [vmem:[%s5 + $0x18] sm:$0xff]
      %752 = vset.pattern.permute.xlu0 0
      %753 = vperm.xlu0 %752, %v747
      %v754 = vpop.permute.xlu0 %753
      %757 = vset.pattern.permute.xlu0 0
      %758 = vperm.xlu0 %757, %v748
      %v759 = vpop.permute.xlu0 %758
      %762 = vset.pattern.permute.xlu0 0
      %763 = vperm.xlu0 %762, %v749
      %v764 = vpop.permute.xlu0 %763
      %767 = vset.pattern.permute.xlu0 0
      %768 = vperm.xlu0 %767, %v750
      %v769 = vpop.permute.xlu0 %768
      %v775 = vunpack.c.l.b16 %v743
      %v776 = vunpack.c.l.b16 %v744
      %v777 = vunpack.c.l.b16 %v745
      %v778 = vunpack.c.l.b16 %v746
      %v779 = vpack.c.b16 %v776, %v775
      %v780 = vpack.c.b16 %v778, %v777
      %vm781 = vcmask 15360
      %v783 = vsel %vm781, %v779, 0
      %v786 = vsel %vm781, %v780, 0
      %vm788 = vcmask 1040384
      %v790 = vsel %vm788, %v502, 0
      %v793 = vsel %vm788, %v503, 0
      %795 = vmatprep.subr.bf16.mxu0 %v793
      %796 = vmatpush1.bf16.msra.mxu0 %v790
      %797 = vmatprep.subr.bf16.mxu0 0
      %798 = vmatpush1.bf16.msra.mxu0 0
      %799 = vmatprep.subr.bf16.mxu0 0
      %800 = vmatpush1.bf16.msra.mxu0 0
      %801 = vmatprep.subr.bf16.mxu0 0
      %802 = vmatpush1.bf16.msra.mxu0 0
      %803 = vmatprep.subr.bf16.mxu0 0
      %804 = vmatpush1.bf16.msra.mxu0 0
      %805 = vmatprep.subr.bf16.mxu0 0
      %806 = vmatpush1.bf16.msra.mxu0 0
      %807 = vmatprep.subr.bf16.mxu0 0
      %808 = vmatpush1.bf16.msra.mxu0 0
      %809 = vmatprep.subr.bf16.mxu0 0
      %810 = vmatpush1.bf16.msra.mxu0 0
      %811 = vmatprep.subr.bf16.mxu0 0
      %812 = vmatpush1.bf16.msra.mxu0 0
      %813 = vmatprep.subr.bf16.mxu0 0
      %814 = vmatpush1.bf16.msra.mxu0 0
      %815 = vmatprep.subr.bf16.mxu0 0
      %816 = vmatpush1.bf16.msra.mxu0 0
      %817 = vmatprep.subr.bf16.mxu0 0
      %818 = vmatpush1.bf16.msra.mxu0 0
      %819 = vmatprep.subr.bf16.mxu0 0
      %820 = vmatpush1.bf16.msra.mxu0 0
      %821 = vmatprep.subr.bf16.mxu0 0
      %822 = vmatpush1.bf16.msra.mxu0 0
      %823 = vmatprep.subr.bf16.mxu0 0
      %824 = vmatpush1.bf16.msra.mxu0 0
      %825 = vmatprep.subr.bf16.mxu0 0
      %826 = vmatpush1.bf16.msra.mxu0 0
      %827 = vmatprep.mubr.bf16.mxu0 0
      %828 = vmatmul.mubr.bf16.gmra.mrb[0].mxu0 %v783
      %v829 = vpop.f32.mrb[0].mxu0
      %v830 = vadd.f32 %v754, %v829
      %v831 = vpop.f32.mrb[0].mxu0
      %v832 = vadd.f32 %v754, %v831
      %v833 = vpop.f32.mrb[0].mxu0
      %v834 = vadd.f32 %v759, %v833
      %v835 = vpop.f32.mrb[0].mxu0
      %v836 = vadd.f32 %v759, %v835
      %837 = vmatprep.mubr.bf16.mxu0 0
      %838 = vmatmul.mubr.bf16.gmra.mrb[0].mxu0 %v786
      %v839 = vpop.f32.mrb[0].mxu0
      %v840 = vadd.f32 %v764, %v839
      %v841 = vpop.f32.mrb[0].mxu0
      %v842 = vadd.f32 %v764, %v841
      %v843 = vpop.f32.mrb[0].mxu0
      %v844 = vadd.f32 %v769, %v843
      %v845 = vpop.f32.mrb[0].mxu0
      %v846 = vadd.f32 %v769, %v845
      %847 = vdwg.mxu0
      %v848 = vadd.f32 %v830, %v735
      %v849 = vadd.f32 %v832, %v736
      %v850 = vadd.f32 %v834, %v737
      %v851 = vadd.f32 %v836, %v738
      %v852 = vadd.f32 %v840, %v739
      %v853 = vadd.f32 %v842, %v740
      %v854 = vadd.f32 %v844, %v741
      %v855 = vadd.f32 %v846, %v742
      %v856 = vand.u32 2147483647, %v848
      %vm857 = vcmp.le.f32.partialorder %v856, 0.7853982
      %vm858 = vcmp.lt.s32.totalorder %v848, 0
      %v859 = vand.u32 %v848, 2139095040
      %v860 = vshrl.u32 %v859, 23
      %v861 = vsub.s32 %v860, 127
      %v862 = vand.u32 2147483647, %v848
      %v863 = vand.u32 %v862, 8388607
      %v864 = vor.u32 %v863, 8388608
      %v865 = vsub.s32 0, %v864
      %v866 = vadd.s32 %v861, 1
      %vm867 = vcmp.gt.s32.totalorder %v866, 0
      %v868 = vsel %vm867, %v866, 0
      %v869 = vshrl.u32 %v868, 5
      %v870 = vand.u32 %v868, 31
      %v871 = vsub.s32 32, %v870
      %v872 = vshrl.u32 683565275, %v871
      %v873 = vshll.u32 683565275, %v870
      %v874 = vshrl.u32 2475754826, %v871
      %v875 = vor.u32 %v873, %v874
      %v876 = vshll.u32 2475754826, %v870
      %v877 = vshrl.u32 2131351028, %v871
      %v878 = vor.u32 %v876, %v877
      %v879 = vshll.u32 2131351028, %v870
      %v880 = vshrl.u32 2102212464, %v871
      %v881 = vor.u32 %v879, %v880
      %v882 = vshll.u32 2102212464, %v870
      %v883 = vshrl.u32 920167782, %v871
      %v884 = vor.u32 %v882, %v883
      %v885 = vshll.u32 920167782, %v870
      %v886 = vshrl.u32 1326507024, %v871
      %v887 = vor.u32 %v885, %v886
      %vm888 = vcmp.lt.s32.totalorder %v869, 1
      %vm889 = vcmp.lt.s32.totalorder %v869, 2
      %vm890 = vcmp.lt.s32.totalorder %v869, 3
      %vm891 = vcmp.lt.s32.totalorder %v869, 4
      %v892 = vsel %vm888, %v872, %v875
      %v893 = vsel %vm891, %v881, 2102212464
      %v894 = vsel %vm890, %v878, %v893
      %v895 = vsel %vm889, %v892, %v894
      %v896 = vsel %vm888, %v875, %v878
      %v897 = vsel %vm891, %v884, 920167782
      %v898 = vsel %vm890, %v881, %v897
      %v899 = vsel %vm889, %v896, %v898
      %v900 = vsel %vm888, %v878, %v881
      %v901 = vsel %vm891, %v887, 1326507024
      %v902 = vsel %vm890, %v884, %v901
      %v903 = vsel %vm889, %v900, %v902
      %v904 = vshll.u32 %v864, 8
      %v905 = vmul.u32.u64.compose %v904, %v903
      %v906 = vextract.low.u32 %v905
      %v907 = vextract.high.u32 %v905
      %v908 = vmul.u32.u64.compose %v904, %v899
      %v909 = vextract.low.u32 %v908
      %v910 = vextract.high.u32 %v908
      %v911 = vmul.u32 %v904, %v895
      %v912 = vadd.s32 %v907, %v909
      %vm913 = vc.u32 %v907, %v909
      %v914 = vadd.s32 %v910, 1
      %v915 = vsel %vm913, %v914, %v910
      %v916 = vadd.s32 %v911, %v915
      %v917 = vadd.s32 %v916, 536870912
      %v918 = vshrl.u32 %v917, 30
      %v919 = vshll.u32 %v918, 30
      %v920 = vsub.s32 %v916, %v919
      %vm921 = vcmp.lt.s32.totalorder %v920, 0
      %v922 = vsub.s32 0, %v920
      %v923 = vsel %vm921, %v922, %v920
      %v924 = vclz %v923
      %v925 = vsub.s32 %v924, 2
      %vm926 = vcmp.gt.s32.totalorder 0, %v925
      %v927 = vsel %vm926, 0, %v925
      %v928 = vsub.s32 32, %v927
      %v929 = vshll.u32 %v920, %v927
      %v930 = vshrl.u32 %v912, %v928
      %v931 = vor.u32 %v929, %v930
      %v932 = vsub.s32 4294967266, %v927
      %v933 = vadd.s32 %v932, 127
      %v934 = vshll.u32 %v933, 23
      %v935 = vor.u32 4788187, %v934
      %v936 = vand.u32 2147483647, %v935
      %v938 = vcvt.s32.f32 %v931
      %v939 = vmul.f32 %v938, %v936
      %v940 = vxor.u32 %v939, 2147483648
      %v941 = vsel %vm858, %v940, %v939
      %v942 = vsub.s32 4, %v918
      %v943 = vsel %vm858, %v942, %v918
      %v944 = vsel %vm857, %v848, %v941
      %v945 = vsel %vm857, 0, %v943
      %v946 = vcosq.f32.pop %v944
      %v947 = vsinq.f32.pop %v944
      %vm948 = vweird.f32 %v848
      %v949 = vadd.s32 %v945, 3
      %v950 = vand.u32 %v949, 3
      %vm951 = vcmp.lt.s32.totalorder %v950, 2
      %vm952 = vcmp.eq.s32.totalorder %v950, 0
      %v953 = vxor.u32 %v947, 2147483648
      %v954 = vsel %vm952, %v946, %v953
      %vm955 = vcmp.eq.s32.totalorder %v950, 2
      %v956 = vxor.u32 %v946, 2147483648
      %v957 = vsel %vm955, %v956, %v947
      %v958 = vsel %vm951, %v954, %v957
      %v959 = vsel %vm948, nan, %v958
      %v960 = vand.u32 2147483647, %v849
      %vm961 = vcmp.le.f32.partialorder %v960, 0.7853982
      %vm962 = vcmp.lt.s32.totalorder %v849, 0
      %v963 = vand.u32 %v849, 2139095040
      %v964 = vshrl.u32 %v963, 23
      %v965 = vsub.s32 %v964, 127
      %v966 = vand.u32 2147483647, %v849
      %v967 = vand.u32 %v966, 8388607
      %v968 = vor.u32 %v967, 8388608
      %v969 = vsub.s32 0, %v968
      %v970 = vadd.s32 %v965, 1
      %vm971 = vcmp.gt.s32.totalorder %v970, 0
      %v972 = vsel %vm971, %v970, 0
      %v973 = vshrl.u32 %v972, 5
      %v974 = vand.u32 %v972, 31
      %v975 = vsub.s32 32, %v974
      %v976 = vshrl.u32 683565275, %v975
      %v977 = vshll.u32 683565275, %v974
      %v978 = vshrl.u32 2475754826, %v975
      %v979 = vor.u32 %v977, %v978
      %v980 = vshll.u32 2475754826, %v974
      %v981 = vshrl.u32 2131351028, %v975
      %v982 = vor.u32 %v980, %v981
      %v983 = vshll.u32 2131351028, %v974
      %v984 = vshrl.u32 2102212464, %v975
      %v985 = vor.u32 %v983, %v984
      %v986 = vshll.u32 2102212464, %v974
      %v987 = vshrl.u32 920167782, %v975
      %v988 = vor.u32 %v986, %v987
      %v989 = vshll.u32 920167782, %v974
      %v990 = vshrl.u32 1326507024, %v975
      %v991 = vor.u32 %v989, %v990
      %vm992 = vcmp.lt.s32.totalorder %v973, 1
      %vm993 = vcmp.lt.s32.totalorder %v973, 2
      %vm994 = vcmp.lt.s32.totalorder %v973, 3
      %vm995 = vcmp.lt.s32.totalorder %v973, 4
      %v996 = vsel %vm992, %v976, %v979
      %v997 = vsel %vm995, %v985, 2102212464
      %v998 = vsel %vm994, %v982, %v997
      %v999 = vsel %vm993, %v996, %v998
      %v1000 = vsel %vm992, %v979, %v982
      %v1001 = vsel %vm995, %v988, 920167782
      %v1002 = vsel %vm994, %v985, %v1001
      %v1003 = vsel %vm993, %v1000, %v1002
      %v1004 = vsel %vm992, %v982, %v985
      %v1005 = vsel %vm995, %v991, 1326507024
      %v1006 = vsel %vm994, %v988, %v1005
      %v1007 = vsel %vm993, %v1004, %v1006
      %v1008 = vshll.u32 %v968, 8
      %v1009 = vmul.u32.u64.compose %v1008, %v1007
      %v1010 = vextract.low.u32 %v1009
      %v1011 = vextract.high.u32 %v1009
      %v1012 = vmul.u32.u64.compose %v1008, %v1003
      %v1013 = vextract.low.u32 %v1012
      %v1014 = vextract.high.u32 %v1012
      %v1015 = vmul.u32 %v1008, %v999
      %v1016 = vadd.s32 %v1011, %v1013
      %vm1017 = vc.u32 %v1011, %v1013
      %v1018 = vadd.s32 %v1014, 1
      %v1019 = vsel %vm1017, %v1018, %v1014
      %v1020 = vadd.s32 %v1015, %v1019
      %v1021 = vadd.s32 %v1020, 536870912
      %v1022 = vshrl.u32 %v1021, 30
      %v1023 = vshll.u32 %v1022, 30
      %v1024 = vsub.s32 %v1020, %v1023
      %vm1025 = vcmp.lt.s32.totalorder %v1024, 0
      %v1026 = vsub.s32 0, %v1024
      %v1027 = vsel %vm1025, %v1026, %v1024
      %v1028 = vclz %v1027
      %v1029 = vsub.s32 %v1028, 2
      %vm1030 = vcmp.gt.s32.totalorder 0, %v1029
      %v1031 = vsel %vm1030, 0, %v1029
      %v1032 = vsub.s32 32, %v1031
      %v1033 = vshll.u32 %v1024, %v1031
      %v1034 = vshrl.u32 %v1016, %v1032
      %v1035 = vor.u32 %v1033, %v1034
      %v1036 = vsub.s32 4294967266, %v1031
      %v1037 = vadd.s32 %v1036, 127
      %v1038 = vshll.u32 %v1037, 23
      %v1039 = vor.u32 4788187, %v1038
      %v1040 = vand.u32 2147483647, %v1039
      %v1042 = vcvt.s32.f32 %v1035
      %v1043 = vmul.f32 %v1042, %v1040
      %v1044 = vxor.u32 %v1043, 2147483648
      %v1045 = vsel %vm962, %v1044, %v1043
      %v1046 = vsub.s32 4, %v1022
      %v1047 = vsel %vm962, %v1046, %v1022
      %v1048 = vsel %vm961, %v849, %v1045
      %v1049 = vsel %vm961, 0, %v1047
      %v1050 = vcosq.f32.pop %v1048
      %v1051 = vsinq.f32.pop %v1048
      %vm1052 = vweird.f32 %v849
      %v1053 = vadd.s32 %v1049, 3
      %v1054 = vand.u32 %v1053, 3
      %vm1055 = vcmp.lt.s32.totalorder %v1054, 2
      %vm1056 = vcmp.eq.s32.totalorder %v1054, 0
      %v1057 = vxor.u32 %v1051, 2147483648
      %v1058 = vsel %vm1056, %v1050, %v1057
      %vm1059 = vcmp.eq.s32.totalorder %v1054, 2
      %v1060 = vxor.u32 %v1050, 2147483648
      %v1061 = vsel %vm1059, %v1060, %v1051
      %v1062 = vsel %vm1055, %v1058, %v1061
      %v1063 = vsel %vm1052, nan, %v1062
      %v1064 = vand.u32 2147483647, %v850
      %vm1065 = vcmp.le.f32.partialorder %v1064, 0.7853982
      %vm1066 = vcmp.lt.s32.totalorder %v850, 0
      %v1067 = vand.u32 %v850, 2139095040
      %v1068 = vshrl.u32 %v1067, 23
      %v1069 = vsub.s32 %v1068, 127
      %v1070 = vand.u32 2147483647, %v850
      %v1071 = vand.u32 %v1070, 8388607
      %v1072 = vor.u32 %v1071, 8388608
      %v1073 = vsub.s32 0, %v1072
      %v1074 = vadd.s32 %v1069, 1
      %vm1075 = vcmp.gt.s32.totalorder %v1074, 0
      %v1076 = vsel %vm1075, %v1074, 0
      %v1077 = vshrl.u32 %v1076, 5
      %v1078 = vand.u32 %v1076, 31
      %v1079 = vsub.s32 32, %v1078
      %v1080 = vshrl.u32 683565275, %v1079
      %v1081 = vshll.u32 683565275, %v1078
      %v1082 = vshrl.u32 2475754826, %v1079
      %v1083 = vor.u32 %v1081, %v1082
      %v1084 = vshll.u32 2475754826, %v1078
      %v1085 = vshrl.u32 2131351028, %v1079
      %v1086 = vor.u32 %v1084, %v1085
      %v1087 = vshll.u32 2131351028, %v1078
      %v1088 = vshrl.u32 2102212464, %v1079
      %v1089 = vor.u32 %v1087, %v1088
      %v1090 = vshll.u32 2102212464, %v1078
      %v1091 = vshrl.u32 920167782, %v1079
      %v1092 = vor.u32 %v1090, %v1091
      %v1093 = vshll.u32 920167782, %v1078
      %v1094 = vshrl.u32 1326507024, %v1079
      %v1095 = vor.u32 %v1093, %v1094
      %vm1096 = vcmp.lt.s32.totalorder %v1077, 1
      %vm1097 = vcmp.lt.s32.totalorder %v1077, 2
      %vm1098 = vcmp.lt.s32.totalorder %v1077, 3
      %vm1099 = vcmp.lt.s32.totalorder %v1077, 4
      %v1100 = vsel %vm1096, %v1080, %v1083
      %v1101 = vsel %vm1099, %v1089, 2102212464
      %v1102 = vsel %vm1098, %v1086, %v1101
      %v1103 = vsel %vm1097, %v1100, %v1102
      %v1104 = vsel %vm1096, %v1083, %v1086
      %v1105 = vsel %vm1099, %v1092, 920167782
      %v1106 = vsel %vm1098, %v1089, %v1105
      %v1107 = vsel %vm1097, %v1104, %v1106
      %v1108 = vsel %vm1096, %v1086, %v1089
      %v1109 = vsel %vm1099, %v1095, 1326507024
      %v1110 = vsel %vm1098, %v1092, %v1109
      %v1111 = vsel %vm1097, %v1108, %v1110
      %v1112 = vshll.u32 %v1072, 8
      %v1113 = vmul.u32.u64.compose %v1112, %v1111
      %v1114 = vextract.low.u32 %v1113
      %v1115 = vextract.high.u32 %v1113
      %v1116 = vmul.u32.u64.compose %v1112, %v1107
      %v1117 = vextract.low.u32 %v1116
      %v1118 = vextract.high.u32 %v1116
      %v1119 = vmul.u32 %v1112, %v1103
      %v1120 = vadd.s32 %v1115, %v1117
      %vm1121 = vc.u32 %v1115, %v1117
      %v1122 = vadd.s32 %v1118, 1
      %v1123 = vsel %vm1121, %v1122, %v1118
      %v1124 = vadd.s32 %v1119, %v1123
      %v1125 = vadd.s32 %v1124, 536870912
      %v1126 = vshrl.u32 %v1125, 30
      %v1127 = vshll.u32 %v1126, 30
      %v1128 = vsub.s32 %v1124, %v1127
      %vm1129 = vcmp.lt.s32.totalorder %v1128, 0
      %v1130 = vsub.s32 0, %v1128
      %v1131 = vsel %vm1129, %v1130, %v1128
      %v1132 = vclz %v1131
      %v1133 = vsub.s32 %v1132, 2
      %vm1134 = vcmp.gt.s32.totalorder 0, %v1133
      %v1135 = vsel %vm1134, 0, %v1133
      %v1136 = vsub.s32 32, %v1135
      %v1137 = vshll.u32 %v1128, %v1135
      %v1138 = vshrl.u32 %v1120, %v1136
      %v1139 = vor.u32 %v1137, %v1138
      %v1140 = vsub.s32 4294967266, %v1135
      %v1141 = vadd.s32 %v1140, 127
      %v1142 = vshll.u32 %v1141, 23
      %v1143 = vor.u32 4788187, %v1142
      %v1144 = vand.u32 2147483647, %v1143
      %v1146 = vcvt.s32.f32 %v1139
      %v1147 = vmul.f32 %v1146, %v1144
      %v1148 = vxor.u32 %v1147, 2147483648
      %v1149 = vsel %vm1066, %v1148, %v1147
      %v1150 = vsub.s32 4, %v1126
      %v1151 = vsel %vm1066, %v1150, %v1126
      %v1152 = vsel %vm1065, %v850, %v1149
      %v1153 = vsel %vm1065, 0, %v1151
      %v1154 = vcosq.f32.pop %v1152
      %v1155 = vsinq.f32.pop %v1152
      %vm1156 = vweird.f32 %v850
      %v1157 = vadd.s32 %v1153, 3
      %v1158 = vand.u32 %v1157, 3
      %vm1159 = vcmp.lt.s32.totalorder %v1158, 2
      %vm1160 = vcmp.eq.s32.totalorder %v1158, 0
      %v1161 = vxor.u32 %v1155, 2147483648
      %v1162 = vsel %vm1160, %v1154, %v1161
      %vm1163 = vcmp.eq.s32.totalorder %v1158, 2
      %v1164 = vxor.u32 %v1154, 2147483648
      %v1165 = vsel %vm1163, %v1164, %v1155
      %v1166 = vsel %vm1159, %v1162, %v1165
      %v1167 = vsel %vm1156, nan, %v1166
      %v1168 = vand.u32 2147483647, %v851
      %vm1169 = vcmp.le.f32.partialorder %v1168, 0.7853982
      %vm1170 = vcmp.lt.s32.totalorder %v851, 0
      %v1171 = vand.u32 %v851, 2139095040
      %v1172 = vshrl.u32 %v1171, 23
      %v1173 = vsub.s32 %v1172, 127
      %v1174 = vand.u32 2147483647, %v851
      %v1175 = vand.u32 %v1174, 8388607
      %v1176 = vor.u32 %v1175, 8388608
      %v1177 = vsub.s32 0, %v1176
      %v1178 = vadd.s32 %v1173, 1
      %vm1179 = vcmp.gt.s32.totalorder %v1178, 0
      %v1180 = vsel %vm1179, %v1178, 0
      %v1181 = vshrl.u32 %v1180, 5
      %v1182 = vand.u32 %v1180, 31
      %v1183 = vsub.s32 32, %v1182
      %v1184 = vshrl.u32 683565275, %v1183
      %v1185 = vshll.u32 683565275, %v1182
      %v1186 = vshrl.u32 2475754826, %v1183
      %v1187 = vor.u32 %v1185, %v1186
      %v1188 = vshll.u32 2475754826, %v1182
      %v1189 = vshrl.u32 2131351028, %v1183
      %v1190 = vor.u32 %v1188, %v1189
      %v1191 = vshll.u32 2131351028, %v1182
      %v1192 = vshrl.u32 2102212464, %v1183
      %v1193 = vor.u32 %v1191, %v1192
      %v1194 = vshll.u32 2102212464, %v1182
      %v1195 = vshrl.u32 920167782, %v1183
      %v1196 = vor.u32 %v1194, %v1195
      %v1197 = vshll.u32 920167782, %v1182
      %v1198 = vshrl.u32 1326507024, %v1183
      %v1199 = vor.u32 %v1197, %v1198
      %vm1200 = vcmp.lt.s32.totalorder %v1181, 1
      %vm1201 = vcmp.lt.s32.totalorder %v1181, 2
      %vm1202 = vcmp.lt.s32.totalorder %v1181, 3
      %vm1203 = vcmp.lt.s32.totalorder %v1181, 4
      %v1204 = vsel %vm1200, %v1184, %v1187
      %v1205 = vsel %vm1203, %v1193, 2102212464
      %v1206 = vsel %vm1202, %v1190, %v1205
      %v1207 = vsel %vm1201, %v1204, %v1206
      %v1208 = vsel %vm1200, %v1187, %v1190
      %v1209 = vsel %vm1203, %v1196, 920167782
      %v1210 = vsel %vm1202, %v1193, %v1209
      %v1211 = vsel %vm1201, %v1208, %v1210
      %v1212 = vsel %vm1200, %v1190, %v1193
      %v1213 = vsel %vm1203, %v1199, 1326507024
      %v1214 = vsel %vm1202, %v1196, %v1213
      %v1215 = vsel %vm1201, %v1212, %v1214
      %v1216 = vshll.u32 %v1176, 8
      %v1217 = vmul.u32.u64.compose %v1216, %v1215
      %v1218 = vextract.low.u32 %v1217
      %v1219 = vextract.high.u32 %v1217
      %v1220 = vmul.u32.u64.compose %v1216, %v1211
      %v1221 = vextract.low.u32 %v1220
      %v1222 = vextract.high.u32 %v1220
      %v1223 = vmul.u32 %v1216, %v1207
      %v1224 = vadd.s32 %v1219, %v1221
      %vm1225 = vc.u32 %v1219, %v1221
      %v1226 = vadd.s32 %v1222, 1
      %v1227 = vsel %vm1225, %v1226, %v1222
      %v1228 = vadd.s32 %v1223, %v1227
      %v1229 = vadd.s32 %v1228, 536870912
      %v1230 = vshrl.u32 %v1229, 30
      %v1231 = vshll.u32 %v1230, 30
      %v1232 = vsub.s32 %v1228, %v1231
      %vm1233 = vcmp.lt.s32.totalorder %v1232, 0
      %v1234 = vsub.s32 0, %v1232
      %v1235 = vsel %vm1233, %v1234, %v1232
      %v1236 = vclz %v1235
      %v1237 = vsub.s32 %v1236, 2
      %vm1238 = vcmp.gt.s32.totalorder 0, %v1237
      %v1239 = vsel %vm1238, 0, %v1237
      %v1240 = vsub.s32 32, %v1239
      %v1241 = vshll.u32 %v1232, %v1239
      %v1242 = vshrl.u32 %v1224, %v1240
      %v1243 = vor.u32 %v1241, %v1242
      %v1244 = vsub.s32 4294967266, %v1239
      %v1245 = vadd.s32 %v1244, 127
      %v1246 = vshll.u32 %v1245, 23
      %v1247 = vor.u32 4788187, %v1246
      %v1248 = vand.u32 2147483647, %v1247
      %v1250 = vcvt.s32.f32 %v1243
      %v1251 = vmul.f32 %v1250, %v1248
      %v1252 = vxor.u32 %v1251, 2147483648
      %v1253 = vsel %vm1170, %v1252, %v1251
      %v1254 = vsub.s32 4, %v1230
      %v1255 = vsel %vm1170, %v1254, %v1230
      %v1256 = vsel %vm1169, %v851, %v1253
      %v1257 = vsel %vm1169, 0, %v1255
      %v1258 = vcosq.f32.pop %v1256
      %v1259 = vsinq.f32.pop %v1256
      %vm1260 = vweird.f32 %v851
      %v1261 = vadd.s32 %v1257, 3
      %v1262 = vand.u32 %v1261, 3
      %vm1263 = vcmp.lt.s32.totalorder %v1262, 2
      %vm1264 = vcmp.eq.s32.totalorder %v1262, 0
      %v1265 = vxor.u32 %v1259, 2147483648
      %v1266 = vsel %vm1264, %v1258, %v1265
      %vm1267 = vcmp.eq.s32.totalorder %v1262, 2
      %v1268 = vxor.u32 %v1258, 2147483648
      %v1269 = vsel %vm1267, %v1268, %v1259
      %v1270 = vsel %vm1263, %v1266, %v1269
      %v1271 = vsel %vm1260, nan, %v1270
      %v1272 = vand.u32 2147483647, %v852
      %vm1273 = vcmp.le.f32.partialorder %v1272, 0.7853982
      %vm1274 = vcmp.lt.s32.totalorder %v852, 0
      %v1275 = vand.u32 %v852, 2139095040
      %v1276 = vshrl.u32 %v1275, 23
      %v1277 = vsub.s32 %v1276, 127
      %v1278 = vand.u32 2147483647, %v852
      %v1279 = vand.u32 %v1278, 8388607
      %v1280 = vor.u32 %v1279, 8388608
      %v1281 = vsub.s32 0, %v1280
      %v1282 = vadd.s32 %v1277, 1
      %vm1283 = vcmp.gt.s32.totalorder %v1282, 0
      %v1284 = vsel %vm1283, %v1282, 0
      %v1285 = vshrl.u32 %v1284, 5
      %v1286 = vand.u32 %v1284, 31
      %v1287 = vsub.s32 32, %v1286
      %v1288 = vshrl.u32 683565275, %v1287
      %v1289 = vshll.u32 683565275, %v1286
      %v1290 = vshrl.u32 2475754826, %v1287
      %v1291 = vor.u32 %v1289, %v1290
      %v1292 = vshll.u32 2475754826, %v1286
      %v1293 = vshrl.u32 2131351028, %v1287
      %v1294 = vor.u32 %v1292, %v1293
      %v1295 = vshll.u32 2131351028, %v1286
      %v1296 = vshrl.u32 2102212464, %v1287
      %v1297 = vor.u32 %v1295, %v1296
      %v1298 = vshll.u32 2102212464, %v1286
      %v1299 = vshrl.u32 920167782, %v1287
      %v1300 = vor.u32 %v1298, %v1299
      %v1301 = vshll.u32 920167782, %v1286
      %v1302 = vshrl.u32 1326507024, %v1287
      %v1303 = vor.u32 %v1301, %v1302
      %vm1304 = vcmp.lt.s32.totalorder %v1285, 1
      %vm1305 = vcmp.lt.s32.totalorder %v1285, 2
      %vm1306 = vcmp.lt.s32.totalorder %v1285, 3
      %vm1307 = vcmp.lt.s32.totalorder %v1285, 4
      %v1308 = vsel %vm1304, %v1288, %v1291
      %v1309 = vsel %vm1307, %v1297, 2102212464
      %v1310 = vsel %vm1306, %v1294, %v1309
      %v1311 = vsel %vm1305, %v1308, %v1310
      %v1312 = vsel %vm1304, %v1291, %v1294
      %v1313 = vsel %vm1307, %v1300, 920167782
      %v1314 = vsel %vm1306, %v1297, %v1313
      %v1315 = vsel %vm1305, %v1312, %v1314
      %v1316 = vsel %vm1304, %v1294, %v1297
      %v1317 = vsel %vm1307, %v1303, 1326507024
      %v1318 = vsel %vm1306, %v1300, %v1317
      %v1319 = vsel %vm1305, %v1316, %v1318
      %v1320 = vshll.u32 %v1280, 8
      %v1321 = vmul.u32.u64.compose %v1320, %v1319
      %v1322 = vextract.low.u32 %v1321
      %v1323 = vextract.high.u32 %v1321
      %v1324 = vmul.u32.u64.compose %v1320, %v1315
      %v1325 = vextract.low.u32 %v1324
      %v1326 = vextract.high.u32 %v1324
      %v1327 = vmul.u32 %v1320, %v1311
      %v1328 = vadd.s32 %v1323, %v1325
      %vm1329 = vc.u32 %v1323, %v1325
      %v1330 = vadd.s32 %v1326, 1
      %v1331 = vsel %vm1329, %v1330, %v1326
      %v1332 = vadd.s32 %v1327, %v1331
      %v1333 = vadd.s32 %v1332, 536870912
      %v1334 = vshrl.u32 %v1333, 30
      %v1335 = vshll.u32 %v1334, 30
      %v1336 = vsub.s32 %v1332, %v1335
      %vm1337 = vcmp.lt.s32.totalorder %v1336, 0
      %v1338 = vsub.s32 0, %v1336
      %v1339 = vsel %vm1337, %v1338, %v1336
      %v1340 = vclz %v1339
      %v1341 = vsub.s32 %v1340, 2
      %vm1342 = vcmp.gt.s32.totalorder 0, %v1341
      %v1343 = vsel %vm1342, 0, %v1341
      %v1344 = vsub.s32 32, %v1343
      %v1345 = vshll.u32 %v1336, %v1343
      %v1346 = vshrl.u32 %v1328, %v1344
      %v1347 = vor.u32 %v1345, %v1346
      %v1348 = vsub.s32 4294967266, %v1343
      %v1349 = vadd.s32 %v1348, 127
      %v1350 = vshll.u32 %v1349, 23
      %v1351 = vor.u32 4788187, %v1350
      %v1352 = vand.u32 2147483647, %v1351
      %v1354 = vcvt.s32.f32 %v1347
      %v1355 = vmul.f32 %v1354, %v1352
      %v1356 = vxor.u32 %v1355, 2147483648
      %v1357 = vsel %vm1274, %v1356, %v1355
      %v1358 = vsub.s32 4, %v1334
      %v1359 = vsel %vm1274, %v1358, %v1334
      %v1360 = vsel %vm1273, %v852, %v1357
      %v1361 = vsel %vm1273, 0, %v1359
      %v1362 = vcosq.f32.pop %v1360
      %v1363 = vsinq.f32.pop %v1360
      %vm1364 = vweird.f32 %v852
      %v1365 = vadd.s32 %v1361, 3
      %v1366 = vand.u32 %v1365, 3
      %vm1367 = vcmp.lt.s32.totalorder %v1366, 2
      %vm1368 = vcmp.eq.s32.totalorder %v1366, 0
      %v1369 = vxor.u32 %v1363, 2147483648
      %v1370 = vsel %vm1368, %v1362, %v1369
      %vm1371 = vcmp.eq.s32.totalorder %v1366, 2
      %v1372 = vxor.u32 %v1362, 2147483648
      %v1373 = vsel %vm1371, %v1372, %v1363
      %v1374 = vsel %vm1367, %v1370, %v1373
      %v1375 = vsel %vm1364, nan, %v1374
      %v1376 = vand.u32 2147483647, %v853
      %vm1377 = vcmp.le.f32.partialorder %v1376, 0.7853982
      %vm1378 = vcmp.lt.s32.totalorder %v853, 0
      %v1379 = vand.u32 %v853, 2139095040
      %v1380 = vshrl.u32 %v1379, 23
      %v1381 = vsub.s32 %v1380, 127
      %v1382 = vand.u32 2147483647, %v853
      %v1383 = vand.u32 %v1382, 8388607
      %v1384 = vor.u32 %v1383, 8388608
      %v1385 = vsub.s32 0, %v1384
      %v1386 = vadd.s32 %v1381, 1
      %vm1387 = vcmp.gt.s32.totalorder %v1386, 0
      %v1388 = vsel %vm1387, %v1386, 0
      %v1389 = vshrl.u32 %v1388, 5
      %v1390 = vand.u32 %v1388, 31
      %v1391 = vsub.s32 32, %v1390
      %v1392 = vshrl.u32 683565275, %v1391
      %v1393 = vshll.u32 683565275, %v1390
      %v1394 = vshrl.u32 2475754826, %v1391
      %v1395 = vor.u32 %v1393, %v1394
      %v1396 = vshll.u32 2475754826, %v1390
      %v1397 = vshrl.u32 2131351028, %v1391
      %v1398 = vor.u32 %v1396, %v1397
      %v1399 = vshll.u32 2131351028, %v1390
      %v1400 = vshrl.u32 2102212464, %v1391
      %v1401 = vor.u32 %v1399, %v1400
      %v1402 = vshll.u32 2102212464, %v1390
      %v1403 = vshrl.u32 920167782, %v1391
      %v1404 = vor.u32 %v1402, %v1403
      %v1405 = vshll.u32 920167782, %v1390
      %v1406 = vshrl.u32 1326507024, %v1391
      %v1407 = vor.u32 %v1405, %v1406
      %vm1408 = vcmp.lt.s32.totalorder %v1389, 1
      %vm1409 = vcmp.lt.s32.totalorder %v1389, 2
      %vm1410 = vcmp.lt.s32.totalorder %v1389, 3
      %vm1411 = vcmp.lt.s32.totalorder %v1389, 4
      %v1412 = vsel %vm1408, %v1392, %v1395
      %v1413 = vsel %vm1411, %v1401, 2102212464
      %v1414 = vsel %vm1410, %v1398, %v1413
      %v1415 = vsel %vm1409, %v1412, %v1414
      %v1416 = vsel %vm1408, %v1395, %v1398
      %v1417 = vsel %vm1411, %v1404, 920167782
      %v1418 = vsel %vm1410, %v1401, %v1417
      %v1419 = vsel %vm1409, %v1416, %v1418
      %v1420 = vsel %vm1408, %v1398, %v1401
      %v1421 = vsel %vm1411, %v1407, 1326507024
      %v1422 = vsel %vm1410, %v1404, %v1421
      %v1423 = vsel %vm1409, %v1420, %v1422
      %v1424 = vshll.u32 %v1384, 8
      %v1425 = vmul.u32.u64.compose %v1424, %v1423
      %v1426 = vextract.low.u32 %v1425
      %v1427 = vextract.high.u32 %v1425
      %v1428 = vmul.u32.u64.compose %v1424, %v1419
      %v1429 = vextract.low.u32 %v1428
      %v1430 = vextract.high.u32 %v1428
      %v1431 = vmul.u32 %v1424, %v1415
      %v1432 = vadd.s32 %v1427, %v1429
      %vm1433 = vc.u32 %v1427, %v1429
      %v1434 = vadd.s32 %v1430, 1
      %v1435 = vsel %vm1433, %v1434, %v1430
      %v1436 = vadd.s32 %v1431, %v1435
      %v1437 = vadd.s32 %v1436, 536870912
      %v1438 = vshrl.u32 %v1437, 30
      %v1439 = vshll.u32 %v1438, 30
      %v1440 = vsub.s32 %v1436, %v1439
      %vm1441 = vcmp.lt.s32.totalorder %v1440, 0
      %v1442 = vsub.s32 0, %v1440
      %v1443 = vsel %vm1441, %v1442, %v1440
      %v1444 = vclz %v1443
      %v1445 = vsub.s32 %v1444, 2
      %vm1446 = vcmp.gt.s32.totalorder 0, %v1445
      %v1447 = vsel %vm1446, 0, %v1445
      %v1448 = vsub.s32 32, %v1447
      %v1449 = vshll.u32 %v1440, %v1447
      %v1450 = vshrl.u32 %v1432, %v1448
      %v1451 = vor.u32 %v1449, %v1450
      %v1452 = vsub.s32 4294967266, %v1447
      %v1453 = vadd.s32 %v1452, 127
      %v1454 = vshll.u32 %v1453, 23
      %v1455 = vor.u32 4788187, %v1454
      %v1456 = vand.u32 2147483647, %v1455
      %v1458 = vcvt.s32.f32 %v1451
      %v1459 = vmul.f32 %v1458, %v1456
      %v1460 = vxor.u32 %v1459, 2147483648
      %v1461 = vsel %vm1378, %v1460, %v1459
      %v1462 = vsub.s32 4, %v1438
      %v1463 = vsel %vm1378, %v1462, %v1438
      %v1464 = vsel %vm1377, %v853, %v1461
      %v1465 = vsel %vm1377, 0, %v1463
      %v1466 = vcosq.f32.pop %v1464
      %v1467 = vsinq.f32.pop %v1464
      %vm1468 = vweird.f32 %v853
      %v1469 = vadd.s32 %v1465, 3
      %v1470 = vand.u32 %v1469, 3
      %vm1471 = vcmp.lt.s32.totalorder %v1470, 2
      %vm1472 = vcmp.eq.s32.totalorder %v1470, 0
      %v1473 = vxor.u32 %v1467, 2147483648
      %v1474 = vsel %vm1472, %v1466, %v1473
      %vm1475 = vcmp.eq.s32.totalorder %v1470, 2
      %v1476 = vxor.u32 %v1466, 2147483648
      %v1477 = vsel %vm1475, %v1476, %v1467
      %v1478 = vsel %vm1471, %v1474, %v1477
      %v1479 = vsel %vm1468, nan, %v1478
      %v1480 = vand.u32 2147483647, %v854
      %vm1481 = vcmp.le.f32.partialorder %v1480, 0.7853982
      %vm1482 = vcmp.lt.s32.totalorder %v854, 0
      %v1483 = vand.u32 %v854, 2139095040
      %v1484 = vshrl.u32 %v1483, 23
      %v1485 = vsub.s32 %v1484, 127
      %v1486 = vand.u32 2147483647, %v854
      %v1487 = vand.u32 %v1486, 8388607
      %v1488 = vor.u32 %v1487, 8388608
      %v1489 = vsub.s32 0, %v1488
      %v1490 = vadd.s32 %v1485, 1
      %vm1491 = vcmp.gt.s32.totalorder %v1490, 0
      %v1492 = vsel %vm1491, %v1490, 0
      %v1493 = vshrl.u32 %v1492, 5
      %v1494 = vand.u32 %v1492, 31
      %v1495 = vsub.s32 32, %v1494
      %v1496 = vshrl.u32 683565275, %v1495
      %v1497 = vshll.u32 683565275, %v1494
      %v1498 = vshrl.u32 2475754826, %v1495
      %v1499 = vor.u32 %v1497, %v1498
      %v1500 = vshll.u32 2475754826, %v1494
      %v1501 = vshrl.u32 2131351028, %v1495
      %v1502 = vor.u32 %v1500, %v1501
      %v1503 = vshll.u32 2131351028, %v1494
      %v1504 = vshrl.u32 2102212464, %v1495
      %v1505 = vor.u32 %v1503, %v1504
      %v1506 = vshll.u32 2102212464, %v1494
      %v1507 = vshrl.u32 920167782, %v1495
      %v1508 = vor.u32 %v1506, %v1507
      %v1509 = vshll.u32 920167782, %v1494
      %v1510 = vshrl.u32 1326507024, %v1495
      %v1511 = vor.u32 %v1509, %v1510
      %vm1512 = vcmp.lt.s32.totalorder %v1493, 1
      %vm1513 = vcmp.lt.s32.totalorder %v1493, 2
      %vm1514 = vcmp.lt.s32.totalorder %v1493, 3
      %vm1515 = vcmp.lt.s32.totalorder %v1493, 4
      %v1516 = vsel %vm1512, %v1496, %v1499
      %v1517 = vsel %vm1515, %v1505, 2102212464
      %v1518 = vsel %vm1514, %v1502, %v1517
      %v1519 = vsel %vm1513, %v1516, %v1518
      %v1520 = vsel %vm1512, %v1499, %v1502
      %v1521 = vsel %vm1515, %v1508, 920167782
      %v1522 = vsel %vm1514, %v1505, %v1521
      %v1523 = vsel %vm1513, %v1520, %v1522
      %v1524 = vsel %vm1512, %v1502, %v1505
      %v1525 = vsel %vm1515, %v1511, 1326507024
      %v1526 = vsel %vm1514, %v1508, %v1525
      %v1527 = vsel %vm1513, %v1524, %v1526
      %v1528 = vshll.u32 %v1488, 8
      %v1529 = vmul.u32.u64.compose %v1528, %v1527
      %v1530 = vextract.low.u32 %v1529
      %v1531 = vextract.high.u32 %v1529
      %v1532 = vmul.u32.u64.compose %v1528, %v1523
      %v1533 = vextract.low.u32 %v1532
      %v1534 = vextract.high.u32 %v1532
      %v1535 = vmul.u32 %v1528, %v1519
      %v1536 = vadd.s32 %v1531, %v1533
      %vm1537 = vc.u32 %v1531, %v1533
      %v1538 = vadd.s32 %v1534, 1
      %v1539 = vsel %vm1537, %v1538, %v1534
      %v1540 = vadd.s32 %v1535, %v1539
      %v1541 = vadd.s32 %v1540, 536870912
      %v1542 = vshrl.u32 %v1541, 30
      %v1543 = vshll.u32 %v1542, 30
      %v1544 = vsub.s32 %v1540, %v1543
      %vm1545 = vcmp.lt.s32.totalorder %v1544, 0
      %v1546 = vsub.s32 0, %v1544
      %v1547 = vsel %vm1545, %v1546, %v1544
      %v1548 = vclz %v1547
      %v1549 = vsub.s32 %v1548, 2
      %vm1550 = vcmp.gt.s32.totalorder 0, %v1549
      %v1551 = vsel %vm1550, 0, %v1549
      %v1552 = vsub.s32 32, %v1551
      %v1553 = vshll.u32 %v1544, %v1551
      %v1554 = vshrl.u32 %v1536, %v1552
      %v1555 = vor.u32 %v1553, %v1554
      %v1556 = vsub.s32 4294967266, %v1551
      %v1557 = vadd.s32 %v1556, 127
      %v1558 = vshll.u32 %v1557, 23
      %v1559 = vor.u32 4788187, %v1558
      %v1560 = vand.u32 2147483647, %v1559
      %v1562 = vcvt.s32.f32 %v1555
      %v1563 = vmul.f32 %v1562, %v1560
      %v1564 = vxor.u32 %v1563, 2147483648
      %v1565 = vsel %vm1482, %v1564, %v1563
      %v1566 = vsub.s32 4, %v1542
      %v1567 = vsel %vm1482, %v1566, %v1542
      %v1568 = vsel %vm1481, %v854, %v1565
      %v1569 = vsel %vm1481, 0, %v1567
      %v1570 = vcosq.f32.pop %v1568
      %v1571 = vsinq.f32.pop %v1568
      %vm1572 = vweird.f32 %v854
      %v1573 = vadd.s32 %v1569, 3
      %v1574 = vand.u32 %v1573, 3
      %vm1575 = vcmp.lt.s32.totalorder %v1574, 2
      %vm1576 = vcmp.eq.s32.totalorder %v1574, 0
      %v1577 = vxor.u32 %v1571, 2147483648
      %v1578 = vsel %vm1576, %v1570, %v1577
      %vm1579 = vcmp.eq.s32.totalorder %v1574, 2
      %v1580 = vxor.u32 %v1570, 2147483648
      %v1581 = vsel %vm1579, %v1580, %v1571
      %v1582 = vsel %vm1575, %v1578, %v1581
      %v1583 = vsel %vm1572, nan, %v1582
      %v1584 = vand.u32 2147483647, %v855
      %vm1585 = vcmp.le.f32.partialorder %v1584, 0.7853982
      %vm1586 = vcmp.lt.s32.totalorder %v855, 0
      %v1587 = vand.u32 %v855, 2139095040
      %v1588 = vshrl.u32 %v1587, 23
      %v1589 = vsub.s32 %v1588, 127
      %v1590 = vand.u32 2147483647, %v855
      %v1591 = vand.u32 %v1590, 8388607
      %v1592 = vor.u32 %v1591, 8388608
      %v1593 = vsub.s32 0, %v1592
      %v1594 = vadd.s32 %v1589, 1
      %vm1595 = vcmp.gt.s32.totalorder %v1594, 0
      %v1596 = vsel %vm1595, %v1594, 0
      %v1597 = vshrl.u32 %v1596, 5
      %v1598 = vand.u32 %v1596, 31
      %v1599 = vsub.s32 32, %v1598
      %v1600 = vshrl.u32 683565275, %v1599
      %v1601 = vshll.u32 683565275, %v1598
      %v1602 = vshrl.u32 2475754826, %v1599
      %v1603 = vor.u32 %v1601, %v1602
      %v1604 = vshll.u32 2475754826, %v1598
      %v1605 = vshrl.u32 2131351028, %v1599
      %v1606 = vor.u32 %v1604, %v1605
      %v1607 = vshll.u32 2131351028, %v1598
      %v1608 = vshrl.u32 2102212464, %v1599
      %v1609 = vor.u32 %v1607, %v1608
      %v1610 = vshll.u32 2102212464, %v1598
      %v1611 = vshrl.u32 920167782, %v1599
      %v1612 = vor.u32 %v1610, %v1611
      %v1613 = vshll.u32 920167782, %v1598
      %v1614 = vshrl.u32 1326507024, %v1599
      %v1615 = vor.u32 %v1613, %v1614
      %vm1616 = vcmp.lt.s32.totalorder %v1597, 1
      %vm1617 = vcmp.lt.s32.totalorder %v1597, 2
      %vm1618 = vcmp.lt.s32.totalorder %v1597, 3
      %vm1619 = vcmp.lt.s32.totalorder %v1597, 4
      %v1620 = vsel %vm1616, %v1600, %v1603
      %v1621 = vsel %vm1619, %v1609, 2102212464
      %v1622 = vsel %vm1618, %v1606, %v1621
      %v1623 = vsel %vm1617, %v1620, %v1622
      %v1624 = vsel %vm1616, %v1603, %v1606
      %v1625 = vsel %vm1619, %v1612, 920167782
      %v1626 = vsel %vm1618, %v1609, %v1625
      %v1627 = vsel %vm1617, %v1624, %v1626
      %v1628 = vsel %vm1616, %v1606, %v1609
      %v1629 = vsel %vm1619, %v1615, 1326507024
      %v1630 = vsel %vm1618, %v1612, %v1629
      %v1631 = vsel %vm1617, %v1628, %v1630
      %v1632 = vshll.u32 %v1592, 8
      %v1633 = vmul.u32.u64.compose %v1632, %v1631
      %v1634 = vextract.low.u32 %v1633
      %v1635 = vextract.high.u32 %v1633
      %v1636 = vmul.u32.u64.compose %v1632, %v1627
      %v1637 = vextract.low.u32 %v1636
      %v1638 = vextract.high.u32 %v1636
      %v1639 = vmul.u32 %v1632, %v1623
      %v1640 = vadd.s32 %v1635, %v1637
      %vm1641 = vc.u32 %v1635, %v1637
      %v1642 = vadd.s32 %v1638, 1
      %v1643 = vsel %vm1641, %v1642, %v1638
      %v1644 = vadd.s32 %v1639, %v1643
      %v1645 = vadd.s32 %v1644, 536870912
      %v1646 = vshrl.u32 %v1645, 30
      %v1647 = vshll.u32 %v1646, 30
      %v1648 = vsub.s32 %v1644, %v1647
      %vm1649 = vcmp.lt.s32.totalorder %v1648, 0
      %v1650 = vsub.s32 0, %v1648
      %v1651 = vsel %vm1649, %v1650, %v1648
      %v1652 = vclz %v1651
      %v1653 = vsub.s32 %v1652, 2
      %vm1654 = vcmp.gt.s32.totalorder 0, %v1653
      %v1655 = vsel %vm1654, 0, %v1653
      %v1656 = vsub.s32 32, %v1655
      %v1657 = vshll.u32 %v1648, %v1655
      %v1658 = vshrl.u32 %v1640, %v1656
      %v1659 = vor.u32 %v1657, %v1658
      %v1660 = vsub.s32 4294967266, %v1655
      %v1661 = vadd.s32 %v1660, 127
      %v1662 = vshll.u32 %v1661, 23
      %v1663 = vor.u32 4788187, %v1662
      %v1664 = vand.u32 2147483647, %v1663
      %v1666 = vcvt.s32.f32 %v1659
      %v1667 = vmul.f32 %v1666, %v1664
      %v1668 = vxor.u32 %v1667, 2147483648
      %v1669 = vsel %vm1586, %v1668, %v1667
      %v1670 = vsub.s32 4, %v1646
      %v1671 = vsel %vm1586, %v1670, %v1646
      %v1672 = vsel %vm1585, %v855, %v1669
      %v1673 = vsel %vm1585, 0, %v1671
      %v1674 = vcosq.f32.pop %v1672
      %v1675 = vsinq.f32.pop %v1672
      %vm1676 = vweird.f32 %v855
      %v1677 = vadd.s32 %v1673, 3
      %v1678 = vand.u32 %v1677, 3
      %vm1679 = vcmp.lt.s32.totalorder %v1678, 2
      %vm1680 = vcmp.eq.s32.totalorder %v1678, 0
      %v1681 = vxor.u32 %v1675, 2147483648
      %v1682 = vsel %vm1680, %v1674, %v1681
      %vm1683 = vcmp.eq.s32.totalorder %v1678, 2
      %v1684 = vxor.u32 %v1674, 2147483648
      %v1685 = vsel %vm1683, %v1684, %v1675
      %v1686 = vsel %vm1679, %v1682, %v1685
      %v1687 = vsel %vm1676, nan, %v1686
      %v1688 = vpack.c.bf16 %v737, %v735
      %v1689 = vpack.c.bf16 %v738, %v736
      %v1690 = vpack.c.bf16 %v741, %v739
      %v1691 = vpack.c.bf16 %v742, %v740
      %v1692 = vpack.c.bf16 %v1167, %v959
      %v1693 = vpack.c.bf16 %v1271, %v1063
      %v1694 = vpack.c.bf16 %v1583, %v1375
      %v1695 = vpack.c.bf16 %v1687, %v1479
      %v1696 = vld [vmem:[%s6] sm:$0xf]
      %v1697 = vld [vmem:[%s6 + $0x4] sm:$0xf]
      %v1698 = vld [vmem:[%s6 + $0x8] sm:$0xf]
      %v1699 = vld [vmem:[%s6 + $0xc] sm:$0xf]
      %v1700 = vld [vmem:[#allocation2 + $0x40] sm:$0xff]
      %v1701 = vld [vmem:[#allocation2 + $0x48] sm:$0xff]
      %v1702 = vld [vmem:[#allocation2 + $0x50] sm:$0xff]
      %v1703 = vld [vmem:[#allocation2 + $0x58] sm:$0xff]
      %v1704 = vld [vmem:[#allocation2 + $0x60] sm:$0xff]
      %v1705 = vld [vmem:[#allocation2 + $0x68] sm:$0xff]
      %v1706 = vld [vmem:[#allocation2 + $0x70] sm:$0xff]
      %v1707 = vld [vmem:[#allocation2 + $0x78] sm:$0xff]
      %v1712 = vunpack.c.l.b16 %v1696
      %v1713 = vunpack.c.l.b16 %v1697
      %v1714 = vunpack.c.l.b16 %v1698
      %v1715 = vunpack.c.l.b16 %v1699
      %v1716 = vpack.c.b16 %v1713, %v1712
      %v1717 = vpack.c.b16 %v1715, %v1714
      %vm1718 = vcmask 523264
      %v1720 = vsel %vm1718, %v1716, 0
      %v1723 = vsel %vm1718, %v1717, 0
      %1725 = vmatprep.subr.bf16.mxu0 %v1689
      %1726 = vmatpush1.bf16.msra.mxu0 %v1688
      %1727 = vmatprep.subr.bf16.mxu0 %v1691
      %1728 = vmatpush1.bf16.msra.mxu0 %v1690
      %1729 = vmatprep.subr.bf16.mxu0 %v1693
      %1730 = vmatpush1.bf16.msra.mxu0 %v1692
      %1731 = vmatprep.subr.bf16.mxu0 %v1695
      %1732 = vmatpush1.bf16.msra.mxu0 %v1694
      %1733 = vmatprep.subr.bf16.mxu0 0
      %1734 = vmatpush1.bf16.msra.mxu0 0
      %1735 = vmatprep.subr.bf16.mxu0 0
      %1736 = vmatpush1.bf16.msra.mxu0 0
      %1737 = vmatprep.subr.bf16.mxu0 0
      %1738 = vmatpush1.bf16.msra.mxu0 0
      %1739 = vmatprep.subr.bf16.mxu0 0
      %1740 = vmatpush1.bf16.msra.mxu0 0
      %1741 = vmatprep.subr.bf16.mxu0 0
      %1742 = vmatpush1.bf16.msra.mxu0 0
      %1743 = vmatprep.subr.bf16.mxu0 0
      %1744 = vmatpush1.bf16.msra.mxu0 0
      %1745 = vmatprep.subr.bf16.mxu0 0
      %1746 = vmatpush1.bf16.msra.mxu0 0
      %1747 = vmatprep.subr.bf16.mxu0 0
      %1748 = vmatpush1.bf16.msra.mxu0 0
      %1749 = vmatprep.subr.bf16.mxu0 0
      %1750 = vmatpush1.bf16.msra.mxu0 0
      %1751 = vmatprep.subr.bf16.mxu0 0
      %1752 = vmatpush1.bf16.msra.mxu0 0
      %1753 = vmatprep.subr.bf16.mxu0 0
      %1754 = vmatpush1.bf16.msra.mxu0 0
      %1755 = vmatprep.subr.bf16.mxu0 0
      %1756 = vmatpush1.bf16.msra.mxu0 0
      %1757 = vmatprep.mubr.bf16.mxu0 0
      %1758 = vmatmul.mubr.bf16.gmra.mrb[0].mxu0 %v1720
      %v1759 = vpop.f32.mrb[0].mxu0
      %v1760 = vadd.f32 %v1700, %v1759
      %v1761 = vpop.f32.mrb[0].mxu0
      %v1762 = vadd.f32 %v1701, %v1761
      %v1763 = vpop.f32.mrb[0].mxu0
      %v1764 = vadd.f32 %v1702, %v1763
      %v1765 = vpop.f32.mrb[0].mxu0
      %v1766 = vadd.f32 %v1703, %v1765
      %1767 = vmatprep.mubr.bf16.mxu0 0
      %1768 = vmatmul.mubr.bf16.gmra.mrb[0].mxu0 %v1723
      %v1769 = vpop.f32.mrb[0].mxu0
      %v1770 = vadd.f32 %v1704, %v1769
      %v1771 = vpop.f32.mrb[0].mxu0
      %v1772 = vadd.f32 %v1705, %v1771
      %v1773 = vpop.f32.mrb[0].mxu0
      %v1774 = vadd.f32 %v1706, %v1773
      %v1775 = vpop.f32.mrb[0].mxu0
      %v1776 = vadd.f32 %v1707, %v1775
      %1777 = vdwg.mxu0
      %v1778 = vld [vmem:[%s7] sm:$0xff]
      %v1779 = vld [vmem:[%s7 + $0x8] sm:$0xff]
      %v1780 = vld [vmem:[%s7 + $0x10] sm:$0xff]
      %v1781 = vld [vmem:[%s7 + $0x18] sm:$0xff]
      %1783 = vset.pattern.permute.xlu0 0
      %1784 = vperm.xlu0 %1783, %v1778
      %v1785 = vpop.permute.xlu0 %1784
      %1788 = vset.pattern.permute.xlu0 0
      %1789 = vperm.xlu0 %1788, %v1779
      %v1790 = vpop.permute.xlu0 %1789
      %1793 = vset.pattern.permute.xlu0 0
      %1794 = vperm.xlu0 %1793, %v1780
      %v1795 = vpop.permute.xlu0 %1794
      %1798 = vset.pattern.permute.xlu0 0
      %1799 = vperm.xlu0 %1798, %v1781
      %v1800 = vpop.permute.xlu0 %1799
      %v1802 = vadd.f32 %v1760, %v1785
      %v1803 = vadd.f32 %v1762, %v1785
      %v1804 = vadd.f32 %v1764, %v1790
      %v1805 = vadd.f32 %v1766, %v1790
      %v1806 = vadd.f32 %v1770, %v1795
      %v1807 = vadd.f32 %v1772, %v1795
      %v1808 = vadd.f32 %v1774, %v1800
      %v1809 = vadd.f32 %v1776, %v1800
      %v1810 = vmax.f32 %v1802, 0.0
      %v1811 = vmax.f32 %v1803, 0.0
      %v1812 = vmax.f32 %v1804, 0.0
      %v1813 = vmax.f32 %v1805, 0.0
      %v1814 = vmax.f32 %v1806, 0.0
      %v1815 = vmax.f32 %v1807, 0.0
      %v1816 = vmax.f32 %v1808, 0.0
      %v1817 = vmax.f32 %v1809, 0.0
      %v1818 = vld [vmem:[%s8] sm:$0xf]
      %v1819 = vld [vmem:[%s8 + $0x4] sm:$0xf]
      %v1820 = vld [vmem:[%s8 + $0x8] sm:$0xf]
      %v1821 = vld [vmem:[%s8 + $0xc] sm:$0xf]
      %v1822 = vld [vmem:[%s9] sm:$0xff]
      %v1823 = vld [vmem:[%s9 + $0x8] sm:$0xff]
      %v1824 = vld [vmem:[%s9 + $0x10] sm:$0xff]
      %v1825 = vld [vmem:[%s9 + $0x18] sm:$0xff]
      %1827 = vset.pattern.permute.xlu0 0
      %1828 = vperm.xlu0 %1827, %v1822
      %v1829 = vpop.permute.xlu0 %1828
      %1832 = vset.pattern.permute.xlu0 0
      %1833 = vperm.xlu0 %1832, %v1823
      %v1834 = vpop.permute.xlu0 %1833
      %1837 = vset.pattern.permute.xlu0 0
      %1838 = vperm.xlu0 %1837, %v1824
      %v1839 = vpop.permute.xlu0 %1838
      %1842 = vset.pattern.permute.xlu0 0
      %1843 = vperm.xlu0 %1842, %v1825
      %v1844 = vpop.permute.xlu0 %1843
      %v1850 = vunpack.c.l.b16 %v1818
      %v1851 = vunpack.c.l.b16 %v1819
      %v1852 = vunpack.c.l.b16 %v1820
      %v1853 = vunpack.c.l.b16 %v1821
      %v1854 = vpack.c.b16 %v1851, %v1850
      %v1855 = vpack.c.b16 %v1853, %v1852
      %vm1856 = vcmask 261120
      %v1858 = vsel %vm1856, %v1854, 0
      %v1861 = vsel %vm1856, %v1855, 0
      %1863 = vmatprep.subr.bf16.mxu0 %v1693
      %1864 = vmatpush1.bf16.msra.mxu0 %v1692
      %1865 = vmatprep.subr.bf16.mxu0 %v1695
      %1866 = vmatpush1.bf16.msra.mxu0 %v1694
      %1867 = vmatprep.subr.bf16.mxu0 0
      %1868 = vmatpush1.bf16.msra.mxu0 0
      %1869 = vmatprep.subr.bf16.mxu0 0
      %1870 = vmatpush1.bf16.msra.mxu0 0
      %1871 = vmatprep.subr.bf16.mxu0 0
      %1872 = vmatpush1.bf16.msra.mxu0 0
      %1873 = vmatprep.subr.bf16.mxu0 0
      %1874 = vmatpush1.bf16.msra.mxu0 0
      %1875 = vmatprep.subr.bf16.mxu0 0
      %1876 = vmatpush1.bf16.msra.mxu0 0
      %1877 = vmatprep.subr.bf16.mxu0 0
      %1878 = vmatpush1.bf16.msra.mxu0 0
      %1879 = vmatprep.subr.bf16.mxu0 0
      %1880 = vmatpush1.bf16.msra.mxu0 0
      %1881 = vmatprep.subr.bf16.mxu0 0
      %1882 = vmatpush1.bf16.msra.mxu0 0
      %1883 = vmatprep.subr.bf16.mxu0 0
      %1884 = vmatpush1.bf16.msra.mxu0 0
      %1885 = vmatprep.subr.bf16.mxu0 0
      %1886 = vmatpush1.bf16.msra.mxu0 0
      %1887 = vmatprep.subr.bf16.mxu0 0
      %1888 = vmatpush1.bf16.msra.mxu0 0
      %1889 = vmatprep.subr.bf16.mxu0 0
      %1890 = vmatpush1.bf16.msra.mxu0 0
      %1891 = vmatprep.subr.bf16.mxu0 0
      %1892 = vmatpush1.bf16.msra.mxu0 0
      %1893 = vmatprep.subr.bf16.mxu0 0
      %1894 = vmatpush1.bf16.msra.mxu0 0
      %1895 = vmatprep.mubr.bf16.mxu0 0
      %1896 = vmatmul.mubr.bf16.gmra.mrb[0].mxu0 %v1858
      %v1897 = vpop.f32.mrb[0].mxu0
      %v1898 = vadd.f32 %v1829, %v1897
      %v1899 = vpop.f32.mrb[0].mxu0
      %v1900 = vadd.f32 %v1829, %v1899
      %v1901 = vpop.f32.mrb[0].mxu0
      %v1902 = vadd.f32 %v1834, %v1901
      %v1903 = vpop.f32.mrb[0].mxu0
      %v1904 = vadd.f32 %v1834, %v1903
      %1905 = vmatprep.mubr.bf16.mxu0 0
      %1906 = vmatmul.mubr.bf16.gmra.mrb[0].mxu0 %v1861
      %v1907 = vpop.f32.mrb[0].mxu0
      %v1908 = vadd.f32 %v1839, %v1907
      %v1909 = vpop.f32.mrb[0].mxu0
      %v1910 = vadd.f32 %v1839, %v1909
      %v1911 = vpop.f32.mrb[0].mxu0
      %v1912 = vadd.f32 %v1844, %v1911
      %v1913 = vpop.f32.mrb[0].mxu0
      %v1914 = vadd.f32 %v1844, %v1913
      %1915 = vdwg.mxu0
      %v1916 = vadd.f32 %v1898, %v1810
      %v1917 = vadd.f32 %v1900, %v1811
      %v1918 = vadd.f32 %v1902, %v1812
      %v1919 = vadd.f32 %v1904, %v1813
      %v1920 = vadd.f32 %v1908, %v1814
      %v1921 = vadd.f32 %v1910, %v1815
      %v1922 = vadd.f32 %v1912, %v1816
      %v1923 = vadd.f32 %v1914, %v1817
      %v1924 = vand.u32 2147483647, %v1916
      %vm1925 = vcmp.le.f32.partialorder %v1924, 0.7853982
      %vm1926 = vcmp.lt.s32.totalorder %v1916, 0
      %v1927 = vand.u32 %v1916, 2139095040
      %v1928 = vshrl.u32 %v1927, 23
      %v1929 = vsub.s32 %v1928, 127
      %v1930 = vand.u32 2147483647, %v1916
      %v1931 = vand.u32 %v1930, 8388607
      %v1932 = vor.u32 %v1931, 8388608
      %v1933 = vsub.s32 0, %v1932
      %v1934 = vadd.s32 %v1929, 1
      %vm1935 = vcmp.gt.s32.totalorder %v1934, 0
      %v1936 = vsel %vm1935, %v1934, 0
      %v1937 = vshrl.u32 %v1936, 5
      %v1938 = vand.u32 %v1936, 31
      %v1939 = vsub.s32 32, %v1938
      %v1940 = vshrl.u32 683565275, %v1939
      %v1941 = vshll.u32 683565275, %v1938
      %v1942 = vshrl.u32 2475754826, %v1939
      %v1943 = vor.u32 %v1941, %v1942
      %v1944 = vshll.u32 2475754826, %v1938
      %v1945 = vshrl.u32 2131351028, %v1939
      %v1946 = vor.u32 %v1944, %v1945
      %v1947 = vshll.u32 2131351028, %v1938
      %v1948 = vshrl.u32 2102212464, %v1939
      %v1949 = vor.u32 %v1947, %v1948
      %v1950 = vshll.u32 2102212464, %v1938
      %v1951 = vshrl.u32 920167782, %v1939
      %v1952 = vor.u32 %v1950, %v1951
      %v1953 = vshll.u32 920167782, %v1938
      %v1954 = vshrl.u32 1326507024, %v1939
      %v1955 = vor.u32 %v1953, %v1954
      %vm1956 = vcmp.lt.s32.totalorder %v1937, 1
      %vm1957 = vcmp.lt.s32.totalorder %v1937, 2
      %vm1958 = vcmp.lt.s32.totalorder %v1937, 3
      %vm1959 = vcmp.lt.s32.totalorder %v1937, 4
      %v1960 = vsel %vm1956, %v1940, %v1943
      %v1961 = vsel %vm1959, %v1949, 2102212464
      %v1962 = vsel %vm1958, %v1946, %v1961
      %v1963 = vsel %vm1957, %v1960, %v1962
      %v1964 = vsel %vm1956, %v1943, %v1946
      %v1965 = vsel %vm1959, %v1952, 920167782
      %v1966 = vsel %vm1958, %v1949, %v1965
      %v1967 = vsel %vm1957, %v1964, %v1966
      %v1968 = vsel %vm1956, %v1946, %v1949
      %v1969 = vsel %vm1959, %v1955, 1326507024
      %v1970 = vsel %vm1958, %v1952, %v1969
      %v1971 = vsel %vm1957, %v1968, %v1970
      %v1972 = vshll.u32 %v1932, 8
      %v1973 = vmul.u32.u64.compose %v1972, %v1971
      %v1974 = vextract.low.u32 %v1973
      %v1975 = vextract.high.u32 %v1973
      %v1976 = vmul.u32.u64.compose %v1972, %v1967
      %v1977 = vextract.low.u32 %v1976
      %v1978 = vextract.high.u32 %v1976
      %v1979 = vmul.u32 %v1972, %v1963
      %v1980 = vadd.s32 %v1975, %v1977
      %vm1981 = vc.u32 %v1975, %v1977
      %v1982 = vadd.s32 %v1978, 1
      %v1983 = vsel %vm1981, %v1982, %v1978
      %v1984 = vadd.s32 %v1979, %v1983
      %v1985 = vadd.s32 %v1984, 536870912
      %v1986 = vshrl.u32 %v1985, 30
      %v1987 = vshll.u32 %v1986, 30
      %v1988 = vsub.s32 %v1984, %v1987
      %vm1989 = vcmp.lt.s32.totalorder %v1988, 0
      %v1990 = vsub.s32 0, %v1988
      %v1991 = vsel %vm1989, %v1990, %v1988
      %v1992 = vclz %v1991
      %v1993 = vsub.s32 %v1992, 2
      %vm1994 = vcmp.gt.s32.totalorder 0, %v1993
      %v1995 = vsel %vm1994, 0, %v1993
      %v1996 = vsub.s32 32, %v1995
      %v1997 = vshll.u32 %v1988, %v1995
      %v1998 = vshrl.u32 %v1980, %v1996
      %v1999 = vor.u32 %v1997, %v1998
      %v2000 = vsub.s32 4294967266, %v1995
      %v2001 = vadd.s32 %v2000, 127
      %v2002 = vshll.u32 %v2001, 23
      %v2003 = vor.u32 4788187, %v2002
      %v2004 = vand.u32 2147483647, %v2003
      %v2006 = vcvt.s32.f32 %v1999
      %v2007 = vmul.f32 %v2006, %v2004
      %v2008 = vxor.u32 %v2007, 2147483648
      %v2009 = vsel %vm1926, %v2008, %v2007
      %v2010 = vsub.s32 4, %v1986
      %v2011 = vsel %vm1926, %v2010, %v1986
      %v2012 = vsel %vm1925, %v1916, %v2009
      %v2013 = vsel %vm1925, 0, %v2011
      %v2014 = vcosq.f32.pop %v2012
      %v2015 = vsinq.f32.pop %v2012
      %vm2016 = vweird.f32 %v1916
      %v2017 = vadd.s32 %v2013, 3
      %v2018 = vand.u32 %v2017, 3
      %vm2019 = vcmp.lt.s32.totalorder %v2018, 2
      %vm2020 = vcmp.eq.s32.totalorder %v2018, 0
      %v2021 = vxor.u32 %v2015, 2147483648
      %v2022 = vsel %vm2020, %v2014, %v2021
      %vm2023 = vcmp.eq.s32.totalorder %v2018, 2
      %v2024 = vxor.u32 %v2014, 2147483648
      %v2025 = vsel %vm2023, %v2024, %v2015
      %v2026 = vsel %vm2019, %v2022, %v2025
      %v2027 = vsel %vm2016, nan, %v2026
      %v2028 = vand.u32 2147483647, %v1917
      %vm2029 = vcmp.le.f32.partialorder %v2028, 0.7853982
      %vm2030 = vcmp.lt.s32.totalorder %v1917, 0
      %v2031 = vand.u32 %v1917, 2139095040
      %v2032 = vshrl.u32 %v2031, 23
      %v2033 = vsub.s32 %v2032, 127
      %v2034 = vand.u32 2147483647, %v1917
      %v2035 = vand.u32 %v2034, 8388607
      %v2036 = vor.u32 %v2035, 8388608
      %v2037 = vsub.s32 0, %v2036
      %v2038 = vadd.s32 %v2033, 1
      %vm2039 = vcmp.gt.s32.totalorder %v2038, 0
      %v2040 = vsel %vm2039, %v2038, 0
      %v2041 = vshrl.u32 %v2040, 5
      %v2042 = vand.u32 %v2040, 31
      %v2043 = vsub.s32 32, %v2042
      %v2044 = vshrl.u32 683565275, %v2043
      %v2045 = vshll.u32 683565275, %v2042
      %v2046 = vshrl.u32 2475754826, %v2043
      %v2047 = vor.u32 %v2045, %v2046
      %v2048 = vshll.u32 2475754826, %v2042
      %v2049 = vshrl.u32 2131351028, %v2043
      %v2050 = vor.u32 %v2048, %v2049
      %v2051 = vshll.u32 2131351028, %v2042
      %v2052 = vshrl.u32 2102212464, %v2043
      %v2053 = vor.u32 %v2051, %v2052
      %v2054 = vshll.u32 2102212464, %v2042
      %v2055 = vshrl.u32 920167782, %v2043
      %v2056 = vor.u32 %v2054, %v2055
      %v2057 = vshll.u32 920167782, %v2042
      %v2058 = vshrl.u32 1326507024, %v2043
      %v2059 = vor.u32 %v2057, %v2058
      %vm2060 = vcmp.lt.s32.totalorder %v2041, 1
      %vm2061 = vcmp.lt.s32.totalorder %v2041, 2
      %vm2062 = vcmp.lt.s32.totalorder %v2041, 3
      %vm2063 = vcmp.lt.s32.totalorder %v2041, 4
      %v2064 = vsel %vm2060, %v2044, %v2047
      %v2065 = vsel %vm2063, %v2053, 2102212464
      %v2066 = vsel %vm2062, %v2050, %v2065
      %v2067 = vsel %vm2061, %v2064, %v2066
      %v2068 = vsel %vm2060, %v2047, %v2050
      %v2069 = vsel %vm2063, %v2056, 920167782
      %v2070 = vsel %vm2062, %v2053, %v2069
      %v2071 = vsel %vm2061, %v2068, %v2070
      %v2072 = vsel %vm2060, %v2050, %v2053
      %v2073 = vsel %vm2063, %v2059, 1326507024
      %v2074 = vsel %vm2062, %v2056, %v2073
      %v2075 = vsel %vm2061, %v2072, %v2074
      %v2076 = vshll.u32 %v2036, 8
      %v2077 = vmul.u32.u64.compose %v2076, %v2075
      %v2078 = vextract.low.u32 %v2077
      %v2079 = vextract.high.u32 %v2077
      %v2080 = vmul.u32.u64.compose %v2076, %v2071
      %v2081 = vextract.low.u32 %v2080
      %v2082 = vextract.high.u32 %v2080
      %v2083 = vmul.u32 %v2076, %v2067
      %v2084 = vadd.s32 %v2079, %v2081
      %vm2085 = vc.u32 %v2079, %v2081
      %v2086 = vadd.s32 %v2082, 1
      %v2087 = vsel %vm2085, %v2086, %v2082
      %v2088 = vadd.s32 %v2083, %v2087
      %v2089 = vadd.s32 %v2088, 536870912
      %v2090 = vshrl.u32 %v2089, 30
      %v2091 = vshll.u32 %v2090, 30
      %v2092 = vsub.s32 %v2088, %v2091
      %vm2093 = vcmp.lt.s32.totalorder %v2092, 0
      %v2094 = vsub.s32 0, %v2092
      %v2095 = vsel %vm2093, %v2094, %v2092
      %v2096 = vclz %v2095
      %v2097 = vsub.s32 %v2096, 2
      %vm2098 = vcmp.gt.s32.totalorder 0, %v2097
      %v2099 = vsel %vm2098, 0, %v2097
      %v2100 = vsub.s32 32, %v2099
      %v2101 = vshll.u32 %v2092, %v2099
      %v2102 = vshrl.u32 %v2084, %v2100
      %v2103 = vor.u32 %v2101, %v2102
      %v2104 = vsub.s32 4294967266, %v2099
      %v2105 = vadd.s32 %v2104, 127
      %v2106 = vshll.u32 %v2105, 23
      %v2107 = vor.u32 4788187, %v2106
      %v2108 = vand.u32 2147483647, %v2107
      %v2110 = vcvt.s32.f32 %v2103
      %v2111 = vmul.f32 %v2110, %v2108
      %v2112 = vxor.u32 %v2111, 2147483648
      %v2113 = vsel %vm2030, %v2112, %v2111
      %v2114 = vsub.s32 4, %v2090
      %v2115 = vsel %vm2030, %v2114, %v2090
      %v2116 = vsel %vm2029, %v1917, %v2113
      %v2117 = vsel %vm2029, 0, %v2115
      %v2118 = vcosq.f32.pop %v2116
      %v2119 = vsinq.f32.pop %v2116
      %vm2120 = vweird.f32 %v1917
      %v2121 = vadd.s32 %v2117, 3
      %v2122 = vand.u32 %v2121, 3
      %vm2123 = vcmp.lt.s32.totalorder %v2122, 2
      %vm2124 = vcmp.eq.s32.totalorder %v2122, 0
      %v2125 = vxor.u32 %v2119, 2147483648
      %v2126 = vsel %vm2124, %v2118, %v2125
      %vm2127 = vcmp.eq.s32.totalorder %v2122, 2
      %v2128 = vxor.u32 %v2118, 2147483648
      %v2129 = vsel %vm2127, %v2128, %v2119
      %v2130 = vsel %vm2123, %v2126, %v2129
      %v2131 = vsel %vm2120, nan, %v2130
      %v2132 = vand.u32 2147483647, %v1918
      %vm2133 = vcmp.le.f32.partialorder %v2132, 0.7853982
      %vm2134 = vcmp.lt.s32.totalorder %v1918, 0
      %v2135 = vand.u32 %v1918, 2139095040
      %v2136 = vshrl.u32 %v2135, 23
      %v2137 = vsub.s32 %v2136, 127
      %v2138 = vand.u32 2147483647, %v1918
      %v2139 = vand.u32 %v2138, 8388607
      %v2140 = vor.u32 %v2139, 8388608
      %v2141 = vsub.s32 0, %v2140
      %v2142 = vadd.s32 %v2137, 1
      %vm2143 = vcmp.gt.s32.totalorder %v2142, 0
      %v2144 = vsel %vm2143, %v2142, 0
      %v2145 = vshrl.u32 %v2144, 5
      %v2146 = vand.u32 %v2144, 31
      %v2147 = vsub.s32 32, %v2146
      %v2148 = vshrl.u32 683565275, %v2147
      %v2149 = vshll.u32 683565275, %v2146
      %v2150 = vshrl.u32 2475754826, %v2147
      %v2151 = vor.u32 %v2149, %v2150
      %v2152 = vshll.u32 2475754826, %v2146
      %v2153 = vshrl.u32 2131351028, %v2147
      %v2154 = vor.u32 %v2152, %v2153
      %v2155 = vshll.u32 2131351028, %v2146
      %v2156 = vshrl.u32 2102212464, %v2147
      %v2157 = vor.u32 %v2155, %v2156
      %v2158 = vshll.u32 2102212464, %v2146
      %v2159 = vshrl.u32 920167782, %v2147
      %v2160 = vor.u32 %v2158, %v2159
      %v2161 = vshll.u32 920167782, %v2146
      %v2162 = vshrl.u32 1326507024, %v2147
      %v2163 = vor.u32 %v2161, %v2162
      %vm2164 = vcmp.lt.s32.totalorder %v2145, 1
      %vm2165 = vcmp.lt.s32.totalorder %v2145, 2
      %vm2166 = vcmp.lt.s32.totalorder %v2145, 3
      %vm2167 = vcmp.lt.s32.totalorder %v2145, 4
      %v2168 = vsel %vm2164, %v2148, %v2151
      %v2169 = vsel %vm2167, %v2157, 2102212464
      %v2170 = vsel %vm2166, %v2154, %v2169
      %v2171 = vsel %vm2165, %v2168, %v2170
      %v2172 = vsel %vm2164, %v2151, %v2154
      %v2173 = vsel %vm2167, %v2160, 920167782
      %v2174 = vsel %vm2166, %v2157, %v2173
      %v2175 = vsel %vm2165, %v2172, %v2174
      %v2176 = vsel %vm2164, %v2154, %v2157
      %v2177 = vsel %vm2167, %v2163, 1326507024
      %v2178 = vsel %vm2166, %v2160, %v2177
      %v2179 = vsel %vm2165, %v2176, %v2178
      %v2180 = vshll.u32 %v2140, 8
      %v2181 = vmul.u32.u64.compose %v2180, %v2179
      %v2182 = vextract.low.u32 %v2181
      %v2183 = vextract.high.u32 %v2181
      %v2184 = vmul.u32.u64.compose %v2180, %v2175
      %v2185 = vextract.low.u32 %v2184
      %v2186 = vextract.high.u32 %v2184
      %v2187 = vmul.u32 %v2180, %v2171
      %v2188 = vadd.s32 %v2183, %v2185
      %vm2189 = vc.u32 %v2183, %v2185
      %v2190 = vadd.s32 %v2186, 1
      %v2191 = vsel %vm2189, %v2190, %v2186
      %v2192 = vadd.s32 %v2187, %v2191
      %v2193 = vadd.s32 %v2192, 536870912
      %v2194 = vshrl.u32 %v2193, 30
      %v2195 = vshll.u32 %v2194, 30
      %v2196 = vsub.s32 %v2192, %v2195
      %vm2197 = vcmp.lt.s32.totalorder %v2196, 0
      %v2198 = vsub.s32 0, %v2196
      %v2199 = vsel %vm2197, %v2198, %v2196
      %v2200 = vclz %v2199
      %v2201 = vsub.s32 %v2200, 2
      %vm2202 = vcmp.gt.s32.totalorder 0, %v2201
      %v2203 = vsel %vm2202, 0, %v2201
      %v2204 = vsub.s32 32, %v2203
      %v2205 = vshll.u32 %v2196, %v2203
      %v2206 = vshrl.u32 %v2188, %v2204
      %v2207 = vor.u32 %v2205, %v2206
      %v2208 = vsub.s32 4294967266, %v2203
      %v2209 = vadd.s32 %v2208, 127
      %v2210 = vshll.u32 %v2209, 23
      %v2211 = vor.u32 4788187, %v2210
      %v2212 = vand.u32 2147483647, %v2211
      %v2214 = vcvt.s32.f32 %v2207
      %v2215 = vmul.f32 %v2214, %v2212
      %v2216 = vxor.u32 %v2215, 2147483648
      %v2217 = vsel %vm2134, %v2216, %v2215
      %v2218 = vsub.s32 4, %v2194
      %v2219 = vsel %vm2134, %v2218, %v2194
      %v2220 = vsel %vm2133, %v1918, %v2217
      %v2221 = vsel %vm2133, 0, %v2219
      %v2222 = vcosq.f32.pop %v2220
      %v2223 = vsinq.f32.pop %v2220
      %vm2224 = vweird.f32 %v1918
      %v2225 = vadd.s32 %v2221, 3
      %v2226 = vand.u32 %v2225, 3
      %vm2227 = vcmp.lt.s32.totalorder %v2226, 2
      %vm2228 = vcmp.eq.s32.totalorder %v2226, 0
      %v2229 = vxor.u32 %v2223, 2147483648
      %v2230 = vsel %vm2228, %v2222, %v2229
      %vm2231 = vcmp.eq.s32.totalorder %v2226, 2
      %v2232 = vxor.u32 %v2222, 2147483648
      %v2233 = vsel %vm2231, %v2232, %v2223
      %v2234 = vsel %vm2227, %v2230, %v2233
      %v2235 = vsel %vm2224, nan, %v2234
      %v2236 = vand.u32 2147483647, %v1919
      %vm2237 = vcmp.le.f32.partialorder %v2236, 0.7853982
      %vm2238 = vcmp.lt.s32.totalorder %v1919, 0
      %v2239 = vand.u32 %v1919, 2139095040
      %v2240 = vshrl.u32 %v2239, 23
      %v2241 = vsub.s32 %v2240, 127
      %v2242 = vand.u32 2147483647, %v1919
      %v2243 = vand.u32 %v2242, 8388607
      %v2244 = vor.u32 %v2243, 8388608
      %v2245 = vsub.s32 0, %v2244
      %v2246 = vadd.s32 %v2241, 1
      %vm2247 = vcmp.gt.s32.totalorder %v2246, 0
      %v2248 = vsel %vm2247, %v2246, 0
      %v2249 = vshrl.u32 %v2248, 5
      %v2250 = vand.u32 %v2248, 31
      %v2251 = vsub.s32 32, %v2250
      %v2252 = vshrl.u32 683565275, %v2251
      %v2253 = vshll.u32 683565275, %v2250
      %v2254 = vshrl.u32 2475754826, %v2251
      %v2255 = vor.u32 %v2253, %v2254
      %v2256 = vshll.u32 2475754826, %v2250
      %v2257 = vshrl.u32 2131351028, %v2251
      %v2258 = vor.u32 %v2256, %v2257
      %v2259 = vshll.u32 2131351028, %v2250
      %v2260 = vshrl.u32 2102212464, %v2251
      %v2261 = vor.u32 %v2259, %v2260
      %v2262 = vshll.u32 2102212464, %v2250
      %v2263 = vshrl.u32 920167782, %v2251
      %v2264 = vor.u32 %v2262, %v2263
      %v2265 = vshll.u32 920167782, %v2250
      %v2266 = vshrl.u32 1326507024, %v2251
      %v2267 = vor.u32 %v2265, %v2266
      %vm2268 = vcmp.lt.s32.totalorder %v2249, 1
      %vm2269 = vcmp.lt.s32.totalorder %v2249, 2
      %vm2270 = vcmp.lt.s32.totalorder %v2249, 3
      %vm2271 = vcmp.lt.s32.totalorder %v2249, 4
      %v2272 = vsel %vm2268, %v2252, %v2255
      %v2273 = vsel %vm2271, %v2261, 2102212464
      %v2274 = vsel %vm2270, %v2258, %v2273
      %v2275 = vsel %vm2269, %v2272, %v2274
      %v2276 = vsel %vm2268, %v2255, %v2258
      %v2277 = vsel %vm2271, %v2264, 920167782
      %v2278 = vsel %vm2270, %v2261, %v2277
      %v2279 = vsel %vm2269, %v2276, %v2278
      %v2280 = vsel %vm2268, %v2258, %v2261
      %v2281 = vsel %vm2271, %v2267, 1326507024
      %v2282 = vsel %vm2270, %v2264, %v2281
      %v2283 = vsel %vm2269, %v2280, %v2282
      %v2284 = vshll.u32 %v2244, 8
      %v2285 = vmul.u32.u64.compose %v2284, %v2283
      %v2286 = vextract.low.u32 %v2285
      %v2287 = vextract.high.u32 %v2285
      %v2288 = vmul.u32.u64.compose %v2284, %v2279
      %v2289 = vextract.low.u32 %v2288
      %v2290 = vextract.high.u32 %v2288
      %v2291 = vmul.u32 %v2284, %v2275
      %v2292 = vadd.s32 %v2287, %v2289
      %vm2293 = vc.u32 %v2287, %v2289
      %v2294 = vadd.s32 %v2290, 1
      %v2295 = vsel %vm2293, %v2294, %v2290
      %v2296 = vadd.s32 %v2291, %v2295
      %v2297 = vadd.s32 %v2296, 536870912
      %v2298 = vshrl.u32 %v2297, 30
      %v2299 = vshll.u32 %v2298, 30
      %v2300 = vsub.s32 %v2296, %v2299
      %vm2301 = vcmp.lt.s32.totalorder %v2300, 0
      %v2302 = vsub.s32 0, %v2300
      %v2303 = vsel %vm2301, %v2302, %v2300
      %v2304 = vclz %v2303
      %v2305 = vsub.s32 %v2304, 2
      %vm2306 = vcmp.gt.s32.totalorder 0, %v2305
      %v2307 = vsel %vm2306, 0, %v2305
      %v2308 = vsub.s32 32, %v2307
      %v2309 = vshll.u32 %v2300, %v2307
      %v2310 = vshrl.u32 %v2292, %v2308
      %v2311 = vor.u32 %v2309, %v2310
      %v2312 = vsub.s32 4294967266, %v2307
      %v2313 = vadd.s32 %v2312, 127
      %v2314 = vshll.u32 %v2313, 23
      %v2315 = vor.u32 4788187, %v2314
      %v2316 = vand.u32 2147483647, %v2315
      %v2318 = vcvt.s32.f32 %v2311
      %v2319 = vmul.f32 %v2318, %v2316
      %v2320 = vxor.u32 %v2319, 2147483648
      %v2321 = vsel %vm2238, %v2320, %v2319
      %v2322 = vsub.s32 4, %v2298
      %v2323 = vsel %vm2238, %v2322, %v2298
      %v2324 = vsel %vm2237, %v1919, %v2321
      %v2325 = vsel %vm2237, 0, %v2323
      %v2326 = vcosq.f32.pop %v2324
      %v2327 = vsinq.f32.pop %v2324
      %vm2328 = vweird.f32 %v1919
      %v2329 = vadd.s32 %v2325, 3
      %v2330 = vand.u32 %v2329, 3
      %vm2331 = vcmp.lt.s32.totalorder %v2330, 2
      %vm2332 = vcmp.eq.s32.totalorder %v2330, 0
      %v2333 = vxor.u32 %v2327, 2147483648
      %v2334 = vsel %vm2332, %v2326, %v2333
      %vm2335 = vcmp.eq.s32.totalorder %v2330, 2
      %v2336 = vxor.u32 %v2326, 2147483648
      %v2337 = vsel %vm2335, %v2336, %v2327
      %v2338 = vsel %vm2331, %v2334, %v2337
      %v2339 = vsel %vm2328, nan, %v2338
      %v2340 = vand.u32 2147483647, %v1920
      %vm2341 = vcmp.le.f32.partialorder %v2340, 0.7853982
      %vm2342 = vcmp.lt.s32.totalorder %v1920, 0
      %v2343 = vand.u32 %v1920, 2139095040
      %v2344 = vshrl.u32 %v2343, 23
      %v2345 = vsub.s32 %v2344, 127
      %v2346 = vand.u32 2147483647, %v1920
      %v2347 = vand.u32 %v2346, 8388607
      %v2348 = vor.u32 %v2347, 8388608
      %v2349 = vsub.s32 0, %v2348
      %v2350 = vadd.s32 %v2345, 1
      %vm2351 = vcmp.gt.s32.totalorder %v2350, 0
      %v2352 = vsel %vm2351, %v2350, 0
      %v2353 = vshrl.u32 %v2352, 5
      %v2354 = vand.u32 %v2352, 31
      %v2355 = vsub.s32 32, %v2354
      %v2356 = vshrl.u32 683565275, %v2355
      %v2357 = vshll.u32 683565275, %v2354
      %v2358 = vshrl.u32 2475754826, %v2355
      %v2359 = vor.u32 %v2357, %v2358
      %v2360 = vshll.u32 2475754826, %v2354
      %v2361 = vshrl.u32 2131351028, %v2355
      %v2362 = vor.u32 %v2360, %v2361
      %v2363 = vshll.u32 2131351028, %v2354
      %v2364 = vshrl.u32 2102212464, %v2355
      %v2365 = vor.u32 %v2363, %v2364
      %v2366 = vshll.u32 2102212464, %v2354
      %v2367 = vshrl.u32 920167782, %v2355
      %v2368 = vor.u32 %v2366, %v2367
      %v2369 = vshll.u32 920167782, %v2354
      %v2370 = vshrl.u32 1326507024, %v2355
      %v2371 = vor.u32 %v2369, %v2370
      %vm2372 = vcmp.lt.s32.totalorder %v2353, 1
      %vm2373 = vcmp.lt.s32.totalorder %v2353, 2
      %vm2374 = vcmp.lt.s32.totalorder %v2353, 3
      %vm2375 = vcmp.lt.s32.totalorder %v2353, 4
      %v2376 = vsel %vm2372, %v2356, %v2359
      %v2377 = vsel %vm2375, %v2365, 2102212464
      %v2378 = vsel %vm2374, %v2362, %v2377
      %v2379 = vsel %vm2373, %v2376, %v2378
      %v2380 = vsel %vm2372, %v2359, %v2362
      %v2381 = vsel %vm2375, %v2368, 920167782
      %v2382 = vsel %vm2374, %v2365, %v2381
      %v2383 = vsel %vm2373, %v2380, %v2382
      %v2384 = vsel %vm2372, %v2362, %v2365
      %v2385 = vsel %vm2375, %v2371, 1326507024
      %v2386 = vsel %vm2374, %v2368, %v2385
      %v2387 = vsel %vm2373, %v2384, %v2386
      %v2388 = vshll.u32 %v2348, 8
      %v2389 = vmul.u32.u64.compose %v2388, %v2387
      %v2390 = vextract.low.u32 %v2389
      %v2391 = vextract.high.u32 %v2389
      %v2392 = vmul.u32.u64.compose %v2388, %v2383
      %v2393 = vextract.low.u32 %v2392
      %v2394 = vextract.high.u32 %v2392
      %v2395 = vmul.u32 %v2388, %v2379
      %v2396 = vadd.s32 %v2391, %v2393
      %vm2397 = vc.u32 %v2391, %v2393
      %v2398 = vadd.s32 %v2394, 1
      %v2399 = vsel %vm2397, %v2398, %v2394
      %v2400 = vadd.s32 %v2395, %v2399
      %v2401 = vadd.s32 %v2400, 536870912
      %v2402 = vshrl.u32 %v2401, 30
      %v2403 = vshll.u32 %v2402, 30
      %v2404 = vsub.s32 %v2400, %v2403
      %vm2405 = vcmp.lt.s32.totalorder %v2404, 0
      %v2406 = vsub.s32 0, %v2404
      %v2407 = vsel %vm2405, %v2406, %v2404
      %v2408 = vclz %v2407
      %v2409 = vsub.s32 %v2408, 2
      %vm2410 = vcmp.gt.s32.totalorder 0, %v2409
      %v2411 = vsel %vm2410, 0, %v2409
      %v2412 = vsub.s32 32, %v2411
      %v2413 = vshll.u32 %v2404, %v2411
      %v2414 = vshrl.u32 %v2396, %v2412
      %v2415 = vor.u32 %v2413, %v2414
      %v2416 = vsub.s32 4294967266, %v2411
      %v2417 = vadd.s32 %v2416, 127
      %v2418 = vshll.u32 %v2417, 23
      %v2419 = vor.u32 4788187, %v2418
      %v2420 = vand.u32 2147483647, %v2419
      %v2422 = vcvt.s32.f32 %v2415
      %v2423 = vmul.f32 %v2422, %v2420
      %v2424 = vxor.u32 %v2423, 2147483648
      %v2425 = vsel %vm2342, %v2424, %v2423
      %v2426 = vsub.s32 4, %v2402
      %v2427 = vsel %vm2342, %v2426, %v2402
      %v2428 = vsel %vm2341, %v1920, %v2425
      %v2429 = vsel %vm2341, 0, %v2427
      %v2430 = vcosq.f32.pop %v2428
      %v2431 = vsinq.f32.pop %v2428
      %vm2432 = vweird.f32 %v1920
      %v2433 = vadd.s32 %v2429, 3
      %v2434 = vand.u32 %v2433, 3
      %vm2435 = vcmp.lt.s32.totalorder %v2434, 2
      %vm2436 = vcmp.eq.s32.totalorder %v2434, 0
      %v2437 = vxor.u32 %v2431, 2147483648
      %v2438 = vsel %vm2436, %v2430, %v2437
      %vm2439 = vcmp.eq.s32.totalorder %v2434, 2
      %v2440 = vxor.u32 %v2430, 2147483648
      %v2441 = vsel %vm2439, %v2440, %v2431
      %v2442 = vsel %vm2435, %v2438, %v2441
      %v2443 = vsel %vm2432, nan, %v2442
      %v2444 = vand.u32 2147483647, %v1921
      %vm2445 = vcmp.le.f32.partialorder %v2444, 0.7853982
      %vm2446 = vcmp.lt.s32.totalorder %v1921, 0
      %v2447 = vand.u32 %v1921, 2139095040
      %v2448 = vshrl.u32 %v2447, 23
      %v2449 = vsub.s32 %v2448, 127
      %v2450 = vand.u32 2147483647, %v1921
      %v2451 = vand.u32 %v2450, 8388607
      %v2452 = vor.u32 %v2451, 8388608
      %v2453 = vsub.s32 0, %v2452
      %v2454 = vadd.s32 %v2449, 1
      %vm2455 = vcmp.gt.s32.totalorder %v2454, 0
      %v2456 = vsel %vm2455, %v2454, 0
      %v2457 = vshrl.u32 %v2456, 5
      %v2458 = vand.u32 %v2456, 31
      %v2459 = vsub.s32 32, %v2458
      %v2460 = vshrl.u32 683565275, %v2459
      %v2461 = vshll.u32 683565275, %v2458
      %v2462 = vshrl.u32 2475754826, %v2459
      %v2463 = vor.u32 %v2461, %v2462
      %v2464 = vshll.u32 2475754826, %v2458
      %v2465 = vshrl.u32 2131351028, %v2459
      %v2466 = vor.u32 %v2464, %v2465
      %v2467 = vshll.u32 2131351028, %v2458
      %v2468 = vshrl.u32 2102212464, %v2459
      %v2469 = vor.u32 %v2467, %v2468
      %v2470 = vshll.u32 2102212464, %v2458
      %v2471 = vshrl.u32 920167782, %v2459
      %v2472 = vor.u32 %v2470, %v2471
      %v2473 = vshll.u32 920167782, %v2458
      %v2474 = vshrl.u32 1326507024, %v2459
      %v2475 = vor.u32 %v2473, %v2474
      %vm2476 = vcmp.lt.s32.totalorder %v2457, 1
      %vm2477 = vcmp.lt.s32.totalorder %v2457, 2
      %vm2478 = vcmp.lt.s32.totalorder %v2457, 3
      %vm2479 = vcmp.lt.s32.totalorder %v2457, 4
      %v2480 = vsel %vm2476, %v2460, %v2463
      %v2481 = vsel %vm2479, %v2469, 2102212464
      %v2482 = vsel %vm2478, %v2466, %v2481
      %v2483 = vsel %vm2477, %v2480, %v2482
      %v2484 = vsel %vm2476, %v2463, %v2466
      %v2485 = vsel %vm2479, %v2472, 920167782
      %v2486 = vsel %vm2478, %v2469, %v2485
      %v2487 = vsel %vm2477, %v2484, %v2486
      %v2488 = vsel %vm2476, %v2466, %v2469
      %v2489 = vsel %vm2479, %v2475, 1326507024
      %v2490 = vsel %vm2478, %v2472, %v2489
      %v2491 = vsel %vm2477, %v2488, %v2490
      %v2492 = vshll.u32 %v2452, 8
      %v2493 = vmul.u32.u64.compose %v2492, %v2491
      %v2494 = vextract.low.u32 %v2493
      %v2495 = vextract.high.u32 %v2493
      %v2496 = vmul.u32.u64.compose %v2492, %v2487
      %v2497 = vextract.low.u32 %v2496
      %v2498 = vextract.high.u32 %v2496
      %v2499 = vmul.u32 %v2492, %v2483
      %v2500 = vadd.s32 %v2495, %v2497
      %vm2501 = vc.u32 %v2495, %v2497
      %v2502 = vadd.s32 %v2498, 1
      %v2503 = vsel %vm2501, %v2502, %v2498
      %v2504 = vadd.s32 %v2499, %v2503
      %v2505 = vadd.s32 %v2504, 536870912
      %v2506 = vshrl.u32 %v2505, 30
      %v2507 = vshll.u32 %v2506, 30
      %v2508 = vsub.s32 %v2504, %v2507
      %vm2509 = vcmp.lt.s32.totalorder %v2508, 0
      %v2510 = vsub.s32 0, %v2508
      %v2511 = vsel %vm2509, %v2510, %v2508
      %v2512 = vclz %v2511
      %v2513 = vsub.s32 %v2512, 2
      %vm2514 = vcmp.gt.s32.totalorder 0, %v2513
      %v2515 = vsel %vm2514, 0, %v2513
      %v2516 = vsub.s32 32, %v2515
      %v2517 = vshll.u32 %v2508, %v2515
      %v2518 = vshrl.u32 %v2500, %v2516
      %v2519 = vor.u32 %v2517, %v2518
      %v2520 = vsub.s32 4294967266, %v2515
      %v2521 = vadd.s32 %v2520, 127
      %v2522 = vshll.u32 %v2521, 23
      %v2523 = vor.u32 4788187, %v2522
      %v2524 = vand.u32 2147483647, %v2523
      %v2526 = vcvt.s32.f32 %v2519
      %v2527 = vmul.f32 %v2526, %v2524
      %v2528 = vxor.u32 %v2527, 2147483648
      %v2529 = vsel %vm2446, %v2528, %v2527
      %v2530 = vsub.s32 4, %v2506
      %v2531 = vsel %vm2446, %v2530, %v2506
      %v2532 = vsel %vm2445, %v1921, %v2529
      %v2533 = vsel %vm2445, 0, %v2531
      %v2534 = vcosq.f32.pop %v2532
      %v2535 = vsinq.f32.pop %v2532
      %vm2536 = vweird.f32 %v1921
      %v2537 = vadd.s32 %v2533, 3
      %v2538 = vand.u32 %v2537, 3
      %vm2539 = vcmp.lt.s32.totalorder %v2538, 2
      %vm2540 = vcmp.eq.s32.totalorder %v2538, 0
      %v2541 = vxor.u32 %v2535, 2147483648
      %v2542 = vsel %vm2540, %v2534, %v2541
      %vm2543 = vcmp.eq.s32.totalorder %v2538, 2
      %v2544 = vxor.u32 %v2534, 2147483648
      %v2545 = vsel %vm2543, %v2544, %v2535
      %v2546 = vsel %vm2539, %v2542, %v2545
      %v2547 = vsel %vm2536, nan, %v2546
      %v2548 = vand.u32 2147483647, %v1922
      %vm2549 = vcmp.le.f32.partialorder %v2548, 0.7853982
      %vm2550 = vcmp.lt.s32.totalorder %v1922, 0
      %v2551 = vand.u32 %v1922, 2139095040
      %v2552 = vshrl.u32 %v2551, 23
      %v2553 = vsub.s32 %v2552, 127
      %v2554 = vand.u32 2147483647, %v1922
      %v2555 = vand.u32 %v2554, 8388607
      %v2556 = vor.u32 %v2555, 8388608
      %v2557 = vsub.s32 0, %v2556
      %v2558 = vadd.s32 %v2553, 1
      %vm2559 = vcmp.gt.s32.totalorder %v2558, 0
      %v2560 = vsel %vm2559, %v2558, 0
      %v2561 = vshrl.u32 %v2560, 5
      %v2562 = vand.u32 %v2560, 31
      %v2563 = vsub.s32 32, %v2562
      %v2564 = vshrl.u32 683565275, %v2563
      %v2565 = vshll.u32 683565275, %v2562
      %v2566 = vshrl.u32 2475754826, %v2563
      %v2567 = vor.u32 %v2565, %v2566
      %v2568 = vshll.u32 2475754826, %v2562
      %v2569 = vshrl.u32 2131351028, %v2563
      %v2570 = vor.u32 %v2568, %v2569
      %v2571 = vshll.u32 2131351028, %v2562
      %v2572 = vshrl.u32 2102212464, %v2563
      %v2573 = vor.u32 %v2571, %v2572
      %v2574 = vshll.u32 2102212464, %v2562
      %v2575 = vshrl.u32 920167782, %v2563
      %v2576 = vor.u32 %v2574, %v2575
      %v2577 = vshll.u32 920167782, %v2562
      %v2578 = vshrl.u32 1326507024, %v2563
      %v2579 = vor.u32 %v2577, %v2578
      %vm2580 = vcmp.lt.s32.totalorder %v2561, 1
      %vm2581 = vcmp.lt.s32.totalorder %v2561, 2
      %vm2582 = vcmp.lt.s32.totalorder %v2561, 3
      %vm2583 = vcmp.lt.s32.totalorder %v2561, 4
      %v2584 = vsel %vm2580, %v2564, %v2567
      %v2585 = vsel %vm2583, %v2573, 2102212464
      %v2586 = vsel %vm2582, %v2570, %v2585
      %v2587 = vsel %vm2581, %v2584, %v2586
      %v2588 = vsel %vm2580, %v2567, %v2570
      %v2589 = vsel %vm2583, %v2576, 920167782
      %v2590 = vsel %vm2582, %v2573, %v2589
      %v2591 = vsel %vm2581, %v2588, %v2590
      %v2592 = vsel %vm2580, %v2570, %v2573
      %v2593 = vsel %vm2583, %v2579, 1326507024
      %v2594 = vsel %vm2582, %v2576, %v2593
      %v2595 = vsel %vm2581, %v2592, %v2594
      %v2596 = vshll.u32 %v2556, 8
      %v2597 = vmul.u32.u64.compose %v2596, %v2595
      %v2598 = vextract.low.u32 %v2597
      %v2599 = vextract.high.u32 %v2597
      %v2600 = vmul.u32.u64.compose %v2596, %v2591
      %v2601 = vextract.low.u32 %v2600
      %v2602 = vextract.high.u32 %v2600
      %v2603 = vmul.u32 %v2596, %v2587
      %v2604 = vadd.s32 %v2599, %v2601
      %vm2605 = vc.u32 %v2599, %v2601
      %v2606 = vadd.s32 %v2602, 1
      %v2607 = vsel %vm2605, %v2606, %v2602
      %v2608 = vadd.s32 %v2603, %v2607
      %v2609 = vadd.s32 %v2608, 536870912
      %v2610 = vshrl.u32 %v2609, 30
      %v2611 = vshll.u32 %v2610, 30
      %v2612 = vsub.s32 %v2608, %v2611
      %vm2613 = vcmp.lt.s32.totalorder %v2612, 0
      %v2614 = vsub.s32 0, %v2612
      %v2615 = vsel %vm2613, %v2614, %v2612
      %v2616 = vclz %v2615
      %v2617 = vsub.s32 %v2616, 2
      %vm2618 = vcmp.gt.s32.totalorder 0, %v2617
      %v2619 = vsel %vm2618, 0, %v2617
      %v2620 = vsub.s32 32, %v2619
      %v2621 = vshll.u32 %v2612, %v2619
      %v2622 = vshrl.u32 %v2604, %v2620
      %v2623 = vor.u32 %v2621, %v2622
      %v2624 = vsub.s32 4294967266, %v2619
      %v2625 = vadd.s32 %v2624, 127
      %v2626 = vshll.u32 %v2625, 23
      %v2627 = vor.u32 4788187, %v2626
      %v2628 = vand.u32 2147483647, %v2627
      %v2630 = vcvt.s32.f32 %v2623
      %v2631 = vmul.f32 %v2630, %v2628
      %v2632 = vxor.u32 %v2631, 2147483648
      %v2633 = vsel %vm2550, %v2632, %v2631
      %v2634 = vsub.s32 4, %v2610
      %v2635 = vsel %vm2550, %v2634, %v2610
      %v2636 = vsel %vm2549, %v1922, %v2633
      %v2637 = vsel %vm2549, 0, %v2635
      %v2638 = vcosq.f32.pop %v2636
      %v2639 = vsinq.f32.pop %v2636
      %vm2640 = vweird.f32 %v1922
      %v2641 = vadd.s32 %v2637, 3
      %v2642 = vand.u32 %v2641, 3
      %vm2643 = vcmp.lt.s32.totalorder %v2642, 2
      %vm2644 = vcmp.eq.s32.totalorder %v2642, 0
      %v2645 = vxor.u32 %v2639, 2147483648
      %v2646 = vsel %vm2644, %v2638, %v2645
      %vm2647 = vcmp.eq.s32.totalorder %v2642, 2
      %v2648 = vxor.u32 %v2638, 2147483648
      %v2649 = vsel %vm2647, %v2648, %v2639
      %v2650 = vsel %vm2643, %v2646, %v2649
      %v2651 = vsel %vm2640, nan, %v2650
      %v2652 = vand.u32 2147483647, %v1923
      %vm2653 = vcmp.le.f32.partialorder %v2652, 0.7853982
      %vm2654 = vcmp.lt.s32.totalorder %v1923, 0
      %v2655 = vand.u32 %v1923, 2139095040
      %v2656 = vshrl.u32 %v2655, 23
      %v2657 = vsub.s32 %v2656, 127
      %v2658 = vand.u32 2147483647, %v1923
      %v2659 = vand.u32 %v2658, 8388607
      %v2660 = vor.u32 %v2659, 8388608
      %v2661 = vsub.s32 0, %v2660
      %v2662 = vadd.s32 %v2657, 1
      %vm2663 = vcmp.gt.s32.totalorder %v2662, 0
      %v2664 = vsel %vm2663, %v2662, 0
      %v2665 = vshrl.u32 %v2664, 5
      %v2666 = vand.u32 %v2664, 31
      %v2667 = vsub.s32 32, %v2666
      %v2668 = vshrl.u32 683565275, %v2667
      %v2669 = vshll.u32 683565275, %v2666
      %v2670 = vshrl.u32 2475754826, %v2667
      %v2671 = vor.u32 %v2669, %v2670
      %v2672 = vshll.u32 2475754826, %v2666
      %v2673 = vshrl.u32 2131351028, %v2667
      %v2674 = vor.u32 %v2672, %v2673
      %v2675 = vshll.u32 2131351028, %v2666
      %v2676 = vshrl.u32 2102212464, %v2667
      %v2677 = vor.u32 %v2675, %v2676
      %v2678 = vshll.u32 2102212464, %v2666
      %v2679 = vshrl.u32 920167782, %v2667
      %v2680 = vor.u32 %v2678, %v2679
      %v2681 = vshll.u32 920167782, %v2666
      %v2682 = vshrl.u32 1326507024, %v2667
      %v2683 = vor.u32 %v2681, %v2682
      %vm2684 = vcmp.lt.s32.totalorder %v2665, 1
      %vm2685 = vcmp.lt.s32.totalorder %v2665, 2
      %vm2686 = vcmp.lt.s32.totalorder %v2665, 3
      %vm2687 = vcmp.lt.s32.totalorder %v2665, 4
      %v2688 = vsel %vm2684, %v2668, %v2671
      %v2689 = vsel %vm2687, %v2677, 2102212464
      %v2690 = vsel %vm2686, %v2674, %v2689
      %v2691 = vsel %vm2685, %v2688, %v2690
      %v2692 = vsel %vm2684, %v2671, %v2674
      %v2693 = vsel %vm2687, %v2680, 920167782
      %v2694 = vsel %vm2686, %v2677, %v2693
      %v2695 = vsel %vm2685, %v2692, %v2694
      %v2696 = vsel %vm2684, %v2674, %v2677
      %v2697 = vsel %vm2687, %v2683, 1326507024
      %v2698 = vsel %vm2686, %v2680, %v2697
      %v2699 = vsel %vm2685, %v2696, %v2698
      %v2700 = vshll.u32 %v2660, 8
      %v2701 = vmul.u32.u64.compose %v2700, %v2699
      %v2702 = vextract.low.u32 %v2701
      %v2703 = vextract.high.u32 %v2701
      %v2704 = vmul.u32.u64.compose %v2700, %v2695
      %v2705 = vextract.low.u32 %v2704
      %v2706 = vextract.high.u32 %v2704
      %v2707 = vmul.u32 %v2700, %v2691
      %v2708 = vadd.s32 %v2703, %v2705
      %vm2709 = vc.u32 %v2703, %v2705
      %v2710 = vadd.s32 %v2706, 1
      %v2711 = vsel %vm2709, %v2710, %v2706
      %v2712 = vadd.s32 %v2707, %v2711
      %v2713 = vadd.s32 %v2712, 536870912
      %v2714 = vshrl.u32 %v2713, 30
      %v2715 = vshll.u32 %v2714, 30
      %v2716 = vsub.s32 %v2712, %v2715
      %vm2717 = vcmp.lt.s32.totalorder %v2716, 0
      %v2718 = vsub.s32 0, %v2716
      %v2719 = vsel %vm2717, %v2718, %v2716
      %v2720 = vclz %v2719
      %v2721 = vsub.s32 %v2720, 2
      %vm2722 = vcmp.gt.s32.totalorder 0, %v2721
      %v2723 = vsel %vm2722, 0, %v2721
      %v2724 = vsub.s32 32, %v2723
      %v2725 = vshll.u32 %v2716, %v2723
      %v2726 = vshrl.u32 %v2708, %v2724
      %v2727 = vor.u32 %v2725, %v2726
      %v2728 = vsub.s32 4294967266, %v2723
      %v2729 = vadd.s32 %v2728, 127
      %v2730 = vshll.u32 %v2729, 23
      %v2731 = vor.u32 4788187, %v2730
      %v2732 = vand.u32 2147483647, %v2731
      %v2734 = vcvt.s32.f32 %v2727
      %v2735 = vmul.f32 %v2734, %v2732
      %v2736 = vxor.u32 %v2735, 2147483648
      %v2737 = vsel %vm2654, %v2736, %v2735
      %v2738 = vsub.s32 4, %v2714
      %v2739 = vsel %vm2654, %v2738, %v2714
      %v2740 = vsel %vm2653, %v1923, %v2737
      %v2741 = vsel %vm2653, 0, %v2739
      %v2742 = vcosq.f32.pop %v2740
      %v2743 = vsinq.f32.pop %v2740
      %vm2744 = vweird.f32 %v1923
      %v2745 = vadd.s32 %v2741, 3
      %v2746 = vand.u32 %v2745, 3
      %vm2747 = vcmp.lt.s32.totalorder %v2746, 2
      %vm2748 = vcmp.eq.s32.totalorder %v2746, 0
      %v2749 = vxor.u32 %v2743, 2147483648
      %v2750 = vsel %vm2748, %v2742, %v2749
      %vm2751 = vcmp.eq.s32.totalorder %v2746, 2
      %v2752 = vxor.u32 %v2742, 2147483648
      %v2753 = vsel %vm2751, %v2752, %v2743
      %v2754 = vsel %vm2747, %v2750, %v2753
      %v2755 = vsel %vm2744, nan, %v2754
      %v2756 = vpack.c.bf16 %v1812, %v1810
      %v2757 = vpack.c.bf16 %v1813, %v1811
      %v2758 = vpack.c.bf16 %v1816, %v1814
      %v2759 = vpack.c.bf16 %v1817, %v1815
      %v2760 = vpack.c.bf16 %v2235, %v2027
      %v2761 = vpack.c.bf16 %v2339, %v2131
      %v2762 = vpack.c.bf16 %v2651, %v2443
      %v2763 = vpack.c.bf16 %v2755, %v2547
      %s2764 = scalar_lea.vmem %s6, 16
      %v2765 = vld [vmem:[%s2764] sm:$0xf]
      %v2766 = vld [vmem:[%s2764 + $0x4] sm:$0xf]
      %v2767 = vld [vmem:[%s2764 + $0x8] sm:$0xf]
      %v2768 = vld [vmem:[%s2764 + $0xc] sm:$0xf]
      %v2769 = vld [vmem:[#allocation2 + $0x80] sm:$0xff]
      %v2770 = vld [vmem:[#allocation2 + $0x88] sm:$0xff]
      %v2771 = vld [vmem:[#allocation2 + $0x90] sm:$0xff]
      %v2772 = vld [vmem:[#allocation2 + $0x98] sm:$0xff]
      %v2773 = vld [vmem:[#allocation2 + $0xa0] sm:$0xff]
      %v2774 = vld [vmem:[#allocation2 + $0xa8] sm:$0xff]
      %v2775 = vld [vmem:[#allocation2 + $0xb0] sm:$0xff]
      %v2776 = vld [vmem:[#allocation2 + $0xb8] sm:$0xff]
      %v2781 = vunpack.c.l.b16 %v2765
      %v2782 = vunpack.c.l.b16 %v2766
      %v2783 = vunpack.c.l.b16 %v2767
      %v2784 = vunpack.c.l.b16 %v2768
      %v2785 = vpack.c.b16 %v2782, %v2781
      %v2786 = vpack.c.b16 %v2784, %v2783
      %v2788 = vsel %vm1718, %v2785, 0
      %v2791 = vsel %vm1718, %v2786, 0
      %2793 = vmatprep.subr.bf16.mxu0 %v2757
      %2794 = vmatpush1.bf16.msra.mxu0 %v2756
      %2795 = vmatprep.subr.bf16.mxu0 %v2759
      %2796 = vmatpush1.bf16.msra.mxu0 %v2758
      %2797 = vmatprep.subr.bf16.mxu0 %v2761
      %2798 = vmatpush1.bf16.msra.mxu0 %v2760
      %2799 = vmatprep.subr.bf16.mxu0 %v2763
      %2800 = vmatpush1.bf16.msra.mxu0 %v2762
      %2801 = vmatprep.subr.bf16.mxu0 0
      %2802 = vmatpush1.bf16.msra.mxu0 0
      %2803 = vmatprep.subr.bf16.mxu0 0
      %2804 = vmatpush1.bf16.msra.mxu0 0
      %2805 = vmatprep.subr.bf16.mxu0 0
      %2806 = vmatpush1.bf16.msra.mxu0 0
      %2807 = vmatprep.subr.bf16.mxu0 0
      %2808 = vmatpush1.bf16.msra.mxu0 0
      %2809 = vmatprep.subr.bf16.mxu0 0
      %2810 = vmatpush1.bf16.msra.mxu0 0
      %2811 = vmatprep.subr.bf16.mxu0 0
      %2812 = vmatpush1.bf16.msra.mxu0 0
      %2813 = vmatprep.subr.bf16.mxu0 0
      %2814 = vmatpush1.bf16.msra.mxu0 0
      %2815 = vmatprep.subr.bf16.mxu0 0
      %2816 = vmatpush1.bf16.msra.mxu0 0
      %2817 = vmatprep.subr.bf16.mxu0 0
      %2818 = vmatpush1.bf16.msra.mxu0 0
      %2819 = vmatprep.subr.bf16.mxu0 0
      %2820 = vmatpush1.bf16.msra.mxu0 0
      %2821 = vmatprep.subr.bf16.mxu0 0
      %2822 = vmatpush1.bf16.msra.mxu0 0
      %2823 = vmatprep.subr.bf16.mxu0 0
      %2824 = vmatpush1.bf16.msra.mxu0 0
      %2825 = vmatprep.mubr.bf16.mxu0 0
      %2826 = vmatmul.mubr.bf16.gmra.mrb[0].mxu0 %v2788
      %v2827 = vpop.f32.mrb[0].mxu0
      %v2828 = vadd.f32 %v2769, %v2827
      %v2829 = vpop.f32.mrb[0].mxu0
      %v2830 = vadd.f32 %v2770, %v2829
      %v2831 = vpop.f32.mrb[0].mxu0
      %v2832 = vadd.f32 %v2771, %v2831
      %v2833 = vpop.f32.mrb[0].mxu0
      %v2834 = vadd.f32 %v2772, %v2833
      %2835 = vmatprep.mubr.bf16.mxu0 0
      %2836 = vmatmul.mubr.bf16.gmra.mrb[0].mxu0 %v2791
      %v2837 = vpop.f32.mrb[0].mxu0
      %v2838 = vadd.f32 %v2773, %v2837
      %v2839 = vpop.f32.mrb[0].mxu0
      %v2840 = vadd.f32 %v2774, %v2839
      %v2841 = vpop.f32.mrb[0].mxu0
      %v2842 = vadd.f32 %v2775, %v2841
      %v2843 = vpop.f32.mrb[0].mxu0
      %v2844 = vadd.f32 %v2776, %v2843
      %2845 = vdwg.mxu0
      %s2846 = scalar_lea.vmem %s7, 32
      %v2847 = vld [vmem:[%s2846] sm:$0xff]
      %v2848 = vld [vmem:[%s2846 + $0x8] sm:$0xff]
      %v2849 = vld [vmem:[%s2846 + $0x10] sm:$0xff]
      %v2850 = vld [vmem:[%s2846 + $0x18] sm:$0xff]
      %2852 = vset.pattern.permute.xlu0 0
      %2853 = vperm.xlu0 %2852, %v2847
      %v2854 = vpop.permute.xlu0 %2853
      %2857 = vset.pattern.permute.xlu0 0
      %2858 = vperm.xlu0 %2857, %v2848
      %v2859 = vpop.permute.xlu0 %2858
      %2862 = vset.pattern.permute.xlu0 0
      %2863 = vperm.xlu0 %2862, %v2849
      %v2864 = vpop.permute.xlu0 %2863
      %2867 = vset.pattern.permute.xlu0 0
      %2868 = vperm.xlu0 %2867, %v2850
      %v2869 = vpop.permute.xlu0 %2868
      %v2871 = vadd.f32 %v2828, %v2854
      %v2872 = vadd.f32 %v2830, %v2854
      %v2873 = vadd.f32 %v2832, %v2859
      %v2874 = vadd.f32 %v2834, %v2859
      %v2875 = vadd.f32 %v2838, %v2864
      %v2876 = vadd.f32 %v2840, %v2864
      %v2877 = vadd.f32 %v2842, %v2869
      %v2878 = vadd.f32 %v2844, %v2869
      %v2879 = vmax.f32 %v2871, 0.0
      %v2880 = vmax.f32 %v2872, 0.0
      %v2881 = vmax.f32 %v2873, 0.0
      %v2882 = vmax.f32 %v2874, 0.0
      %v2883 = vmax.f32 %v2875, 0.0
      %v2884 = vmax.f32 %v2876, 0.0
      %v2885 = vmax.f32 %v2877, 0.0
      %v2886 = vmax.f32 %v2878, 0.0
      %s2887 = scalar_lea.vmem %s8, 16
      %v2888 = vld [vmem:[%s2887] sm:$0xf]
      %v2889 = vld [vmem:[%s2887 + $0x4] sm:$0xf]
      %v2890 = vld [vmem:[%s2887 + $0x8] sm:$0xf]
      %v2891 = vld [vmem:[%s2887 + $0xc] sm:$0xf]
      %s2892 = scalar_lea.vmem %s9, 32
      %v2893 = vld [vmem:[%s2892] sm:$0xff]
      %v2894 = vld [vmem:[%s2892 + $0x8] sm:$0xff]
      %v2895 = vld [vmem:[%s2892 + $0x10] sm:$0xff]
      %v2896 = vld [vmem:[%s2892 + $0x18] sm:$0xff]
      %2898 = vset.pattern.permute.xlu0 0
      %2899 = vperm.xlu0 %2898, %v2893
      %v2900 = vpop.permute.xlu0 %2899
      %2903 = vset.pattern.permute.xlu0 0
      %2904 = vperm.xlu0 %2903, %v2894
      %v2905 = vpop.permute.xlu0 %2904
      %2908 = vset.pattern.permute.xlu0 0
      %2909 = vperm.xlu0 %2908, %v2895
      %v2910 = vpop.permute.xlu0 %2909
      %2913 = vset.pattern.permute.xlu0 0
      %2914 = vperm.xlu0 %2913, %v2896
      %v2915 = vpop.permute.xlu0 %2914
      %v2921 = vunpack.c.l.b16 %v2888
      %v2922 = vunpack.c.l.b16 %v2889
      %v2923 = vunpack.c.l.b16 %v2890
      %v2924 = vunpack.c.l.b16 %v2891
      %v2925 = vpack.c.b16 %v2922, %v2921
      %v2926 = vpack.c.b16 %v2924, %v2923
      %v2928 = vsel %vm1856, %v2925, 0
      %v2931 = vsel %vm1856, %v2926, 0
      %2933 = vmatprep.subr.bf16.mxu0 %v2761
      %2934 = vmatpush1.bf16.msra.mxu0 %v2760
      %2935 = vmatprep.subr.bf16.mxu0 %v2763
      %2936 = vmatpush1.bf16.msra.mxu0 %v2762
      %2937 = vmatprep.subr.bf16.mxu0 0
      %2938 = vmatpush1.bf16.msra.mxu0 0
      %2939 = vmatprep.subr.bf16.mxu0 0
      %2940 = vmatpush1.bf16.msra.mxu0 0
      %2941 = vmatprep.subr.bf16.mxu0 0
      %2942 = vmatpush1.bf16.msra.mxu0 0
      %2943 = vmatprep.subr.bf16.mxu0 0
      %2944 = vmatpush1.bf16.msra.mxu0 0
      %2945 = vmatprep.subr.bf16.mxu0 0
      %2946 = vmatpush1.bf16.msra.mxu0 0
      %2947 = vmatprep.subr.bf16.mxu0 0
      %2948 = vmatpush1.bf16.msra.mxu0 0
      %2949 = vmatprep.subr.bf16.mxu0 0
      %2950 = vmatpush1.bf16.msra.mxu0 0
      %2951 = vmatprep.subr.bf16.mxu0 0
      %2952 = vmatpush1.bf16.msra.mxu0 0
      %2953 = vmatprep.subr.bf16.mxu0 0
      %2954 = vmatpush1.bf16.msra.mxu0 0
      %2955 = vmatprep.subr.bf16.mxu0 0
      %2956 = vmatpush1.bf16.msra.mxu0 0
      %2957 = vmatprep.subr.bf16.mxu0 0
      %2958 = vmatpush1.bf16.msra.mxu0 0
      %2959 = vmatprep.subr.bf16.mxu0 0
      %2960 = vmatpush1.bf16.msra.mxu0 0
      %2961 = vmatprep.subr.bf16.mxu0 0
      %2962 = vmatpush1.bf16.msra.mxu0 0
      %2963 = vmatprep.subr.bf16.mxu0 0
      %2964 = vmatpush1.bf16.msra.mxu0 0
      %2965 = vmatprep.mubr.bf16.mxu0 0
      %2966 = vmatmul.mubr.bf16.gmra.mrb[0].mxu0 %v2928
      %v2967 = vpop.f32.mrb[0].mxu0
      %v2968 = vadd.f32 %v2900, %v2967
      %v2969 = vpop.f32.mrb[0].mxu0
      %v2970 = vadd.f32 %v2900, %v2969
      %v2971 = vpop.f32.mrb[0].mxu0
      %v2972 = vadd.f32 %v2905, %v2971
      %v2973 = vpop.f32.mrb[0].mxu0
      %v2974 = vadd.f32 %v2905, %v2973
      %2975 = vmatprep.mubr.bf16.mxu0 0
      %2976 = vmatmul.mubr.bf16.gmra.mrb[0].mxu0 %v2931
      %v2977 = vpop.f32.mrb[0].mxu0
      %v2978 = vadd.f32 %v2910, %v2977
      %v2979 = vpop.f32.mrb[0].mxu0
      %v2980 = vadd.f32 %v2910, %v2979
      %v2981 = vpop.f32.mrb[0].mxu0
      %v2982 = vadd.f32 %v2915, %v2981
      %v2983 = vpop.f32.mrb[0].mxu0
      %v2984 = vadd.f32 %v2915, %v2983
      %2985 = vdwg.mxu0
      %v2986 = vadd.f32 %v2968, %v2879
      %v2987 = vadd.f32 %v2970, %v2880
      %v2988 = vadd.f32 %v2972, %v2881
      %v2989 = vadd.f32 %v2974, %v2882
      %v2990 = vadd.f32 %v2978, %v2883
      %v2991 = vadd.f32 %v2980, %v2884
      %v2992 = vadd.f32 %v2982, %v2885
      %v2993 = vadd.f32 %v2984, %v2886
      %v2994 = vand.u32 2147483647, %v2986
      %vm2995 = vcmp.le.f32.partialorder %v2994, 0.7853982
      %vm2996 = vcmp.lt.s32.totalorder %v2986, 0
      %v2997 = vand.u32 %v2986, 2139095040
      %v2998 = vshrl.u32 %v2997, 23
      %v2999 = vsub.s32 %v2998, 127
      %v3000 = vand.u32 2147483647, %v2986
      %v3001 = vand.u32 %v3000, 8388607
      %v3002 = vor.u32 %v3001, 8388608
      %v3003 = vsub.s32 0, %v3002
      %v3004 = vadd.s32 %v2999, 1
      %vm3005 = vcmp.gt.s32.totalorder %v3004, 0
      %v3006 = vsel %vm3005, %v3004, 0
      %v3007 = vshrl.u32 %v3006, 5
      %v3008 = vand.u32 %v3006, 31
      %v3009 = vsub.s32 32, %v3008
      %v3010 = vshrl.u32 683565275, %v3009
      %v3011 = vshll.u32 683565275, %v3008
      %v3012 = vshrl.u32 2475754826, %v3009
      %v3013 = vor.u32 %v3011, %v3012
      %v3014 = vshll.u32 2475754826, %v3008
      %v3015 = vshrl.u32 2131351028, %v3009
      %v3016 = vor.u32 %v3014, %v3015
      %v3017 = vshll.u32 2131351028, %v3008
      %v3018 = vshrl.u32 2102212464, %v3009
      %v3019 = vor.u32 %v3017, %v3018
      %v3020 = vshll.u32 2102212464, %v3008
      %v3021 = vshrl.u32 920167782, %v3009
      %v3022 = vor.u32 %v3020, %v3021
      %v3023 = vshll.u32 920167782, %v3008
      %v3024 = vshrl.u32 1326507024, %v3009
      %v3025 = vor.u32 %v3023, %v3024
      %vm3026 = vcmp.lt.s32.totalorder %v3007, 1
      %vm3027 = vcmp.lt.s32.totalorder %v3007, 2
      %vm3028 = vcmp.lt.s32.totalorder %v3007, 3
      %vm3029 = vcmp.lt.s32.totalorder %v3007, 4
      %v3030 = vsel %vm3026, %v3010, %v3013
      %v3031 = vsel %vm3029, %v3019, 2102212464
      %v3032 = vsel %vm3028, %v3016, %v3031
      %v3033 = vsel %vm3027, %v3030, %v3032
      %v3034 = vsel %vm3026, %v3013, %v3016
      %v3035 = vsel %vm3029, %v3022, 920167782
      %v3036 = vsel %vm3028, %v3019, %v3035
      %v3037 = vsel %vm3027, %v3034, %v3036
      %v3038 = vsel %vm3026, %v3016, %v3019
      %v3039 = vsel %vm3029, %v3025, 1326507024
      %v3040 = vsel %vm3028, %v3022, %v3039
      %v3041 = vsel %vm3027, %v3038, %v3040
      %v3042 = vshll.u32 %v3002, 8
      %v3043 = vmul.u32.u64.compose %v3042, %v3041
      %v3044 = vextract.low.u32 %v3043
      %v3045 = vextract.high.u32 %v3043
      %v3046 = vmul.u32.u64.compose %v3042, %v3037
      %v3047 = vextract.low.u32 %v3046
      %v3048 = vextract.high.u32 %v3046
      %v3049 = vmul.u32 %v3042, %v3033
      %v3050 = vadd.s32 %v3045, %v3047
      %vm3051 = vc.u32 %v3045, %v3047
      %v3052 = vadd.s32 %v3048, 1
      %v3053 = vsel %vm3051, %v3052, %v3048
      %v3054 = vadd.s32 %v3049, %v3053
      %v3055 = vadd.s32 %v3054, 536870912
      %v3056 = vshrl.u32 %v3055, 30
      %v3057 = vshll.u32 %v3056, 30
      %v3058 = vsub.s32 %v3054, %v3057
      %vm3059 = vcmp.lt.s32.totalorder %v3058, 0
      %v3060 = vsub.s32 0, %v3058
      %v3061 = vsel %vm3059, %v3060, %v3058
      %v3062 = vclz %v3061
      %v3063 = vsub.s32 %v3062, 2
      %vm3064 = vcmp.gt.s32.totalorder 0, %v3063
      %v3065 = vsel %vm3064, 0, %v3063
      %v3066 = vsub.s32 32, %v3065
      %v3067 = vshll.u32 %v3058, %v3065
      %v3068 = vshrl.u32 %v3050, %v3066
      %v3069 = vor.u32 %v3067, %v3068
      %v3070 = vsub.s32 4294967266, %v3065
      %v3071 = vadd.s32 %v3070, 127
      %v3072 = vshll.u32 %v3071, 23
      %v3073 = vor.u32 4788187, %v3072
      %v3074 = vand.u32 2147483647, %v3073
      %v3076 = vcvt.s32.f32 %v3069
      %v3077 = vmul.f32 %v3076, %v3074
      %v3078 = vxor.u32 %v3077, 2147483648
      %v3079 = vsel %vm2996, %v3078, %v3077
      %v3080 = vsub.s32 4, %v3056
      %v3081 = vsel %vm2996, %v3080, %v3056
      %v3082 = vsel %vm2995, %v2986, %v3079
      %v3083 = vsel %vm2995, 0, %v3081
      %v3084 = vcosq.f32.pop %v3082
      %v3085 = vsinq.f32.pop %v3082
      %vm3086 = vweird.f32 %v2986
      %v3087 = vadd.s32 %v3083, 3
      %v3088 = vand.u32 %v3087, 3
      %vm3089 = vcmp.lt.s32.totalorder %v3088, 2
      %vm3090 = vcmp.eq.s32.totalorder %v3088, 0
      %v3091 = vxor.u32 %v3085, 2147483648
      %v3092 = vsel %vm3090, %v3084, %v3091
      %vm3093 = vcmp.eq.s32.totalorder %v3088, 2
      %v3094 = vxor.u32 %v3084, 2147483648
      %v3095 = vsel %vm3093, %v3094, %v3085
      %v3096 = vsel %vm3089, %v3092, %v3095
      %v3097 = vsel %vm3086, nan, %v3096
      %v3098 = vand.u32 2147483647, %v2987
      %vm3099 = vcmp.le.f32.partialorder %v3098, 0.7853982
      %vm3100 = vcmp.lt.s32.totalorder %v2987, 0
      %v3101 = vand.u32 %v2987, 2139095040
      %v3102 = vshrl.u32 %v3101, 23
      %v3103 = vsub.s32 %v3102, 127
      %v3104 = vand.u32 2147483647, %v2987
      %v3105 = vand.u32 %v3104, 8388607
      %v3106 = vor.u32 %v3105, 8388608
      %v3107 = vsub.s32 0, %v3106
      %v3108 = vadd.s32 %v3103, 1
      %vm3109 = vcmp.gt.s32.totalorder %v3108, 0
      %v3110 = vsel %vm3109, %v3108, 0
      %v3111 = vshrl.u32 %v3110, 5
      %v3112 = vand.u32 %v3110, 31
      %v3113 = vsub.s32 32, %v3112
      %v3114 = vshrl.u32 683565275, %v3113
      %v3115 = vshll.u32 683565275, %v3112
      %v3116 = vshrl.u32 2475754826, %v3113
      %v3117 = vor.u32 %v3115, %v3116
      %v3118 = vshll.u32 2475754826, %v3112
      %v3119 = vshrl.u32 2131351028, %v3113
      %v3120 = vor.u32 %v3118, %v3119
      %v3121 = vshll.u32 2131351028, %v3112
      %v3122 = vshrl.u32 2102212464, %v3113
      %v3123 = vor.u32 %v3121, %v3122
      %v3124 = vshll.u32 2102212464, %v3112
      %v3125 = vshrl.u32 920167782, %v3113
      %v3126 = vor.u32 %v3124, %v3125
      %v3127 = vshll.u32 920167782, %v3112
      %v3128 = vshrl.u32 1326507024, %v3113
      %v3129 = vor.u32 %v3127, %v3128
      %vm3130 = vcmp.lt.s32.totalorder %v3111, 1
      %vm3131 = vcmp.lt.s32.totalorder %v3111, 2
      %vm3132 = vcmp.lt.s32.totalorder %v3111, 3
      %vm3133 = vcmp.lt.s32.totalorder %v3111, 4
      %v3134 = vsel %vm3130, %v3114, %v3117
      %v3135 = vsel %vm3133, %v3123, 2102212464
      %v3136 = vsel %vm3132, %v3120, %v3135
      %v3137 = vsel %vm3131, %v3134, %v3136
      %v3138 = vsel %vm3130, %v3117, %v3120
      %v3139 = vsel %vm3133, %v3126, 920167782
      %v3140 = vsel %vm3132, %v3123, %v3139
      %v3141 = vsel %vm3131, %v3138, %v3140
      %v3142 = vsel %vm3130, %v3120, %v3123
      %v3143 = vsel %vm3133, %v3129, 1326507024
      %v3144 = vsel %vm3132, %v3126, %v3143
      %v3145 = vsel %vm3131, %v3142, %v3144
      %v3146 = vshll.u32 %v3106, 8
      %v3147 = vmul.u32.u64.compose %v3146, %v3145
      %v3148 = vextract.low.u32 %v3147
      %v3149 = vextract.high.u32 %v3147
      %v3150 = vmul.u32.u64.compose %v3146, %v3141
      %v3151 = vextract.low.u32 %v3150
      %v3152 = vextract.high.u32 %v3150
      %v3153 = vmul.u32 %v3146, %v3137
      %v3154 = vadd.s32 %v3149, %v3151
      %vm3155 = vc.u32 %v3149, %v3151
      %v3156 = vadd.s32 %v3152, 1
      %v3157 = vsel %vm3155, %v3156, %v3152
      %v3158 = vadd.s32 %v3153, %v3157
      %v3159 = vadd.s32 %v3158, 536870912
      %v3160 = vshrl.u32 %v3159, 30
      %v3161 = vshll.u32 %v3160, 30
      %v3162 = vsub.s32 %v3158, %v3161
      %vm3163 = vcmp.lt.s32.totalorder %v3162, 0
      %v3164 = vsub.s32 0, %v3162
      %v3165 = vsel %vm3163, %v3164, %v3162
      %v3166 = vclz %v3165
      %v3167 = vsub.s32 %v3166, 2
      %vm3168 = vcmp.gt.s32.totalorder 0, %v3167
      %v3169 = vsel %vm3168, 0, %v3167
      %v3170 = vsub.s32 32, %v3169
      %v3171 = vshll.u32 %v3162, %v3169
      %v3172 = vshrl.u32 %v3154, %v3170
      %v3173 = vor.u32 %v3171, %v3172
      %v3174 = vsub.s32 4294967266, %v3169
      %v3175 = vadd.s32 %v3174, 127
      %v3176 = vshll.u32 %v3175, 23
      %v3177 = vor.u32 4788187, %v3176
      %v3178 = vand.u32 2147483647, %v3177
      %v3180 = vcvt.s32.f32 %v3173
      %v3181 = vmul.f32 %v3180, %v3178
      %v3182 = vxor.u32 %v3181, 2147483648
      %v3183 = vsel %vm3100, %v3182, %v3181
      %v3184 = vsub.s32 4, %v3160
      %v3185 = vsel %vm3100, %v3184, %v3160
      %v3186 = vsel %vm3099, %v2987, %v3183
      %v3187 = vsel %vm3099, 0, %v3185
      %v3188 = vcosq.f32.pop %v3186
      %v3189 = vsinq.f32.pop %v3186
      %vm3190 = vweird.f32 %v2987
      %v3191 = vadd.s32 %v3187, 3
      %v3192 = vand.u32 %v3191, 3
      %vm3193 = vcmp.lt.s32.totalorder %v3192, 2
      %vm3194 = vcmp.eq.s32.totalorder %v3192, 0
      %v3195 = vxor.u32 %v3189, 2147483648
      %v3196 = vsel %vm3194, %v3188, %v3195
      %vm3197 = vcmp.eq.s32.totalorder %v3192, 2
      %v3198 = vxor.u32 %v3188, 2147483648
      %v3199 = vsel %vm3197, %v3198, %v3189
      %v3200 = vsel %vm3193, %v3196, %v3199
      %v3201 = vsel %vm3190, nan, %v3200
      %v3202 = vand.u32 2147483647, %v2988
      %vm3203 = vcmp.le.f32.partialorder %v3202, 0.7853982
      %vm3204 = vcmp.lt.s32.totalorder %v2988, 0
      %v3205 = vand.u32 %v2988, 2139095040
      %v3206 = vshrl.u32 %v3205, 23
      %v3207 = vsub.s32 %v3206, 127
      %v3208 = vand.u32 2147483647, %v2988
      %v3209 = vand.u32 %v3208, 8388607
      %v3210 = vor.u32 %v3209, 8388608
      %v3211 = vsub.s32 0, %v3210
      %v3212 = vadd.s32 %v3207, 1
      %vm3213 = vcmp.gt.s32.totalorder %v3212, 0
      %v3214 = vsel %vm3213, %v3212, 0
      %v3215 = vshrl.u32 %v3214, 5
      %v3216 = vand.u32 %v3214, 31
      %v3217 = vsub.s32 32, %v3216
      %v3218 = vshrl.u32 683565275, %v3217
      %v3219 = vshll.u32 683565275, %v3216
      %v3220 = vshrl.u32 2475754826, %v3217
      %v3221 = vor.u32 %v3219, %v3220
      %v3222 = vshll.u32 2475754826, %v3216
      %v3223 = vshrl.u32 2131351028, %v3217
      %v3224 = vor.u32 %v3222, %v3223
      %v3225 = vshll.u32 2131351028, %v3216
      %v3226 = vshrl.u32 2102212464, %v3217
      %v3227 = vor.u32 %v3225, %v3226
      %v3228 = vshll.u32 2102212464, %v3216
      %v3229 = vshrl.u32 920167782, %v3217
      %v3230 = vor.u32 %v3228, %v3229
      %v3231 = vshll.u32 920167782, %v3216
      %v3232 = vshrl.u32 1326507024, %v3217
      %v3233 = vor.u32 %v3231, %v3232
      %vm3234 = vcmp.lt.s32.totalorder %v3215, 1
      %vm3235 = vcmp.lt.s32.totalorder %v3215, 2
      %vm3236 = vcmp.lt.s32.totalorder %v3215, 3
      %vm3237 = vcmp.lt.s32.totalorder %v3215, 4
      %v3238 = vsel %vm3234, %v3218, %v3221
      %v3239 = vsel %vm3237, %v3227, 2102212464
      %v3240 = vsel %vm3236, %v3224, %v3239
      %v3241 = vsel %vm3235, %v3238, %v3240
      %v3242 = vsel %vm3234, %v3221, %v3224
      %v3243 = vsel %vm3237, %v3230, 920167782
      %v3244 = vsel %vm3236, %v3227, %v3243
      %v3245 = vsel %vm3235, %v3242, %v3244
      %v3246 = vsel %vm3234, %v3224, %v3227
      %v3247 = vsel %vm3237, %v3233, 1326507024
      %v3248 = vsel %vm3236, %v3230, %v3247
      %v3249 = vsel %vm3235, %v3246, %v3248
      %v3250 = vshll.u32 %v3210, 8
      %v3251 = vmul.u32.u64.compose %v3250, %v3249
      %v3252 = vextract.low.u32 %v3251
      %v3253 = vextract.high.u32 %v3251
      %v3254 = vmul.u32.u64.compose %v3250, %v3245
      %v3255 = vextract.low.u32 %v3254
      %v3256 = vextract.high.u32 %v3254
      %v3257 = vmul.u32 %v3250, %v3241
      %v3258 = vadd.s32 %v3253, %v3255
      %vm3259 = vc.u32 %v3253, %v3255
      %v3260 = vadd.s32 %v3256, 1
      %v3261 = vsel %vm3259, %v3260, %v3256
      %v3262 = vadd.s32 %v3257, %v3261
      %v3263 = vadd.s32 %v3262, 536870912
      %v3264 = vshrl.u32 %v3263, 30
      %v3265 = vshll.u32 %v3264, 30
      %v3266 = vsub.s32 %v3262, %v3265
      %vm3267 = vcmp.lt.s32.totalorder %v3266, 0
      %v3268 = vsub.s32 0, %v3266
      %v3269 = vsel %vm3267, %v3268, %v3266
      %v3270 = vclz %v3269
      %v3271 = vsub.s32 %v3270, 2
      %vm3272 = vcmp.gt.s32.totalorder 0, %v3271
      %v3273 = vsel %vm3272, 0, %v3271
      %v3274 = vsub.s32 32, %v3273
      %v3275 = vshll.u32 %v3266, %v3273
      %v3276 = vshrl.u32 %v3258, %v3274
      %v3277 = vor.u32 %v3275, %v3276
      %v3278 = vsub.s32 4294967266, %v3273
      %v3279 = vadd.s32 %v3278, 127
      %v3280 = vshll.u32 %v3279, 23
      %v3281 = vor.u32 4788187, %v3280
      %v3282 = vand.u32 2147483647, %v3281
      %v3284 = vcvt.s32.f32 %v3277
      %v3285 = vmul.f32 %v3284, %v3282
      %v3286 = vxor.u32 %v3285, 2147483648
      %v3287 = vsel %vm3204, %v3286, %v3285
      %v3288 = vsub.s32 4, %v3264
      %v3289 = vsel %vm3204, %v3288, %v3264
      %v3290 = vsel %vm3203, %v2988, %v3287
      %v3291 = vsel %vm3203, 0, %v3289
      %v3292 = vcosq.f32.pop %v3290
      %v3293 = vsinq.f32.pop %v3290
      %vm3294 = vweird.f32 %v2988
      %v3295 = vadd.s32 %v3291, 3
      %v3296 = vand.u32 %v3295, 3
      %vm3297 = vcmp.lt.s32.totalorder %v3296, 2
      %vm3298 = vcmp.eq.s32.totalorder %v3296, 0
      %v3299 = vxor.u32 %v3293, 2147483648
      %v3300 = vsel %vm3298, %v3292, %v3299
      %vm3301 = vcmp.eq.s32.totalorder %v3296, 2
      %v3302 = vxor.u32 %v3292, 2147483648
      %v3303 = vsel %vm3301, %v3302, %v3293
      %v3304 = vsel %vm3297, %v3300, %v3303
      %v3305 = vsel %vm3294, nan, %v3304
      %v3306 = vand.u32 2147483647, %v2989
      %vm3307 = vcmp.le.f32.partialorder %v3306, 0.7853982
      %vm3308 = vcmp.lt.s32.totalorder %v2989, 0
      %v3309 = vand.u32 %v2989, 2139095040
      %v3310 = vshrl.u32 %v3309, 23
      %v3311 = vsub.s32 %v3310, 127
      %v3312 = vand.u32 2147483647, %v2989
      %v3313 = vand.u32 %v3312, 8388607
      %v3314 = vor.u32 %v3313, 8388608
      %v3315 = vsub.s32 0, %v3314
      %v3316 = vadd.s32 %v3311, 1
      %vm3317 = vcmp.gt.s32.totalorder %v3316, 0
      %v3318 = vsel %vm3317, %v3316, 0
      %v3319 = vshrl.u32 %v3318, 5
      %v3320 = vand.u32 %v3318, 31
      %v3321 = vsub.s32 32, %v3320
      %v3322 = vshrl.u32 683565275, %v3321
      %v3323 = vshll.u32 683565275, %v3320
      %v3324 = vshrl.u32 2475754826, %v3321
      %v3325 = vor.u32 %v3323, %v3324
      %v3326 = vshll.u32 2475754826, %v3320
      %v3327 = vshrl.u32 2131351028, %v3321
      %v3328 = vor.u32 %v3326, %v3327
      %v3329 = vshll.u32 2131351028, %v3320
      %v3330 = vshrl.u32 2102212464, %v3321
      %v3331 = vor.u32 %v3329, %v3330
      %v3332 = vshll.u32 2102212464, %v3320
      %v3333 = vshrl.u32 920167782, %v3321
      %v3334 = vor.u32 %v3332, %v3333
      %v3335 = vshll.u32 920167782, %v3320
      %v3336 = vshrl.u32 1326507024, %v3321
      %v3337 = vor.u32 %v3335, %v3336
      %vm3338 = vcmp.lt.s32.totalorder %v3319, 1
      %vm3339 = vcmp.lt.s32.totalorder %v3319, 2
      %vm3340 = vcmp.lt.s32.totalorder %v3319, 3
      %vm3341 = vcmp.lt.s32.totalorder %v3319, 4
      %v3342 = vsel %vm3338, %v3322, %v3325
      %v3343 = vsel %vm3341, %v3331, 2102212464
      %v3344 = vsel %vm3340, %v3328, %v3343
      %v3345 = vsel %vm3339, %v3342, %v3344
      %v3346 = vsel %vm3338, %v3325, %v3328
      %v3347 = vsel %vm3341, %v3334, 920167782
      %v3348 = vsel %vm3340, %v3331, %v3347
      %v3349 = vsel %vm3339, %v3346, %v3348
      %v3350 = vsel %vm3338, %v3328, %v3331
      %v3351 = vsel %vm3341, %v3337, 1326507024
      %v3352 = vsel %vm3340, %v3334, %v3351
      %v3353 = vsel %vm3339, %v3350, %v3352
      %v3354 = vshll.u32 %v3314, 8
      %v3355 = vmul.u32.u64.compose %v3354, %v3353
      %v3356 = vextract.low.u32 %v3355
      %v3357 = vextract.high.u32 %v3355
      %v3358 = vmul.u32.u64.compose %v3354, %v3349
      %v3359 = vextract.low.u32 %v3358
      %v3360 = vextract.high.u32 %v3358
      %v3361 = vmul.u32 %v3354, %v3345
      %v3362 = vadd.s32 %v3357, %v3359
      %vm3363 = vc.u32 %v3357, %v3359
      %v3364 = vadd.s32 %v3360, 1
      %v3365 = vsel %vm3363, %v3364, %v3360
      %v3366 = vadd.s32 %v3361, %v3365
      %v3367 = vadd.s32 %v3366, 536870912
      %v3368 = vshrl.u32 %v3367, 30
      %v3369 = vshll.u32 %v3368, 30
      %v3370 = vsub.s32 %v3366, %v3369
      %vm3371 = vcmp.lt.s32.totalorder %v3370, 0
      %v3372 = vsub.s32 0, %v3370
      %v3373 = vsel %vm3371, %v3372, %v3370
      %v3374 = vclz %v3373
      %v3375 = vsub.s32 %v3374, 2
      %vm3376 = vcmp.gt.s32.totalorder 0, %v3375
      %v3377 = vsel %vm3376, 0, %v3375
      %v3378 = vsub.s32 32, %v3377
      %v3379 = vshll.u32 %v3370, %v3377
      %v3380 = vshrl.u32 %v3362, %v3378
      %v3381 = vor.u32 %v3379, %v3380
      %v3382 = vsub.s32 4294967266, %v3377
      %v3383 = vadd.s32 %v3382, 127
      %v3384 = vshll.u32 %v3383, 23
      %v3385 = vor.u32 4788187, %v3384
      %v3386 = vand.u32 2147483647, %v3385
      %v3388 = vcvt.s32.f32 %v3381
      %v3389 = vmul.f32 %v3388, %v3386
      %v3390 = vxor.u32 %v3389, 2147483648
      %v3391 = vsel %vm3308, %v3390, %v3389
      %v3392 = vsub.s32 4, %v3368
      %v3393 = vsel %vm3308, %v3392, %v3368
      %v3394 = vsel %vm3307, %v2989, %v3391
      %v3395 = vsel %vm3307, 0, %v3393
      %v3396 = vcosq.f32.pop %v3394
      %v3397 = vsinq.f32.pop %v3394
      %vm3398 = vweird.f32 %v2989
      %v3399 = vadd.s32 %v3395, 3
      %v3400 = vand.u32 %v3399, 3
      %vm3401 = vcmp.lt.s32.totalorder %v3400, 2
      %vm3402 = vcmp.eq.s32.totalorder %v3400, 0
      %v3403 = vxor.u32 %v3397, 2147483648
      %v3404 = vsel %vm3402, %v3396, %v3403
      %vm3405 = vcmp.eq.s32.totalorder %v3400, 2
      %v3406 = vxor.u32 %v3396, 2147483648
      %v3407 = vsel %vm3405, %v3406, %v3397
      %v3408 = vsel %vm3401, %v3404, %v3407
      %v3409 = vsel %vm3398, nan, %v3408
      %v3410 = vand.u32 2147483647, %v2990
      %vm3411 = vcmp.le.f32.partialorder %v3410, 0.7853982
      %vm3412 = vcmp.lt.s32.totalorder %v2990, 0
      %v3413 = vand.u32 %v2990, 2139095040
      %v3414 = vshrl.u32 %v3413, 23
      %v3415 = vsub.s32 %v3414, 127
      %v3416 = vand.u32 2147483647, %v2990
      %v3417 = vand.u32 %v3416, 8388607
      %v3418 = vor.u32 %v3417, 8388608
      %v3419 = vsub.s32 0, %v3418
      %v3420 = vadd.s32 %v3415, 1
      %vm3421 = vcmp.gt.s32.totalorder %v3420, 0
      %v3422 = vsel %vm3421, %v3420, 0
      %v3423 = vshrl.u32 %v3422, 5
      %v3424 = vand.u32 %v3422, 31
      %v3425 = vsub.s32 32, %v3424
      %v3426 = vshrl.u32 683565275, %v3425
      %v3427 = vshll.u32 683565275, %v3424
      %v3428 = vshrl.u32 2475754826, %v3425
      %v3429 = vor.u32 %v3427, %v3428
      %v3430 = vshll.u32 2475754826, %v3424
      %v3431 = vshrl.u32 2131351028, %v3425
      %v3432 = vor.u32 %v3430, %v3431
      %v3433 = vshll.u32 2131351028, %v3424
      %v3434 = vshrl.u32 2102212464, %v3425
      %v3435 = vor.u32 %v3433, %v3434
      %v3436 = vshll.u32 2102212464, %v3424
      %v3437 = vshrl.u32 920167782, %v3425
      %v3438 = vor.u32 %v3436, %v3437
      %v3439 = vshll.u32 920167782, %v3424
      %v3440 = vshrl.u32 1326507024, %v3425
      %v3441 = vor.u32 %v3439, %v3440
      %vm3442 = vcmp.lt.s32.totalorder %v3423, 1
      %vm3443 = vcmp.lt.s32.totalorder %v3423, 2
      %vm3444 = vcmp.lt.s32.totalorder %v3423, 3
      %vm3445 = vcmp.lt.s32.totalorder %v3423, 4
      %v3446 = vsel %vm3442, %v3426, %v3429
      %v3447 = vsel %vm3445, %v3435, 2102212464
      %v3448 = vsel %vm3444, %v3432, %v3447
      %v3449 = vsel %vm3443, %v3446, %v3448
      %v3450 = vsel %vm3442, %v3429, %v3432
      %v3451 = vsel %vm3445, %v3438, 920167782
      %v3452 = vsel %vm3444, %v3435, %v3451
      %v3453 = vsel %vm3443, %v3450, %v3452
      %v3454 = vsel %vm3442, %v3432, %v3435
      %v3455 = vsel %vm3445, %v3441, 1326507024
      %v3456 = vsel %vm3444, %v3438, %v3455
      %v3457 = vsel %vm3443, %v3454, %v3456
      %v3458 = vshll.u32 %v3418, 8
      %v3459 = vmul.u32.u64.compose %v3458, %v3457
      %v3460 = vextract.low.u32 %v3459
      %v3461 = vextract.high.u32 %v3459
      %v3462 = vmul.u32.u64.compose %v3458, %v3453
      %v3463 = vextract.low.u32 %v3462
      %v3464 = vextract.high.u32 %v3462
      %v3465 = vmul.u32 %v3458, %v3449
      %v3466 = vadd.s32 %v3461, %v3463
      %vm3467 = vc.u32 %v3461, %v3463
      %v3468 = vadd.s32 %v3464, 1
      %v3469 = vsel %vm3467, %v3468, %v3464
      %v3470 = vadd.s32 %v3465, %v3469
      %v3471 = vadd.s32 %v3470, 536870912
      %v3472 = vshrl.u32 %v3471, 30
      %v3473 = vshll.u32 %v3472, 30
      %v3474 = vsub.s32 %v3470, %v3473
      %vm3475 = vcmp.lt.s32.totalorder %v3474, 0
      %v3476 = vsub.s32 0, %v3474
      %v3477 = vsel %vm3475, %v3476, %v3474
      %v3478 = vclz %v3477
      %v3479 = vsub.s32 %v3478, 2
      %vm3480 = vcmp.gt.s32.totalorder 0, %v3479
      %v3481 = vsel %vm3480, 0, %v3479
      %v3482 = vsub.s32 32, %v3481
      %v3483 = vshll.u32 %v3474, %v3481
      %v3484 = vshrl.u32 %v3466, %v3482
      %v3485 = vor.u32 %v3483, %v3484
      %v3486 = vsub.s32 4294967266, %v3481
      %v3487 = vadd.s32 %v3486, 127
      %v3488 = vshll.u32 %v3487, 23
      %v3489 = vor.u32 4788187, %v3488
      %v3490 = vand.u32 2147483647, %v3489
      %v3492 = vcvt.s32.f32 %v3485
      %v3493 = vmul.f32 %v3492, %v3490
      %v3494 = vxor.u32 %v3493, 2147483648
      %v3495 = vsel %vm3412, %v3494, %v3493
      %v3496 = vsub.s32 4, %v3472
      %v3497 = vsel %vm3412, %v3496, %v3472
      %v3498 = vsel %vm3411, %v2990, %v3495
      %v3499 = vsel %vm3411, 0, %v3497
      %v3500 = vcosq.f32.pop %v3498
      %v3501 = vsinq.f32.pop %v3498
      %vm3502 = vweird.f32 %v2990
      %v3503 = vadd.s32 %v3499, 3
      %v3504 = vand.u32 %v3503, 3
      %vm3505 = vcmp.lt.s32.totalorder %v3504, 2
      %vm3506 = vcmp.eq.s32.totalorder %v3504, 0
      %v3507 = vxor.u32 %v3501, 2147483648
      %v3508 = vsel %vm3506, %v3500, %v3507
      %vm3509 = vcmp.eq.s32.totalorder %v3504, 2
      %v3510 = vxor.u32 %v3500, 2147483648
      %v3511 = vsel %vm3509, %v3510, %v3501
      %v3512 = vsel %vm3505, %v3508, %v3511
      %v3513 = vsel %vm3502, nan, %v3512
      %v3514 = vand.u32 2147483647, %v2991
      %vm3515 = vcmp.le.f32.partialorder %v3514, 0.7853982
      %vm3516 = vcmp.lt.s32.totalorder %v2991, 0
      %v3517 = vand.u32 %v2991, 2139095040
      %v3518 = vshrl.u32 %v3517, 23
      %v3519 = vsub.s32 %v3518, 127
      %v3520 = vand.u32 2147483647, %v2991
      %v3521 = vand.u32 %v3520, 8388607
      %v3522 = vor.u32 %v3521, 8388608
      %v3523 = vsub.s32 0, %v3522
      %v3524 = vadd.s32 %v3519, 1
      %vm3525 = vcmp.gt.s32.totalorder %v3524, 0
      %v3526 = vsel %vm3525, %v3524, 0
      %v3527 = vshrl.u32 %v3526, 5
      %v3528 = vand.u32 %v3526, 31
      %v3529 = vsub.s32 32, %v3528
      %v3530 = vshrl.u32 683565275, %v3529
      %v3531 = vshll.u32 683565275, %v3528
      %v3532 = vshrl.u32 2475754826, %v3529
      %v3533 = vor.u32 %v3531, %v3532
      %v3534 = vshll.u32 2475754826, %v3528
      %v3535 = vshrl.u32 2131351028, %v3529
      %v3536 = vor.u32 %v3534, %v3535
      %v3537 = vshll.u32 2131351028, %v3528
      %v3538 = vshrl.u32 2102212464, %v3529
      %v3539 = vor.u32 %v3537, %v3538
      %v3540 = vshll.u32 2102212464, %v3528
      %v3541 = vshrl.u32 920167782, %v3529
      %v3542 = vor.u32 %v3540, %v3541
      %v3543 = vshll.u32 920167782, %v3528
      %v3544 = vshrl.u32 1326507024, %v3529
      %v3545 = vor.u32 %v3543, %v3544
      %vm3546 = vcmp.lt.s32.totalorder %v3527, 1
      %vm3547 = vcmp.lt.s32.totalorder %v3527, 2
      %vm3548 = vcmp.lt.s32.totalorder %v3527, 3
      %vm3549 = vcmp.lt.s32.totalorder %v3527, 4
      %v3550 = vsel %vm3546, %v3530, %v3533
      %v3551 = vsel %vm3549, %v3539, 2102212464
      %v3552 = vsel %vm3548, %v3536, %v3551
      %v3553 = vsel %vm3547, %v3550, %v3552
      %v3554 = vsel %vm3546, %v3533, %v3536
      %v3555 = vsel %vm3549, %v3542, 920167782
      %v3556 = vsel %vm3548, %v3539, %v3555
      %v3557 = vsel %vm3547, %v3554, %v3556
      %v3558 = vsel %vm3546, %v3536, %v3539
      %v3559 = vsel %vm3549, %v3545, 1326507024
      %v3560 = vsel %vm3548, %v3542, %v3559
      %v3561 = vsel %vm3547, %v3558, %v3560
      %v3562 = vshll.u32 %v3522, 8
      %v3563 = vmul.u32.u64.compose %v3562, %v3561
      %v3564 = vextract.low.u32 %v3563
      %v3565 = vextract.high.u32 %v3563
      %v3566 = vmul.u32.u64.compose %v3562, %v3557
      %v3567 = vextract.low.u32 %v3566
      %v3568 = vextract.high.u32 %v3566
      %v3569 = vmul.u32 %v3562, %v3553
      %v3570 = vadd.s32 %v3565, %v3567
      %vm3571 = vc.u32 %v3565, %v3567
      %v3572 = vadd.s32 %v3568, 1
      %v3573 = vsel %vm3571, %v3572, %v3568
      %v3574 = vadd.s32 %v3569, %v3573
      %v3575 = vadd.s32 %v3574, 536870912
      %v3576 = vshrl.u32 %v3575, 30
      %v3577 = vshll.u32 %v3576, 30
      %v3578 = vsub.s32 %v3574, %v3577
      %vm3579 = vcmp.lt.s32.totalorder %v3578, 0
      %v3580 = vsub.s32 0, %v3578
      %v3581 = vsel %vm3579, %v3580, %v3578
      %v3582 = vclz %v3581
      %v3583 = vsub.s32 %v3582, 2
      %vm3584 = vcmp.gt.s32.totalorder 0, %v3583
      %v3585 = vsel %vm3584, 0, %v3583
      %v3586 = vsub.s32 32, %v3585
      %v3587 = vshll.u32 %v3578, %v3585
      %v3588 = vshrl.u32 %v3570, %v3586
      %v3589 = vor.u32 %v3587, %v3588
      %v3590 = vsub.s32 4294967266, %v3585
      %v3591 = vadd.s32 %v3590, 127
      %v3592 = vshll.u32 %v3591, 23
      %v3593 = vor.u32 4788187, %v3592
      %v3594 = vand.u32 2147483647, %v3593
      %v3596 = vcvt.s32.f32 %v3589
      %v3597 = vmul.f32 %v3596, %v3594
      %v3598 = vxor.u32 %v3597, 2147483648
      %v3599 = vsel %vm3516, %v3598, %v3597
      %v3600 = vsub.s32 4, %v3576
      %v3601 = vsel %vm3516, %v3600, %v3576
      %v3602 = vsel %vm3515, %v2991, %v3599
      %v3603 = vsel %vm3515, 0, %v3601
      %v3604 = vcosq.f32.pop %v3602
      %v3605 = vsinq.f32.pop %v3602
      %vm3606 = vweird.f32 %v2991
      %v3607 = vadd.s32 %v3603, 3
      %v3608 = vand.u32 %v3607, 3
      %vm3609 = vcmp.lt.s32.totalorder %v3608, 2
      %vm3610 = vcmp.eq.s32.totalorder %v3608, 0
      %v3611 = vxor.u32 %v3605, 2147483648
      %v3612 = vsel %vm3610, %v3604, %v3611
      %vm3613 = vcmp.eq.s32.totalorder %v3608, 2
      %v3614 = vxor.u32 %v3604, 2147483648
      %v3615 = vsel %vm3613, %v3614, %v3605
      %v3616 = vsel %vm3609, %v3612, %v3615
      %v3617 = vsel %vm3606, nan, %v3616
      %v3618 = vand.u32 2147483647, %v2992
      %vm3619 = vcmp.le.f32.partialorder %v3618, 0.7853982
      %vm3620 = vcmp.lt.s32.totalorder %v2992, 0
      %v3621 = vand.u32 %v2992, 2139095040
      %v3622 = vshrl.u32 %v3621, 23
      %v3623 = vsub.s32 %v3622, 127
      %v3624 = vand.u32 2147483647, %v2992
      %v3625 = vand.u32 %v3624, 8388607
      %v3626 = vor.u32 %v3625, 8388608
      %v3627 = vsub.s32 0, %v3626
      %v3628 = vadd.s32 %v3623, 1
      %vm3629 = vcmp.gt.s32.totalorder %v3628, 0
      %v3630 = vsel %vm3629, %v3628, 0
      %v3631 = vshrl.u32 %v3630, 5
      %v3632 = vand.u32 %v3630, 31
      %v3633 = vsub.s32 32, %v3632
      %v3634 = vshrl.u32 683565275, %v3633
      %v3635 = vshll.u32 683565275, %v3632
      %v3636 = vshrl.u32 2475754826, %v3633
      %v3637 = vor.u32 %v3635, %v3636
      %v3638 = vshll.u32 2475754826, %v3632
      %v3639 = vshrl.u32 2131351028, %v3633
      %v3640 = vor.u32 %v3638, %v3639
      %v3641 = vshll.u32 2131351028, %v3632
      %v3642 = vshrl.u32 2102212464, %v3633
      %v3643 = vor.u32 %v3641, %v3642
      %v3644 = vshll.u32 2102212464, %v3632
      %v3645 = vshrl.u32 920167782, %v3633
      %v3646 = vor.u32 %v3644, %v3645
      %v3647 = vshll.u32 920167782, %v3632
      %v3648 = vshrl.u32 1326507024, %v3633
      %v3649 = vor.u32 %v3647, %v3648
      %vm3650 = vcmp.lt.s32.totalorder %v3631, 1
      %vm3651 = vcmp.lt.s32.totalorder %v3631, 2
      %vm3652 = vcmp.lt.s32.totalorder %v3631, 3
      %vm3653 = vcmp.lt.s32.totalorder %v3631, 4
      %v3654 = vsel %vm3650, %v3634, %v3637
      %v3655 = vsel %vm3653, %v3643, 2102212464
      %v3656 = vsel %vm3652, %v3640, %v3655
      %v3657 = vsel %vm3651, %v3654, %v3656
      %v3658 = vsel %vm3650, %v3637, %v3640
      %v3659 = vsel %vm3653, %v3646, 920167782
      %v3660 = vsel %vm3652, %v3643, %v3659
      %v3661 = vsel %vm3651, %v3658, %v3660
      %v3662 = vsel %vm3650, %v3640, %v3643
      %v3663 = vsel %vm3653, %v3649, 1326507024
      %v3664 = vsel %vm3652, %v3646, %v3663
      %v3665 = vsel %vm3651, %v3662, %v3664
      %v3666 = vshll.u32 %v3626, 8
      %v3667 = vmul.u32.u64.compose %v3666, %v3665
      %v3668 = vextract.low.u32 %v3667
      %v3669 = vextract.high.u32 %v3667
      %v3670 = vmul.u32.u64.compose %v3666, %v3661
      %v3671 = vextract.low.u32 %v3670
      %v3672 = vextract.high.u32 %v3670
      %v3673 = vmul.u32 %v3666, %v3657
      %v3674 = vadd.s32 %v3669, %v3671
      %vm3675 = vc.u32 %v3669, %v3671
      %v3676 = vadd.s32 %v3672, 1
      %v3677 = vsel %vm3675, %v3676, %v3672
      %v3678 = vadd.s32 %v3673, %v3677
      %v3679 = vadd.s32 %v3678, 536870912
      %v3680 = vshrl.u32 %v3679, 30
      %v3681 = vshll.u32 %v3680, 30
      %v3682 = vsub.s32 %v3678, %v3681
      %vm3683 = vcmp.lt.s32.totalorder %v3682, 0
      %v3684 = vsub.s32 0, %v3682
      %v3685 = vsel %vm3683, %v3684, %v3682
      %v3686 = vclz %v3685
      %v3687 = vsub.s32 %v3686, 2
      %vm3688 = vcmp.gt.s32.totalorder 0, %v3687
      %v3689 = vsel %vm3688, 0, %v3687
      %v3690 = vsub.s32 32, %v3689
      %v3691 = vshll.u32 %v3682, %v3689
      %v3692 = vshrl.u32 %v3674, %v3690
      %v3693 = vor.u32 %v3691, %v3692
      %v3694 = vsub.s32 4294967266, %v3689
      %v3695 = vadd.s32 %v3694, 127
      %v3696 = vshll.u32 %v3695, 23
      %v3697 = vor.u32 4788187, %v3696
      %v3698 = vand.u32 2147483647, %v3697
      %v3700 = vcvt.s32.f32 %v3693
      %v3701 = vmul.f32 %v3700, %v3698
      %v3702 = vxor.u32 %v3701, 2147483648
      %v3703 = vsel %vm3620, %v3702, %v3701
      %v3704 = vsub.s32 4, %v3680
      %v3705 = vsel %vm3620, %v3704, %v3680
      %v3706 = vsel %vm3619, %v2992, %v3703
      %v3707 = vsel %vm3619, 0, %v3705
      %v3708 = vcosq.f32.pop %v3706
      %v3709 = vsinq.f32.pop %v3706
      %vm3710 = vweird.f32 %v2992
      %v3711 = vadd.s32 %v3707, 3
      %v3712 = vand.u32 %v3711, 3
      %vm3713 = vcmp.lt.s32.totalorder %v3712, 2
      %vm3714 = vcmp.eq.s32.totalorder %v3712, 0
      %v3715 = vxor.u32 %v3709, 2147483648
      %v3716 = vsel %vm3714, %v3708, %v3715
      %vm3717 = vcmp.eq.s32.totalorder %v3712, 2
      %v3718 = vxor.u32 %v3708, 2147483648
      %v3719 = vsel %vm3717, %v3718, %v3709
      %v3720 = vsel %vm3713, %v3716, %v3719
      %v3721 = vsel %vm3710, nan, %v3720
      %v3722 = vand.u32 2147483647, %v2993
      %vm3723 = vcmp.le.f32.partialorder %v3722, 0.7853982
      %vm3724 = vcmp.lt.s32.totalorder %v2993, 0
      %v3725 = vand.u32 %v2993, 2139095040
      %v3726 = vshrl.u32 %v3725, 23
      %v3727 = vsub.s32 %v3726, 127
      %v3728 = vand.u32 2147483647, %v2993
      %v3729 = vand.u32 %v3728, 8388607
      %v3730 = vor.u32 %v3729, 8388608
      %v3731 = vsub.s32 0, %v3730
      %v3732 = vadd.s32 %v3727, 1
      %vm3733 = vcmp.gt.s32.totalorder %v3732, 0
      %v3734 = vsel %vm3733, %v3732, 0
      %v3735 = vshrl.u32 %v3734, 5
      %v3736 = vand.u32 %v3734, 31
      %v3737 = vsub.s32 32, %v3736
      %v3738 = vshrl.u32 683565275, %v3737
      %v3739 = vshll.u32 683565275, %v3736
      %v3740 = vshrl.u32 2475754826, %v3737
      %v3741 = vor.u32 %v3739, %v3740
      %v3742 = vshll.u32 2475754826, %v3736
      %v3743 = vshrl.u32 2131351028, %v3737
      %v3744 = vor.u32 %v3742, %v3743
      %v3745 = vshll.u32 2131351028, %v3736
      %v3746 = vshrl.u32 2102212464, %v3737
      %v3747 = vor.u32 %v3745, %v3746
      %v3748 = vshll.u32 2102212464, %v3736
      %v3749 = vshrl.u32 920167782, %v3737
      %v3750 = vor.u32 %v3748, %v3749
      %v3751 = vshll.u32 920167782, %v3736
      %v3752 = vshrl.u32 1326507024, %v3737
      %v3753 = vor.u32 %v3751, %v3752
      %vm3754 = vcmp.lt.s32.totalorder %v3735, 1
      %vm3755 = vcmp.lt.s32.totalorder %v3735, 2
      %vm3756 = vcmp.lt.s32.totalorder %v3735, 3
      %vm3757 = vcmp.lt.s32.totalorder %v3735, 4
      %v3758 = vsel %vm3754, %v3738, %v3741
      %v3759 = vsel %vm3757, %v3747, 2102212464
      %v3760 = vsel %vm3756, %v3744, %v3759
      %v3761 = vsel %vm3755, %v3758, %v3760
      %v3762 = vsel %vm3754, %v3741, %v3744
      %v3763 = vsel %vm3757, %v3750, 920167782
      %v3764 = vsel %vm3756, %v3747, %v3763
      %v3765 = vsel %vm3755, %v3762, %v3764
      %v3766 = vsel %vm3754, %v3744, %v3747
      %v3767 = vsel %vm3757, %v3753, 1326507024
      %v3768 = vsel %vm3756, %v3750, %v3767
      %v3769 = vsel %vm3755, %v3766, %v3768
      %v3770 = vshll.u32 %v3730, 8
      %v3771 = vmul.u32.u64.compose %v3770, %v3769
      %v3772 = vextract.low.u32 %v3771
      %v3773 = vextract.high.u32 %v3771
      %v3774 = vmul.u32.u64.compose %v3770, %v3765
      %v3775 = vextract.low.u32 %v3774
      %v3776 = vextract.high.u32 %v3774
      %v3777 = vmul.u32 %v3770, %v3761
      %v3778 = vadd.s32 %v3773, %v3775
      %vm3779 = vc.u32 %v3773, %v3775
      %v3780 = vadd.s32 %v3776, 1
      %v3781 = vsel %vm3779, %v3780, %v3776
      %v3782 = vadd.s32 %v3777, %v3781
      %v3783 = vadd.s32 %v3782, 536870912
      %v3784 = vshrl.u32 %v3783, 30
      %v3785 = vshll.u32 %v3784, 30
      %v3786 = vsub.s32 %v3782, %v3785
      %vm3787 = vcmp.lt.s32.totalorder %v3786, 0
      %v3788 = vsub.s32 0, %v3786
      %v3789 = vsel %vm3787, %v3788, %v3786
      %v3790 = vclz %v3789
      %v3791 = vsub.s32 %v3790, 2
      %vm3792 = vcmp.gt.s32.totalorder 0, %v3791
      %v3793 = vsel %vm3792, 0, %v3791
      %v3794 = vsub.s32 32, %v3793
      %v3795 = vshll.u32 %v3786, %v3793
      %v3796 = vshrl.u32 %v3778, %v3794
      %v3797 = vor.u32 %v3795, %v3796
      %v3798 = vsub.s32 4294967266, %v3793
      %v3799 = vadd.s32 %v3798, 127
      %v3800 = vshll.u32 %v3799, 23
      %v3801 = vor.u32 4788187, %v3800
      %v3802 = vand.u32 2147483647, %v3801
      %v3804 = vcvt.s32.f32 %v3797
      %v3805 = vmul.f32 %v3804, %v3802
      %v3806 = vxor.u32 %v3805, 2147483648
      %v3807 = vsel %vm3724, %v3806, %v3805
      %v3808 = vsub.s32 4, %v3784
      %v3809 = vsel %vm3724, %v3808, %v3784
      %v3810 = vsel %vm3723, %v2993, %v3807
      %v3811 = vsel %vm3723, 0, %v3809
      %v3812 = vcosq.f32.pop %v3810
      %v3813 = vsinq.f32.pop %v3810
      %vm3814 = vweird.f32 %v2993
      %v3815 = vadd.s32 %v3811, 3
      %v3816 = vand.u32 %v3815, 3
      %vm3817 = vcmp.lt.s32.totalorder %v3816, 2
      %vm3818 = vcmp.eq.s32.totalorder %v3816, 0
      %v3819 = vxor.u32 %v3813, 2147483648
      %v3820 = vsel %vm3818, %v3812, %v3819
      %vm3821 = vcmp.eq.s32.totalorder %v3816, 2
      %v3822 = vxor.u32 %v3812, 2147483648
      %v3823 = vsel %vm3821, %v3822, %v3813
      %v3824 = vsel %vm3817, %v3820, %v3823
      %v3825 = vsel %vm3814, nan, %v3824
      %v3826 = vld [vmem:[%s10] sm:$0x3]
      %v3827 = vpack.c.bf16 %v3305, %v3097
      %v3828 = vpack.c.bf16 %v3409, %v3201
      %v3829 = vpack.c.bf16 %v3721, %v3513
      %v3830 = vpack.c.bf16 %v3825, %v3617
      %v3831 = vld [vmem:[%s11] sm:$0x7]
      %3833 = vset.pattern.permute.xlu0 0
      %3834 = vperm.xlu0 %3833, %v3831
      %v3835 = vpop.permute.xlu0 %3834
      %v3838 = vsel %vm1856, %v3826, 0
      %3840 = vmatprep.subr.bf16.mxu0 %v3828
      %3841 = vmatpush1.bf16.msra.mxu0 %v3827
      %3842 = vmatprep.subr.bf16.mxu0 %v3830
      %3843 = vmatpush1.bf16.msra.mxu0 %v3829
      %3844 = vmatprep.subr.bf16.mxu0 0
      %3845 = vmatpush1.bf16.msra.mxu0 0
      %3846 = vmatprep.subr.bf16.mxu0 0
      %3847 = vmatpush1.bf16.msra.mxu0 0
      %3848 = vmatprep.subr.bf16.mxu0 0
      %3849 = vmatpush1.bf16.msra.mxu0 0
      %3850 = vmatprep.subr.bf16.mxu0 0
      %3851 = vmatpush1.bf16.msra.mxu0 0
      %3852 = vmatprep.subr.bf16.mxu0 0
      %3853 = vmatpush1.bf16.msra.mxu0 0
      %3854 = vmatprep.subr.bf16.mxu0 0
      %3855 = vmatpush1.bf16.msra.mxu0 0
      %3856 = vmatprep.subr.bf16.mxu0 0
      %3857 = vmatpush1.bf16.msra.mxu0 0
      %3858 = vmatprep.subr.bf16.mxu0 0
      %3859 = vmatpush1.bf16.msra.mxu0 0
      %3860 = vmatprep.subr.bf16.mxu0 0
      %3861 = vmatpush1.bf16.msra.mxu0 0
      %3862 = vmatprep.subr.bf16.mxu0 0
      %3863 = vmatpush1.bf16.msra.mxu0 0
      %3864 = vmatprep.subr.bf16.mxu0 0
      %3865 = vmatpush1.bf16.msra.mxu0 0
      %3866 = vmatprep.subr.bf16.mxu0 0
      %3867 = vmatpush1.bf16.msra.mxu0 0
      %3868 = vmatprep.subr.bf16.mxu0 0
      %3869 = vmatpush1.bf16.msra.mxu0 0
      %3870 = vmatprep.subr.bf16.mxu0 0
      %3871 = vmatpush1.bf16.msra.mxu0 0
      %3872 = vmatprep.mubr.bf16.mxu0 0
      %3873 = vmatmul.mubr.bf16.gmra.mrb[0].mxu0 %v3838
      %v3874 = vpop.f32.mrb[0].mxu0
      %v3875 = vadd.f32 %v3835, %v3874
      %v3876 = vpop.f32.mrb[0].mxu0
      %v3877 = vadd.f32 %v3835, %v3876
      %v3878 = vpop.f32.mrb[0].mxu0
      %v3879 = vpop.f32.mrb[0].mxu0
      %3880 = vdwg.mxu0
      %v3883 = vcombine.low %v3875, %v3877
      %3885 = vst [vmem:[%s487] sm:$0x77] %v3883
      %s3886 = smul.u32 2, %s28
      %p3887 = scmp.lt.s32.totalorder %s27, 1
      %s3888 = scalar_select %p3887, %s27, 1
      %p3889 = scmp.lt.s32.totalorder %s3886, 1
      %s3890 = scalar_select %p3889, %s3886, 1
      %s3891 = smul.addr %s3888, 2
      %s3892 = sadd.s32 %s3890, %s3891
      %s3893 = smul.addr %s3892, 4
      %s3894 = scalar_lea.vmem %s12, %s3893
      // Predicated region
      $region69: #{tpu_custom_call.1} parent=67 // pred_check
        %p3895 = pneg %p321
      $region70: #{tpu_custom_call.1} parent=67 // pred_check_branch
        %3897 = sbr.rel (%p3895) target = $region72
      $region71: #{tpu_custom_call.1} parent=67 // pred_region
        %s3898 = smul.u32 2, %s28
      $region72: #{tpu_custom_call.1} parent=67 // pred_fallthru
        _
    $region68: #{tpu_custom_call.1} parent=5 // pred_fallthru
      _
    %p3899 = scmp.le.s32.totalorder 2, %s18
    // Predicated region
    $region73: #{tpu_custom_call.1} parent=5 // pred_check
      %p3900 = pneg %p3899
    $region74: #{tpu_custom_call.1} parent=5 // pred_check_branch
      %3902 = sbr.rel (%p3900) target = $region76
    $region75: #{tpu_custom_call.1} parent=5 // pred_region
      %s3903 = ssub.s32 %s18, 2
      // Predicated region
      $region77: #{tpu_custom_call.1} parent=75 // pred_check
        %p3904 = pneg %p327
      $region78: #{tpu_custom_call.1} parent=75 // pred_check_branch
        %3906 = sbr.rel (%p3904) target = $region80
      $region79: #{tpu_custom_call.1} parent=75 // pred_region
        %s3907 = smul.u32 2, %s30
        %p3908 = scmp.lt.s32.totalorder %s29, 1
        %s3909 = scalar_select %p3908, %s29, 1
        %p3910 = scmp.lt.s32.totalorder %s3907, 1
        %s3911 = scalar_select %p3910, %s3907, 1
        %s3912 = smul.addr %s3909, 2
        %s3913 = sadd.s32 %s3911, %s3912
        %s3914 = smul.addr %s3913, 4
        %s3915 = scalar_lea.vmem %s12, %s3914
      $region80: #{tpu_custom_call.1} parent=75 // pred_fallthru
        _
    $region76: #{tpu_custom_call.1} parent=5 // pred_fallthru
      _
  $region6: #{tpu_custom_call.1} parent=0 // loop_footer
    %s22 = sadd.s32 1, %s18
  $region7: #{tpu_custom_call.1} parent=0 // loop_footer_branch
    %17 = sbr.rel target = $region3
  $region8: #{tpu_custom_call.1} parent=0 // loop_exit
    _

// kernel: tpu_custom_call.1
$region0: #{tpu_custom_call.1}
  #allocation0 [shape = 'u32[]', space=smem, size = 0x4, offset = 0x4, fixed_abs, tag = 'smem constant byte address 0x4 - core index']
  #allocation1 [shape = 'u32[144,128]{1,0:T(1,128)}', space=vmem, size = 0x12000, scoped, tag = 'internal scratch']
  #allocation2 [shape = 'f32[96,256]{1,0:T(8,128)}', space=vmem, size = 0x18000, scoped, tag = 'scratch operand']
  %s0 = inlined_call_operand.vmem [shape: f32[2,2,256], index: 0, kind: input, shape index: {}]
  %s1 = inlined_call_operand.vmem [shape: f32[2,4,256], index: 1, kind: input, shape index: {}]
  %s2 = inlined_call_operand.vmem [shape: bf16[96,4], index: 2, kind: input, shape index: {}]
  %s3 = inlined_call_operand.vmem [shape: f32[32,1], index: 3, kind: input, shape index: {}]
  %s4 = inlined_call_operand.vmem [shape: bf16[32,2], index: 4, kind: input, shape index: {}]
  %s5 = inlined_call_operand.vmem [shape: f32[32,1], index: 5, kind: input, shape index: {}]
  %s6 = inlined_call_operand.vmem [shape: bf16[2,32,64], index: 6, kind: input, shape index: {}]
  %s7 = inlined_call_operand.vmem [shape: f32[2,32,1], index: 7, kind: input, shape index: {}]
  %s8 = inlined_call_operand.vmem [shape: bf16[2,32,32], index: 8, kind: input, shape index: {}]
  %s9 = inlined_call_operand.vmem [shape: f32[2,32,1], index: 9, kind: input, shape index: {}]
  %s10 = inlined_call_operand.vmem [shape: bf16[3,32], index: 10, kind: input, shape index: {}]
  %s11 = inlined_call_operand.vmem [shape: f32[3,1], index: 11, kind: input, shape index: {}]
  %s12 = inlined_call_operand.vmem [shape: f32[2,3,256], index: 12, kind: output, shape index: {}]
  %s13 = sld [smem:[#allocation0]]
  $region81: #{tpu_custom_call.1} parent=0
    _
  %s15 = ssub.s32 1, %s13
  %s16 = scalar_select 0, %s15, %s13
  loop: start=0, step=1, limit=4
  $region2: #{tpu_custom_call.1} parent=0 // loop_pre_header
    _
  $region3: #{tpu_custom_call.1} parent=0 // loop_header
    %s18 = sphi 0, %s22
    %p19 = scmp.ge.s32.totalorder %s18, 4
    %s25 = sphi 0, %s37
    %s26 = sphi 0, %s33
    %s27 = sphi 0, %s25
    %s28 = sphi 0, %s26
    %s29 = sphi 0, %s27
    %s30 = sphi 0, %s28
    %s42 = sphi 0, %s44
    %s45 = sphi 0, %s42
    %s46 = sphi 0, %s45
    %s62 = sphi 0, %s46
    %s70 = sphi 0, %s72
    %s73 = sphi 0, %s70
    %s74 = sphi 0, %s73
    %s90 = sphi 0, %s74
    %s94 = sphi 0, %s94
    %s96 = sphi 0, %s94
    %s97 = sphi 0, %s96
    %s111 = sphi 0, %s97
    %s115 = sphi 0, %s115
    %s117 = sphi 0, %s115
    %s118 = sphi 0, %s117
    %s132 = sphi 0, %s118
    %s136 = sphi 0, %s136
    %s138 = sphi 0, %s136
    %s139 = sphi 0, %s138
    %s153 = sphi 0, %s139
    %s157 = sphi 0, %s157
    %s159 = sphi 0, %s157
    %s160 = sphi 0, %s159
    %s174 = sphi 0, %s160
    %s178 = sphi 0, %s178
    %s180 = sphi 0, %s178
    %s181 = sphi 0, %s180
    %s195 = sphi 0, %s181
    %s199 = sphi 0, %s199
    %s201 = sphi 0, %s199
    %s202 = sphi 0, %s201
    %s216 = sphi 0, %s202
    %s220 = sphi 0, %s220
    %s222 = sphi 0, %s220
    %s223 = sphi 0, %s222
    %s237 = sphi 0, %s223
    %s241 = sphi 0, %s241
    %s243 = sphi 0, %s241
    %s244 = sphi 0, %s243
    %s258 = sphi 0, %s244
    %s262 = sphi 0, %s262
    %s264 = sphi 0, %s262
    %s265 = sphi 0, %s264
    %s279 = sphi 0, %s265
    %s283 = sphi 0, %s283
    %s285 = sphi 0, %s283
    %s286 = sphi 0, %s285
    %s300 = sphi 0, %s286
    %s308 = sphi 0, %s310
    %s311 = sphi 0, %s308
    %s312 = sphi 0, %s311
    %s328 = sphi 0, %s312
  $region4: #{tpu_custom_call.1} parent=0 // loop_header_branch
    %21 = sbr.rel (%p19) target = $region8
  $region5: #{tpu_custom_call.1} parent=0 // loop_body
    %s23 = ssub.s32 %s18, 1
    %s24 = ssub.s32 %s18, 2
    %s31 = sadd.s32 1, %s26
    %p32 = scmp.ge.s32.totalorder %s31, 1
    %s33 = scalar_select %p32, 0, %s31
    %s34 = sadd.s32 1, %s25
    %s35 = scalar_select %p32, %s34, %s25
    %p36 = scmp.ge.s32.totalorder %s35, 2
    %s37 = scalar_select %p36, 0, %s35
    %s38 = ssub.s32 %s25, %s37
    %s39 = ssub.s32 %s26, %s33
    %s40 = sor.u32 %s38, %s39
    %p41 = scmp.eq.s32.totalorder %s40, 0
    %s43 = sadd.s32 %s42, 1
    %s44 = scalar_select %p41, %s42, %s43
    %p47 = pneg %p41
    %p48 = scmp.eq.s32.totalorder %s18, 1
    %p49 = por %p47, %p48
    %p50 = scmp.ne.s32.totalorder %s42, %s45
    %p51 = scmp.eq.s32.totalorder %s18, 0
    %p52 = por %p50, %p51
    %p53 = scmp.ne.s32.totalorder %s42, %s45
    %p54 = scmp.eq.s32.totalorder %s23, 1
    %p55 = por %p53, %p54
    %p56 = scmp.ne.s32.totalorder %s45, %s46
    %p57 = scmp.eq.s32.totalorder %s23, 0
    %p58 = por %p56, %p57
    %p59 = scmp.ne.s32.totalorder %s45, %s46
    %p60 = scmp.eq.s32.totalorder %s24, 1
    %p61 = por %p59, %p60
    %p63 = scmp.ne.s32.totalorder %s46, %s62
    %p64 = scmp.eq.s32.totalorder %s24, 0
    %p65 = por %p63, %p64
    %s66 = ssub.s32 %s25, %s37
    %s67 = ssub.s32 %s26, %s33
    %s68 = sor.u32 %s66, %s67
    %p69 = scmp.eq.s32.totalorder %s68, 0
    %s71 = sadd.s32 %s70, 1
    %s72 = scalar_select %p69, %s70, %s71
    %p75 = pneg %p69
    %p76 = scmp.eq.s32.totalorder %s18, 1
    %p77 = por %p75, %p76
    %p78 = scmp.ne.s32.totalorder %s70, %s73
    %p79 = scmp.eq.s32.totalorder %s18, 0
    %p80 = por %p78, %p79
    %p81 = scmp.ne.s32.totalorder %s70, %s73
    %p82 = scmp.eq.s32.totalorder %s23, 1
    %p83 = por %p81, %p82
    %p84 = scmp.ne.s32.totalorder %s73, %s74
    %p85 = scmp.eq.s32.totalorder %s23, 0
    %p86 = por %p84, %p85
    %p87 = scmp.ne.s32.totalorder %s73, %s74
    %p88 = scmp.eq.s32.totalorder %s24, 1
    %p89 = por %p87, %p88
    %p91 = scmp.ne.s32.totalorder %s74, %s90
    %p92 = scmp.eq.s32.totalorder %s24, 0
    %p93 = por %p91, %p92
    %s95 = sadd.s32 %s94, 1
    %p98 = scmp.eq.s32.totalorder %s18, 1
    %p99 = scmp.ne.s32.totalorder %s94, %s96
    %p100 = scmp.eq.s32.totalorder %s18, 0
    %p101 = por %p99, %p100
    %p102 = scmp.ne.s32.totalorder %s94, %s96
    %p103 = scmp.eq.s32.totalorder %s23, 1
    %p104 = por %p102, %p103
    %p105 = scmp.ne.s32.totalorder %s96, %s97
    %p106 = scmp.eq.s32.totalorder %s23, 0
    %p107 = por %p105, %p106
    %p108 = scmp.ne.s32.totalorder %s96, %s97
    %p109 = scmp.eq.s32.totalorder %s24, 1
    %p110 = por %p108, %p109
    %p112 = scmp.ne.s32.totalorder %s97, %s111
    %p113 = scmp.eq.s32.totalorder %s24, 0
    %p114 = por %p112, %p113
    %s116 = sadd.s32 %s115, 1
    %p119 = scmp.eq.s32.totalorder %s18, 1
    %p120 = scmp.ne.s32.totalorder %s115, %s117
    %p121 = scmp.eq.s32.totalorder %s18, 0
    %p122 = por %p120, %p121
    %p123 = scmp.ne.s32.totalorder %s115, %s117
    %p124 = scmp.eq.s32.totalorder %s23, 1
    %p125 = por %p123, %p124
    %p126 = scmp.ne.s32.totalorder %s117, %s118
    %p127 = scmp.eq.s32.totalorder %s23, 0
    %p128 = por %p126, %p127
    %p129 = scmp.ne.s32.totalorder %s117, %s118
    %p130 = scmp.eq.s32.totalorder %s24, 1
    %p131 = por %p129, %p130
    %p133 = scmp.ne.s32.totalorder %s118, %s132
    %p134 = scmp.eq.s32.totalorder %s24, 0
    %p135 = por %p133, %p134
    %s137 = sadd.s32 %s136, 1
    %p140 = scmp.eq.s32.totalorder %s18, 1
    %p141 = scmp.ne.s32.totalorder %s136, %s138
    %p142 = scmp.eq.s32.totalorder %s18, 0
    %p143 = por %p141, %p142
    %p144 = scmp.ne.s32.totalorder %s136, %s138
    %p145 = scmp.eq.s32.totalorder %s23, 1
    %p146 = por %p144, %p145
    %p147 = scmp.ne.s32.totalorder %s138, %s139
    %p148 = scmp.eq.s32.totalorder %s23, 0
    %p149 = por %p147, %p148
    %p150 = scmp.ne.s32.totalorder %s138, %s139
    %p151 = scmp.eq.s32.totalorder %s24, 1
    %p152 = por %p150, %p151
    %p154 = scmp.ne.s32.totalorder %s139, %s153
    %p155 = scmp.eq.s32.totalorder %s24, 0
    %p156 = por %p154, %p155
    %s158 = sadd.s32 %s157, 1
    %p161 = scmp.eq.s32.totalorder %s18, 1
    %p162 = scmp.ne.s32.totalorder %s157, %s159
    %p163 = scmp.eq.s32.totalorder %s18, 0
    %p164 = por %p162, %p163
    %p165 = scmp.ne.s32.totalorder %s157, %s159
    %p166 = scmp.eq.s32.totalorder %s23, 1
    %p167 = por %p165, %p166
    %p168 = scmp.ne.s32.totalorder %s159, %s160
    %p169 = scmp.eq.s32.totalorder %s23, 0
    %p170 = por %p168, %p169
    %p171 = scmp.ne.s32.totalorder %s159, %s160
    %p172 = scmp.eq.s32.totalorder %s24, 1
    %p173 = por %p171, %p172
    %p175 = scmp.ne.s32.totalorder %s160, %s174
    %p176 = scmp.eq.s32.totalorder %s24, 0
    %p177 = por %p175, %p176
    %s179 = sadd.s32 %s178, 1
    %p182 = scmp.eq.s32.totalorder %s18, 1
    %p183 = scmp.ne.s32.totalorder %s178, %s180
    %p184 = scmp.eq.s32.totalorder %s18, 0
    %p185 = por %p183, %p184
    %p186 = scmp.ne.s32.totalorder %s178, %s180
    %p187 = scmp.eq.s32.totalorder %s23, 1
    %p188 = por %p186, %p187
    %p189 = scmp.ne.s32.totalorder %s180, %s181
    %p190 = scmp.eq.s32.totalorder %s23, 0
    %p191 = por %p189, %p190
    %p192 = scmp.ne.s32.totalorder %s180, %s181
    %p193 = scmp.eq.s32.totalorder %s24, 1
    %p194 = por %p192, %p193
    %p196 = scmp.ne.s32.totalorder %s181, %s195
    %p197 = scmp.eq.s32.totalorder %s24, 0
    %p198 = por %p196, %p197
    %s200 = sadd.s32 %s199, 1
    %p203 = scmp.eq.s32.totalorder %s18, 1
    %p204 = scmp.ne.s32.totalorder %s199, %s201
    %p205 = scmp.eq.s32.totalorder %s18, 0
    %p206 = por %p204, %p205
    %p207 = scmp.ne.s32.totalorder %s199, %s201
    %p208 = scmp.eq.s32.totalorder %s23, 1
    %p209 = por %p207, %p208
    %p210 = scmp.ne.s32.totalorder %s201, %s202
    %p211 = scmp.eq.s32.totalorder %s23, 0
    %p212 = por %p210, %p211
    %p213 = scmp.ne.s32.totalorder %s201, %s202
    %p214 = scmp.eq.s32.totalorder %s24, 1
    %p215 = por %p213, %p214
    %p217 = scmp.ne.s32.totalorder %s202, %s216
    %p218 = scmp.eq.s32.totalorder %s24, 0
    %p219 = por %p217, %p218
    %s221 = sadd.s32 %s220, 1
    %p224 = scmp.eq.s32.totalorder %s18, 1
    %p225 = scmp.ne.s32.totalorder %s220, %s222
    %p226 = scmp.eq.s32.totalorder %s18, 0
    %p227 = por %p225, %p226
    %p228 = scmp.ne.s32.totalorder %s220, %s222
    %p229 = scmp.eq.s32.totalorder %s23, 1
    %p230 = por %p228, %p229
    %p231 = scmp.ne.s32.totalorder %s222, %s223
    %p232 = scmp.eq.s32.totalorder %s23, 0
    %p233 = por %p231, %p232
    %p234 = scmp.ne.s32.totalorder %s222, %s223
    %p235 = scmp.eq.s32.totalorder %s24, 1
    %p236 = por %p234, %p235
    %p238 = scmp.ne.s32.totalorder %s223, %s237
    %p239 = scmp.eq.s32.totalorder %s24, 0
    %p240 = por %p238, %p239
    %s242 = sadd.s32 %s241, 1
    %p245 = scmp.eq.s32.totalorder %s18, 1
    %p246 = scmp.ne.s32.totalorder %s241, %s243
    %p247 = scmp.eq.s32.totalorder %s18, 0
    %p248 = por %p246, %p247
    %p249 = scmp.ne.s32.totalorder %s241, %s243
    %p250 = scmp.eq.s32.totalorder %s23, 1
    %p251 = por %p249, %p250
    %p252 = scmp.ne.s32.totalorder %s243, %s244
    %p253 = scmp.eq.s32.totalorder %s23, 0
    %p254 = por %p252, %p253
    %p255 = scmp.ne.s32.totalorder %s243, %s244
    %p256 = scmp.eq.s32.totalorder %s24, 1
    %p257 = por %p255, %p256
    %p259 = scmp.ne.s32.totalorder %s244, %s258
    %p260 = scmp.eq.s32.totalorder %s24, 0
    %p261 = por %p259, %p260
    %s263 = sadd.s32 %s262, 1
    %p266 = scmp.eq.s32.totalorder %s18, 1
    %p267 = scmp.ne.s32.totalorder %s262, %s264
    %p268 = scmp.eq.s32.totalorder %s18, 0
    %p269 = por %p267, %p268
    %p270 = scmp.ne.s32.totalorder %s262, %s264
    %p271 = scmp.eq.s32.totalorder %s23, 1
    %p272 = por %p270, %p271
    %p273 = scmp.ne.s32.totalorder %s264, %s265
    %p274 = scmp.eq.s32.totalorder %s23, 0
    %p275 = por %p273, %p274
    %p276 = scmp.ne.s32.totalorder %s264, %s265
    %p277 = scmp.eq.s32.totalorder %s24, 1
    %p278 = por %p276, %p277
    %p280 = scmp.ne.s32.totalorder %s265, %s279
    %p281 = scmp.eq.s32.totalorder %s24, 0
    %p282 = por %p280, %p281
    %s284 = sadd.s32 %s283, 1
    %p287 = scmp.eq.s32.totalorder %s18, 1
    %p288 = scmp.ne.s32.totalorder %s283, %s285
    %p289 = scmp.eq.s32.totalorder %s18, 0
    %p290 = por %p288, %p289
    %p291 = scmp.ne.s32.totalorder %s283, %s285
    %p292 = scmp.eq.s32.totalorder %s23, 1
    %p293 = por %p291, %p292
    %p294 = scmp.ne.s32.totalorder %s285, %s286
    %p295 = scmp.eq.s32.totalorder %s23, 0
    %p296 = por %p294, %p295
    %p297 = scmp.ne.s32.totalorder %s285, %s286
    %p298 = scmp.eq.s32.totalorder %s24, 1
    %p299 = por %p297, %p298
    %p301 = scmp.ne.s32.totalorder %s286, %s300
    %p302 = scmp.eq.s32.totalorder %s24, 0
    %p303 = por %p301, %p302
    %s304 = ssub.s32 %s25, %s37
    %s305 = ssub.s32 %s26, %s33
    %s306 = sor.u32 %s304, %s305
    %p307 = scmp.eq.s32.totalorder %s306, 0
    %s309 = sadd.s32 %s308, 1
    %s310 = scalar_select %p307, %s308, %s309
    %p313 = pneg %p307
    %p314 = scmp.eq.s32.totalorder %s18, 1
    %p315 = por %p313, %p314
    %p316 = scmp.ne.s32.totalorder %s308, %s311
    %p317 = scmp.eq.s32.totalorder %s18, 0
    %p318 = por %p316, %p317
    %p319 = scmp.ne.s32.totalorder %s308, %s311
    %p320 = scmp.eq.s32.totalorder %s23, 1
    %p321 = por %p319, %p320
    %p322 = scmp.ne.s32.totalorder %s311, %s312
    %p323 = scmp.eq.s32.totalorder %s23, 0
    %p324 = por %p322, %p323
    %p325 = scmp.ne.s32.totalorder %s311, %s312
    %p326 = scmp.eq.s32.totalorder %s24, 1
    %p327 = por %p325, %p326
    %p329 = scmp.ne.s32.totalorder %s312, %s328
    %p330 = scmp.eq.s32.totalorder %s24, 0
    %p331 = por %p329, %p330
    %p332 = scmp.le.s32.totalorder 1, %s18
    %p333 = scmp.lt.s32.totalorder %s18, 3
    %p334 = pnand %p332, %p333
    %p335 = pneg %p334
    // Predicated region
    $region9: #{tpu_custom_call.1} parent=5 // pred_check
      _
    $region10: #{tpu_custom_call.1} parent=5 // pred_check_branch
      %337 = sbr.rel (%p334) target = $region12
    $region11: #{tpu_custom_call.1} parent=5 // pred_region
      %s338 = ssub.s32 %s18, 1
      // Predicated region
      $region13: #{tpu_custom_call.1} parent=11 // pred_check
        %p339 = pneg %p107
      $region14: #{tpu_custom_call.1} parent=11 // pred_check_branch
        %341 = sbr.rel (%p339) target = $region16
      $region15: #{tpu_custom_call.1} parent=11 // pred_region
        _
      $region16: #{tpu_custom_call.1} parent=11 // pred_fallthru
        _
      // Predicated region
      $region17: #{tpu_custom_call.1} parent=11 // pred_check
        %p342 = pneg %p128
      $region18: #{tpu_custom_call.1} parent=11 // pred_check_branch
        %344 = sbr.rel (%p342) target = $region20
      $region19: #{tpu_custom_call.1} parent=11 // pred_region
        _
      $region20: #{tpu_custom_call.1} parent=11 // pred_fallthru
        _
      // Predicated region
      $region21: #{tpu_custom_call.1} parent=11 // pred_check
        %p345 = pneg %p149
      $region22: #{tpu_custom_call.1} parent=11 // pred_check_branch
        %347 = sbr.rel (%p345) target = $region24
      $region23: #{tpu_custom_call.1} parent=11 // pred_region
        _
      $region24: #{tpu_custom_call.1} parent=11 // pred_fallthru
        _
      // Predicated region
      $region25: #{tpu_custom_call.1} parent=11 // pred_check
        %p348 = pneg %p170
      $region26: #{tpu_custom_call.1} parent=11 // pred_check_branch
        %350 = sbr.rel (%p348) target = $region28
      $region27: #{tpu_custom_call.1} parent=11 // pred_region
        _
      $region28: #{tpu_custom_call.1} parent=11 // pred_fallthru
        _
      // Predicated region
      $region29: #{tpu_custom_call.1} parent=11 // pred_check
        %p351 = pneg %p191
      $region30: #{tpu_custom_call.1} parent=11 // pred_check_branch
        %353 = sbr.rel (%p351) target = $region32
      $region31: #{tpu_custom_call.1} parent=11 // pred_region
        _
      $region32: #{tpu_custom_call.1} parent=11 // pred_fallthru
        _
      // Predicated region
      $region33: #{tpu_custom_call.1} parent=11 // pred_check
        %p354 = pneg %p212
      $region34: #{tpu_custom_call.1} parent=11 // pred_check_branch
        %356 = sbr.rel (%p354) target = $region36
      $region35: #{tpu_custom_call.1} parent=11 // pred_region
        _
      $region36: #{tpu_custom_call.1} parent=11 // pred_fallthru
        _
      // Predicated region
      $region37: #{tpu_custom_call.1} parent=11 // pred_check
        %p357 = pneg %p233
      $region38: #{tpu_custom_call.1} parent=11 // pred_check_branch
        %359 = sbr.rel (%p357) target = $region40
      $region39: #{tpu_custom_call.1} parent=11 // pred_region
        _
      $region40: #{tpu_custom_call.1} parent=11 // pred_fallthru
        _
      // Predicated region
      $region41: #{tpu_custom_call.1} parent=11 // pred_check
        %p360 = pneg %p254
      $region42: #{tpu_custom_call.1} parent=11 // pred_check_branch
        %362 = sbr.rel (%p360) target = $region44
      $region43: #{tpu_custom_call.1} parent=11 // pred_region
        _
      $region44: #{tpu_custom_call.1} parent=11 // pred_fallthru
        _
      // Predicated region
      $region45: #{tpu_custom_call.1} parent=11 // pred_check
        %p363 = pneg %p275
      $region46: #{tpu_custom_call.1} parent=11 // pred_check_branch
        %365 = sbr.rel (%p363) target = $region48
      $region47: #{tpu_custom_call.1} parent=11 // pred_region
        _
      $region48: #{tpu_custom_call.1} parent=11 // pred_fallthru
        _
      // Predicated region
      $region49: #{tpu_custom_call.1} parent=11 // pred_check
        %p366 = pneg %p296
      $region50: #{tpu_custom_call.1} parent=11 // pred_check_branch
        %368 = sbr.rel (%p366) target = $region52
      $region51: #{tpu_custom_call.1} parent=11 // pred_region
        _
      $region52: #{tpu_custom_call.1} parent=11 // pred_fallthru
        _
    $region12: #{tpu_custom_call.1} parent=5 // pred_fallthru
      _
    %p369 = scmp.lt.s32.totalorder %s18, 2
    // Predicated region
    $region53: #{tpu_custom_call.1} parent=5 // pred_check
      %p370 = pneg %p369
    $region54: #{tpu_custom_call.1} parent=5 // pred_check_branch
      %372 = sbr.rel (%p370) target = $region56
    $region55: #{tpu_custom_call.1} parent=5 // pred_region
      // Predicated region
      $region57: #{tpu_custom_call.1} parent=55 // pred_check
        %p373 = pneg %p52
      $region58: #{tpu_custom_call.1} parent=55 // pred_check_branch
        %375 = sbr.rel (%p373) target = $region60
      $region59: #{tpu_custom_call.1} parent=55 // pred_region
        %s376 = smul.u32 2, %s26
        %p377 = scmp.lt.s32.totalorder %s25, 1
        %s378 = scalar_select %p377, %s25, 1
        %p379 = scmp.lt.s32.totalorder %s376, 1
        %s380 = scalar_select %p379, %s376, 1
        %s381 = smul.addr %s378, 2
        %s382 = sadd.s32 %s380, %s381
        %s383 = smul.addr %s382, 2
        %s384 = scalar_lea.vmem %s0, %s383
        %s385 = smul.u32 2, %s26
      $region60: #{tpu_custom_call.1} parent=55 // pred_fallthru
        _
      // Predicated region
      $region61: #{tpu_custom_call.1} parent=55 // pred_check
        %p386 = pneg %p80
      $region62: #{tpu_custom_call.1} parent=55 // pred_check_branch
        %388 = sbr.rel (%p386) target = $region64
      $region63: #{tpu_custom_call.1} parent=55 // pred_region
        %s389 = smul.u32 2, %s26
        %p390 = scmp.lt.s32.totalorder %s25, 1
        %s391 = scalar_select %p390, %s25, 1
        %p392 = scmp.lt.s32.totalorder %s389, 1
        %s393 = scalar_select %p392, %s389, 1
        %s394 = smul.addr %s391, 2
        %s395 = sadd.s32 %s393, %s394
        %s396 = smul.addr %s395, 4
        %s397 = scalar_lea.vmem %s1, %s396
        %s398 = smul.u32 2, %s26
      $region64: #{tpu_custom_call.1} parent=55 // pred_fallthru
        _
    $region56: #{tpu_custom_call.1} parent=5 // pred_fallthru
      _
    %p399 = scmp.le.s32.totalorder 1, %s18
    %p400 = scmp.lt.s32.totalorder %s18, 3
    %p401 = pnand %p399, %p400
    %p402 = pneg %p401
    // Predicated region
    $region65: #{tpu_custom_call.1} parent=5 // pred_check
      _
    $region66: #{tpu_custom_call.1} parent=5 // pred_check_branch
      %404 = sbr.rel (%p401) target = $region68
    $region67: #{tpu_custom_call.1} parent=5 // pred_region
      %s405 = ssub.s32 %s18, 1
      %s406 = smul.u32 2, %s28
      %p407 = scmp.lt.s32.totalorder %s27, 1
      %s408 = scalar_select %p407, %s27, 1
      %p409 = scmp.lt.s32.totalorder %s406, 1
      %s410 = scalar_select %p409, %s406, 1
      %s411 = smul.addr %s408, 2
      %s412 = sadd.s32 %s410, %s411
      %s413 = smul.addr %s412, 2
      %s414 = scalar_lea.vmem %s0, %s413
      %p415 = pneg %p58
      %p416 = pneg %p55
      %s417 = smul.u32 2, %s28
      %p418 = scmp.lt.s32.totalorder %s27, 1
      %s419 = scalar_select %p418, %s27, 1
      %p420 = scmp.lt.s32.totalorder %s417, 1
      %s421 = scalar_select %p420, %s417, 1
      %s422 = smul.addr %s419, 2
      %s423 = sadd.s32 %s421, %s422
      %s424 = smul.addr %s423, 4
      %s425 = scalar_lea.vmem %s1, %s424
      %p426 = pneg %p86
      %p427 = pneg %p83
      %p428 = pneg %p107
      %p429 = pneg %p104
      %p430 = pneg %p128
      %p431 = pneg %p125
      %p432 = pneg %p149
      %p433 = pneg %p146
      %p434 = pneg %p170
      %p435 = pneg %p167
      %p436 = pneg %p191
      %p437 = pneg %p188
      %p438 = pneg %p212
      %p439 = pneg %p209
      %p440 = pneg %p233
      %p441 = pneg %p230
      %p442 = pneg %p254
      %p443 = pneg %p251
      %p444 = pneg %p275
      %p445 = pneg %p272
      %p446 = pneg %p296
      %p447 = pneg %p293
      %p448 = pneg %p324
      %p449 = pneg %p321
      %s450 = smul.u32 2, %s28
      %p451 = scmp.lt.s32.totalorder %s27, 1
      %s452 = scalar_select %p451, %s27, 1
      %p453 = scmp.lt.s32.totalorder %s450, 1
      %s454 = scalar_select %p453, %s450, 1
      %s455 = smul.addr %s452, 2
      %s456 = sadd.s32 %s454, %s455
      %s457 = smul.addr %s456, 4
      %s458 = scalar_lea.vmem %s12, %s457
      %s459 = smul.u32 2, %s28
      %p460 = scmp.lt.s32.totalorder %s27, 1
      %s461 = scalar_select %p460, %s27, 1
      %p462 = scmp.lt.s32.totalorder %s459, 1
      %s463 = scalar_select %p462, %s459, 1
      %s464 = smul.addr %s461, 2
      %s465 = sadd.s32 %s463, %s464
      %s466 = smul.addr %s465, 2
      %s467 = scalar_lea.vmem %s0, %s466
      %s468 = smul.u32 2, %s28
      %s469 = smul.u32 2, %s28
      %p470 = scmp.lt.s32.totalorder %s27, 1
      %s471 = scalar_select %p470, %s27, 1
      %p472 = scmp.lt.s32.totalorder %s469, 1
      %s473 = scalar_select %p472, %s469, 1
      %s474 = smul.addr %s471, 2
      %s475 = sadd.s32 %s473, %s474
      %s476 = smul.addr %s475, 4
      %s477 = scalar_lea.vmem %s1, %s476
      %s478 = smul.u32 2, %s28
      %s479 = smul.u32 2, %s28
      %p480 = scmp.lt.s32.totalorder %s27, 1
      %s481 = scalar_select %p480, %s27, 1
      %p482 = scmp.lt.s32.totalorder %s479, 1
      %s483 = scalar_select %p482, %s479, 1
      %s484 = smul.addr %s481, 2
      %s485 = sadd.s32 %s483, %s484
      %s486 = smul.addr %s485, 4
      %s487 = scalar_lea.vmem %s12, %s486
      %s488 = smul.u32 2, %s28
      %v490 = vld [vmem:[%s467] sm:$0xf]
      %v493 = vunpack.c.l.s4 1983009808
      %v494 = vunpack.c.0.s8 %v493
      %v495 = vlaneseq
      %v496 = vshrl.u32 %v495, 7
      %v497 = vsub.s32 %v494, %v496
      %v498 = vrot.slane %v490, %v497
      %v499 = vcombine.high %v498, %v498
      %v502 = vpack.c.bf16 %v498, %v498
      %v503 = vpack.c.bf16 %v499, %v499
      %v504 = vld [vmem:[%s477] sm:$0xff]
      %v506 = vcombine.high %v504, %v504
      %v508 = vpack.c.bf16 %v504, %v504
      %v509 = vpack.c.bf16 %v506, %v506
      %v510 = vld [vmem:[%s2] sm:$0xf]
      %v511 = vld [vmem:[%s2 + $0x4] sm:$0xf]
      %v512 = vld [vmem:[%s2 + $0x8] sm:$0xf]
      %v513 = vld [vmem:[%s2 + $0xc] sm:$0xf]
      %v514 = vld [vmem:[%s2 + $0x10] sm:$0xf]
      %v515 = vld [vmem:[%s2 + $0x14] sm:$0xf]
      %v516 = vld [vmem:[%s2 + $0x18] sm:$0xf]
      %v517 = vld [vmem:[%s2 + $0x1c] sm:$0xf]
      %v518 = vld [vmem:[%s2 + $0x20] sm:$0xf]
      %v519 = vld [vmem:[%s2 + $0x24] sm:$0xf]
      %v520 = vld [vmem:[%s2 + $0x28] sm:$0xf]
      %v521 = vld [vmem:[%s2 + $0x2c] sm:$0xf]
      %v534 = vunpack.c.l.b16 %v510
      %v535 = vunpack.c.l.b16 %v511
      %v536 = vunpack.c.l.b16 %v512
      %v537 = vunpack.c.l.b16 %v513
      %v538 = vunpack.c.l.b16 %v514
      %v539 = vunpack.c.l.b16 %v515
      %v540 = vunpack.c.l.b16 %v516
      %v541 = vunpack.c.l.b16 %v517
      %v542 = vunpack.c.l.b16 %v518
      %v543 = vunpack.c.l.b16 %v519
      %v544 = vunpack.c.l.b16 %v520
      %v545 = vunpack.c.l.b16 %v521
      %v546 = vpack.c.b16 %v535, %v534
      %v547 = vpack.c.b16 %v537, %v536
      %v548 = vpack.c.b16 %v539, %v538
      %v549 = vpack.c.b16 %v541, %v540
      %v550 = vpack.c.b16 %v543, %v542
      %v551 = vpack.c.b16 %v545, %v544
      %vm552 = vcmask 31744
      %v554 = vsel %vm552, %v546, 0
      %v557 = vsel %vm552, %v547, 0
      %v560 = vsel %vm552, %v548, 0
      %v563 = vsel %vm552, %v549, 0
      %v566 = vsel %vm552, %v550, 0
      %v569 = vsel %vm552, %v551, 0
      %vm571 = vcmask 1041408
      %v573 = vsel %vm571, %v508, 0
      %v576 = vsel %vm571, %v509, 0
      %578 = vmatprep.subr.bf16.mxu0 %v576
      %579 = vmatpush1.bf16.msra.mxu0 %v573
      %580 = vmatprep.subr.bf16.mxu0 0
      %581 = vmatpush1.bf16.msra.mxu0 0
      %582 = vmatprep.subr.bf16.mxu0 0
      %583 = vmatpush1.bf16.msra.mxu0 0
      %584 = vmatprep.subr.bf16.mxu0 0
      %585 = vmatpush1.bf16.msra.mxu0 0
      %586 = vmatprep.subr.bf16.mxu0 0
      %587 = vmatpush1.bf16.msra.mxu0 0
      %588 = vmatprep.subr.bf16.mxu0 0
      %589 = vmatpush1.bf16.msra.mxu0 0
      %590 = vmatprep.subr.bf16.mxu0 0
      %591 = vmatpush1.bf16.msra.mxu0 0
      %592 = vmatprep.subr.bf16.mxu0 0
      %593 = vmatpush1.bf16.msra.mxu0 0
      %594 = vmatprep.subr.bf16.mxu0 0
      %595 = vmatpush1.bf16.msra.mxu0 0
      %596 = vmatprep.subr.bf16.mxu0 0
      %597 = vmatpush1.bf16.msra.mxu0 0
      %598 = vmatprep.subr.bf16.mxu0 0
      %599 = vmatpush1.bf16.msra.mxu0 0
      %600 = vmatprep.subr.bf16.mxu0 0
      %601 = vmatpush1.bf16.msra.mxu0 0
      %602 = vmatprep.subr.bf16.mxu0 0
      %603 = vmatpush1.bf16.msra.mxu0 0
      %604 = vmatprep.subr.bf16.mxu0 0
      %605 = vmatpush1.bf16.msra.mxu0 0
      %606 = vmatprep.subr.bf16.mxu0 0
      %607 = vmatpush1.bf16.msra.mxu0 0
      %608 = vmatprep.subr.bf16.mxu0 0
      %609 = vmatpush1.bf16.msra.mxu0 0
      %610 = vmatprep.mubr.bf16.mxu0 0
      %611 = vmatmul.mubr.bf16.gmra.mrb[0].mxu0 %v554
      %v612 = vpop.f32.mrb[0].mxu0
      %v613 = vadd.f32 0.0, %v612
      %v614 = vpop.f32.mrb[0].mxu0
      %v615 = vadd.f32 0.0, %v614
      %v616 = vpop.f32.mrb[0].mxu0
      %v617 = vadd.f32 0.0, %v616
      %v618 = vpop.f32.mrb[0].mxu0
      %v619 = vadd.f32 0.0, %v618
      %620 = vmatprep.mubr.bf16.mxu0 0
      %621 = vmatmul.mubr.bf16.gmra.mrb[0].mxu0 %v557
      %v622 = vpop.f32.mrb[0].mxu0
      %v623 = vadd.f32 0.0, %v622
      %v624 = vpop.f32.mrb[0].mxu0
      %v625 = vadd.f32 0.0, %v624
      %v626 = vpop.f32.mrb[0].mxu0
      %v627 = vadd.f32 0.0, %v626
      %v628 = vpop.f32.mrb[0].mxu0
      %v629 = vadd.f32 0.0, %v628
      %630 = vmatprep.mubr.bf16.mxu0 0
      %631 = vmatmul.mubr.bf16.gmra.mrb[0].mxu0 %v560
      %v632 = vpop.f32.mrb[0].mxu0
      %v633 = vadd.f32 0.0, %v632
      %v634 = vpop.f32.mrb[0].mxu0
      %v635 = vadd.f32 0.0, %v634
      %v636 = vpop.f32.mrb[0].mxu0
      %v637 = vadd.f32 0.0, %v636
      %v638 = vpop.f32.mrb[0].mxu0
      %v639 = vadd.f32 0.0, %v638
      %640 = vmatprep.mubr.bf16.mxu0 0
      %641 = vmatmul.mubr.bf16.gmra.mrb[0].mxu0 %v563
      %v642 = vpop.f32.mrb[0].mxu0
      %v643 = vadd.f32 0.0, %v642
      %v644 = vpop.f32.mrb[0].mxu0
      %v645 = vadd.f32 0.0, %v644
      %v646 = vpop.f32.mrb[0].mxu0
      %v647 = vadd.f32 0.0, %v646
      %v648 = vpop.f32.mrb[0].mxu0
      %v649 = vadd.f32 0.0, %v648
      %650 = vmatprep.mubr.bf16.mxu0 0
      %651 = vmatmul.mubr.bf16.gmra.mrb[0].mxu0 %v566
      %v652 = vpop.f32.mrb[0].mxu0
      %v653 = vadd.f32 0.0, %v652
      %v654 = vpop.f32.mrb[0].mxu0
      %v655 = vadd.f32 0.0, %v654
      %v656 = vpop.f32.mrb[0].mxu0
      %v657 = vadd.f32 0.0, %v656
      %v658 = vpop.f32.mrb[0].mxu0
      %v659 = vadd.f32 0.0, %v658
      %660 = vmatprep.mubr.bf16.mxu0 0
      %661 = vmatmul.mubr.bf16.gmra.mrb[0].mxu0 %v569
      %v662 = vpop.f32.mrb[0].mxu0
      %v663 = vadd.f32 0.0, %v662
      %v664 = vpop.f32.mrb[0].mxu0
      %v665 = vadd.f32 0.0, %v664
      %v666 = vpop.f32.mrb[0].mxu0
      %v667 = vadd.f32 0.0, %v666
      %v668 = vpop.f32.mrb[0].mxu0
      %v669 = vadd.f32 0.0, %v668
      %670 = vdwg.mxu0
      %671 = vst [vmem:[#allocation2] sm:$0xff] %v613
      %672 = vst [vmem:[#allocation2 + $0x8] sm:$0xff] %v615
      %673 = vst [vmem:[#allocation2 + $0x10] sm:$0xff] %v617
      %674 = vst [vmem:[#allocation2 + $0x18] sm:$0xff] %v619
      %675 = vst [vmem:[#allocation2 + $0x20] sm:$0xff] %v623
      %676 = vst [vmem:[#allocation2 + $0x28] sm:$0xff] %v625
      %677 = vst [vmem:[#allocation2 + $0x30] sm:$0xff] %v627
      %678 = vst [vmem:[#allocation2 + $0x38] sm:$0xff] %v629
      %679 = vst [vmem:[#allocation2 + $0x40] sm:$0xff] %v633
      %680 = vst [vmem:[#allocation2 + $0x48] sm:$0xff] %v635
      %681 = vst [vmem:[#allocation2 + $0x50] sm:$0xff] %v637
      %682 = vst [vmem:[#allocation2 + $0x58] sm:$0xff] %v639
      %683 = vst [vmem:[#allocation2 + $0x60] sm:$0xff] %v643
      %684 = vst [vmem:[#allocation2 + $0x68] sm:$0xff] %v645
      %685 = vst [vmem:[#allocation2 + $0x70] sm:$0xff] %v647
      %686 = vst [vmem:[#allocation2 + $0x78] sm:$0xff] %v649
      %687 = vst [vmem:[#allocation2 + $0x80] sm:$0xff] %v653
      %688 = vst [vmem:[#allocation2 + $0x88] sm:$0xff] %v655
      %689 = vst [vmem:[#allocation2 + $0x90] sm:$0xff] %v657
      %690 = vst [vmem:[#allocation2 + $0x98] sm:$0xff] %v659
      %691 = vst [vmem:[#allocation2 + $0xa0] sm:$0xff] %v663
      %692 = vst [vmem:[#allocation2 + $0xa8] sm:$0xff] %v665
      %693 = vst [vmem:[#allocation2 + $0xb0] sm:$0xff] %v667
      %694 = vst [vmem:[#allocation2 + $0xb8] sm:$0xff] %v669
      %v695 = vld [vmem:[#allocation2] sm:$0xff]
      %v696 = vld [vmem:[#allocation2 + $0x8] sm:$0xff]
      %v697 = vld [vmem:[#allocation2 + $0x10] sm:$0xff]
      %v698 = vld [vmem:[#allocation2 + $0x18] sm:$0xff]
      %v699 = vld [vmem:[#allocation2 + $0x20] sm:$0xff]
      %v700 = vld [vmem:[#allocation2 + $0x28] sm:$0xff]
      %v701 = vld [vmem:[#allocation2 + $0x30] sm:$0xff]
      %v702 = vld [vmem:[#allocation2 + $0x38] sm:$0xff]
      %v703 = vld [vmem:[%s3] sm:$0xff]
      %v704 = vld [vmem:[%s3 + $0x8] sm:$0xff]
      %v705 = vld [vmem:[%s3 + $0x10] sm:$0xff]
      %v706 = vld [vmem:[%s3 + $0x18] sm:$0xff]
      %708 = vset.pattern.permute.xlu0 0
      %709 = vperm.xlu0 %708, %v703
      %v710 = vpop.permute.xlu0 %709
      %713 = vset.pattern.permute.xlu0 0
      %714 = vperm.xlu0 %713, %v704
      %v715 = vpop.permute.xlu0 %714
      %718 = vset.pattern.permute.xlu0 0
      %719 = vperm.xlu0 %718, %v705
      %v720 = vpop.permute.xlu0 %719
      %723 = vset.pattern.permute.xlu0 0
      %724 = vperm.xlu0 %723, %v706
      %v725 = vpop.permute.xlu0 %724
      %v727 = vadd.f32 %v695, %v710
      %v728 = vadd.f32 %v696, %v710
      %v729 = vadd.f32 %v697, %v715
      %v730 = vadd.f32 %v698, %v715
      %v731 = vadd.f32 %v699, %v720
      %v732 = vadd.f32 %v700, %v720
      %v733 = vadd.f32 %v701, %v725
      %v734 = vadd.f32 %v702, %v725
      %v735 = vmax.f32 %v727, 0.0
      %v736 = vmax.f32 %v728, 0.0
      %v737 = vmax.f32 %v729, 0.0
      %v738 = vmax.f32 %v730, 0.0
      %v739 = vmax.f32 %v731, 0.0
      %v740 = vmax.f32 %v732, 0.0
      %v741 = vmax.f32 %v733, 0.0
      %v742 = vmax.f32 %v734, 0.0
      %v743 = vld [vmem:[%s4] sm:$0xf]
      %v744 = vld [vmem:[%s4 + $0x4] sm:$0xf]
      %v745 = vld [vmem:[%s4 + $0x8] sm:$0xf]
      %v746 = vld [vmem:[%s4 + $0xc] sm:$0xf]
      %v747 = vld [vmem:[%s5] sm:$0xff]
      %v748 = vld [vmem:[%s5 + $0x8] sm:$0xff]
      %v749 = vld [vmem:[%s5 + $0x10] sm:$0xff]
      %v750 = vld [vmem:[%s5 + $0x18] sm:$0xff]
      %752 = vset.pattern.permute.xlu0 0
      %753 = vperm.xlu0 %752, %v747
      %v754 = vpop.permute.xlu0 %753
      %757 = vset.pattern.permute.xlu0 0
      %758 = vperm.xlu0 %757, %v748
      %v759 = vpop.permute.xlu0 %758
      %762 = vset.pattern.permute.xlu0 0
      %763 = vperm.xlu0 %762, %v749
      %v764 = vpop.permute.xlu0 %763
      %767 = vset.pattern.permute.xlu0 0
      %768 = vperm.xlu0 %767, %v750
      %v769 = vpop.permute.xlu0 %768
      %v775 = vunpack.c.l.b16 %v743
      %v776 = vunpack.c.l.b16 %v744
      %v777 = vunpack.c.l.b16 %v745
      %v778 = vunpack.c.l.b16 %v746
      %v779 = vpack.c.b16 %v776, %v775
      %v780 = vpack.c.b16 %v778, %v777
      %vm781 = vcmask 15360
      %v783 = vsel %vm781, %v779, 0
      %v786 = vsel %vm781, %v780, 0
      %vm788 = vcmask 1040384
      %v790 = vsel %vm788, %v502, 0
      %v793 = vsel %vm788, %v503, 0
      %795 = vmatprep.subr.bf16.mxu0 %v793
      %796 = vmatpush1.bf16.msra.mxu0 %v790
      %797 = vmatprep.subr.bf16.mxu0 0
      %798 = vmatpush1.bf16.msra.mxu0 0
      %799 = vmatprep.subr.bf16.mxu0 0
      %800 = vmatpush1.bf16.msra.mxu0 0
      %801 = vmatprep.subr.bf16.mxu0 0
      %802 = vmatpush1.bf16.msra.mxu0 0
      %803 = vmatprep.subr.bf16.mxu0 0
      %804 = vmatpush1.bf16.msra.mxu0 0
      %805 = vmatprep.subr.bf16.mxu0 0
      %806 = vmatpush1.bf16.msra.mxu0 0
      %807 = vmatprep.subr.bf16.mxu0 0
      %808 = vmatpush1.bf16.msra.mxu0 0
      %809 = vmatprep.subr.bf16.mxu0 0
      %810 = vmatpush1.bf16.msra.mxu0 0
      %811 = vmatprep.subr.bf16.mxu0 0
      %812 = vmatpush1.bf16.msra.mxu0 0
      %813 = vmatprep.subr.bf16.mxu0 0
      %814 = vmatpush1.bf16.msra.mxu0 0
      %815 = vmatprep.subr.bf16.mxu0 0
      %816 = vmatpush1.bf16.msra.mxu0 0
      %817 = vmatprep.subr.bf16.mxu0 0
      %818 = vmatpush1.bf16.msra.mxu0 0
      %819 = vmatprep.subr.bf16.mxu0 0
      %820 = vmatpush1.bf16.msra.mxu0 0
      %821 = vmatprep.subr.bf16.mxu0 0
      %822 = vmatpush1.bf16.msra.mxu0 0
      %823 = vmatprep.subr.bf16.mxu0 0
      %824 = vmatpush1.bf16.msra.mxu0 0
      %825 = vmatprep.subr.bf16.mxu0 0
      %826 = vmatpush1.bf16.msra.mxu0 0
      %827 = vmatprep.mubr.bf16.mxu0 0
      %828 = vmatmul.mubr.bf16.gmra.mrb[0].mxu0 %v783
      %v829 = vpop.f32.mrb[0].mxu0
      %v830 = vadd.f32 %v754, %v829
      %v831 = vpop.f32.mrb[0].mxu0
      %v832 = vadd.f32 %v754, %v831
      %v833 = vpop.f32.mrb[0].mxu0
      %v834 = vadd.f32 %v759, %v833
      %v835 = vpop.f32.mrb[0].mxu0
      %v836 = vadd.f32 %v759, %v835
      %837 = vmatprep.mubr.bf16.mxu0 0
      %838 = vmatmul.mubr.bf16.gmra.mrb[0].mxu0 %v786
      %v839 = vpop.f32.mrb[0].mxu0
      %v840 = vadd.f32 %v764, %v839
      %v841 = vpop.f32.mrb[0].mxu0
      %v842 = vadd.f32 %v764, %v841
      %v843 = vpop.f32.mrb[0].mxu0
      %v844 = vadd.f32 %v769, %v843
      %v845 = vpop.f32.mrb[0].mxu0
      %v846 = vadd.f32 %v769, %v845
      %847 = vdwg.mxu0
      %v848 = vadd.f32 %v830, %v735
      %v849 = vadd.f32 %v832, %v736
      %v850 = vadd.f32 %v834, %v737
      %v851 = vadd.f32 %v836, %v738
      %v852 = vadd.f32 %v840, %v739
      %v853 = vadd.f32 %v842, %v740
      %v854 = vadd.f32 %v844, %v741
      %v855 = vadd.f32 %v846, %v742
      %v856 = vand.u32 2147483647, %v848
      %vm857 = vcmp.le.f32.partialorder %v856, 0.7853982
      %vm858 = vcmp.lt.s32.totalorder %v848, 0
      %v859 = vand.u32 %v848, 2139095040
      %v860 = vshrl.u32 %v859, 23
      %v861 = vsub.s32 %v860, 127
      %v862 = vand.u32 2147483647, %v848
      %v863 = vand.u32 %v862, 8388607
      %v864 = vor.u32 %v863, 8388608
      %v865 = vsub.s32 0, %v864
      %v866 = vadd.s32 %v861, 1
      %vm867 = vcmp.gt.s32.totalorder %v866, 0
      %v868 = vsel %vm867, %v866, 0
      %v869 = vshrl.u32 %v868, 5
      %v870 = vand.u32 %v868, 31
      %v871 = vsub.s32 32, %v870
      %v872 = vshrl.u32 683565275, %v871
      %v873 = vshll.u32 683565275, %v870
      %v874 = vshrl.u32 2475754826, %v871
      %v875 = vor.u32 %v873, %v874
      %v876 = vshll.u32 2475754826, %v870
      %v877 = vshrl.u32 2131351028, %v871
      %v878 = vor.u32 %v876, %v877
      %v879 = vshll.u32 2131351028, %v870
      %v880 = vshrl.u32 2102212464, %v871
      %v881 = vor.u32 %v879, %v880
      %v882 = vshll.u32 2102212464, %v870
      %v883 = vshrl.u32 920167782, %v871
      %v884 = vor.u32 %v882, %v883
      %v885 = vshll.u32 920167782, %v870
      %v886 = vshrl.u32 1326507024, %v871
      %v887 = vor.u32 %v885, %v886
      %vm888 = vcmp.lt.s32.totalorder %v869, 1
      %vm889 = vcmp.lt.s32.totalorder %v869, 2
      %vm890 = vcmp.lt.s32.totalorder %v869, 3
      %vm891 = vcmp.lt.s32.totalorder %v869, 4
      %v892 = vsel %vm888, %v872, %v875
      %v893 = vsel %vm891, %v881, 2102212464
      %v894 = vsel %vm890, %v878, %v893
      %v895 = vsel %vm889, %v892, %v894
      %v896 = vsel %vm888, %v875, %v878
      %v897 = vsel %vm891, %v884, 920167782
      %v898 = vsel %vm890, %v881, %v897
      %v899 = vsel %vm889, %v896, %v898
      %v900 = vsel %vm888, %v878, %v881
      %v901 = vsel %vm891, %v887, 1326507024
      %v902 = vsel %vm890, %v884, %v901
      %v903 = vsel %vm889, %v900, %v902
      %v904 = vshll.u32 %v864, 8
      %v905 = vmul.u32.u64.compose %v904, %v903
      %v906 = vextract.low.u32 %v905
      %v907 = vextract.high.u32 %v905
      %v908 = vmul.u32.u64.compose %v904, %v899
      %v909 = vextract.low.u32 %v908
      %v910 = vextract.high.u32 %v908
      %v911 = vmul.u32 %v904, %v895
      %v912 = vadd.s32 %v907, %v909
      %vm913 = vc.u32 %v907, %v909
      %v914 = vadd.s32 %v910, 1
      %v915 = vsel %vm913, %v914, %v910
      %v916 = vadd.s32 %v911, %v915
      %v917 = vadd.s32 %v916, 536870912
      %v918 = vshrl.u32 %v917, 30
      %v919 = vshll.u32 %v918, 30
      %v920 = vsub.s32 %v916, %v919
      %vm921 = vcmp.lt.s32.totalorder %v920, 0
      %v922 = vsub.s32 0, %v920
      %v923 = vsel %vm921, %v922, %v920
      %v924 = vclz %v923
      %v925 = vsub.s32 %v924, 2
      %vm926 = vcmp.gt.s32.totalorder 0, %v925
      %v927 = vsel %vm926, 0, %v925
      %v928 = vsub.s32 32, %v927
      %v929 = vshll.u32 %v920, %v927
      %v930 = vshrl.u32 %v912, %v928
      %v931 = vor.u32 %v929, %v930
      %v932 = vsub.s32 4294967266, %v927
      %v933 = vadd.s32 %v932, 127
      %v934 = vshll.u32 %v933, 23
      %v935 = vor.u32 4788187, %v934
      %v936 = vand.u32 2147483647, %v935
      %v938 = vcvt.s32.f32 %v931
      %v939 = vmul.f32 %v938, %v936
      %v940 = vxor.u32 %v939, 2147483648
      %v941 = vsel %vm858, %v940, %v939
      %v942 = vsub.s32 4, %v918
      %v943 = vsel %vm858, %v942, %v918
      %v944 = vsel %vm857, %v848, %v941
      %v945 = vsel %vm857, 0, %v943
      %v946 = vcosq.f32.pop %v944
      %v947 = vsinq.f32.pop %v944
      %vm948 = vweird.f32 %v848
      %v949 = vadd.s32 %v945, 3
      %v950 = vand.u32 %v949, 3
      %vm951 = vcmp.lt.s32.totalorder %v950, 2
      %vm952 = vcmp.eq.s32.totalorder %v950, 0
      %v953 = vxor.u32 %v947, 2147483648
      %v954 = vsel %vm952, %v946, %v953
      %vm955 = vcmp.eq.s32.totalorder %v950, 2
      %v956 = vxor.u32 %v946, 2147483648
      %v957 = vsel %vm955, %v956, %v947
      %v958 = vsel %vm951, %v954, %v957
      %v959 = vsel %vm948, nan, %v958
      %v960 = vand.u32 2147483647, %v849
      %vm961 = vcmp.le.f32.partialorder %v960, 0.7853982
      %vm962 = vcmp.lt.s32.totalorder %v849, 0
      %v963 = vand.u32 %v849, 2139095040
      %v964 = vshrl.u32 %v963, 23
      %v965 = vsub.s32 %v964, 127
      %v966 = vand.u32 2147483647, %v849
      %v967 = vand.u32 %v966, 8388607
      %v968 = vor.u32 %v967, 8388608
      %v969 = vsub.s32 0, %v968
      %v970 = vadd.s32 %v965, 1
      %vm971 = vcmp.gt.s32.totalorder %v970, 0
      %v972 = vsel %vm971, %v970, 0
      %v973 = vshrl.u32 %v972, 5
      %v974 = vand.u32 %v972, 31
      %v975 = vsub.s32 32, %v974
      %v976 = vshrl.u32 683565275, %v975
      %v977 = vshll.u32 683565275, %v974
      %v978 = vshrl.u32 2475754826, %v975
      %v979 = vor.u32 %v977, %v978
      %v980 = vshll.u32 2475754826, %v974
      %v981 = vshrl.u32 2131351028, %v975
      %v982 = vor.u32 %v980, %v981
      %v983 = vshll.u32 2131351028, %v974
      %v984 = vshrl.u32 2102212464, %v975
      %v985 = vor.u32 %v983, %v984
      %v986 = vshll.u32 2102212464, %v974
      %v987 = vshrl.u32 920167782, %v975
      %v988 = vor.u32 %v986, %v987
      %v989 = vshll.u32 920167782, %v974
      %v990 = vshrl.u32 1326507024, %v975
      %v991 = vor.u32 %v989, %v990
      %vm992 = vcmp.lt.s32.totalorder %v973, 1
      %vm993 = vcmp.lt.s32.totalorder %v973, 2
      %vm994 = vcmp.lt.s32.totalorder %v973, 3
      %vm995 = vcmp.lt.s32.totalorder %v973, 4
      %v996 = vsel %vm992, %v976, %v979
      %v997 = vsel %vm995, %v985, 2102212464
      %v998 = vsel %vm994, %v982, %v997
      %v999 = vsel %vm993, %v996, %v998
      %v1000 = vsel %vm992, %v979, %v982
      %v1001 = vsel %vm995, %v988, 920167782
      %v1002 = vsel %vm994, %v985, %v1001
      %v1003 = vsel %vm993, %v1000, %v1002
      %v1004 = vsel %vm992, %v982, %v985
      %v1005 = vsel %vm995, %v991, 1326507024
      %v1006 = vsel %vm994, %v988, %v1005
      %v1007 = vsel %vm993, %v1004, %v1006
      %v1008 = vshll.u32 %v968, 8
      %v1009 = vmul.u32.u64.compose %v1008, %v1007
      %v1010 = vextract.low.u32 %v1009
      %v1011 = vextract.high.u32 %v1009
      %v1012 = vmul.u32.u64.compose %v1008, %v1003
      %v1013 = vextract.low.u32 %v1012
      %v1014 = vextract.high.u32 %v1012
      %v1015 = vmul.u32 %v1008, %v999
      %v1016 = vadd.s32 %v1011, %v1013
      %vm1017 = vc.u32 %v1011, %v1013
      %v1018 = vadd.s32 %v1014, 1
      %v1019 = vsel %vm1017, %v1018, %v1014
      %v1020 = vadd.s32 %v1015, %v1019
      %v1021 = vadd.s32 %v1020, 536870912
      %v1022 = vshrl.u32 %v1021, 30
      %v1023 = vshll.u32 %v1022, 30
      %v1024 = vsub.s32 %v1020, %v1023
      %vm1025 = vcmp.lt.s32.totalorder %v1024, 0
      %v1026 = vsub.s32 0, %v1024
      %v1027 = vsel %vm1025, %v1026, %v1024
      %v1028 = vclz %v1027
      %v1029 = vsub.s32 %v1028, 2
      %vm1030 = vcmp.gt.s32.totalorder 0, %v1029
      %v1031 = vsel %vm1030, 0, %v1029
      %v1032 = vsub.s32 32, %v1031
      %v1033 = vshll.u32 %v1024, %v1031
      %v1034 = vshrl.u32 %v1016, %v1032
      %v1035 = vor.u32 %v1033, %v1034
      %v1036 = vsub.s32 4294967266, %v1031
      %v1037 = vadd.s32 %v1036, 127
      %v1038 = vshll.u32 %v1037, 23
      %v1039 = vor.u32 4788187, %v1038
      %v1040 = vand.u32 2147483647, %v1039
      %v1042 = vcvt.s32.f32 %v1035
      %v1043 = vmul.f32 %v1042, %v1040
      %v1044 = vxor.u32 %v1043, 2147483648
      %v1045 = vsel %vm962, %v1044, %v1043
      %v1046 = vsub.s32 4, %v1022
      %v1047 = vsel %vm962, %v1046, %v1022
      %v1048 = vsel %vm961, %v849, %v1045
      %v1049 = vsel %vm961, 0, %v1047
      %v1050 = vcosq.f32.pop %v1048
      %v1051 = vsinq.f32.pop %v1048
      %vm1052 = vweird.f32 %v849
      %v1053 = vadd.s32 %v1049, 3
      %v1054 = vand.u32 %v1053, 3
      %vm1055 = vcmp.lt.s32.totalorder %v1054, 2
      %vm1056 = vcmp.eq.s32.totalorder %v1054, 0
      %v1057 = vxor.u32 %v1051, 2147483648
      %v1058 = vsel %vm1056, %v1050, %v1057
      %vm1059 = vcmp.eq.s32.totalorder %v1054, 2
      %v1060 = vxor.u32 %v1050, 2147483648
      %v1061 = vsel %vm1059, %v1060, %v1051
      %v1062 = vsel %vm1055, %v1058, %v1061
      %v1063 = vsel %vm1052, nan, %v1062
      %v1064 = vand.u32 2147483647, %v850
      %vm1065 = vcmp.le.f32.partialorder %v1064, 0.7853982
      %vm1066 = vcmp.lt.s32.totalorder %v850, 0
      %v1067 = vand.u32 %v850, 2139095040
      %v1068 = vshrl.u32 %v1067, 23
      %v1069 = vsub.s32 %v1068, 127
      %v1070 = vand.u32 2147483647, %v850
      %v1071 = vand.u32 %v1070, 8388607
      %v1072 = vor.u32 %v1071, 8388608
      %v1073 = vsub.s32 0, %v1072
      %v1074 = vadd.s32 %v1069, 1
      %vm1075 = vcmp.gt.s32.totalorder %v1074, 0
      %v1076 = vsel %vm1075, %v1074, 0
      %v1077 = vshrl.u32 %v1076, 5
      %v1078 = vand.u32 %v1076, 31
      %v1079 = vsub.s32 32, %v1078
      %v1080 = vshrl.u32 683565275, %v1079
      %v1081 = vshll.u32 683565275, %v1078
      %v1082 = vshrl.u32 2475754826, %v1079
      %v1083 = vor.u32 %v1081, %v1082
      %v1084 = vshll.u32 2475754826, %v1078
      %v1085 = vshrl.u32 2131351028, %v1079
      %v1086 = vor.u32 %v1084, %v1085
      %v1087 = vshll.u32 2131351028, %v1078
      %v1088 = vshrl.u32 2102212464, %v1079
      %v1089 = vor.u32 %v1087, %v1088
      %v1090 = vshll.u32 2102212464, %v1078
      %v1091 = vshrl.u32 920167782, %v1079
      %v1092 = vor.u32 %v1090, %v1091
      %v1093 = vshll.u32 920167782, %v1078
      %v1094 = vshrl.u32 1326507024, %v1079
      %v1095 = vor.u32 %v1093, %v1094
      %vm1096 = vcmp.lt.s32.totalorder %v1077, 1
      %vm1097 = vcmp.lt.s32.totalorder %v1077, 2
      %vm1098 = vcmp.lt.s32.totalorder %v1077, 3
      %vm1099 = vcmp.lt.s32.totalorder %v1077, 4
      %v1100 = vsel %vm1096, %v1080, %v1083
      %v1101 = vsel %vm1099, %v1089, 2102212464
      %v1102 = vsel %vm1098, %v1086, %v1101
      %v1103 = vsel %vm1097, %v1100, %v1102
      %v1104 = vsel %vm1096, %v1083, %v1086
      %v1105 = vsel %vm1099, %v1092, 920167782
      %v1106 = vsel %vm1098, %v1089, %v1105
      %v1107 = vsel %vm1097, %v1104, %v1106
      %v1108 = vsel %vm1096, %v1086, %v1089
      %v1109 = vsel %vm1099, %v1095, 1326507024
      %v1110 = vsel %vm1098, %v1092, %v1109
      %v1111 = vsel %vm1097, %v1108, %v1110
      %v1112 = vshll.u32 %v1072, 8
      %v1113 = vmul.u32.u64.compose %v1112, %v1111
      %v1114 = vextract.low.u32 %v1113
      %v1115 = vextract.high.u32 %v1113
      %v1116 = vmul.u32.u64.compose %v1112, %v1107
      %v1117 = vextract.low.u32 %v1116
      %v1118 = vextract.high.u32 %v1116
      %v1119 = vmul.u32 %v1112, %v1103
      %v1120 = vadd.s32 %v1115, %v1117
      %vm1121 = vc.u32 %v1115, %v1117
      %v1122 = vadd.s32 %v1118, 1
      %v1123 = vsel %vm1121, %v1122, %v1118
      %v1124 = vadd.s32 %v1119, %v1123
      %v1125 = vadd.s32 %v1124, 536870912
      %v1126 = vshrl.u32 %v1125, 30
      %v1127 = vshll.u32 %v1126, 30
      %v1128 = vsub.s32 %v1124, %v1127
      %vm1129 = vcmp.lt.s32.totalorder %v1128, 0
      %v1130 = vsub.s32 0, %v1128
      %v1131 = vsel %vm1129, %v1130, %v1128
      %v1132 = vclz %v1131
      %v1133 = vsub.s32 %v1132, 2
      %vm1134 = vcmp.gt.s32.totalorder 0, %v1133
      %v1135 = vsel %vm1134, 0, %v1133
      %v1136 = vsub.s32 32, %v1135
      %v1137 = vshll.u32 %v1128, %v1135
      %v1138 = vshrl.u32 %v1120, %v1136
      %v1139 = vor.u32 %v1137, %v1138
      %v1140 = vsub.s32 4294967266, %v1135
      %v1141 = vadd.s32 %v1140, 127
      %v1142 = vshll.u32 %v1141, 23
      %v1143 = vor.u32 4788187, %v1142
      %v1144 = vand.u32 2147483647, %v1143
      %v1146 = vcvt.s32.f32 %v1139
      %v1147 = vmul.f32 %v1146, %v1144
      %v1148 = vxor.u32 %v1147, 2147483648
      %v1149 = vsel %vm1066, %v1148, %v1147
      %v1150 = vsub.s32 4, %v1126
      %v1151 = vsel %vm1066, %v1150, %v1126
      %v1152 = vsel %vm1065, %v850, %v1149
      %v1153 = vsel %vm1065, 0, %v1151
      %v1154 = vcosq.f32.pop %v1152
      %v1155 = vsinq.f32.pop %v1152
      %vm1156 = vweird.f32 %v850
      %v1157 = vadd.s32 %v1153, 3
      %v1158 = vand.u32 %v1157, 3
      %vm1159 = vcmp.lt.s32.totalorder %v1158, 2
      %vm1160 = vcmp.eq.s32.totalorder %v1158, 0
      %v1161 = vxor.u32 %v1155, 2147483648
      %v1162 = vsel %vm1160, %v1154, %v1161
      %vm1163 = vcmp.eq.s32.totalorder %v1158, 2
      %v1164 = vxor.u32 %v1154, 2147483648
      %v1165 = vsel %vm1163, %v1164, %v1155
      %v1166 = vsel %vm1159, %v1162, %v1165
      %v1167 = vsel %vm1156, nan, %v1166
      %v1168 = vand.u32 2147483647, %v851
      %vm1169 = vcmp.le.f32.partialorder %v1168, 0.7853982
      %vm1170 = vcmp.lt.s32.totalorder %v851, 0
      %v1171 = vand.u32 %v851, 2139095040
      %v1172 = vshrl.u32 %v1171, 23
      %v1173 = vsub.s32 %v1172, 127
      %v1174 = vand.u32 2147483647, %v851
      %v1175 = vand.u32 %v1174, 8388607
      %v1176 = vor.u32 %v1175, 8388608
      %v1177 = vsub.s32 0, %v1176
      %v1178 = vadd.s32 %v1173, 1
      %vm1179 = vcmp.gt.s32.totalorder %v1178, 0
      %v1180 = vsel %vm1179, %v1178, 0
      %v1181 = vshrl.u32 %v1180, 5
      %v1182 = vand.u32 %v1180, 31
      %v1183 = vsub.s32 32, %v1182
      %v1184 = vshrl.u32 683565275, %v1183
      %v1185 = vshll.u32 683565275, %v1182
      %v1186 = vshrl.u32 2475754826, %v1183
      %v1187 = vor.u32 %v1185, %v1186
      %v1188 = vshll.u32 2475754826, %v1182
      %v1189 = vshrl.u32 2131351028, %v1183
      %v1190 = vor.u32 %v1188, %v1189
      %v1191 = vshll.u32 2131351028, %v1182
      %v1192 = vshrl.u32 2102212464, %v1183
      %v1193 = vor.u32 %v1191, %v1192
      %v1194 = vshll.u32 2102212464, %v1182
      %v1195 = vshrl.u32 920167782, %v1183
      %v1196 = vor.u32 %v1194, %v1195
      %v1197 = vshll.u32 920167782, %v1182
      %v1198 = vshrl.u32 1326507024, %v1183
      %v1199 = vor.u32 %v1197, %v1198
      %vm1200 = vcmp.lt.s32.totalorder %v1181, 1
      %vm1201 = vcmp.lt.s32.totalorder %v1181, 2
      %vm1202 = vcmp.lt.s32.totalorder %v1181, 3
      %vm1203 = vcmp.lt.s32.totalorder %v1181, 4
      %v1204 = vsel %vm1200, %v1184, %v1187
      %v1205 = vsel %vm1203, %v1193, 2102212464
      %v1206 = vsel %vm1202, %v1190, %v1205
      %v1207 = vsel %vm1201, %v1204, %v1206
      %v1208 = vsel %vm1200, %v1187, %v1190
      %v1209 = vsel %vm1203, %v1196, 920167782
      %v1210 = vsel %vm1202, %v1193, %v1209
      %v1211 = vsel %vm1201, %v1208, %v1210
      %v1212 = vsel %vm1200, %v1190, %v1193
      %v1213 = vsel %vm1203, %v1199, 1326507024
      %v1214 = vsel %vm1202, %v1196, %v1213
      %v1215 = vsel %vm1201, %v1212, %v1214
      %v1216 = vshll.u32 %v1176, 8
      %v1217 = vmul.u32.u64.compose %v1216, %v1215
      %v1218 = vextract.low.u32 %v1217
      %v1219 = vextract.high.u32 %v1217
      %v1220 = vmul.u32.u64.compose %v1216, %v1211
      %v1221 = vextract.low.u32 %v1220
      %v1222 = vextract.high.u32 %v1220
      %v1223 = vmul.u32 %v1216, %v1207
      %v1224 = vadd.s32 %v1219, %v1221
      %vm1225 = vc.u32 %v1219, %v1221
      %v1226 = vadd.s32 %v1222, 1
      %v1227 = vsel %vm1225, %v1226, %v1222
      %v1228 = vadd.s32 %v1223, %v1227
      %v1229 = vadd.s32 %v1228, 536870912
      %v1230 = vshrl.u32 %v1229, 30
      %v1231 = vshll.u32 %v1230, 30
      %v1232 = vsub.s32 %v1228, %v1231
      %vm1233 = vcmp.lt.s32.totalorder %v1232, 0
      %v1234 = vsub.s32 0, %v1232
      %v1235 = vsel %vm1233, %v1234, %v1232
      %v1236 = vclz %v1235
      %v1237 = vsub.s32 %v1236, 2
      %vm1238 = vcmp.gt.s32.totalorder 0, %v1237
      %v1239 = vsel %vm1238, 0, %v1237
      %v1240 = vsub.s32 32, %v1239
      %v1241 = vshll.u32 %v1232, %v1239
      %v1242 = vshrl.u32 %v1224, %v1240
      %v1243 = vor.u32 %v1241, %v1242
      %v1244 = vsub.s32 4294967266, %v1239
      %v1245 = vadd.s32 %v1244, 127
      %v1246 = vshll.u32 %v1245, 23
      %v1247 = vor.u32 4788187, %v1246
      %v1248 = vand.u32 2147483647, %v1247
      %v1250 = vcvt.s32.f32 %v1243
      %v1251 = vmul.f32 %v1250, %v1248
      %v1252 = vxor.u32 %v1251, 2147483648
      %v1253 = vsel %vm1170, %v1252, %v1251
      %v1254 = vsub.s32 4, %v1230
      %v1255 = vsel %vm1170, %v1254, %v1230
      %v1256 = vsel %vm1169, %v851, %v1253
      %v1257 = vsel %vm1169, 0, %v1255
      %v1258 = vcosq.f32.pop %v1256
      %v1259 = vsinq.f32.pop %v1256
      %vm1260 = vweird.f32 %v851
      %v1261 = vadd.s32 %v1257, 3
      %v1262 = vand.u32 %v1261, 3
      %vm1263 = vcmp.lt.s32.totalorder %v1262, 2
      %vm1264 = vcmp.eq.s32.totalorder %v1262, 0
      %v1265 = vxor.u32 %v1259, 2147483648
      %v1266 = vsel %vm1264, %v1258, %v1265
      %vm1267 = vcmp.eq.s32.totalorder %v1262, 2
      %v1268 = vxor.u32 %v1258, 2147483648
      %v1269 = vsel %vm1267, %v1268, %v1259
      %v1270 = vsel %vm1263, %v1266, %v1269
      %v1271 = vsel %vm1260, nan, %v1270
      %v1272 = vand.u32 2147483647, %v852
      %vm1273 = vcmp.le.f32.partialorder %v1272, 0.7853982
      %vm1274 = vcmp.lt.s32.totalorder %v852, 0
      %v1275 = vand.u32 %v852, 2139095040
      %v1276 = vshrl.u32 %v1275, 23
      %v1277 = vsub.s32 %v1276, 127
      %v1278 = vand.u32 2147483647, %v852
      %v1279 = vand.u32 %v1278, 8388607
      %v1280 = vor.u32 %v1279, 8388608
      %v1281 = vsub.s32 0, %v1280
      %v1282 = vadd.s32 %v1277, 1
      %vm1283 = vcmp.gt.s32.totalorder %v1282, 0
      %v1284 = vsel %vm1283, %v1282, 0
      %v1285 = vshrl.u32 %v1284, 5
      %v1286 = vand.u32 %v1284, 31
      %v1287 = vsub.s32 32, %v1286
      %v1288 = vshrl.u32 683565275, %v1287
      %v1289 = vshll.u32 683565275, %v1286
      %v1290 = vshrl.u32 2475754826, %v1287
      %v1291 = vor.u32 %v1289, %v1290
      %v1292 = vshll.u32 2475754826, %v1286
      %v1293 = vshrl.u32 2131351028, %v1287
      %v1294 = vor.u32 %v1292, %v1293
      %v1295 = vshll.u32 2131351028, %v1286
      %v1296 = vshrl.u32 2102212464, %v1287
      %v1297 = vor.u32 %v1295, %v1296
      %v1298 = vshll.u32 2102212464, %v1286
      %v1299 = vshrl.u32 920167782, %v1287
      %v1300 = vor.u32 %v1298, %v1299
      %v1301 = vshll.u32 920167782, %v1286
      %v1302 = vshrl.u32 1326507024, %v1287
      %v1303 = vor.u32 %v1301, %v1302
      %vm1304 = vcmp.lt.s32.totalorder %v1285, 1
      %vm1305 = vcmp.lt.s32.totalorder %v1285, 2
      %vm1306 = vcmp.lt.s32.totalorder %v1285, 3
      %vm1307 = vcmp.lt.s32.totalorder %v1285, 4
      %v1308 = vsel %vm1304, %v1288, %v1291
      %v1309 = vsel %vm1307, %v1297, 2102212464
      %v1310 = vsel %vm1306, %v1294, %v1309
      %v1311 = vsel %vm1305, %v1308, %v1310
      %v1312 = vsel %vm1304, %v1291, %v1294
      %v1313 = vsel %vm1307, %v1300, 920167782
      %v1314 = vsel %vm1306, %v1297, %v1313
      %v1315 = vsel %vm1305, %v1312, %v1314
      %v1316 = vsel %vm1304, %v1294, %v1297
      %v1317 = vsel %vm1307, %v1303, 1326507024
      %v1318 = vsel %vm1306, %v1300, %v1317
      %v1319 = vsel %vm1305, %v1316, %v1318
      %v1320 = vshll.u32 %v1280, 8
      %v1321 = vmul.u32.u64.compose %v1320, %v1319
      %v1322 = vextract.low.u32 %v1321
      %v1323 = vextract.high.u32 %v1321
      %v1324 = vmul.u32.u64.compose %v1320, %v1315
      %v1325 = vextract.low.u32 %v1324
      %v1326 = vextract.high.u32 %v1324
      %v1327 = vmul.u32 %v1320, %v1311
      %v1328 = vadd.s32 %v1323, %v1325
      %vm1329 = vc.u32 %v1323, %v1325
      %v1330 = vadd.s32 %v1326, 1
      %v1331 = vsel %vm1329, %v1330, %v1326
      %v1332 = vadd.s32 %v1327, %v1331
      %v1333 = vadd.s32 %v1332, 536870912
      %v1334 = vshrl.u32 %v1333, 30
      %v1335 = vshll.u32 %v1334, 30
      %v1336 = vsub.s32 %v1332, %v1335
      %vm1337 = vcmp.lt.s32.totalorder %v1336, 0
      %v1338 = vsub.s32 0, %v1336
      %v1339 = vsel %vm1337, %v1338, %v1336
      %v1340 = vclz %v1339
      %v1341 = vsub.s32 %v1340, 2
      %vm1342 = vcmp.gt.s32.totalorder 0, %v1341
      %v1343 = vsel %vm1342, 0, %v1341
      %v1344 = vsub.s32 32, %v1343
      %v1345 = vshll.u32 %v1336, %v1343
      %v1346 = vshrl.u32 %v1328, %v1344
      %v1347 = vor.u32 %v1345, %v1346
      %v1348 = vsub.s32 4294967266, %v1343
      %v1349 = vadd.s32 %v1348, 127
      %v1350 = vshll.u32 %v1349, 23
      %v1351 = vor.u32 4788187, %v1350
      %v1352 = vand.u32 2147483647, %v1351
      %v1354 = vcvt.s32.f32 %v1347
      %v1355 = vmul.f32 %v1354, %v1352
      %v1356 = vxor.u32 %v1355, 2147483648
      %v1357 = vsel %vm1274, %v1356, %v1355
      %v1358 = vsub.s32 4, %v1334
      %v1359 = vsel %vm1274, %v1358, %v1334
      %v1360 = vsel %vm1273, %v852, %v1357
      %v1361 = vsel %vm1273, 0, %v1359
      %v1362 = vcosq.f32.pop %v1360
      %v1363 = vsinq.f32.pop %v1360
      %vm1364 = vweird.f32 %v852
      %v1365 = vadd.s32 %v1361, 3
      %v1366 = vand.u32 %v1365, 3
      %vm1367 = vcmp.lt.s32.totalorder %v1366, 2
      %vm1368 = vcmp.eq.s32.totalorder %v1366, 0
      %v1369 = vxor.u32 %v1363, 2147483648
      %v1370 = vsel %vm1368, %v1362, %v1369
      %vm1371 = vcmp.eq.s32.totalorder %v1366, 2
      %v1372 = vxor.u32 %v1362, 2147483648
      %v1373 = vsel %vm1371, %v1372, %v1363
      %v1374 = vsel %vm1367, %v1370, %v1373
      %v1375 = vsel %vm1364, nan, %v1374
      %v1376 = vand.u32 2147483647, %v853
      %vm1377 = vcmp.le.f32.partialorder %v1376, 0.7853982
      %vm1378 = vcmp.lt.s32.totalorder %v853, 0
      %v1379 = vand.u32 %v853, 2139095040
      %v1380 = vshrl.u32 %v1379, 23
      %v1381 = vsub.s32 %v1380, 127
      %v1382 = vand.u32 2147483647, %v853
      %v1383 = vand.u32 %v1382, 8388607
      %v1384 = vor.u32 %v1383, 8388608
      %v1385 = vsub.s32 0, %v1384
      %v1386 = vadd.s32 %v1381, 1
      %vm1387 = vcmp.gt.s32.totalorder %v1386, 0
      %v1388 = vsel %vm1387, %v1386, 0
      %v1389 = vshrl.u32 %v1388, 5
      %v1390 = vand.u32 %v1388, 31
      %v1391 = vsub.s32 32, %v1390
      %v1392 = vshrl.u32 683565275, %v1391
      %v1393 = vshll.u32 683565275, %v1390
      %v1394 = vshrl.u32 2475754826, %v1391
      %v1395 = vor.u32 %v1393, %v1394
      %v1396 = vshll.u32 2475754826, %v1390
      %v1397 = vshrl.u32 2131351028, %v1391
      %v1398 = vor.u32 %v1396, %v1397
      %v1399 = vshll.u32 2131351028, %v1390
      %v1400 = vshrl.u32 2102212464, %v1391
      %v1401 = vor.u32 %v1399, %v1400
      %v1402 = vshll.u32 2102212464, %v1390
      %v1403 = vshrl.u32 920167782, %v1391
      %v1404 = vor.u32 %v1402, %v1403
      %v1405 = vshll.u32 920167782, %v1390
      %v1406 = vshrl.u32 1326507024, %v1391
      %v1407 = vor.u32 %v1405, %v1406
      %vm1408 = vcmp.lt.s32.totalorder %v1389, 1
      %vm1409 = vcmp.lt.s32.totalorder %v1389, 2
      %vm1410 = vcmp.lt.s32.totalorder %v1389, 3
      %vm1411 = vcmp.lt.s32.totalorder %v1389, 4
      %v1412 = vsel %vm1408, %v1392, %v1395
      %v1413 = vsel %vm1411, %v1401, 2102212464
      %v1414 = vsel %vm1410, %v1398, %v1413
      %v1415 = vsel %vm1409, %v1412, %v1414
      %v1416 = vsel %vm1408, %v1395, %v1398
      %v1417 = vsel %vm1411, %v1404, 920167782
      %v1418 = vsel %vm1410, %v1401, %v1417
      %v1419 = vsel %vm1409, %v1416, %v1418
      %v1420 = vsel %vm1408, %v1398, %v1401
      %v1421 = vsel %vm1411, %v1407, 1326507024
      %v1422 = vsel %vm1410, %v1404, %v1421
      %v1423 = vsel %vm1409, %v1420, %v1422
      %v1424 = vshll.u32 %v1384, 8
      %v1425 = vmul.u32.u64.compose %v1424, %v1423
      %v1426 = vextract.low.u32 %v1425
      %v1427 = vextract.high.u32 %v1425
      %v1428 = vmul.u32.u64.compose %v1424, %v1419
      %v1429 = vextract.low.u32 %v1428
      %v1430 = vextract.high.u32 %v1428
      %v1431 = vmul.u32 %v1424, %v1415
      %v1432 = vadd.s32 %v1427, %v1429
      %vm1433 = vc.u32 %v1427, %v1429
      %v1434 = vadd.s32 %v1430, 1
      %v1435 = vsel %vm1433, %v1434, %v1430
      %v1436 = vadd.s32 %v1431, %v1435
      %v1437 = vadd.s32 %v1436, 536870912
      %v1438 = vshrl.u32 %v1437, 30
      %v1439 = vshll.u32 %v1438, 30
      %v1440 = vsub.s32 %v1436, %v1439
      %vm1441 = vcmp.lt.s32.totalorder %v1440, 0
      %v1442 = vsub.s32 0, %v1440
      %v1443 = vsel %vm1441, %v1442, %v1440
      %v1444 = vclz %v1443
      %v1445 = vsub.s32 %v1444, 2
      %vm1446 = vcmp.gt.s32.totalorder 0, %v1445
      %v1447 = vsel %vm1446, 0, %v1445
      %v1448 = vsub.s32 32, %v1447
      %v1449 = vshll.u32 %v1440, %v1447
      %v1450 = vshrl.u32 %v1432, %v1448
      %v1451 = vor.u32 %v1449, %v1450
      %v1452 = vsub.s32 4294967266, %v1447
      %v1453 = vadd.s32 %v1452, 127
      %v1454 = vshll.u32 %v1453, 23
      %v1455 = vor.u32 4788187, %v1454
      %v1456 = vand.u32 2147483647, %v1455
      %v1458 = vcvt.s32.f32 %v1451
      %v1459 = vmul.f32 %v1458, %v1456
      %v1460 = vxor.u32 %v1459, 2147483648
      %v1461 = vsel %vm1378, %v1460, %v1459
      %v1462 = vsub.s32 4, %v1438
      %v1463 = vsel %vm1378, %v1462, %v1438
      %v1464 = vsel %vm1377, %v853, %v1461
      %v1465 = vsel %vm1377, 0, %v1463
      %v1466 = vcosq.f32.pop %v1464
      %v1467 = vsinq.f32.pop %v1464
      %vm1468 = vweird.f32 %v853
      %v1469 = vadd.s32 %v1465, 3
      %v1470 = vand.u32 %v1469, 3
      %vm1471 = vcmp.lt.s32.totalorder %v1470, 2
      %vm1472 = vcmp.eq.s32.totalorder %v1470, 0
      %v1473 = vxor.u32 %v1467, 2147483648
      %v1474 = vsel %vm1472, %v1466, %v1473
      %vm1475 = vcmp.eq.s32.totalorder %v1470, 2
      %v1476 = vxor.u32 %v1466, 2147483648
      %v1477 = vsel %vm1475, %v1476, %v1467
      %v1478 = vsel %vm1471, %v1474, %v1477
      %v1479 = vsel %vm1468, nan, %v1478
      %v1480 = vand.u32 2147483647, %v854
      %vm1481 = vcmp.le.f32.partialorder %v1480, 0.7853982
      %vm1482 = vcmp.lt.s32.totalorder %v854, 0
      %v1483 = vand.u32 %v854, 2139095040
      %v1484 = vshrl.u32 %v1483, 23
      %v1485 = vsub.s32 %v1484, 127
      %v1486 = vand.u32 2147483647, %v854
      %v1487 = vand.u32 %v1486, 8388607
      %v1488 = vor.u32 %v1487, 8388608
      %v1489 = vsub.s32 0, %v1488
      %v1490 = vadd.s32 %v1485, 1
      %vm1491 = vcmp.gt.s32.totalorder %v1490, 0
      %v1492 = vsel %vm1491, %v1490, 0
      %v1493 = vshrl.u32 %v1492, 5
      %v1494 = vand.u32 %v1492, 31
      %v1495 = vsub.s32 32, %v1494
      %v1496 = vshrl.u32 683565275, %v1495
      %v1497 = vshll.u32 683565275, %v1494
      %v1498 = vshrl.u32 2475754826, %v1495
      %v1499 = vor.u32 %v1497, %v1498
      %v1500 = vshll.u32 2475754826, %v1494
      %v1501 = vshrl.u32 2131351028, %v1495
      %v1502 = vor.u32 %v1500, %v1501
      %v1503 = vshll.u32 2131351028, %v1494
      %v1504 = vshrl.u32 2102212464, %v1495
      %v1505 = vor.u32 %v1503, %v1504
      %v1506 = vshll.u32 2102212464, %v1494
      %v1507 = vshrl.u32 920167782, %v1495
      %v1508 = vor.u32 %v1506, %v1507
      %v1509 = vshll.u32 920167782, %v1494
      %v1510 = vshrl.u32 1326507024, %v1495
      %v1511 = vor.u32 %v1509, %v1510
      %vm1512 = vcmp.lt.s32.totalorder %v1493, 1
      %vm1513 = vcmp.lt.s32.totalorder %v1493, 2
      %vm1514 = vcmp.lt.s32.totalorder %v1493, 3
      %vm1515 = vcmp.lt.s32.totalorder %v1493, 4
      %v1516 = vsel %vm1512, %v1496, %v1499
      %v1517 = vsel %vm1515, %v1505, 2102212464
      %v1518 = vsel %vm1514, %v1502, %v1517
      %v1519 = vsel %vm1513, %v1516, %v1518
      %v1520 = vsel %vm1512, %v1499, %v1502
      %v1521 = vsel %vm1515, %v1508, 920167782
      %v1522 = vsel %vm1514, %v1505, %v1521
      %v1523 = vsel %vm1513, %v1520, %v1522
      %v1524 = vsel %vm1512, %v1502, %v1505
      %v1525 = vsel %vm1515, %v1511, 1326507024
      %v1526 = vsel %vm1514, %v1508, %v1525
      %v1527 = vsel %vm1513, %v1524, %v1526
      %v1528 = vshll.u32 %v1488, 8
      %v1529 = vmul.u32.u64.compose %v1528, %v1527
      %v1530 = vextract.low.u32 %v1529
      %v1531 = vextract.high.u32 %v1529
      %v1532 = vmul.u32.u64.compose %v1528, %v1523
      %v1533 = vextract.low.u32 %v1532
      %v1534 = vextract.high.u32 %v1532
      %v1535 = vmul.u32 %v1528, %v1519
      %v1536 = vadd.s32 %v1531, %v1533
      %vm1537 = vc.u32 %v1531, %v1533
      %v1538 = vadd.s32 %v1534, 1
      %v1539 = vsel %vm1537, %v1538, %v1534
      %v1540 = vadd.s32 %v1535, %v1539
      %v1541 = vadd.s32 %v1540, 536870912
      %v1542 = vshrl.u32 %v1541, 30
      %v1543 = vshll.u32 %v1542, 30
      %v1544 = vsub.s32 %v1540, %v1543
      %vm1545 = vcmp.lt.s32.totalorder %v1544, 0
      %v1546 = vsub.s32 0, %v1544
      %v1547 = vsel %vm1545, %v1546, %v1544
      %v1548 = vclz %v1547
      %v1549 = vsub.s32 %v1548, 2
      %vm1550 = vcmp.gt.s32.totalorder 0, %v1549
      %v1551 = vsel %vm1550, 0, %v1549
      %v1552 = vsub.s32 32, %v1551
      %v1553 = vshll.u32 %v1544, %v1551
      %v1554 = vshrl.u32 %v1536, %v1552
      %v1555 = vor.u32 %v1553, %v1554
      %v1556 = vsub.s32 4294967266, %v1551
      %v1557 = vadd.s32 %v1556, 127
      %v1558 = vshll.u32 %v1557, 23
      %v1559 = vor.u32 4788187, %v1558
      %v1560 = vand.u32 2147483647, %v1559
      %v1562 = vcvt.s32.f32 %v1555
      %v1563 = vmul.f32 %v1562, %v1560
      %v1564 = vxor.u32 %v1563, 2147483648
      %v1565 = vsel %vm1482, %v1564, %v1563
      %v1566 = vsub.s32 4, %v1542
      %v1567 = vsel %vm1482, %v1566, %v1542
      %v1568 = vsel %vm1481, %v854, %v1565
      %v1569 = vsel %vm1481, 0, %v1567
      %v1570 = vcosq.f32.pop %v1568
      %v1571 = vsinq.f32.pop %v1568
      %vm1572 = vweird.f32 %v854
      %v1573 = vadd.s32 %v1569, 3
      %v1574 = vand.u32 %v1573, 3
      %vm1575 = vcmp.lt.s32.totalorder %v1574, 2
      %vm1576 = vcmp.eq.s32.totalorder %v1574, 0
      %v1577 = vxor.u32 %v1571, 2147483648
      %v1578 = vsel %vm1576, %v1570, %v1577
      %vm1579 = vcmp.eq.s32.totalorder %v1574, 2
      %v1580 = vxor.u32 %v1570, 2147483648
      %v1581 = vsel %vm1579, %v1580, %v1571
      %v1582 = vsel %vm1575, %v1578, %v1581
      %v1583 = vsel %vm1572, nan, %v1582
      %v1584 = vand.u32 2147483647, %v855
      %vm1585 = vcmp.le.f32.partialorder %v1584, 0.7853982
      %vm1586 = vcmp.lt.s32.totalorder %v855, 0
      %v1587 = vand.u32 %v855, 2139095040
      %v1588 = vshrl.u32 %v1587, 23
      %v1589 = vsub.s32 %v1588, 127
      %v1590 = vand.u32 2147483647, %v855
      %v1591 = vand.u32 %v1590, 8388607
      %v1592 = vor.u32 %v1591, 8388608
      %v1593 = vsub.s32 0, %v1592
      %v1594 = vadd.s32 %v1589, 1
      %vm1595 = vcmp.gt.s32.totalorder %v1594, 0
      %v1596 = vsel %vm1595, %v1594, 0
      %v1597 = vshrl.u32 %v1596, 5
      %v1598 = vand.u32 %v1596, 31
      %v1599 = vsub.s32 32, %v1598
      %v1600 = vshrl.u32 683565275, %v1599
      %v1601 = vshll.u32 683565275, %v1598
      %v1602 = vshrl.u32 2475754826, %v1599
      %v1603 = vor.u32 %v1601, %v1602
      %v1604 = vshll.u32 2475754826, %v1598
      %v1605 = vshrl.u32 2131351028, %v1599
      %v1606 = vor.u32 %v1604, %v1605
      %v1607 = vshll.u32 2131351028, %v1598
      %v1608 = vshrl.u32 2102212464, %v1599
      %v1609 = vor.u32 %v1607, %v1608
      %v1610 = vshll.u32 2102212464, %v1598
      %v1611 = vshrl.u32 920167782, %v1599
      %v1612 = vor.u32 %v1610, %v1611
      %v1613 = vshll.u32 920167782, %v1598
      %v1614 = vshrl.u32 1326507024, %v1599
      %v1615 = vor.u32 %v1613, %v1614
      %vm1616 = vcmp.lt.s32.totalorder %v1597, 1
      %vm1617 = vcmp.lt.s32.totalorder %v1597, 2
      %vm1618 = vcmp.lt.s32.totalorder %v1597, 3
      %vm1619 = vcmp.lt.s32.totalorder %v1597, 4
      %v1620 = vsel %vm1616, %v1600, %v1603
      %v1621 = vsel %vm1619, %v1609, 2102212464
      %v1622 = vsel %vm1618, %v1606, %v1621
      %v1623 = vsel %vm1617, %v1620, %v1622
      %v1624 = vsel %vm1616, %v1603, %v1606
      %v1625 = vsel %vm1619, %v1612, 920167782
      %v1626 = vsel %vm1618, %v1609, %v1625
      %v1627 = vsel %vm1617, %v1624, %v1626
      %v1628 = vsel %vm1616, %v1606, %v1609
      %v1629 = vsel %vm1619, %v1615, 1326507024
      %v1630 = vsel %vm1618, %v1612, %v1629
      %v1631 = vsel %vm1617, %v1628, %v1630
      %v1632 = vshll.u32 %v1592, 8
      %v1633 = vmul.u32.u64.compose %v1632, %v1631
      %v1634 = vextract.low.u32 %v1633
      %v1635 = vextract.high.u32 %v1633
      %v1636 = vmul.u32.u64.compose %v1632, %v1627
      %v1637 = vextract.low.u32 %v1636
      %v1638 = vextract.high.u32 %v1636
      %v1639 = vmul.u32 %v1632, %v1623
      %v1640 = vadd.s32 %v1635, %v1637
      %vm1641 = vc.u32 %v1635, %v1637
      %v1642 = vadd.s32 %v1638, 1
      %v1643 = vsel %vm1641, %v1642, %v1638
      %v1644 = vadd.s32 %v1639, %v1643
      %v1645 = vadd.s32 %v1644, 536870912
      %v1646 = vshrl.u32 %v1645, 30
      %v1647 = vshll.u32 %v1646, 30
      %v1648 = vsub.s32 %v1644, %v1647
      %vm1649 = vcmp.lt.s32.totalorder %v1648, 0
      %v1650 = vsub.s32 0, %v1648
      %v1651 = vsel %vm1649, %v1650, %v1648
      %v1652 = vclz %v1651
      %v1653 = vsub.s32 %v1652, 2
      %vm1654 = vcmp.gt.s32.totalorder 0, %v1653
      %v1655 = vsel %vm1654, 0, %v1653
      %v1656 = vsub.s32 32, %v1655
      %v1657 = vshll.u32 %v1648, %v1655
      %v1658 = vshrl.u32 %v1640, %v1656
      %v1659 = vor.u32 %v1657, %v1658
      %v1660 = vsub.s32 4294967266, %v1655
      %v1661 = vadd.s32 %v1660, 127
      %v1662 = vshll.u32 %v1661, 23
      %v1663 = vor.u32 4788187, %v1662
      %v1664 = vand.u32 2147483647, %v1663
      %v1666 = vcvt.s32.f32 %v1659
      %v1667 = vmul.f32 %v1666, %v1664
      %v1668 = vxor.u32 %v1667, 2147483648
      %v1669 = vsel %vm1586, %v1668, %v1667
      %v1670 = vsub.s32 4, %v1646
      %v1671 = vsel %vm1586, %v1670, %v1646
      %v1672 = vsel %vm1585, %v855, %v1669
      %v1673 = vsel %vm1585, 0, %v1671
      %v1674 = vcosq.f32.pop %v1672
      %v1675 = vsinq.f32.pop %v1672
      %vm1676 = vweird.f32 %v855
      %v1677 = vadd.s32 %v1673, 3
      %v1678 = vand.u32 %v1677, 3
      %vm1679 = vcmp.lt.s32.totalorder %v1678, 2
      %vm1680 = vcmp.eq.s32.totalorder %v1678, 0
      %v1681 = vxor.u32 %v1675, 2147483648
      %v1682 = vsel %vm1680, %v1674, %v1681
      %vm1683 = vcmp.eq.s32.totalorder %v1678, 2
      %v1684 = vxor.u32 %v1674, 2147483648
      %v1685 = vsel %vm1683, %v1684, %v1675
      %v1686 = vsel %vm1679, %v1682, %v1685
      %v1687 = vsel %vm1676, nan, %v1686
      %v1688 = vpack.c.bf16 %v737, %v735
      %v1689 = vpack.c.bf16 %v738, %v736
      %v1690 = vpack.c.bf16 %v741, %v739
      %v1691 = vpack.c.bf16 %v742, %v740
      %v1692 = vpack.c.bf16 %v1167, %v959
      %v1693 = vpack.c.bf16 %v1271, %v1063
      %v1694 = vpack.c.bf16 %v1583, %v1375
      %v1695 = vpack.c.bf16 %v1687, %v1479
      %v1696 = vld [vmem:[%s6] sm:$0xf]
      %v1697 = vld [vmem:[%s6 + $0x4] sm:$0xf]
      %v1698 = vld [vmem:[%s6 + $0x8] sm:$0xf]
      %v1699 = vld [vmem:[%s6 + $0xc] sm:$0xf]
      %v1700 = vld [vmem:[#allocation2 + $0x40] sm:$0xff]
      %v1701 = vld [vmem:[#allocation2 + $0x48] sm:$0xff]
      %v1702 = vld [vmem:[#allocation2 + $0x50] sm:$0xff]
      %v1703 = vld [vmem:[#allocation2 + $0x58] sm:$0xff]
      %v1704 = vld [vmem:[#allocation2 + $0x60] sm:$0xff]
      %v1705 = vld [vmem:[#allocation2 + $0x68] sm:$0xff]
      %v1706 = vld [vmem:[#allocation2 + $0x70] sm:$0xff]
      %v1707 = vld [vmem:[#allocation2 + $0x78] sm:$0xff]
      %v1712 = vunpack.c.l.b16 %v1696
      %v1713 = vunpack.c.l.b16 %v1697
      %v1714 = vunpack.c.l.b16 %v1698
      %v1715 = vunpack.c.l.b16 %v1699
      %v1716 = vpack.c.b16 %v1713, %v1712
      %v1717 = vpack.c.b16 %v1715, %v1714
      %vm1718 = vcmask 523264
      %v1720 = vsel %vm1718, %v1716, 0
      %v1723 = vsel %vm1718, %v1717, 0
      %1725 = vmatprep.subr.bf16.mxu0 %v1689
      %1726 = vmatpush1.bf16.msra.mxu0 %v1688
      %1727 = vmatprep.subr.bf16.mxu0 %v1691
      %1728 = vmatpush1.bf16.msra.mxu0 %v1690
      %1729 = vmatprep.subr.bf16.mxu0 %v1693
      %1730 = vmatpush1.bf16.msra.mxu0 %v1692
      %1731 = vmatprep.subr.bf16.mxu0 %v1695
      %1732 = vmatpush1.bf16.msra.mxu0 %v1694
      %1733 = vmatprep.subr.bf16.mxu0 0
      %1734 = vmatpush1.bf16.msra.mxu0 0
      %1735 = vmatprep.subr.bf16.mxu0 0
      %1736 = vmatpush1.bf16.msra.mxu0 0
      %1737 = vmatprep.subr.bf16.mxu0 0
      %1738 = vmatpush1.bf16.msra.mxu0 0
      %1739 = vmatprep.subr.bf16.mxu0 0
      %1740 = vmatpush1.bf16.msra.mxu0 0
      %1741 = vmatprep.subr.bf16.mxu0 0
      %1742 = vmatpush1.bf16.msra.mxu0 0
      %1743 = vmatprep.subr.bf16.mxu0 0
      %1744 = vmatpush1.bf16.msra.mxu0 0
      %1745 = vmatprep.subr.bf16.mxu0 0
      %1746 = vmatpush1.bf16.msra.mxu0 0
      %1747 = vmatprep.subr.bf16.mxu0 0
      %1748 = vmatpush1.bf16.msra.mxu0 0
      %1749 = vmatprep.subr.bf16.mxu0 0
      %1750 = vmatpush1.bf16.msra.mxu0 0
      %1751 = vmatprep.subr.bf16.mxu0 0
      %1752 = vmatpush1.bf16.msra.mxu0 0
      %1753 = vmatprep.subr.bf16.mxu0 0
      %1754 = vmatpush1.bf16.msra.mxu0 0
      %1755 = vmatprep.subr.bf16.mxu0 0
      %1756 = vmatpush1.bf16.msra.mxu0 0
      %1757 = vmatprep.mubr.bf16.mxu0 0
      %1758 = vmatmul.mubr.bf16.gmra.mrb[0].mxu0 %v1720
      %v1759 = vpop.f32.mrb[0].mxu0
      %v1760 = vadd.f32 %v1700, %v1759
      %v1761 = vpop.f32.mrb[0].mxu0
      %v1762 = vadd.f32 %v1701, %v1761
      %v1763 = vpop.f32.mrb[0].mxu0
      %v1764 = vadd.f32 %v1702, %v1763
      %v1765 = vpop.f32.mrb[0].mxu0
      %v1766 = vadd.f32 %v1703, %v1765
      %1767 = vmatprep.mubr.bf16.mxu0 0
      %1768 = vmatmul.mubr.bf16.gmra.mrb[0].mxu0 %v1723
      %v1769 = vpop.f32.mrb[0].mxu0
      %v1770 = vadd.f32 %v1704, %v1769
      %v1771 = vpop.f32.mrb[0].mxu0
      %v1772 = vadd.f32 %v1705, %v1771
      %v1773 = vpop.f32.mrb[0].mxu0
      %v1774 = vadd.f32 %v1706, %v1773
      %v1775 = vpop.f32.mrb[0].mxu0
      %v1776 = vadd.f32 %v1707, %v1775
      %1777 = vdwg.mxu0
      %v1778 = vld [vmem:[%s7] sm:$0xff]
      %v1779 = vld [vmem:[%s7 + $0x8] sm:$0xff]
      %v1780 = vld [vmem:[%s7 + $0x10] sm:$0xff]
      %v1781 = vld [vmem:[%s7 + $0x18] sm:$0xff]
      %1783 = vset.pattern.permute.xlu0 0
      %1784 = vperm.xlu0 %1783, %v1778
      %v1785 = vpop.permute.xlu0 %1784
      %1788 = vset.pattern.permute.xlu0 0
      %1789 = vperm.xlu0 %1788, %v1779
      %v1790 = vpop.permute.xlu0 %1789
      %1793 = vset.pattern.permute.xlu0 0
      %1794 = vperm.xlu0 %1793, %v1780
      %v1795 = vpop.permute.xlu0 %1794
      %1798 = vset.pattern.permute.xlu0 0
      %1799 = vperm.xlu0 %1798, %v1781
      %v1800 = vpop.permute.xlu0 %1799
      %v1802 = vadd.f32 %v1760, %v1785
      %v1803 = vadd.f32 %v1762, %v1785
      %v1804 = vadd.f32 %v1764, %v1790
      %v1805 = vadd.f32 %v1766, %v1790
      %v1806 = vadd.f32 %v1770, %v1795
      %v1807 = vadd.f32 %v1772, %v1795
      %v1808 = vadd.f32 %v1774, %v1800
      %v1809 = vadd.f32 %v1776, %v1800
      %v1810 = vmax.f32 %v1802, 0.0
      %v1811 = vmax.f32 %v1803, 0.0
      %v1812 = vmax.f32 %v1804, 0.0
      %v1813 = vmax.f32 %v1805, 0.0
      %v1814 = vmax.f32 %v1806, 0.0
      %v1815 = vmax.f32 %v1807, 0.0
      %v1816 = vmax.f32 %v1808, 0.0
      %v1817 = vmax.f32 %v1809, 0.0
      %v1818 = vld [vmem:[%s8] sm:$0xf]
      %v1819 = vld [vmem:[%s8 + $0x4] sm:$0xf]
      %v1820 = vld [vmem:[%s8 + $0x8] sm:$0xf]
      %v1821 = vld [vmem:[%s8 + $0xc] sm:$0xf]
      %v1822 = vld [vmem:[%s9] sm:$0xff]
      %v1823 = vld [vmem:[%s9 + $0x8] sm:$0xff]
      %v1824 = vld [vmem:[%s9 + $0x10] sm:$0xff]
      %v1825 = vld [vmem:[%s9 + $0x18] sm:$0xff]
      %1827 = vset.pattern.permute.xlu0 0
      %1828 = vperm.xlu0 %1827, %v1822
      %v1829 = vpop.permute.xlu0 %1828
      %1832 = vset.pattern.permute.xlu0 0
      %1833 = vperm.xlu0 %1832, %v1823
      %v1834 = vpop.permute.xlu0 %1833
      %1837 = vset.pattern.permute.xlu0 0
      %1838 = vperm.xlu0 %1837, %v1824
      %v1839 = vpop.permute.xlu0 %1838
      %1842 = vset.pattern.permute.xlu0 0
      %1843 = vperm.xlu0 %1842, %v1825
      %v1844 = vpop.permute.xlu0 %1843
      %v1850 = vunpack.c.l.b16 %v1818
      %v1851 = vunpack.c.l.b16 %v1819
      %v1852 = vunpack.c.l.b16 %v1820
      %v1853 = vunpack.c.l.b16 %v1821
      %v1854 = vpack.c.b16 %v1851, %v1850
      %v1855 = vpack.c.b16 %v1853, %v1852
      %vm1856 = vcmask 261120
      %v1858 = vsel %vm1856, %v1854, 0
      %v1861 = vsel %vm1856, %v1855, 0
      %1863 = vmatprep.subr.bf16.mxu0 %v1693
      %1864 = vmatpush1.bf16.msra.mxu0 %v1692
      %1865 = vmatprep.subr.bf16.mxu0 %v1695
      %1866 = vmatpush1.bf16.msra.mxu0 %v1694
      %1867 = vmatprep.subr.bf16.mxu0 0
      %1868 = vmatpush1.bf16.msra.mxu0 0
      %1869 = vmatprep.subr.bf16.mxu0 0
      %1870 = vmatpush1.bf16.msra.mxu0 0
      %1871 = vmatprep.subr.bf16.mxu0 0
      %1872 = vmatpush1.bf16.msra.mxu0 0
      %1873 = vmatprep.subr.bf16.mxu0 0
      %1874 = vmatpush1.bf16.msra.mxu0 0
      %1875 = vmatprep.subr.bf16.mxu0 0
      %1876 = vmatpush1.bf16.msra.mxu0 0
      %1877 = vmatprep.subr.bf16.mxu0 0
      %1878 = vmatpush1.bf16.msra.mxu0 0
      %1879 = vmatprep.subr.bf16.mxu0 0
      %1880 = vmatpush1.bf16.msra.mxu0 0
      %1881 = vmatprep.subr.bf16.mxu0 0
      %1882 = vmatpush1.bf16.msra.mxu0 0
      %1883 = vmatprep.subr.bf16.mxu0 0
      %1884 = vmatpush1.bf16.msra.mxu0 0
      %1885 = vmatprep.subr.bf16.mxu0 0
      %1886 = vmatpush1.bf16.msra.mxu0 0
      %1887 = vmatprep.subr.bf16.mxu0 0
      %1888 = vmatpush1.bf16.msra.mxu0 0
      %1889 = vmatprep.subr.bf16.mxu0 0
      %1890 = vmatpush1.bf16.msra.mxu0 0
      %1891 = vmatprep.subr.bf16.mxu0 0
      %1892 = vmatpush1.bf16.msra.mxu0 0
      %1893 = vmatprep.subr.bf16.mxu0 0
      %1894 = vmatpush1.bf16.msra.mxu0 0
      %1895 = vmatprep.mubr.bf16.mxu0 0
      %1896 = vmatmul.mubr.bf16.gmra.mrb[0].mxu0 %v1858
      %v1897 = vpop.f32.mrb[0].mxu0
      %v1898 = vadd.f32 %v1829, %v1897
      %v1899 = vpop.f32.mrb[0].mxu0
      %v1900 = vadd.f32 %v1829, %v1899
      %v1901 = vpop.f32.mrb[0].mxu0
      %v1902 = vadd.f32 %v1834, %v1901
      %v1903 = vpop.f32.mrb[0].mxu0
      %v1904 = vadd.f32 %v1834, %v1903
      %1905 = vmatprep.mubr.bf16.mxu0 0
      %1906 = vmatmul.mubr.bf16.gmra.mrb[0].mxu0 %v1861
      %v1907 = vpop.f32.mrb[0].mxu0
      %v1908 = vadd.f32 %v1839, %v1907
      %v1909 = vpop.f32.mrb[0].mxu0
      %v1910 = vadd.f32 %v1839, %v1909
      %v1911 = vpop.f32.mrb[0].mxu0
      %v1912 = vadd.f32 %v1844, %v1911
      %v1913 = vpop.f32.mrb[0].mxu0
      %v1914 = vadd.f32 %v1844, %v1913
      %1915 = vdwg.mxu0
      %v1916 = vadd.f32 %v1898, %v1810
      %v1917 = vadd.f32 %v1900, %v1811
      %v1918 = vadd.f32 %v1902, %v1812
      %v1919 = vadd.f32 %v1904, %v1813
      %v1920 = vadd.f32 %v1908, %v1814
      %v1921 = vadd.f32 %v1910, %v1815
      %v1922 = vadd.f32 %v1912, %v1816
      %v1923 = vadd.f32 %v1914, %v1817
      %v1924 = vand.u32 2147483647, %v1916
      %vm1925 = vcmp.le.f32.partialorder %v1924, 0.7853982
      %vm1926 = vcmp.lt.s32.totalorder %v1916, 0
      %v1927 = vand.u32 %v1916, 2139095040
      %v1928 = vshrl.u32 %v1927, 23
      %v1929 = vsub.s32 %v1928, 127
      %v1930 = vand.u32 2147483647, %v1916
      %v1931 = vand.u32 %v1930, 8388607
      %v1932 = vor.u32 %v1931, 8388608
      %v1933 = vsub.s32 0, %v1932
      %v1934 = vadd.s32 %v1929, 1
      %vm1935 = vcmp.gt.s32.totalorder %v1934, 0
      %v1936 = vsel %vm1935, %v1934, 0
      %v1937 = vshrl.u32 %v1936, 5
      %v1938 = vand.u32 %v1936, 31
      %v1939 = vsub.s32 32, %v1938
      %v1940 = vshrl.u32 683565275, %v1939
      %v1941 = vshll.u32 683565275, %v1938
      %v1942 = vshrl.u32 2475754826, %v1939
      %v1943 = vor.u32 %v1941, %v1942
      %v1944 = vshll.u32 2475754826, %v1938
      %v1945 = vshrl.u32 2131351028, %v1939
      %v1946 = vor.u32 %v1944, %v1945
      %v1947 = vshll.u32 2131351028, %v1938
      %v1948 = vshrl.u32 2102212464, %v1939
      %v1949 = vor.u32 %v1947, %v1948
      %v1950 = vshll.u32 2102212464, %v1938
      %v1951 = vshrl.u32 920167782, %v1939
      %v1952 = vor.u32 %v1950, %v1951
      %v1953 = vshll.u32 920167782, %v1938
      %v1954 = vshrl.u32 1326507024, %v1939
      %v1955 = vor.u32 %v1953, %v1954
      %vm1956 = vcmp.lt.s32.totalorder %v1937, 1
      %vm1957 = vcmp.lt.s32.totalorder %v1937, 2
      %vm1958 = vcmp.lt.s32.totalorder %v1937, 3
      %vm1959 = vcmp.lt.s32.totalorder %v1937, 4
      %v1960 = vsel %vm1956, %v1940, %v1943
      %v1961 = vsel %vm1959, %v1949, 2102212464
      %v1962 = vsel %vm1958, %v1946, %v1961
      %v1963 = vsel %vm1957, %v1960, %v1962
      %v1964 = vsel %vm1956, %v1943, %v1946
      %v1965 = vsel %vm1959, %v1952, 920167782
      %v1966 = vsel %vm1958, %v1949, %v1965
      %v1967 = vsel %vm1957, %v1964, %v1966
      %v1968 = vsel %vm1956, %v1946, %v1949
      %v1969 = vsel %vm1959, %v1955, 1326507024
      %v1970 = vsel %vm1958, %v1952, %v1969
      %v1971 = vsel %vm1957, %v1968, %v1970
      %v1972 = vshll.u32 %v1932, 8
      %v1973 = vmul.u32.u64.compose %v1972, %v1971
      %v1974 = vextract.low.u32 %v1973
      %v1975 = vextract.high.u32 %v1973
      %v1976 = vmul.u32.u64.compose %v1972, %v1967
      %v1977 = vextract.low.u32 %v1976
      %v1978 = vextract.high.u32 %v1976
      %v1979 = vmul.u32 %v1972, %v1963
      %v1980 = vadd.s32 %v1975, %v1977
      %vm1981 = vc.u32 %v1975, %v1977
      %v1982 = vadd.s32 %v1978, 1
      %v1983 = vsel %vm1981, %v1982, %v1978
      %v1984 = vadd.s32 %v1979, %v1983
      %v1985 = vadd.s32 %v1984, 536870912
      %v1986 = vshrl.u32 %v1985, 30
      %v1987 = vshll.u32 %v1986, 30
      %v1988 = vsub.s32 %v1984, %v1987
      %vm1989 = vcmp.lt.s32.totalorder %v1988, 0
      %v1990 = vsub.s32 0, %v1988
      %v1991 = vsel %vm1989, %v1990, %v1988
      %v1992 = vclz %v1991
      %v1993 = vsub.s32 %v1992, 2
      %vm1994 = vcmp.gt.s32.totalorder 0, %v1993
      %v1995 = vsel %vm1994, 0, %v1993
      %v1996 = vsub.s32 32, %v1995
      %v1997 = vshll.u32 %v1988, %v1995
      %v1998 = vshrl.u32 %v1980, %v1996
      %v1999 = vor.u32 %v1997, %v1998
      %v2000 = vsub.s32 4294967266, %v1995
      %v2001 = vadd.s32 %v2000, 127
      %v2002 = vshll.u32 %v2001, 23
      %v2003 = vor.u32 4788187, %v2002
      %v2004 = vand.u32 2147483647, %v2003
      %v2006 = vcvt.s32.f32 %v1999
      %v2007 = vmul.f32 %v2006, %v2004
      %v2008 = vxor.u32 %v2007, 2147483648
      %v2009 = vsel %vm1926, %v2008, %v2007
      %v2010 = vsub.s32 4, %v1986
      %v2011 = vsel %vm1926, %v2010, %v1986
      %v2012 = vsel %vm1925, %v1916, %v2009
      %v2013 = vsel %vm1925, 0, %v2011
      %v2014 = vcosq.f32.pop %v2012
      %v2015 = vsinq.f32.pop %v2012
      %vm2016 = vweird.f32 %v1916
      %v2017 = vadd.s32 %v2013, 3
      %v2018 = vand.u32 %v2017, 3
      %vm2019 = vcmp.lt.s32.totalorder %v2018, 2
      %vm2020 = vcmp.eq.s32.totalorder %v2018, 0
      %v2021 = vxor.u32 %v2015, 2147483648
      %v2022 = vsel %vm2020, %v2014, %v2021
      %vm2023 = vcmp.eq.s32.totalorder %v2018, 2
      %v2024 = vxor.u32 %v2014, 2147483648
      %v2025 = vsel %vm2023, %v2024, %v2015
      %v2026 = vsel %vm2019, %v2022, %v2025
      %v2027 = vsel %vm2016, nan, %v2026
      %v2028 = vand.u32 2147483647, %v1917
      %vm2029 = vcmp.le.f32.partialorder %v2028, 0.7853982
      %vm2030 = vcmp.lt.s32.totalorder %v1917, 0
      %v2031 = vand.u32 %v1917, 2139095040
      %v2032 = vshrl.u32 %v2031, 23
      %v2033 = vsub.s32 %v2032, 127
      %v2034 = vand.u32 2147483647, %v1917
      %v2035 = vand.u32 %v2034, 8388607
      %v2036 = vor.u32 %v2035, 8388608
      %v2037 = vsub.s32 0, %v2036
      %v2038 = vadd.s32 %v2033, 1
      %vm2039 = vcmp.gt.s32.totalorder %v2038, 0
      %v2040 = vsel %vm2039, %v2038, 0
      %v2041 = vshrl.u32 %v2040, 5
      %v2042 = vand.u32 %v2040, 31
      %v2043 = vsub.s32 32, %v2042
      %v2044 = vshrl.u32 683565275, %v2043
      %v2045 = vshll.u32 683565275, %v2042
      %v2046 = vshrl.u32 2475754826, %v2043
      %v2047 = vor.u32 %v2045, %v2046
      %v2048 = vshll.u32 2475754826, %v2042
      %v2049 = vshrl.u32 2131351028, %v2043
      %v2050 = vor.u32 %v2048, %v2049
      %v2051 = vshll.u32 2131351028, %v2042
      %v2052 = vshrl.u32 2102212464, %v2043
      %v2053 = vor.u32 %v2051, %v2052
      %v2054 = vshll.u32 2102212464, %v2042
      %v2055 = vshrl.u32 920167782, %v2043
      %v2056 = vor.u32 %v2054, %v2055
      %v2057 = vshll.u32 920167782, %v2042
      %v2058 = vshrl.u32 1326507024, %v2043
      %v2059 = vor.u32 %v2057, %v2058
      %vm2060 = vcmp.lt.s32.totalorder %v2041, 1
      %vm2061 = vcmp.lt.s32.totalorder %v2041, 2
      %vm2062 = vcmp.lt.s32.totalorder %v2041, 3
      %vm2063 = vcmp.lt.s32.totalorder %v2041, 4
      %v2064 = vsel %vm2060, %v2044, %v2047
      %v2065 = vsel %vm2063, %v2053, 2102212464
      %v2066 = vsel %vm2062, %v2050, %v2065
      %v2067 = vsel %vm2061, %v2064, %v2066
      %v2068 = vsel %vm2060, %v2047, %v2050
      %v2069 = vsel %vm2063, %v2056, 920167782
      %v2070 = vsel %vm2062, %v2053, %v2069
      %v2071 = vsel %vm2061, %v2068, %v2070
      %v2072 = vsel %vm2060, %v2050, %v2053
      %v2073 = vsel %vm2063, %v2059, 1326507024
      %v2074 = vsel %vm2062, %v2056, %v2073
      %v2075 = vsel %vm2061, %v2072, %v2074
      %v2076 = vshll.u32 %v2036, 8
      %v2077 = vmul.u32.u64.compose %v2076, %v2075
      %v2078 = vextract.low.u32 %v2077
      %v2079 = vextract.high.u32 %v2077
      %v2080 = vmul.u32.u64.compose %v2076, %v2071
      %v2081 = vextract.low.u32 %v2080
      %v2082 = vextract.high.u32 %v2080
      %v2083 = vmul.u32 %v2076, %v2067
      %v2084 = vadd.s32 %v2079, %v2081
      %vm2085 = vc.u32 %v2079, %v2081
      %v2086 = vadd.s32 %v2082, 1
      %v2087 = vsel %vm2085, %v2086, %v2082
      %v2088 = vadd.s32 %v2083, %v2087
      %v2089 = vadd.s32 %v2088, 536870912
      %v2090 = vshrl.u32 %v2089, 30
      %v2091 = vshll.u32 %v2090, 30
      %v2092 = vsub.s32 %v2088, %v2091
      %vm2093 = vcmp.lt.s32.totalorder %v2092, 0
      %v2094 = vsub.s32 0, %v2092
      %v2095 = vsel %vm2093, %v2094, %v2092
      %v2096 = vclz %v2095
      %v2097 = vsub.s32 %v2096, 2
      %vm2098 = vcmp.gt.s32.totalorder 0, %v2097
      %v2099 = vsel %vm2098, 0, %v2097
      %v2100 = vsub.s32 32, %v2099
      %v2101 = vshll.u32 %v2092, %v2099
      %v2102 = vshrl.u32 %v2084, %v2100
      %v2103 = vor.u32 %v2101, %v2102
      %v2104 = vsub.s32 4294967266, %v2099
      %v2105 = vadd.s32 %v2104, 127
      %v2106 = vshll.u32 %v2105, 23
      %v2107 = vor.u32 4788187, %v2106
      %v2108 = vand.u32 2147483647, %v2107
      %v2110 = vcvt.s32.f32 %v2103
      %v2111 = vmul.f32 %v2110, %v2108
      %v2112 = vxor.u32 %v2111, 2147483648
      %v2113 = vsel %vm2030, %v2112, %v2111
      %v2114 = vsub.s32 4, %v2090
      %v2115 = vsel %vm2030, %v2114, %v2090
      %v2116 = vsel %vm2029, %v1917, %v2113
      %v2117 = vsel %vm2029, 0, %v2115
      %v2118 = vcosq.f32.pop %v2116
      %v2119 = vsinq.f32.pop %v2116
      %vm2120 = vweird.f32 %v1917
      %v2121 = vadd.s32 %v2117, 3
      %v2122 = vand.u32 %v2121, 3
      %vm2123 = vcmp.lt.s32.totalorder %v2122, 2
      %vm2124 = vcmp.eq.s32.totalorder %v2122, 0
      %v2125 = vxor.u32 %v2119, 2147483648
      %v2126 = vsel %vm2124, %v2118, %v2125
      %vm2127 = vcmp.eq.s32.totalorder %v2122, 2
      %v2128 = vxor.u32 %v2118, 2147483648
      %v2129 = vsel %vm2127, %v2128, %v2119
      %v2130 = vsel %vm2123, %v2126, %v2129
      %v2131 = vsel %vm2120, nan, %v2130
      %v2132 = vand.u32 2147483647, %v1918
      %vm2133 = vcmp.le.f32.partialorder %v2132, 0.7853982
      %vm2134 = vcmp.lt.s32.totalorder %v1918, 0
      %v2135 = vand.u32 %v1918, 2139095040
      %v2136 = vshrl.u32 %v2135, 23
      %v2137 = vsub.s32 %v2136, 127
      %v2138 = vand.u32 2147483647, %v1918
      %v2139 = vand.u32 %v2138, 8388607
      %v2140 = vor.u32 %v2139, 8388608
      %v2141 = vsub.s32 0, %v2140
      %v2142 = vadd.s32 %v2137, 1
      %vm2143 = vcmp.gt.s32.totalorder %v2142, 0
      %v2144 = vsel %vm2143, %v2142, 0
      %v2145 = vshrl.u32 %v2144, 5
      %v2146 = vand.u32 %v2144, 31
      %v2147 = vsub.s32 32, %v2146
      %v2148 = vshrl.u32 683565275, %v2147
      %v2149 = vshll.u32 683565275, %v2146
      %v2150 = vshrl.u32 2475754826, %v2147
      %v2151 = vor.u32 %v2149, %v2150
      %v2152 = vshll.u32 2475754826, %v2146
      %v2153 = vshrl.u32 2131351028, %v2147
      %v2154 = vor.u32 %v2152, %v2153
      %v2155 = vshll.u32 2131351028, %v2146
      %v2156 = vshrl.u32 2102212464, %v2147
      %v2157 = vor.u32 %v2155, %v2156
      %v2158 = vshll.u32 2102212464, %v2146
      %v2159 = vshrl.u32 920167782, %v2147
      %v2160 = vor.u32 %v2158, %v2159
      %v2161 = vshll.u32 920167782, %v2146
      %v2162 = vshrl.u32 1326507024, %v2147
      %v2163 = vor.u32 %v2161, %v2162
      %vm2164 = vcmp.lt.s32.totalorder %v2145, 1
      %vm2165 = vcmp.lt.s32.totalorder %v2145, 2
      %vm2166 = vcmp.lt.s32.totalorder %v2145, 3
      %vm2167 = vcmp.lt.s32.totalorder %v2145, 4
      %v2168 = vsel %vm2164, %v2148, %v2151
      %v2169 = vsel %vm2167, %v2157, 2102212464
      %v2170 = vsel %vm2166, %v2154, %v2169
      %v2171 = vsel %vm2165, %v2168, %v2170
      %v2172 = vsel %vm2164, %v2151, %v2154
      %v2173 = vsel %vm2167, %v2160, 920167782
      %v2174 = vsel %vm2166, %v2157, %v2173
      %v2175 = vsel %vm2165, %v2172, %v2174
      %v2176 = vsel %vm2164, %v2154, %v2157
      %v2177 = vsel %vm2167, %v2163, 1326507024
      %v2178 = vsel %vm2166, %v2160, %v2177
      %v2179 = vsel %vm2165, %v2176, %v2178
      %v2180 = vshll.u32 %v2140, 8
      %v2181 = vmul.u32.u64.compose %v2180, %v2179
      %v2182 = vextract.low.u32 %v2181
      %v2183 = vextract.high.u32 %v2181
      %v2184 = vmul.u32.u64.compose %v2180, %v2175
      %v2185 = vextract.low.u32 %v2184
      %v2186 = vextract.high.u32 %v2184
      %v2187 = vmul.u32 %v2180, %v2171
      %v2188 = vadd.s32 %v2183, %v2185
      %vm2189 = vc.u32 %v2183, %v2185
      %v2190 = vadd.s32 %v2186, 1
      %v2191 = vsel %vm2189, %v2190, %v2186
      %v2192 = vadd.s32 %v2187, %v2191
      %v2193 = vadd.s32 %v2192, 536870912
      %v2194 = vshrl.u32 %v2193, 30
      %v2195 = vshll.u32 %v2194, 30
      %v2196 = vsub.s32 %v2192, %v2195
      %vm2197 = vcmp.lt.s32.totalorder %v2196, 0
      %v2198 = vsub.s32 0, %v2196
      %v2199 = vsel %vm2197, %v2198, %v2196
      %v2200 = vclz %v2199
      %v2201 = vsub.s32 %v2200, 2
      %vm2202 = vcmp.gt.s32.totalorder 0, %v2201
      %v2203 = vsel %vm2202, 0, %v2201
      %v2204 = vsub.s32 32, %v2203
      %v2205 = vshll.u32 %v2196, %v2203
      %v2206 = vshrl.u32 %v2188, %v2204
      %v2207 = vor.u32 %v2205, %v2206
      %v2208 = vsub.s32 4294967266, %v2203
      %v2209 = vadd.s32 %v2208, 127
      %v2210 = vshll.u32 %v2209, 23
      %v2211 = vor.u32 4788187, %v2210
      %v2212 = vand.u32 2147483647, %v2211
      %v2214 = vcvt.s32.f32 %v2207
      %v2215 = vmul.f32 %v2214, %v2212
      %v2216 = vxor.u32 %v2215, 2147483648
      %v2217 = vsel %vm2134, %v2216, %v2215
      %v2218 = vsub.s32 4, %v2194
      %v2219 = vsel %vm2134, %v2218, %v2194
      %v2220 = vsel %vm2133, %v1918, %v2217
      %v2221 = vsel %vm2133, 0, %v2219
      %v2222 = vcosq.f32.pop %v2220
      %v2223 = vsinq.f32.pop %v2220
      %vm2224 = vweird.f32 %v1918
      %v2225 = vadd.s32 %v2221, 3
      %v2226 = vand.u32 %v2225, 3
      %vm2227 = vcmp.lt.s32.totalorder %v2226, 2
      %vm2228 = vcmp.eq.s32.totalorder %v2226, 0
      %v2229 = vxor.u32 %v2223, 2147483648
      %v2230 = vsel %vm2228, %v2222, %v2229
      %vm2231 = vcmp.eq.s32.totalorder %v2226, 2
      %v2232 = vxor.u32 %v2222, 2147483648
      %v2233 = vsel %vm2231, %v2232, %v2223
      %v2234 = vsel %vm2227, %v2230, %v2233
      %v2235 = vsel %vm2224, nan, %v2234
      %v2236 = vand.u32 2147483647, %v1919
      %vm2237 = vcmp.le.f32.partialorder %v2236, 0.7853982
      %vm2238 = vcmp.lt.s32.totalorder %v1919, 0
      %v2239 = vand.u32 %v1919, 2139095040
      %v2240 = vshrl.u32 %v2239, 23
      %v2241 = vsub.s32 %v2240, 127
      %v2242 = vand.u32 2147483647, %v1919
      %v2243 = vand.u32 %v2242, 8388607
      %v2244 = vor.u32 %v2243, 8388608
      %v2245 = vsub.s32 0, %v2244
      %v2246 = vadd.s32 %v2241, 1
      %vm2247 = vcmp.gt.s32.totalorder %v2246, 0
      %v2248 = vsel %vm2247, %v2246, 0
      %v2249 = vshrl.u32 %v2248, 5
      %v2250 = vand.u32 %v2248, 31
      %v2251 = vsub.s32 32, %v2250
      %v2252 = vshrl.u32 683565275, %v2251
      %v2253 = vshll.u32 683565275, %v2250
      %v2254 = vshrl.u32 2475754826, %v2251
      %v2255 = vor.u32 %v2253, %v2254
      %v2256 = vshll.u32 2475754826, %v2250
      %v2257 = vshrl.u32 2131351028, %v2251
      %v2258 = vor.u32 %v2256, %v2257
      %v2259 = vshll.u32 2131351028, %v2250
      %v2260 = vshrl.u32 2102212464, %v2251
      %v2261 = vor.u32 %v2259, %v2260
      %v2262 = vshll.u32 2102212464, %v2250
      %v2263 = vshrl.u32 920167782, %v2251
      %v2264 = vor.u32 %v2262, %v2263
      %v2265 = vshll.u32 920167782, %v2250
      %v2266 = vshrl.u32 1326507024, %v2251
      %v2267 = vor.u32 %v2265, %v2266
      %vm2268 = vcmp.lt.s32.totalorder %v2249, 1
      %vm2269 = vcmp.lt.s32.totalorder %v2249, 2
      %vm2270 = vcmp.lt.s32.totalorder %v2249, 3
      %vm2271 = vcmp.lt.s32.totalorder %v2249, 4
      %v2272 = vsel %vm2268, %v2252, %v2255
      %v2273 = vsel %vm2271, %v2261, 2102212464
      %v2274 = vsel %vm2270, %v2258, %v2273
      %v2275 = vsel %vm2269, %v2272, %v2274
      %v2276 = vsel %vm2268, %v2255, %v2258
      %v2277 = vsel %vm2271, %v2264, 920167782
      %v2278 = vsel %vm2270, %v2261, %v2277
      %v2279 = vsel %vm2269, %v2276, %v2278
      %v2280 = vsel %vm2268, %v2258, %v2261
      %v2281 = vsel %vm2271, %v2267, 1326507024
      %v2282 = vsel %vm2270, %v2264, %v2281
      %v2283 = vsel %vm2269, %v2280, %v2282
      %v2284 = vshll.u32 %v2244, 8
      %v2285 = vmul.u32.u64.compose %v2284, %v2283
      %v2286 = vextract.low.u32 %v2285
      %v2287 = vextract.high.u32 %v2285
      %v2288 = vmul.u32.u64.compose %v2284, %v2279
      %v2289 = vextract.low.u32 %v2288
      %v2290 = vextract.high.u32 %v2288
      %v2291 = vmul.u32 %v2284, %v2275
      %v2292 = vadd.s32 %v2287, %v2289
      %vm2293 = vc.u32 %v2287, %v2289
      %v2294 = vadd.s32 %v2290, 1
      %v2295 = vsel %vm2293, %v2294, %v2290
      %v2296 = vadd.s32 %v2291, %v2295
      %v2297 = vadd.s32 %v2296, 536870912
      %v2298 = vshrl.u32 %v2297, 30
      %v2299 = vshll.u32 %v2298, 30
      %v2300 = vsub.s32 %v2296, %v2299
      %vm2301 = vcmp.lt.s32.totalorder %v2300, 0
      %v2302 = vsub.s32 0, %v2300
      %v2303 = vsel %vm2301, %v2302, %v2300
      %v2304 = vclz %v2303
      %v2305 = vsub.s32 %v2304, 2
      %vm2306 = vcmp.gt.s32.totalorder 0, %v2305
      %v2307 = vsel %vm2306, 0, %v2305
      %v2308 = vsub.s32 32, %v2307
      %v2309 = vshll.u32 %v2300, %v2307
      %v2310 = vshrl.u32 %v2292, %v2308
      %v2311 = vor.u32 %v2309, %v2310
      %v2312 = vsub.s32 4294967266, %v2307
      %v2313 = vadd.s32 %v2312, 127
      %v2314 = vshll.u32 %v2313, 23
      %v2315 = vor.u32 4788187, %v2314
      %v2316 = vand.u32 2147483647, %v2315
      %v2318 = vcvt.s32.f32 %v2311
      %v2319 = vmul.f32 %v2318, %v2316
      %v2320 = vxor.u32 %v2319, 2147483648
      %v2321 = vsel %vm2238, %v2320, %v2319
      %v2322 = vsub.s32 4, %v2298
      %v2323 = vsel %vm2238, %v2322, %v2298
      %v2324 = vsel %vm2237, %v1919, %v2321
      %v2325 = vsel %vm2237, 0, %v2323
      %v2326 = vcosq.f32.pop %v2324
      %v2327 = vsinq.f32.pop %v2324
      %vm2328 = vweird.f32 %v1919
      %v2329 = vadd.s32 %v2325, 3
      %v2330 = vand.u32 %v2329, 3
      %vm2331 = vcmp.lt.s32.totalorder %v2330, 2
      %vm2332 = vcmp.eq.s32.totalorder %v2330, 0
      %v2333 = vxor.u32 %v2327, 2147483648
      %v2334 = vsel %vm2332, %v2326, %v2333
      %vm2335 = vcmp.eq.s32.totalorder %v2330, 2
      %v2336 = vxor.u32 %v2326, 2147483648
      %v2337 = vsel %vm2335, %v2336, %v2327
      %v2338 = vsel %vm2331, %v2334, %v2337
      %v2339 = vsel %vm2328, nan, %v2338
      %v2340 = vand.u32 2147483647, %v1920
      %vm2341 = vcmp.le.f32.partialorder %v2340, 0.7853982
      %vm2342 = vcmp.lt.s32.totalorder %v1920, 0
      %v2343 = vand.u32 %v1920, 2139095040
      %v2344 = vshrl.u32 %v2343, 23
      %v2345 = vsub.s32 %v2344, 127
      %v2346 = vand.u32 2147483647, %v1920
      %v2347 = vand.u32 %v2346, 8388607
      %v2348 = vor.u32 %v2347, 8388608
      %v2349 = vsub.s32 0, %v2348
      %v2350 = vadd.s32 %v2345, 1
      %vm2351 = vcmp.gt.s32.totalorder %v2350, 0
      %v2352 = vsel %vm2351, %v2350, 0
      %v2353 = vshrl.u32 %v2352, 5
      %v2354 = vand.u32 %v2352, 31
      %v2355 = vsub.s32 32, %v2354
      %v2356 = vshrl.u32 683565275, %v2355
      %v2357 = vshll.u32 683565275, %v2354
      %v2358 = vshrl.u32 2475754826, %v2355
      %v2359 = vor.u32 %v2357, %v2358
      %v2360 = vshll.u32 2475754826, %v2354
      %v2361 = vshrl.u32 2131351028, %v2355
      %v2362 = vor.u32 %v2360, %v2361
      %v2363 = vshll.u32 2131351028, %v2354
      %v2364 = vshrl.u32 2102212464, %v2355
      %v2365 = vor.u32 %v2363, %v2364
      %v2366 = vshll.u32 2102212464, %v2354
      %v2367 = vshrl.u32 920167782, %v2355
      %v2368 = vor.u32 %v2366, %v2367
      %v2369 = vshll.u32 920167782, %v2354
      %v2370 = vshrl.u32 1326507024, %v2355
      %v2371 = vor.u32 %v2369, %v2370
      %vm2372 = vcmp.lt.s32.totalorder %v2353, 1
      %vm2373 = vcmp.lt.s32.totalorder %v2353, 2
      %vm2374 = vcmp.lt.s32.totalorder %v2353, 3
      %vm2375 = vcmp.lt.s32.totalorder %v2353, 4
      %v2376 = vsel %vm2372, %v2356, %v2359
      %v2377 = vsel %vm2375, %v2365, 2102212464
      %v2378 = vsel %vm2374, %v2362, %v2377
      %v2379 = vsel %vm2373, %v2376, %v2378
      %v2380 = vsel %vm2372, %v2359, %v2362
      %v2381 = vsel %vm2375, %v2368, 920167782
      %v2382 = vsel %vm2374, %v2365, %v2381
      %v2383 = vsel %vm2373, %v2380, %v2382
      %v2384 = vsel %vm2372, %v2362, %v2365
      %v2385 = vsel %vm2375, %v2371, 1326507024
      %v2386 = vsel %vm2374, %v2368, %v2385
      %v2387 = vsel %vm2373, %v2384, %v2386
      %v2388 = vshll.u32 %v2348, 8
      %v2389 = vmul.u32.u64.compose %v2388, %v2387
      %v2390 = vextract.low.u32 %v2389
      %v2391 = vextract.high.u32 %v2389
      %v2392 = vmul.u32.u64.compose %v2388, %v2383
      %v2393 = vextract.low.u32 %v2392
      %v2394 = vextract.high.u32 %v2392
      %v2395 = vmul.u32 %v2388, %v2379
      %v2396 = vadd.s32 %v2391, %v2393
      %vm2397 = vc.u32 %v2391, %v2393
      %v2398 = vadd.s32 %v2394, 1
      %v2399 = vsel %vm2397, %v2398, %v2394
      %v2400 = vadd.s32 %v2395, %v2399
      %v2401 = vadd.s32 %v2400, 536870912
      %v2402 = vshrl.u32 %v2401, 30
      %v2403 = vshll.u32 %v2402, 30
      %v2404 = vsub.s32 %v2400, %v2403
      %vm2405 = vcmp.lt.s32.totalorder %v2404, 0
      %v2406 = vsub.s32 0, %v2404
      %v2407 = vsel %vm2405, %v2406, %v2404
      %v2408 = vclz %v2407
      %v2409 = vsub.s32 %v2408, 2
      %vm2410 = vcmp.gt.s32.totalorder 0, %v2409
      %v2411 = vsel %vm2410, 0, %v2409
      %v2412 = vsub.s32 32, %v2411
      %v2413 = vshll.u32 %v2404, %v2411
      %v2414 = vshrl.u32 %v2396, %v2412
      %v2415 = vor.u32 %v2413, %v2414
      %v2416 = vsub.s32 4294967266, %v2411
      %v2417 = vadd.s32 %v2416, 127
      %v2418 = vshll.u32 %v2417, 23
      %v2419 = vor.u32 4788187, %v2418
      %v2420 = vand.u32 2147483647, %v2419
      %v2422 = vcvt.s32.f32 %v2415
      %v2423 = vmul.f32 %v2422, %v2420
      %v2424 = vxor.u32 %v2423, 2147483648
      %v2425 = vsel %vm2342, %v2424, %v2423
      %v2426 = vsub.s32 4, %v2402
      %v2427 = vsel %vm2342, %v2426, %v2402
      %v2428 = vsel %vm2341, %v1920, %v2425
      %v2429 = vsel %vm2341, 0, %v2427
      %v2430 = vcosq.f32.pop %v2428
      %v2431 = vsinq.f32.pop %v2428
      %vm2432 = vweird.f32 %v1920
      %v2433 = vadd.s32 %v2429, 3
      %v2434 = vand.u32 %v2433, 3
      %vm2435 = vcmp.lt.s32.totalorder %v2434, 2
      %vm2436 = vcmp.eq.s32.totalorder %v2434, 0
      %v2437 = vxor.u32 %v2431, 2147483648
      %v2438 = vsel %vm2436, %v2430, %v2437
      %vm2439 = vcmp.eq.s32.totalorder %v2434, 2
      %v2440 = vxor.u32 %v2430, 2147483648
      %v2441 = vsel %vm2439, %v2440, %v2431
      %v2442 = vsel %vm2435, %v2438, %v2441
      %v2443 = vsel %vm2432, nan, %v2442
      %v2444 = vand.u32 2147483647, %v1921
      %vm2445 = vcmp.le.f32.partialorder %v2444, 0.7853982
      %vm2446 = vcmp.lt.s32.totalorder %v1921, 0
      %v2447 = vand.u32 %v1921, 2139095040
      %v2448 = vshrl.u32 %v2447, 23
      %v2449 = vsub.s32 %v2448, 127
      %v2450 = vand.u32 2147483647, %v1921
      %v2451 = vand.u32 %v2450, 8388607
      %v2452 = vor.u32 %v2451, 8388608
      %v2453 = vsub.s32 0, %v2452
      %v2454 = vadd.s32 %v2449, 1
      %vm2455 = vcmp.gt.s32.totalorder %v2454, 0
      %v2456 = vsel %vm2455, %v2454, 0
      %v2457 = vshrl.u32 %v2456, 5
      %v2458 = vand.u32 %v2456, 31
      %v2459 = vsub.s32 32, %v2458
      %v2460 = vshrl.u32 683565275, %v2459
      %v2461 = vshll.u32 683565275, %v2458
      %v2462 = vshrl.u32 2475754826, %v2459
      %v2463 = vor.u32 %v2461, %v2462
      %v2464 = vshll.u32 2475754826, %v2458
      %v2465 = vshrl.u32 2131351028, %v2459
      %v2466 = vor.u32 %v2464, %v2465
      %v2467 = vshll.u32 2131351028, %v2458
      %v2468 = vshrl.u32 2102212464, %v2459
      %v2469 = vor.u32 %v2467, %v2468
      %v2470 = vshll.u32 2102212464, %v2458
      %v2471 = vshrl.u32 920167782, %v2459
      %v2472 = vor.u32 %v2470, %v2471
      %v2473 = vshll.u32 920167782, %v2458
      %v2474 = vshrl.u32 1326507024, %v2459
      %v2475 = vor.u32 %v2473, %v2474
      %vm2476 = vcmp.lt.s32.totalorder %v2457, 1
      %vm2477 = vcmp.lt.s32.totalorder %v2457, 2
      %vm2478 = vcmp.lt.s32.totalorder %v2457, 3
      %vm2479 = vcmp.lt.s32.totalorder %v2457, 4
      %v2480 = vsel %vm2476, %v2460, %v2463
      %v2481 = vsel %vm2479, %v2469, 2102212464
      %v2482 = vsel %vm2478, %v2466, %v2481
      %v2483 = vsel %vm2477, %v2480, %v2482
      %v2484 = vsel %vm2476, %v2463, %v2466
      %v2485 = vsel %vm2479, %v2472, 920167782
      %v2486 = vsel %vm2478, %v2469, %v2485
      %v2487 = vsel %vm2477, %v2484, %v2486
      %v2488 = vsel %vm2476, %v2466, %v2469
      %v2489 = vsel %vm2479, %v2475, 1326507024
      %v2490 = vsel %vm2478, %v2472, %v2489
      %v2491 = vsel %vm2477, %v2488, %v2490
      %v2492 = vshll.u32 %v2452, 8
      %v2493 = vmul.u32.u64.compose %v2492, %v2491
      %v2494 = vextract.low.u32 %v2493
      %v2495 = vextract.high.u32 %v2493
      %v2496 = vmul.u32.u64.compose %v2492, %v2487
      %v2497 = vextract.low.u32 %v2496
      %v2498 = vextract.high.u32 %v2496
      %v2499 = vmul.u32 %v2492, %v2483
      %v2500 = vadd.s32 %v2495, %v2497
      %vm2501 = vc.u32 %v2495, %v2497
      %v2502 = vadd.s32 %v2498, 1
      %v2503 = vsel %vm2501, %v2502, %v2498
      %v2504 = vadd.s32 %v2499, %v2503
      %v2505 = vadd.s32 %v2504, 536870912
      %v2506 = vshrl.u32 %v2505, 30
      %v2507 = vshll.u32 %v2506, 30
      %v2508 = vsub.s32 %v2504, %v2507
      %vm2509 = vcmp.lt.s32.totalorder %v2508, 0
      %v2510 = vsub.s32 0, %v2508
      %v2511 = vsel %vm2509, %v2510, %v2508
      %v2512 = vclz %v2511
      %v2513 = vsub.s32 %v2512, 2
      %vm2514 = vcmp.gt.s32.totalorder 0, %v2513
      %v2515 = vsel %vm2514, 0, %v2513
      %v2516 = vsub.s32 32, %v2515
      %v2517 = vshll.u32 %v2508, %v2515
      %v2518 = vshrl.u32 %v2500, %v2516
      %v2519 = vor.u32 %v2517, %v2518
      %v2520 = vsub.s32 4294967266, %v2515
      %v2521 = vadd.s32 %v2520, 127
      %v2522 = vshll.u32 %v2521, 23
      %v2523 = vor.u32 4788187, %v2522
      %v2524 = vand.u32 2147483647, %v2523
      %v2526 = vcvt.s32.f32 %v2519
      %v2527 = vmul.f32 %v2526, %v2524
      %v2528 = vxor.u32 %v2527, 2147483648
      %v2529 = vsel %vm2446, %v2528, %v2527
      %v2530 = vsub.s32 4, %v2506
      %v2531 = vsel %vm2446, %v2530, %v2506
      %v2532 = vsel %vm2445, %v1921, %v2529
      %v2533 = vsel %vm2445, 0, %v2531
      %v2534 = vcosq.f32.pop %v2532
      %v2535 = vsinq.f32.pop %v2532
      %vm2536 = vweird.f32 %v1921
      %v2537 = vadd.s32 %v2533, 3
      %v2538 = vand.u32 %v2537, 3
      %vm2539 = vcmp.lt.s32.totalorder %v2538, 2
      %vm2540 = vcmp.eq.s32.totalorder %v2538, 0
      %v2541 = vxor.u32 %v2535, 2147483648
      %v2542 = vsel %vm2540, %v2534, %v2541
      %vm2543 = vcmp.eq.s32.totalorder %v2538, 2
      %v2544 = vxor.u32 %v2534, 2147483648
      %v2545 = vsel %vm2543, %v2544, %v2535
      %v2546 = vsel %vm2539, %v2542, %v2545
      %v2547 = vsel %vm2536, nan, %v2546
      %v2548 = vand.u32 2147483647, %v1922
      %vm2549 = vcmp.le.f32.partialorder %v2548, 0.7853982
      %vm2550 = vcmp.lt.s32.totalorder %v1922, 0
      %v2551 = vand.u32 %v1922, 2139095040
      %v2552 = vshrl.u32 %v2551, 23
      %v2553 = vsub.s32 %v2552, 127
      %v2554 = vand.u32 2147483647, %v1922
      %v2555 = vand.u32 %v2554, 8388607
      %v2556 = vor.u32 %v2555, 8388608
      %v2557 = vsub.s32 0, %v2556
      %v2558 = vadd.s32 %v2553, 1
      %vm2559 = vcmp.gt.s32.totalorder %v2558, 0
      %v2560 = vsel %vm2559, %v2558, 0
      %v2561 = vshrl.u32 %v2560, 5
      %v2562 = vand.u32 %v2560, 31
      %v2563 = vsub.s32 32, %v2562
      %v2564 = vshrl.u32 683565275, %v2563
      %v2565 = vshll.u32 683565275, %v2562
      %v2566 = vshrl.u32 2475754826, %v2563
      %v2567 = vor.u32 %v2565, %v2566
      %v2568 = vshll.u32 2475754826, %v2562
      %v2569 = vshrl.u32 2131351028, %v2563
      %v2570 = vor.u32 %v2568, %v2569
      %v2571 = vshll.u32 2131351028, %v2562
      %v2572 = vshrl.u32 2102212464, %v2563
      %v2573 = vor.u32 %v2571, %v2572
      %v2574 = vshll.u32 2102212464, %v2562
      %v2575 = vshrl.u32 920167782, %v2563
      %v2576 = vor.u32 %v2574, %v2575
      %v2577 = vshll.u32 920167782, %v2562
      %v2578 = vshrl.u32 1326507024, %v2563
      %v2579 = vor.u32 %v2577, %v2578
      %vm2580 = vcmp.lt.s32.totalorder %v2561, 1
      %vm2581 = vcmp.lt.s32.totalorder %v2561, 2
      %vm2582 = vcmp.lt.s32.totalorder %v2561, 3
      %vm2583 = vcmp.lt.s32.totalorder %v2561, 4
      %v2584 = vsel %vm2580, %v2564, %v2567
      %v2585 = vsel %vm2583, %v2573, 2102212464
      %v2586 = vsel %vm2582, %v2570, %v2585
      %v2587 = vsel %vm2581, %v2584, %v2586
      %v2588 = vsel %vm2580, %v2567, %v2570
      %v2589 = vsel %vm2583, %v2576, 920167782
      %v2590 = vsel %vm2582, %v2573, %v2589
      %v2591 = vsel %vm2581, %v2588, %v2590
      %v2592 = vsel %vm2580, %v2570, %v2573
      %v2593 = vsel %vm2583, %v2579, 1326507024
      %v2594 = vsel %vm2582, %v2576, %v2593
      %v2595 = vsel %vm2581, %v2592, %v2594
      %v2596 = vshll.u32 %v2556, 8
      %v2597 = vmul.u32.u64.compose %v2596, %v2595
      %v2598 = vextract.low.u32 %v2597
      %v2599 = vextract.high.u32 %v2597
      %v2600 = vmul.u32.u64.compose %v2596, %v2591
      %v2601 = vextract.low.u32 %v2600
      %v2602 = vextract.high.u32 %v2600
      %v2603 = vmul.u32 %v2596, %v2587
      %v2604 = vadd.s32 %v2599, %v2601
      %vm2605 = vc.u32 %v2599, %v2601
      %v2606 = vadd.s32 %v2602, 1
      %v2607 = vsel %vm2605, %v2606, %v2602
      %v2608 = vadd.s32 %v2603, %v2607
      %v2609 = vadd.s32 %v2608, 536870912
      %v2610 = vshrl.u32 %v2609, 30
      %v2611 = vshll.u32 %v2610, 30
      %v2612 = vsub.s32 %v2608, %v2611
      %vm2613 = vcmp.lt.s32.totalorder %v2612, 0
      %v2614 = vsub.s32 0, %v2612
      %v2615 = vsel %vm2613, %v2614, %v2612
      %v2616 = vclz %v2615
      %v2617 = vsub.s32 %v2616, 2
      %vm2618 = vcmp.gt.s32.totalorder 0, %v2617
      %v2619 = vsel %vm2618, 0, %v2617
      %v2620 = vsub.s32 32, %v2619
      %v2621 = vshll.u32 %v2612, %v2619
      %v2622 = vshrl.u32 %v2604, %v2620
      %v2623 = vor.u32 %v2621, %v2622
      %v2624 = vsub.s32 4294967266, %v2619
      %v2625 = vadd.s32 %v2624, 127
      %v2626 = vshll.u32 %v2625, 23
      %v2627 = vor.u32 4788187, %v2626
      %v2628 = vand.u32 2147483647, %v2627
      %v2630 = vcvt.s32.f32 %v2623
      %v2631 = vmul.f32 %v2630, %v2628
      %v2632 = vxor.u32 %v2631, 2147483648
      %v2633 = vsel %vm2550, %v2632, %v2631
      %v2634 = vsub.s32 4, %v2610
      %v2635 = vsel %vm2550, %v2634, %v2610
      %v2636 = vsel %vm2549, %v1922, %v2633
      %v2637 = vsel %vm2549, 0, %v2635
      %v2638 = vcosq.f32.pop %v2636
      %v2639 = vsinq.f32.pop %v2636
      %vm2640 = vweird.f32 %v1922
      %v2641 = vadd.s32 %v2637, 3
      %v2642 = vand.u32 %v2641, 3
      %vm2643 = vcmp.lt.s32.totalorder %v2642, 2
      %vm2644 = vcmp.eq.s32.totalorder %v2642, 0
      %v2645 = vxor.u32 %v2639, 2147483648
      %v2646 = vsel %vm2644, %v2638, %v2645
      %vm2647 = vcmp.eq.s32.totalorder %v2642, 2
      %v2648 = vxor.u32 %v2638, 2147483648
      %v2649 = vsel %vm2647, %v2648, %v2639
      %v2650 = vsel %vm2643, %v2646, %v2649
      %v2651 = vsel %vm2640, nan, %v2650
      %v2652 = vand.u32 2147483647, %v1923
      %vm2653 = vcmp.le.f32.partialorder %v2652, 0.7853982
      %vm2654 = vcmp.lt.s32.totalorder %v1923, 0
      %v2655 = vand.u32 %v1923, 2139095040
      %v2656 = vshrl.u32 %v2655, 23
      %v2657 = vsub.s32 %v2656, 127
      %v2658 = vand.u32 2147483647, %v1923
      %v2659 = vand.u32 %v2658, 8388607
      %v2660 = vor.u32 %v2659, 8388608
      %v2661 = vsub.s32 0, %v2660
      %v2662 = vadd.s32 %v2657, 1
      %vm2663 = vcmp.gt.s32.totalorder %v2662, 0
      %v2664 = vsel %vm2663, %v2662, 0
      %v2665 = vshrl.u32 %v2664, 5
      %v2666 = vand.u32 %v2664, 31
      %v2667 = vsub.s32 32, %v2666
      %v2668 = vshrl.u32 683565275, %v2667
      %v2669 = vshll.u32 683565275, %v2666
      %v2670 = vshrl.u32 2475754826, %v2667
      %v2671 = vor.u32 %v2669, %v2670
      %v2672 = vshll.u32 2475754826, %v2666
      %v2673 = vshrl.u32 2131351028, %v2667
      %v2674 = vor.u32 %v2672, %v2673
      %v2675 = vshll.u32 2131351028, %v2666
      %v2676 = vshrl.u32 2102212464, %v2667
      %v2677 = vor.u32 %v2675, %v2676
      %v2678 = vshll.u32 2102212464, %v2666
      %v2679 = vshrl.u32 920167782, %v2667
      %v2680 = vor.u32 %v2678, %v2679
      %v2681 = vshll.u32 920167782, %v2666
      %v2682 = vshrl.u32 1326507024, %v2667
      %v2683 = vor.u32 %v2681, %v2682
      %vm2684 = vcmp.lt.s32.totalorder %v2665, 1
      %vm2685 = vcmp.lt.s32.totalorder %v2665, 2
      %vm2686 = vcmp.lt.s32.totalorder %v2665, 3
      %vm2687 = vcmp.lt.s32.totalorder %v2665, 4
      %v2688 = vsel %vm2684, %v2668, %v2671
      %v2689 = vsel %vm2687, %v2677, 2102212464
      %v2690 = vsel %vm2686, %v2674, %v2689
      %v2691 = vsel %vm2685, %v2688, %v2690
      %v2692 = vsel %vm2684, %v2671, %v2674
      %v2693 = vsel %vm2687, %v2680, 920167782
      %v2694 = vsel %vm2686, %v2677, %v2693
      %v2695 = vsel %vm2685, %v2692, %v2694
      %v2696 = vsel %vm2684, %v2674, %v2677
      %v2697 = vsel %vm2687, %v2683, 1326507024
      %v2698 = vsel %vm2686, %v2680, %v2697
      %v2699 = vsel %vm2685, %v2696, %v2698
      %v2700 = vshll.u32 %v2660, 8
      %v2701 = vmul.u32.u64.compose %v2700, %v2699
      %v2702 = vextract.low.u32 %v2701
      %v2703 = vextract.high.u32 %v2701
      %v2704 = vmul.u32.u64.compose %v2700, %v2695
      %v2705 = vextract.low.u32 %v2704
      %v2706 = vextract.high.u32 %v2704
      %v2707 = vmul.u32 %v2700, %v2691
      %v2708 = vadd.s32 %v2703, %v2705
      %vm2709 = vc.u32 %v2703, %v2705
      %v2710 = vadd.s32 %v2706, 1
      %v2711 = vsel %vm2709, %v2710, %v2706
      %v2712 = vadd.s32 %v2707, %v2711
      %v2713 = vadd.s32 %v2712, 536870912
      %v2714 = vshrl.u32 %v2713, 30
      %v2715 = vshll.u32 %v2714, 30
      %v2716 = vsub.s32 %v2712, %v2715
      %vm2717 = vcmp.lt.s32.totalorder %v2716, 0
      %v2718 = vsub.s32 0, %v2716
      %v2719 = vsel %vm2717, %v2718, %v2716
      %v2720 = vclz %v2719
      %v2721 = vsub.s32 %v2720, 2
      %vm2722 = vcmp.gt.s32.totalorder 0, %v2721
      %v2723 = vsel %vm2722, 0, %v2721
      %v2724 = vsub.s32 32, %v2723
      %v2725 = vshll.u32 %v2716, %v2723
      %v2726 = vshrl.u32 %v2708, %v2724
      %v2727 = vor.u32 %v2725, %v2726
      %v2728 = vsub.s32 4294967266, %v2723
      %v2729 = vadd.s32 %v2728, 127
      %v2730 = vshll.u32 %v2729, 23
      %v2731 = vor.u32 4788187, %v2730
      %v2732 = vand.u32 2147483647, %v2731
      %v2734 = vcvt.s32.f32 %v2727
      %v2735 = vmul.f32 %v2734, %v2732
      %v2736 = vxor.u32 %v2735, 2147483648
      %v2737 = vsel %vm2654, %v2736, %v2735
      %v2738 = vsub.s32 4, %v2714
      %v2739 = vsel %vm2654, %v2738, %v2714
      %v2740 = vsel %vm2653, %v1923, %v2737
      %v2741 = vsel %vm2653, 0, %v2739
      %v2742 = vcosq.f32.pop %v2740
      %v2743 = vsinq.f32.pop %v2740
      %vm2744 = vweird.f32 %v1923
      %v2745 = vadd.s32 %v2741, 3
      %v2746 = vand.u32 %v2745, 3
      %vm2747 = vcmp.lt.s32.totalorder %v2746, 2
      %vm2748 = vcmp.eq.s32.totalorder %v2746, 0
      %v2749 = vxor.u32 %v2743, 2147483648
      %v2750 = vsel %vm2748, %v2742, %v2749
      %vm2751 = vcmp.eq.s32.totalorder %v2746, 2
      %v2752 = vxor.u32 %v2742, 2147483648
      %v2753 = vsel %vm2751, %v2752, %v2743
      %v2754 = vsel %vm2747, %v2750, %v2753
      %v2755 = vsel %vm2744, nan, %v2754
      %v2756 = vpack.c.bf16 %v1812, %v1810
      %v2757 = vpack.c.bf16 %v1813, %v1811
      %v2758 = vpack.c.bf16 %v1816, %v1814
      %v2759 = vpack.c.bf16 %v1817, %v1815
      %v2760 = vpack.c.bf16 %v2235, %v2027
      %v2761 = vpack.c.bf16 %v2339, %v2131
      %v2762 = vpack.c.bf16 %v2651, %v2443
      %v2763 = vpack.c.bf16 %v2755, %v2547
      %s2764 = scalar_lea.vmem %s6, 16
      %v2765 = vld [vmem:[%s2764] sm:$0xf]
      %v2766 = vld [vmem:[%s2764 + $0x4] sm:$0xf]
      %v2767 = vld [vmem:[%s2764 + $0x8] sm:$0xf]
      %v2768 = vld [vmem:[%s2764 + $0xc] sm:$0xf]
      %v2769 = vld [vmem:[#allocation2 + $0x80] sm:$0xff]
      %v2770 = vld [vmem:[#allocation2 + $0x88] sm:$0xff]
      %v2771 = vld [vmem:[#allocation2 + $0x90] sm:$0xff]
      %v2772 = vld [vmem:[#allocation2 + $0x98] sm:$0xff]
      %v2773 = vld [vmem:[#allocation2 + $0xa0] sm:$0xff]
      %v2774 = vld [vmem:[#allocation2 + $0xa8] sm:$0xff]
      %v2775 = vld [vmem:[#allocation2 + $0xb0] sm:$0xff]
      %v2776 = vld [vmem:[#allocation2 + $0xb8] sm:$0xff]
      %v2781 = vunpack.c.l.b16 %v2765
      %v2782 = vunpack.c.l.b16 %v2766
      %v2783 = vunpack.c.l.b16 %v2767
      %v2784 = vunpack.c.l.b16 %v2768
      %v2785 = vpack.c.b16 %v2782, %v2781
      %v2786 = vpack.c.b16 %v2784, %v2783
      %v2788 = vsel %vm1718, %v2785, 0
      %v2791 = vsel %vm1718, %v2786, 0
      %2793 = vmatprep.subr.bf16.mxu0 %v2757
      %2794 = vmatpush1.bf16.msra.mxu0 %v2756
      %2795 = vmatprep.subr.bf16.mxu0 %v2759
      %2796 = vmatpush1.bf16.msra.mxu0 %v2758
      %2797 = vmatprep.subr.bf16.mxu0 %v2761
      %2798 = vmatpush1.bf16.msra.mxu0 %v2760
      %2799 = vmatprep.subr.bf16.mxu0 %v2763
      %2800 = vmatpush1.bf16.msra.mxu0 %v2762
      %2801 = vmatprep.subr.bf16.mxu0 0
      %2802 = vmatpush1.bf16.msra.mxu0 0
      %2803 = vmatprep.subr.bf16.mxu0 0
      %2804 = vmatpush1.bf16.msra.mxu0 0
      %2805 = vmatprep.subr.bf16.mxu0 0
      %2806 = vmatpush1.bf16.msra.mxu0 0
      %2807 = vmatprep.subr.bf16.mxu0 0
      %2808 = vmatpush1.bf16.msra.mxu0 0
      %2809 = vmatprep.subr.bf16.mxu0 0
      %2810 = vmatpush1.bf16.msra.mxu0 0
      %2811 = vmatprep.subr.bf16.mxu0 0
      %2812 = vmatpush1.bf16.msra.mxu0 0
      %2813 = vmatprep.subr.bf16.mxu0 0
      %2814 = vmatpush1.bf16.msra.mxu0 0
      %2815 = vmatprep.subr.bf16.mxu0 0
      %2816 = vmatpush1.bf16.msra.mxu0 0
      %2817 = vmatprep.subr.bf16.mxu0 0
      %2818 = vmatpush1.bf16.msra.mxu0 0
      %2819 = vmatprep.subr.bf16.mxu0 0
      %2820 = vmatpush1.bf16.msra.mxu0 0
      %2821 = vmatprep.subr.bf16.mxu0 0
      %2822 = vmatpush1.bf16.msra.mxu0 0
      %2823 = vmatprep.subr.bf16.mxu0 0
      %2824 = vmatpush1.bf16.msra.mxu0 0
      %2825 = vmatprep.mubr.bf16.mxu0 0
      %2826 = vmatmul.mubr.bf16.gmra.mrb[0].mxu0 %v2788
      %v2827 = vpop.f32.mrb[0].mxu0
      %v2828 = vadd.f32 %v2769, %v2827
      %v2829 = vpop.f32.mrb[0].mxu0
      %v2830 = vadd.f32 %v2770, %v2829
      %v2831 = vpop.f32.mrb[0].mxu0
      %v2832 = vadd.f32 %v2771, %v2831
      %v2833 = vpop.f32.mrb[0].mxu0
      %v2834 = vadd.f32 %v2772, %v2833
      %2835 = vmatprep.mubr.bf16.mxu0 0
      %2836 = vmatmul.mubr.bf16.gmra.mrb[0].mxu0 %v2791
      %v2837 = vpop.f32.mrb[0].mxu0
      %v2838 = vadd.f32 %v2773, %v2837
      %v2839 = vpop.f32.mrb[0].mxu0
      %v2840 = vadd.f32 %v2774, %v2839
      %v2841 = vpop.f32.mrb[0].mxu0
      %v2842 = vadd.f32 %v2775, %v2841
      %v2843 = vpop.f32.mrb[0].mxu0
      %v2844 = vadd.f32 %v2776, %v2843
      %2845 = vdwg.mxu0
      %s2846 = scalar_lea.vmem %s7, 32
      %v2847 = vld [vmem:[%s2846] sm:$0xff]
      %v2848 = vld [vmem:[%s2846 + $0x8] sm:$0xff]
      %v2849 = vld [vmem:[%s2846 + $0x10] sm:$0xff]
      %v2850 = vld [vmem:[%s2846 + $0x18] sm:$0xff]
      %2852 = vset.pattern.permute.xlu0 0
      %2853 = vperm.xlu0 %2852, %v2847
      %v2854 = vpop.permute.xlu0 %2853
      %2857 = vset.pattern.permute.xlu0 0
      %2858 = vperm.xlu0 %2857, %v2848
      %v2859 = vpop.permute.xlu0 %2858
      %2862 = vset.pattern.permute.xlu0 0
      %2863 = vperm.xlu0 %2862, %v2849
      %v2864 = vpop.permute.xlu0 %2863
      %2867 = vset.pattern.permute.xlu0 0
      %2868 = vperm.xlu0 %2867, %v2850
      %v2869 = vpop.permute.xlu0 %2868
      %v2871 = vadd.f32 %v2828, %v2854
      %v2872 = vadd.f32 %v2830, %v2854
      %v2873 = vadd.f32 %v2832, %v2859
      %v2874 = vadd.f32 %v2834, %v2859
      %v2875 = vadd.f32 %v2838, %v2864
      %v2876 = vadd.f32 %v2840, %v2864
      %v2877 = vadd.f32 %v2842, %v2869
      %v2878 = vadd.f32 %v2844, %v2869
      %v2879 = vmax.f32 %v2871, 0.0
      %v2880 = vmax.f32 %v2872, 0.0
      %v2881 = vmax.f32 %v2873, 0.0
      %v2882 = vmax.f32 %v2874, 0.0
      %v2883 = vmax.f32 %v2875, 0.0
      %v2884 = vmax.f32 %v2876, 0.0
      %v2885 = vmax.f32 %v2877, 0.0
      %v2886 = vmax.f32 %v2878, 0.0
      %s2887 = scalar_lea.vmem %s8, 16
      %v2888 = vld [vmem:[%s2887] sm:$0xf]
      %v2889 = vld [vmem:[%s2887 + $0x4] sm:$0xf]
      %v2890 = vld [vmem:[%s2887 + $0x8] sm:$0xf]
      %v2891 = vld [vmem:[%s2887 + $0xc] sm:$0xf]
      %s2892 = scalar_lea.vmem %s9, 32
      %v2893 = vld [vmem:[%s2892] sm:$0xff]
      %v2894 = vld [vmem:[%s2892 + $0x8] sm:$0xff]
      %v2895 = vld [vmem:[%s2892 + $0x10] sm:$0xff]
      %v2896 = vld [vmem:[%s2892 + $0x18] sm:$0xff]
      %2898 = vset.pattern.permute.xlu0 0
      %2899 = vperm.xlu0 %2898, %v2893
      %v2900 = vpop.permute.xlu0 %2899
      %2903 = vset.pattern.permute.xlu0 0
      %2904 = vperm.xlu0 %2903, %v2894
      %v2905 = vpop.permute.xlu0 %2904
      %2908 = vset.pattern.permute.xlu0 0
      %2909 = vperm.xlu0 %2908, %v2895
      %v2910 = vpop.permute.xlu0 %2909
      %2913 = vset.pattern.permute.xlu0 0
      %2914 = vperm.xlu0 %2913, %v2896
      %v2915 = vpop.permute.xlu0 %2914
      %v2921 = vunpack.c.l.b16 %v2888
      %v2922 = vunpack.c.l.b16 %v2889
      %v2923 = vunpack.c.l.b16 %v2890
      %v2924 = vunpack.c.l.b16 %v2891
      %v2925 = vpack.c.b16 %v2922, %v2921
      %v2926 = vpack.c.b16 %v2924, %v2923
      %v2928 = vsel %vm1856, %v2925, 0
      %v2931 = vsel %vm1856, %v2926, 0
      %2933 = vmatprep.subr.bf16.mxu0 %v2761
      %2934 = vmatpush1.bf16.msra.mxu0 %v2760
      %2935 = vmatprep.subr.bf16.mxu0 %v2763
      %2936 = vmatpush1.bf16.msra.mxu0 %v2762
      %2937 = vmatprep.subr.bf16.mxu0 0
      %2938 = vmatpush1.bf16.msra.mxu0 0
      %2939 = vmatprep.subr.bf16.mxu0 0
      %2940 = vmatpush1.bf16.msra.mxu0 0
      %2941 = vmatprep.subr.bf16.mxu0 0
      %2942 = vmatpush1.bf16.msra.mxu0 0
      %2943 = vmatprep.subr.bf16.mxu0 0
      %2944 = vmatpush1.bf16.msra.mxu0 0
      %2945 = vmatprep.subr.bf16.mxu0 0
      %2946 = vmatpush1.bf16.msra.mxu0 0
      %2947 = vmatprep.subr.bf16.mxu0 0
      %2948 = vmatpush1.bf16.msra.mxu0 0
      %2949 = vmatprep.subr.bf16.mxu0 0
      %2950 = vmatpush1.bf16.msra.mxu0 0
      %2951 = vmatprep.subr.bf16.mxu0 0
      %2952 = vmatpush1.bf16.msra.mxu0 0
      %2953 = vmatprep.subr.bf16.mxu0 0
      %2954 = vmatpush1.bf16.msra.mxu0 0
      %2955 = vmatprep.subr.bf16.mxu0 0
      %2956 = vmatpush1.bf16.msra.mxu0 0
      %2957 = vmatprep.subr.bf16.mxu0 0
      %2958 = vmatpush1.bf16.msra.mxu0 0
      %2959 = vmatprep.subr.bf16.mxu0 0
      %2960 = vmatpush1.bf16.msra.mxu0 0
      %2961 = vmatprep.subr.bf16.mxu0 0
      %2962 = vmatpush1.bf16.msra.mxu0 0
      %2963 = vmatprep.subr.bf16.mxu0 0
      %2964 = vmatpush1.bf16.msra.mxu0 0
      %2965 = vmatprep.mubr.bf16.mxu0 0
      %2966 = vmatmul.mubr.bf16.gmra.mrb[0].mxu0 %v2928
      %v2967 = vpop.f32.mrb[0].mxu0
      %v2968 = vadd.f32 %v2900, %v2967
      %v2969 = vpop.f32.mrb[0].mxu0
      %v2970 = vadd.f32 %v2900, %v2969
      %v2971 = vpop.f32.mrb[0].mxu0
      %v2972 = vadd.f32 %v2905, %v2971
      %v2973 = vpop.f32.mrb[0].mxu0
      %v2974 = vadd.f32 %v2905, %v2973
      %2975 = vmatprep.mubr.bf16.mxu0 0
      %2976 = vmatmul.mubr.bf16.gmra.mrb[0].mxu0 %v2931
      %v2977 = vpop.f32.mrb[0].mxu0
      %v2978 = vadd.f32 %v2910, %v2977
      %v2979 = vpop.f32.mrb[0].mxu0
      %v2980 = vadd.f32 %v2910, %v2979
      %v2981 = vpop.f32.mrb[0].mxu0
      %v2982 = vadd.f32 %v2915, %v2981
      %v2983 = vpop.f32.mrb[0].mxu0
      %v2984 = vadd.f32 %v2915, %v2983
      %2985 = vdwg.mxu0
      %v2986 = vadd.f32 %v2968, %v2879
      %v2987 = vadd.f32 %v2970, %v2880
      %v2988 = vadd.f32 %v2972, %v2881
      %v2989 = vadd.f32 %v2974, %v2882
      %v2990 = vadd.f32 %v2978, %v2883
      %v2991 = vadd.f32 %v2980, %v2884
      %v2992 = vadd.f32 %v2982, %v2885
      %v2993 = vadd.f32 %v2984, %v2886
      %v2994 = vand.u32 2147483647, %v2986
      %vm2995 = vcmp.le.f32.partialorder %v2994, 0.7853982
      %vm2996 = vcmp.lt.s32.totalorder %v2986, 0
      %v2997 = vand.u32 %v2986, 2139095040
      %v2998 = vshrl.u32 %v2997, 23
      %v2999 = vsub.s32 %v2998, 127
      %v3000 = vand.u32 2147483647, %v2986
      %v3001 = vand.u32 %v3000, 8388607
      %v3002 = vor.u32 %v3001, 8388608
      %v3003 = vsub.s32 0, %v3002
      %v3004 = vadd.s32 %v2999, 1
      %vm3005 = vcmp.gt.s32.totalorder %v3004, 0
      %v3006 = vsel %vm3005, %v3004, 0
      %v3007 = vshrl.u32 %v3006, 5
      %v3008 = vand.u32 %v3006, 31
      %v3009 = vsub.s32 32, %v3008
      %v3010 = vshrl.u32 683565275, %v3009
      %v3011 = vshll.u32 683565275, %v3008
      %v3012 = vshrl.u32 2475754826, %v3009
      %v3013 = vor.u32 %v3011, %v3012
      %v3014 = vshll.u32 2475754826, %v3008
      %v3015 = vshrl.u32 2131351028, %v3009
      %v3016 = vor.u32 %v3014, %v3015
      %v3017 = vshll.u32 2131351028, %v3008
      %v3018 = vshrl.u32 2102212464, %v3009
      %v3019 = vor.u32 %v3017, %v3018
      %v3020 = vshll.u32 2102212464, %v3008
      %v3021 = vshrl.u32 920167782, %v3009
      %v3022 = vor.u32 %v3020, %v3021
      %v3023 = vshll.u32 920167782, %v3008
      %v3024 = vshrl.u32 1326507024, %v3009
      %v3025 = vor.u32 %v3023, %v3024
      %vm3026 = vcmp.lt.s32.totalorder %v3007, 1
      %vm3027 = vcmp.lt.s32.totalorder %v3007, 2
      %vm3028 = vcmp.lt.s32.totalorder %v3007, 3
      %vm3029 = vcmp.lt.s32.totalorder %v3007, 4
      %v3030 = vsel %vm3026, %v3010, %v3013
      %v3031 = vsel %vm3029, %v3019, 2102212464
      %v3032 = vsel %vm3028, %v3016, %v3031
      %v3033 = vsel %vm3027, %v3030, %v3032
      %v3034 = vsel %vm3026, %v3013, %v3016
      %v3035 = vsel %vm3029, %v3022, 920167782
      %v3036 = vsel %vm3028, %v3019, %v3035
      %v3037 = vsel %vm3027, %v3034, %v3036
      %v3038 = vsel %vm3026, %v3016, %v3019
      %v3039 = vsel %vm3029, %v3025, 1326507024
      %v3040 = vsel %vm3028, %v3022, %v3039
      %v3041 = vsel %vm3027, %v3038, %v3040
      %v3042 = vshll.u32 %v3002, 8
      %v3043 = vmul.u32.u64.compose %v3042, %v3041
      %v3044 = vextract.low.u32 %v3043
      %v3045 = vextract.high.u32 %v3043
      %v3046 = vmul.u32.u64.compose %v3042, %v3037
      %v3047 = vextract.low.u32 %v3046
      %v3048 = vextract.high.u32 %v3046
      %v3049 = vmul.u32 %v3042, %v3033
      %v3050 = vadd.s32 %v3045, %v3047
      %vm3051 = vc.u32 %v3045, %v3047
      %v3052 = vadd.s32 %v3048, 1
      %v3053 = vsel %vm3051, %v3052, %v3048
      %v3054 = vadd.s32 %v3049, %v3053
      %v3055 = vadd.s32 %v3054, 536870912
      %v3056 = vshrl.u32 %v3055, 30
      %v3057 = vshll.u32 %v3056, 30
      %v3058 = vsub.s32 %v3054, %v3057
      %vm3059 = vcmp.lt.s32.totalorder %v3058, 0
      %v3060 = vsub.s32 0, %v3058
      %v3061 = vsel %vm3059, %v3060, %v3058
      %v3062 = vclz %v3061
      %v3063 = vsub.s32 %v3062, 2
      %vm3064 = vcmp.gt.s32.totalorder 0, %v3063
      %v3065 = vsel %vm3064, 0, %v3063
      %v3066 = vsub.s32 32, %v3065
      %v3067 = vshll.u32 %v3058, %v3065
      %v3068 = vshrl.u32 %v3050, %v3066
      %v3069 = vor.u32 %v3067, %v3068
      %v3070 = vsub.s32 4294967266, %v3065
      %v3071 = vadd.s32 %v3070, 127
      %v3072 = vshll.u32 %v3071, 23
      %v3073 = vor.u32 4788187, %v3072
      %v3074 = vand.u32 2147483647, %v3073
      %v3076 = vcvt.s32.f32 %v3069
      %v3077 = vmul.f32 %v3076, %v3074
      %v3078 = vxor.u32 %v3077, 2147483648
      %v3079 = vsel %vm2996, %v3078, %v3077
      %v3080 = vsub.s32 4, %v3056
      %v3081 = vsel %vm2996, %v3080, %v3056
      %v3082 = vsel %vm2995, %v2986, %v3079
      %v3083 = vsel %vm2995, 0, %v3081
      %v3084 = vcosq.f32.pop %v3082
      %v3085 = vsinq.f32.pop %v3082
      %vm3086 = vweird.f32 %v2986
      %v3087 = vadd.s32 %v3083, 3
      %v3088 = vand.u32 %v3087, 3
      %vm3089 = vcmp.lt.s32.totalorder %v3088, 2
      %vm3090 = vcmp.eq.s32.totalorder %v3088, 0
      %v3091 = vxor.u32 %v3085, 2147483648
      %v3092 = vsel %vm3090, %v3084, %v3091
      %vm3093 = vcmp.eq.s32.totalorder %v3088, 2
      %v3094 = vxor.u32 %v3084, 2147483648
      %v3095 = vsel %vm3093, %v3094, %v3085
      %v3096 = vsel %vm3089, %v3092, %v3095
      %v3097 = vsel %vm3086, nan, %v3096
      %v3098 = vand.u32 2147483647, %v2987
      %vm3099 = vcmp.le.f32.partialorder %v3098, 0.7853982
      %vm3100 = vcmp.lt.s32.totalorder %v2987, 0
      %v3101 = vand.u32 %v2987, 2139095040
      %v3102 = vshrl.u32 %v3101, 23
      %v3103 = vsub.s32 %v3102, 127
      %v3104 = vand.u32 2147483647, %v2987
      %v3105 = vand.u32 %v3104, 8388607
      %v3106 = vor.u32 %v3105, 8388608
      %v3107 = vsub.s32 0, %v3106
      %v3108 = vadd.s32 %v3103, 1
      %vm3109 = vcmp.gt.s32.totalorder %v3108, 0
      %v3110 = vsel %vm3109, %v3108, 0
      %v3111 = vshrl.u32 %v3110, 5
      %v3112 = vand.u32 %v3110, 31
      %v3113 = vsub.s32 32, %v3112
      %v3114 = vshrl.u32 683565275, %v3113
      %v3115 = vshll.u32 683565275, %v3112
      %v3116 = vshrl.u32 2475754826, %v3113
      %v3117 = vor.u32 %v3115, %v3116
      %v3118 = vshll.u32 2475754826, %v3112
      %v3119 = vshrl.u32 2131351028, %v3113
      %v3120 = vor.u32 %v3118, %v3119
      %v3121 = vshll.u32 2131351028, %v3112
      %v3122 = vshrl.u32 2102212464, %v3113
      %v3123 = vor.u32 %v3121, %v3122
      %v3124 = vshll.u32 2102212464, %v3112
      %v3125 = vshrl.u32 920167782, %v3113
      %v3126 = vor.u32 %v3124, %v3125
      %v3127 = vshll.u32 920167782, %v3112
      %v3128 = vshrl.u32 1326507024, %v3113
      %v3129 = vor.u32 %v3127, %v3128
      %vm3130 = vcmp.lt.s32.totalorder %v3111, 1
      %vm3131 = vcmp.lt.s32.totalorder %v3111, 2
      %vm3132 = vcmp.lt.s32.totalorder %v3111, 3
      %vm3133 = vcmp.lt.s32.totalorder %v3111, 4
      %v3134 = vsel %vm3130, %v3114, %v3117
      %v3135 = vsel %vm3133, %v3123, 2102212464
      %v3136 = vsel %vm3132, %v3120, %v3135
      %v3137 = vsel %vm3131, %v3134, %v3136
      %v3138 = vsel %vm3130, %v3117, %v3120
      %v3139 = vsel %vm3133, %v3126, 920167782
      %v3140 = vsel %vm3132, %v3123, %v3139
      %v3141 = vsel %vm3131, %v3138, %v3140
      %v3142 = vsel %vm3130, %v3120, %v3123
      %v3143 = vsel %vm3133, %v3129, 1326507024
      %v3144 = vsel %vm3132, %v3126, %v3143
      %v3145 = vsel %vm3131, %v3142, %v3144
      %v3146 = vshll.u32 %v3106, 8
      %v3147 = vmul.u32.u64.compose %v3146, %v3145
      %v3148 = vextract.low.u32 %v3147
      %v3149 = vextract.high.u32 %v3147
      %v3150 = vmul.u32.u64.compose %v3146, %v3141
      %v3151 = vextract.low.u32 %v3150
      %v3152 = vextract.high.u32 %v3150
      %v3153 = vmul.u32 %v3146, %v3137
      %v3154 = vadd.s32 %v3149, %v3151
      %vm3155 = vc.u32 %v3149, %v3151
      %v3156 = vadd.s32 %v3152, 1
      %v3157 = vsel %vm3155, %v3156, %v3152
      %v3158 = vadd.s32 %v3153, %v3157
      %v3159 = vadd.s32 %v3158, 536870912
      %v3160 = vshrl.u32 %v3159, 30
      %v3161 = vshll.u32 %v3160, 30
      %v3162 = vsub.s32 %v3158, %v3161
      %vm3163 = vcmp.lt.s32.totalorder %v3162, 0
      %v3164 = vsub.s32 0, %v3162
      %v3165 = vsel %vm3163, %v3164, %v3162
      %v3166 = vclz %v3165
      %v3167 = vsub.s32 %v3166, 2
      %vm3168 = vcmp.gt.s32.totalorder 0, %v3167
      %v3169 = vsel %vm3168, 0, %v3167
      %v3170 = vsub.s32 32, %v3169
      %v3171 = vshll.u32 %v3162, %v3169
      %v3172 = vshrl.u32 %v3154, %v3170
      %v3173 = vor.u32 %v3171, %v3172
      %v3174 = vsub.s32 4294967266, %v3169
      %v3175 = vadd.s32 %v3174, 127
      %v3176 = vshll.u32 %v3175, 23
      %v3177 = vor.u32 4788187, %v3176
      %v3178 = vand.u32 2147483647, %v3177
      %v3180 = vcvt.s32.f32 %v3173
      %v3181 = vmul.f32 %v3180, %v3178
      %v3182 = vxor.u32 %v3181, 2147483648
      %v3183 = vsel %vm3100, %v3182, %v3181
      %v3184 = vsub.s32 4, %v3160
      %v3185 = vsel %vm3100, %v3184, %v3160
      %v3186 = vsel %vm3099, %v2987, %v3183
      %v3187 = vsel %vm3099, 0, %v3185
      %v3188 = vcosq.f32.pop %v3186
      %v3189 = vsinq.f32.pop %v3186
      %vm3190 = vweird.f32 %v2987
      %v3191 = vadd.s32 %v3187, 3
      %v3192 = vand.u32 %v3191, 3
      %vm3193 = vcmp.lt.s32.totalorder %v3192, 2
      %vm3194 = vcmp.eq.s32.totalorder %v3192, 0
      %v3195 = vxor.u32 %v3189, 2147483648
      %v3196 = vsel %vm3194, %v3188, %v3195
      %vm3197 = vcmp.eq.s32.totalorder %v3192, 2
      %v3198 = vxor.u32 %v3188, 2147483648
      %v3199 = vsel %vm3197, %v3198, %v3189
      %v3200 = vsel %vm3193, %v3196, %v3199
      %v3201 = vsel %vm3190, nan, %v3200
      %v3202 = vand.u32 2147483647, %v2988
      %vm3203 = vcmp.le.f32.partialorder %v3202, 0.7853982
      %vm3204 = vcmp.lt.s32.totalorder %v2988, 0
      %v3205 = vand.u32 %v2988, 2139095040
      %v3206 = vshrl.u32 %v3205, 23
      %v3207 = vsub.s32 %v3206, 127
      %v3208 = vand.u32 2147483647, %v2988
      %v3209 = vand.u32 %v3208, 8388607
      %v3210 = vor.u32 %v3209, 8388608
      %v3211 = vsub.s32 0, %v3210
      %v3212 = vadd.s32 %v3207, 1
      %vm3213 = vcmp.gt.s32.totalorder %v3212, 0
      %v3214 = vsel %vm3213, %v3212, 0
      %v3215 = vshrl.u32 %v3214, 5
      %v3216 = vand.u32 %v3214, 31
      %v3217 = vsub.s32 32, %v3216
      %v3218 = vshrl.u32 683565275, %v3217
      %v3219 = vshll.u32 683565275, %v3216
      %v3220 = vshrl.u32 2475754826, %v3217
      %v3221 = vor.u32 %v3219, %v3220
      %v3222 = vshll.u32 2475754826, %v3216
      %v3223 = vshrl.u32 2131351028, %v3217
      %v3224 = vor.u32 %v3222, %v3223
      %v3225 = vshll.u32 2131351028, %v3216
      %v3226 = vshrl.u32 2102212464, %v3217
      %v3227 = vor.u32 %v3225, %v3226
      %v3228 = vshll.u32 2102212464, %v3216
      %v3229 = vshrl.u32 920167782, %v3217
      %v3230 = vor.u32 %v3228, %v3229
      %v3231 = vshll.u32 920167782, %v3216
      %v3232 = vshrl.u32 1326507024, %v3217
      %v3233 = vor.u32 %v3231, %v3232
      %vm3234 = vcmp.lt.s32.totalorder %v3215, 1
      %vm3235 = vcmp.lt.s32.totalorder %v3215, 2
      %vm3236 = vcmp.lt.s32.totalorder %v3215, 3
      %vm3237 = vcmp.lt.s32.totalorder %v3215, 4
      %v3238 = vsel %vm3234, %v3218, %v3221
      %v3239 = vsel %vm3237, %v3227, 2102212464
      %v3240 = vsel %vm3236, %v3224, %v3239
      %v3241 = vsel %vm3235, %v3238, %v3240
      %v3242 = vsel %vm3234, %v3221, %v3224
      %v3243 = vsel %vm3237, %v3230, 920167782
      %v3244 = vsel %vm3236, %v3227, %v3243
      %v3245 = vsel %vm3235, %v3242, %v3244
      %v3246 = vsel %vm3234, %v3224, %v3227
      %v3247 = vsel %vm3237, %v3233, 1326507024
      %v3248 = vsel %vm3236, %v3230, %v3247
      %v3249 = vsel %vm3235, %v3246, %v3248
      %v3250 = vshll.u32 %v3210, 8
      %v3251 = vmul.u32.u64.compose %v3250, %v3249
      %v3252 = vextract.low.u32 %v3251
      %v3253 = vextract.high.u32 %v3251
      %v3254 = vmul.u32.u64.compose %v3250, %v3245
      %v3255 = vextract.low.u32 %v3254
      %v3256 = vextract.high.u32 %v3254
      %v3257 = vmul.u32 %v3250, %v3241
      %v3258 = vadd.s32 %v3253, %v3255
      %vm3259 = vc.u32 %v3253, %v3255
      %v3260 = vadd.s32 %v3256, 1
      %v3261 = vsel %vm3259, %v3260, %v3256
      %v3262 = vadd.s32 %v3257, %v3261
      %v3263 = vadd.s32 %v3262, 536870912
      %v3264 = vshrl.u32 %v3263, 30
      %v3265 = vshll.u32 %v3264, 30
      %v3266 = vsub.s32 %v3262, %v3265
      %vm3267 = vcmp.lt.s32.totalorder %v3266, 0
      %v3268 = vsub.s32 0, %v3266
      %v3269 = vsel %vm3267, %v3268, %v3266
      %v3270 = vclz %v3269
      %v3271 = vsub.s32 %v3270, 2
      %vm3272 = vcmp.gt.s32.totalorder 0, %v3271
      %v3273 = vsel %vm3272, 0, %v3271
      %v3274 = vsub.s32 32, %v3273
      %v3275 = vshll.u32 %v3266, %v3273
      %v3276 = vshrl.u32 %v3258, %v3274
      %v3277 = vor.u32 %v3275, %v3276
      %v3278 = vsub.s32 4294967266, %v3273
      %v3279 = vadd.s32 %v3278, 127
      %v3280 = vshll.u32 %v3279, 23
      %v3281 = vor.u32 4788187, %v3280
      %v3282 = vand.u32 2147483647, %v3281
      %v3284 = vcvt.s32.f32 %v3277
      %v3285 = vmul.f32 %v3284, %v3282
      %v3286 = vxor.u32 %v3285, 2147483648
      %v3287 = vsel %vm3204, %v3286, %v3285
      %v3288 = vsub.s32 4, %v3264
      %v3289 = vsel %vm3204, %v3288, %v3264
      %v3290 = vsel %vm3203, %v2988, %v3287
      %v3291 = vsel %vm3203, 0, %v3289
      %v3292 = vcosq.f32.pop %v3290
      %v3293 = vsinq.f32.pop %v3290
      %vm3294 = vweird.f32 %v2988
      %v3295 = vadd.s32 %v3291, 3
      %v3296 = vand.u32 %v3295, 3
      %vm3297 = vcmp.lt.s32.totalorder %v3296, 2
      %vm3298 = vcmp.eq.s32.totalorder %v3296, 0
      %v3299 = vxor.u32 %v3293, 2147483648
      %v3300 = vsel %vm3298, %v3292, %v3299
      %vm3301 = vcmp.eq.s32.totalorder %v3296, 2
      %v3302 = vxor.u32 %v3292, 2147483648
      %v3303 = vsel %vm3301, %v3302, %v3293
      %v3304 = vsel %vm3297, %v3300, %v3303
      %v3305 = vsel %vm3294, nan, %v3304
      %v3306 = vand.u32 2147483647, %v2989
      %vm3307 = vcmp.le.f32.partialorder %v3306, 0.7853982
      %vm3308 = vcmp.lt.s32.totalorder %v2989, 0
      %v3309 = vand.u32 %v2989, 2139095040
      %v3310 = vshrl.u32 %v3309, 23
      %v3311 = vsub.s32 %v3310, 127
      %v3312 = vand.u32 2147483647, %v2989
      %v3313 = vand.u32 %v3312, 8388607
      %v3314 = vor.u32 %v3313, 8388608
      %v3315 = vsub.s32 0, %v3314
      %v3316 = vadd.s32 %v3311, 1
      %vm3317 = vcmp.gt.s32.totalorder %v3316, 0
      %v3318 = vsel %vm3317, %v3316, 0
      %v3319 = vshrl.u32 %v3318, 5
      %v3320 = vand.u32 %v3318, 31
      %v3321 = vsub.s32 32, %v3320
      %v3322 = vshrl.u32 683565275, %v3321
      %v3323 = vshll.u32 683565275, %v3320
      %v3324 = vshrl.u32 2475754826, %v3321
      %v3325 = vor.u32 %v3323, %v3324
      %v3326 = vshll.u32 2475754826, %v3320
      %v3327 = vshrl.u32 2131351028, %v3321
      %v3328 = vor.u32 %v3326, %v3327
      %v3329 = vshll.u32 2131351028, %v3320
      %v3330 = vshrl.u32 2102212464, %v3321
      %v3331 = vor.u32 %v3329, %v3330
      %v3332 = vshll.u32 2102212464, %v3320
      %v3333 = vshrl.u32 920167782, %v3321
      %v3334 = vor.u32 %v3332, %v3333
      %v3335 = vshll.u32 920167782, %v3320
      %v3336 = vshrl.u32 1326507024, %v3321
      %v3337 = vor.u32 %v3335, %v3336
      %vm3338 = vcmp.lt.s32.totalorder %v3319, 1
      %vm3339 = vcmp.lt.s32.totalorder %v3319, 2
      %vm3340 = vcmp.lt.s32.totalorder %v3319, 3
      %vm3341 = vcmp.lt.s32.totalorder %v3319, 4
      %v3342 = vsel %vm3338, %v3322, %v3325
      %v3343 = vsel %vm3341, %v3331, 2102212464
      %v3344 = vsel %vm3340, %v3328, %v3343
      %v3345 = vsel %vm3339, %v3342, %v3344
      %v3346 = vsel %vm3338, %v3325, %v3328
      %v3347 = vsel %vm3341, %v3334, 920167782
      %v3348 = vsel %vm3340, %v3331, %v3347
      %v3349 = vsel %vm3339, %v3346, %v3348
      %v3350 = vsel %vm3338, %v3328, %v3331
      %v3351 = vsel %vm3341, %v3337, 1326507024
      %v3352 = vsel %vm3340, %v3334, %v3351
      %v3353 = vsel %vm3339, %v3350, %v3352
      %v3354 = vshll.u32 %v3314, 8
      %v3355 = vmul.u32.u64.compose %v3354, %v3353
      %v3356 = vextract.low.u32 %v3355
      %v3357 = vextract.high.u32 %v3355
      %v3358 = vmul.u32.u64.compose %v3354, %v3349
      %v3359 = vextract.low.u32 %v3358
      %v3360 = vextract.high.u32 %v3358
      %v3361 = vmul.u32 %v3354, %v3345
      %v3362 = vadd.s32 %v3357, %v3359
      %vm3363 = vc.u32 %v3357, %v3359
      %v3364 = vadd.s32 %v3360, 1
      %v3365 = vsel %vm3363, %v3364, %v3360
      %v3366 = vadd.s32 %v3361, %v3365
      %v3367 = vadd.s32 %v3366, 536870912
      %v3368 = vshrl.u32 %v3367, 30
      %v3369 = vshll.u32 %v3368, 30
      %v3370 = vsub.s32 %v3366, %v3369
      %vm3371 = vcmp.lt.s32.totalorder %v3370, 0
      %v3372 = vsub.s32 0, %v3370
      %v3373 = vsel %vm3371, %v3372, %v3370
      %v3374 = vclz %v3373
      %v3375 = vsub.s32 %v3374, 2
      %vm3376 = vcmp.gt.s32.totalorder 0, %v3375
      %v3377 = vsel %vm3376, 0, %v3375
      %v3378 = vsub.s32 32, %v3377
      %v3379 = vshll.u32 %v3370, %v3377
      %v3380 = vshrl.u32 %v3362, %v3378
      %v3381 = vor.u32 %v3379, %v3380
      %v3382 = vsub.s32 4294967266, %v3377
      %v3383 = vadd.s32 %v3382, 127
      %v3384 = vshll.u32 %v3383, 23
      %v3385 = vor.u32 4788187, %v3384
      %v3386 = vand.u32 2147483647, %v3385
      %v3388 = vcvt.s32.f32 %v3381
      %v3389 = vmul.f32 %v3388, %v3386
      %v3390 = vxor.u32 %v3389, 2147483648
      %v3391 = vsel %vm3308, %v3390, %v3389
      %v3392 = vsub.s32 4, %v3368
      %v3393 = vsel %vm3308, %v3392, %v3368
      %v3394 = vsel %vm3307, %v2989, %v3391
      %v3395 = vsel %vm3307, 0, %v3393
      %v3396 = vcosq.f32.pop %v3394
      %v3397 = vsinq.f32.pop %v3394
      %vm3398 = vweird.f32 %v2989
      %v3399 = vadd.s32 %v3395, 3
      %v3400 = vand.u32 %v3399, 3
      %vm3401 = vcmp.lt.s32.totalorder %v3400, 2
      %vm3402 = vcmp.eq.s32.totalorder %v3400, 0
      %v3403 = vxor.u32 %v3397, 2147483648
      %v3404 = vsel %vm3402, %v3396, %v3403
      %vm3405 = vcmp.eq.s32.totalorder %v3400, 2
      %v3406 = vxor.u32 %v3396, 2147483648
      %v3407 = vsel %vm3405, %v3406, %v3397
      %v3408 = vsel %vm3401, %v3404, %v3407
      %v3409 = vsel %vm3398, nan, %v3408
      %v3410 = vand.u32 2147483647, %v2990
      %vm3411 = vcmp.le.f32.partialorder %v3410, 0.7853982
      %vm3412 = vcmp.lt.s32.totalorder %v2990, 0
      %v3413 = vand.u32 %v2990, 2139095040
      %v3414 = vshrl.u32 %v3413, 23
      %v3415 = vsub.s32 %v3414, 127
      %v3416 = vand.u32 2147483647, %v2990
      %v3417 = vand.u32 %v3416, 8388607
      %v3418 = vor.u32 %v3417, 8388608
      %v3419 = vsub.s32 0, %v3418
      %v3420 = vadd.s32 %v3415, 1
      %vm3421 = vcmp.gt.s32.totalorder %v3420, 0
      %v3422 = vsel %vm3421, %v3420, 0
      %v3423 = vshrl.u32 %v3422, 5
      %v3424 = vand.u32 %v3422, 31
      %v3425 = vsub.s32 32, %v3424
      %v3426 = vshrl.u32 683565275, %v3425
      %v3427 = vshll.u32 683565275, %v3424
      %v3428 = vshrl.u32 2475754826, %v3425
      %v3429 = vor.u32 %v3427, %v3428
      %v3430 = vshll.u32 2475754826, %v3424
      %v3431 = vshrl.u32 2131351028, %v3425
      %v3432 = vor.u32 %v3430, %v3431
      %v3433 = vshll.u32 2131351028, %v3424
      %v3434 = vshrl.u32 2102212464, %v3425
      %v3435 = vor.u32 %v3433, %v3434
      %v3436 = vshll.u32 2102212464, %v3424
      %v3437 = vshrl.u32 920167782, %v3425
      %v3438 = vor.u32 %v3436, %v3437
      %v3439 = vshll.u32 920167782, %v3424
      %v3440 = vshrl.u32 1326507024, %v3425
      %v3441 = vor.u32 %v3439, %v3440
      %vm3442 = vcmp.lt.s32.totalorder %v3423, 1
      %vm3443 = vcmp.lt.s32.totalorder %v3423, 2
      %vm3444 = vcmp.lt.s32.totalorder %v3423, 3
      %vm3445 = vcmp.lt.s32.totalorder %v3423, 4
      %v3446 = vsel %vm3442, %v3426, %v3429
      %v3447 = vsel %vm3445, %v3435, 2102212464
      %v3448 = vsel %vm3444, %v3432, %v3447
      %v3449 = vsel %vm3443, %v3446, %v3448
      %v3450 = vsel %vm3442, %v3429, %v3432
      %v3451 = vsel %vm3445, %v3438, 920167782
      %v3452 = vsel %vm3444, %v3435, %v3451
      %v3453 = vsel %vm3443, %v3450, %v3452
      %v3454 = vsel %vm3442, %v3432, %v3435
      %v3455 = vsel %vm3445, %v3441, 1326507024
      %v3456 = vsel %vm3444, %v3438, %v3455
      %v3457 = vsel %vm3443, %v3454, %v3456
      %v3458 = vshll.u32 %v3418, 8
      %v3459 = vmul.u32.u64.compose %v3458, %v3457
      %v3460 = vextract.low.u32 %v3459
      %v3461 = vextract.high.u32 %v3459
      %v3462 = vmul.u32.u64.compose %v3458, %v3453
      %v3463 = vextract.low.u32 %v3462
      %v3464 = vextract.high.u32 %v3462
      %v3465 = vmul.u32 %v3458, %v3449
      %v3466 = vadd.s32 %v3461, %v3463
      %vm3467 = vc.u32 %v3461, %v3463
      %v3468 = vadd.s32 %v3464, 1
      %v3469 = vsel %vm3467, %v3468, %v3464
      %v3470 = vadd.s32 %v3465, %v3469
      %v3471 = vadd.s32 %v3470, 536870912
      %v3472 = vshrl.u32 %v3471, 30
      %v3473 = vshll.u32 %v3472, 30
      %v3474 = vsub.s32 %v3470, %v3473
      %vm3475 = vcmp.lt.s32.totalorder %v3474, 0
      %v3476 = vsub.s32 0, %v3474
      %v3477 = vsel %vm3475, %v3476, %v3474
      %v3478 = vclz %v3477
      %v3479 = vsub.s32 %v3478, 2
      %vm3480 = vcmp.gt.s32.totalorder 0, %v3479
      %v3481 = vsel %vm3480, 0, %v3479
      %v3482 = vsub.s32 32, %v3481
      %v3483 = vshll.u32 %v3474, %v3481
      %v3484 = vshrl.u32 %v3466, %v3482
      %v3485 = vor.u32 %v3483, %v3484
      %v3486 = vsub.s32 4294967266, %v3481
      %v3487 = vadd.s32 %v3486, 127
      %v3488 = vshll.u32 %v3487, 23
      %v3489 = vor.u32 4788187, %v3488
      %v3490 = vand.u32 2147483647, %v3489
      %v3492 = vcvt.s32.f32 %v3485
      %v3493 = vmul.f32 %v3492, %v3490
      %v3494 = vxor.u32 %v3493, 2147483648
      %v3495 = vsel %vm3412, %v3494, %v3493
      %v3496 = vsub.s32 4, %v3472
      %v3497 = vsel %vm3412, %v3496, %v3472
      %v3498 = vsel %vm3411, %v2990, %v3495
      %v3499 = vsel %vm3411, 0, %v3497
      %v3500 = vcosq.f32.pop %v3498
      %v3501 = vsinq.f32.pop %v3498
      %vm3502 = vweird.f32 %v2990
      %v3503 = vadd.s32 %v3499, 3
      %v3504 = vand.u32 %v3503, 3
      %vm3505 = vcmp.lt.s32.totalorder %v3504, 2
      %vm3506 = vcmp.eq.s32.totalorder %v3504, 0
      %v3507 = vxor.u32 %v3501, 2147483648
      %v3508 = vsel %vm3506, %v3500, %v3507
      %vm3509 = vcmp.eq.s32.totalorder %v3504, 2
      %v3510 = vxor.u32 %v3500, 2147483648
      %v3511 = vsel %vm3509, %v3510, %v3501
      %v3512 = vsel %vm3505, %v3508, %v3511
      %v3513 = vsel %vm3502, nan, %v3512
      %v3514 = vand.u32 2147483647, %v2991
      %vm3515 = vcmp.le.f32.partialorder %v3514, 0.7853982
      %vm3516 = vcmp.lt.s32.totalorder %v2991, 0
      %v3517 = vand.u32 %v2991, 2139095040
      %v3518 = vshrl.u32 %v3517, 23
      %v3519 = vsub.s32 %v3518, 127
      %v3520 = vand.u32 2147483647, %v2991
      %v3521 = vand.u32 %v3520, 8388607
      %v3522 = vor.u32 %v3521, 8388608
      %v3523 = vsub.s32 0, %v3522
      %v3524 = vadd.s32 %v3519, 1
      %vm3525 = vcmp.gt.s32.totalorder %v3524, 0
      %v3526 = vsel %vm3525, %v3524, 0
      %v3527 = vshrl.u32 %v3526, 5
      %v3528 = vand.u32 %v3526, 31
      %v3529 = vsub.s32 32, %v3528
      %v3530 = vshrl.u32 683565275, %v3529
      %v3531 = vshll.u32 683565275, %v3528
      %v3532 = vshrl.u32 2475754826, %v3529
      %v3533 = vor.u32 %v3531, %v3532
      %v3534 = vshll.u32 2475754826, %v3528
      %v3535 = vshrl.u32 2131351028, %v3529
      %v3536 = vor.u32 %v3534, %v3535
      %v3537 = vshll.u32 2131351028, %v3528
      %v3538 = vshrl.u32 2102212464, %v3529
      %v3539 = vor.u32 %v3537, %v3538
      %v3540 = vshll.u32 2102212464, %v3528
      %v3541 = vshrl.u32 920167782, %v3529
      %v3542 = vor.u32 %v3540, %v3541
      %v3543 = vshll.u32 920167782, %v3528
      %v3544 = vshrl.u32 1326507024, %v3529
      %v3545 = vor.u32 %v3543, %v3544
      %vm3546 = vcmp.lt.s32.totalorder %v3527, 1
      %vm3547 = vcmp.lt.s32.totalorder %v3527, 2
      %vm3548 = vcmp.lt.s32.totalorder %v3527, 3
      %vm3549 = vcmp.lt.s32.totalorder %v3527, 4
      %v3550 = vsel %vm3546, %v3530, %v3533
      %v3551 = vsel %vm3549, %v3539, 2102212464
      %v3552 = vsel %vm3548, %v3536, %v3551
      %v3553 = vsel %vm3547, %v3550, %v3552
      %v3554 = vsel %vm3546, %v3533, %v3536
      %v3555 = vsel %vm3549, %v3542, 920167782
      %v3556 = vsel %vm3548, %v3539, %v3555
      %v3557 = vsel %vm3547, %v3554, %v3556
      %v3558 = vsel %vm3546, %v3536, %v3539
      %v3559 = vsel %vm3549, %v3545, 1326507024
      %v3560 = vsel %vm3548, %v3542, %v3559
      %v3561 = vsel %vm3547, %v3558, %v3560
      %v3562 = vshll.u32 %v3522, 8
      %v3563 = vmul.u32.u64.compose %v3562, %v3561
      %v3564 = vextract.low.u32 %v3563
      %v3565 = vextract.high.u32 %v3563
      %v3566 = vmul.u32.u64.compose %v3562, %v3557
      %v3567 = vextract.low.u32 %v3566
      %v3568 = vextract.high.u32 %v3566
      %v3569 = vmul.u32 %v3562, %v3553
      %v3570 = vadd.s32 %v3565, %v3567
      %vm3571 = vc.u32 %v3565, %v3567
      %v3572 = vadd.s32 %v3568, 1
      %v3573 = vsel %vm3571, %v3572, %v3568
      %v3574 = vadd.s32 %v3569, %v3573
      %v3575 = vadd.s32 %v3574, 536870912
      %v3576 = vshrl.u32 %v3575, 30
      %v3577 = vshll.u32 %v3576, 30
      %v3578 = vsub.s32 %v3574, %v3577
      %vm3579 = vcmp.lt.s32.totalorder %v3578, 0
      %v3580 = vsub.s32 0, %v3578
      %v3581 = vsel %vm3579, %v3580, %v3578
      %v3582 = vclz %v3581
      %v3583 = vsub.s32 %v3582, 2
      %vm3584 = vcmp.gt.s32.totalorder 0, %v3583
      %v3585 = vsel %vm3584, 0, %v3583
      %v3586 = vsub.s32 32, %v3585
      %v3587 = vshll.u32 %v3578, %v3585
      %v3588 = vshrl.u32 %v3570, %v3586
      %v3589 = vor.u32 %v3587, %v3588
      %v3590 = vsub.s32 4294967266, %v3585
      %v3591 = vadd.s32 %v3590, 127
      %v3592 = vshll.u32 %v3591, 23
      %v3593 = vor.u32 4788187, %v3592
      %v3594 = vand.u32 2147483647, %v3593
      %v3596 = vcvt.s32.f32 %v3589
      %v3597 = vmul.f32 %v3596, %v3594
      %v3598 = vxor.u32 %v3597, 2147483648
      %v3599 = vsel %vm3516, %v3598, %v3597
      %v3600 = vsub.s32 4, %v3576
      %v3601 = vsel %vm3516, %v3600, %v3576
      %v3602 = vsel %vm3515, %v2991, %v3599
      %v3603 = vsel %vm3515, 0, %v3601
      %v3604 = vcosq.f32.pop %v3602
      %v3605 = vsinq.f32.pop %v3602
      %vm3606 = vweird.f32 %v2991
      %v3607 = vadd.s32 %v3603, 3
      %v3608 = vand.u32 %v3607, 3
      %vm3609 = vcmp.lt.s32.totalorder %v3608, 2
      %vm3610 = vcmp.eq.s32.totalorder %v3608, 0
      %v3611 = vxor.u32 %v3605, 2147483648
      %v3612 = vsel %vm3610, %v3604, %v3611
      %vm3613 = vcmp.eq.s32.totalorder %v3608, 2
      %v3614 = vxor.u32 %v3604, 2147483648
      %v3615 = vsel %vm3613, %v3614, %v3605
      %v3616 = vsel %vm3609, %v3612, %v3615
      %v3617 = vsel %vm3606, nan, %v3616
      %v3618 = vand.u32 2147483647, %v2992
      %vm3619 = vcmp.le.f32.partialorder %v3618, 0.7853982
      %vm3620 = vcmp.lt.s32.totalorder %v2992, 0
      %v3621 = vand.u32 %v2992, 2139095040
      %v3622 = vshrl.u32 %v3621, 23
      %v3623 = vsub.s32 %v3622, 127
      %v3624 = vand.u32 2147483647, %v2992
      %v3625 = vand.u32 %v3624, 8388607
      %v3626 = vor.u32 %v3625, 8388608
      %v3627 = vsub.s32 0, %v3626
      %v3628 = vadd.s32 %v3623, 1
      %vm3629 = vcmp.gt.s32.totalorder %v3628, 0
      %v3630 = vsel %vm3629, %v3628, 0
      %v3631 = vshrl.u32 %v3630, 5
      %v3632 = vand.u32 %v3630, 31
      %v3633 = vsub.s32 32, %v3632
      %v3634 = vshrl.u32 683565275, %v3633
      %v3635 = vshll.u32 683565275, %v3632
      %v3636 = vshrl.u32 2475754826, %v3633
      %v3637 = vor.u32 %v3635, %v3636
      %v3638 = vshll.u32 2475754826, %v3632
      %v3639 = vshrl.u32 2131351028, %v3633
      %v3640 = vor.u32 %v3638, %v3639
      %v3641 = vshll.u32 2131351028, %v3632
      %v3642 = vshrl.u32 2102212464, %v3633
      %v3643 = vor.u32 %v3641, %v3642
      %v3644 = vshll.u32 2102212464, %v3632
      %v3645 = vshrl.u32 920167782, %v3633
      %v3646 = vor.u32 %v3644, %v3645
      %v3647 = vshll.u32 920167782, %v3632
      %v3648 = vshrl.u32 1326507024, %v3633
      %v3649 = vor.u32 %v3647, %v3648
      %vm3650 = vcmp.lt.s32.totalorder %v3631, 1
      %vm3651 = vcmp.lt.s32.totalorder %v3631, 2
      %vm3652 = vcmp.lt.s32.totalorder %v3631, 3
      %vm3653 = vcmp.lt.s32.totalorder %v3631, 4
      %v3654 = vsel %vm3650, %v3634, %v3637
      %v3655 = vsel %vm3653, %v3643, 2102212464
      %v3656 = vsel %vm3652, %v3640, %v3655
      %v3657 = vsel %vm3651, %v3654, %v3656
      %v3658 = vsel %vm3650, %v3637, %v3640
      %v3659 = vsel %vm3653, %v3646, 920167782
      %v3660 = vsel %vm3652, %v3643, %v3659
      %v3661 = vsel %vm3651, %v3658, %v3660
      %v3662 = vsel %vm3650, %v3640, %v3643
      %v3663 = vsel %vm3653, %v3649, 1326507024
      %v3664 = vsel %vm3652, %v3646, %v3663
      %v3665 = vsel %vm3651, %v3662, %v3664
      %v3666 = vshll.u32 %v3626, 8
      %v3667 = vmul.u32.u64.compose %v3666, %v3665
      %v3668 = vextract.low.u32 %v3667
      %v3669 = vextract.high.u32 %v3667
      %v3670 = vmul.u32.u64.compose %v3666, %v3661
      %v3671 = vextract.low.u32 %v3670
      %v3672 = vextract.high.u32 %v3670
      %v3673 = vmul.u32 %v3666, %v3657
      %v3674 = vadd.s32 %v3669, %v3671
      %vm3675 = vc.u32 %v3669, %v3671
      %v3676 = vadd.s32 %v3672, 1
      %v3677 = vsel %vm3675, %v3676, %v3672
      %v3678 = vadd.s32 %v3673, %v3677
      %v3679 = vadd.s32 %v3678, 536870912
      %v3680 = vshrl.u32 %v3679, 30
      %v3681 = vshll.u32 %v3680, 30
      %v3682 = vsub.s32 %v3678, %v3681
      %vm3683 = vcmp.lt.s32.totalorder %v3682, 0
      %v3684 = vsub.s32 0, %v3682
      %v3685 = vsel %vm3683, %v3684, %v3682
      %v3686 = vclz %v3685
      %v3687 = vsub.s32 %v3686, 2
      %vm3688 = vcmp.gt.s32.totalorder 0, %v3687
      %v3689 = vsel %vm3688, 0, %v3687
      %v3690 = vsub.s32 32, %v3689
      %v3691 = vshll.u32 %v3682, %v3689
      %v3692 = vshrl.u32 %v3674, %v3690
      %v3693 = vor.u32 %v3691, %v3692
      %v3694 = vsub.s32 4294967266, %v3689
      %v3695 = vadd.s32 %v3694, 127
      %v3696 = vshll.u32 %v3695, 23
      %v3697 = vor.u32 4788187, %v3696
      %v3698 = vand.u32 2147483647, %v3697
      %v3700 = vcvt.s32.f32 %v3693
      %v3701 = vmul.f32 %v3700, %v3698
      %v3702 = vxor.u32 %v3701, 2147483648
      %v3703 = vsel %vm3620, %v3702, %v3701
      %v3704 = vsub.s32 4, %v3680
      %v3705 = vsel %vm3620, %v3704, %v3680
      %v3706 = vsel %vm3619, %v2992, %v3703
      %v3707 = vsel %vm3619, 0, %v3705
      %v3708 = vcosq.f32.pop %v3706
      %v3709 = vsinq.f32.pop %v3706
      %vm3710 = vweird.f32 %v2992
      %v3711 = vadd.s32 %v3707, 3
      %v3712 = vand.u32 %v3711, 3
      %vm3713 = vcmp.lt.s32.totalorder %v3712, 2
      %vm3714 = vcmp.eq.s32.totalorder %v3712, 0
      %v3715 = vxor.u32 %v3709, 2147483648
      %v3716 = vsel %vm3714, %v3708, %v3715
      %vm3717 = vcmp.eq.s32.totalorder %v3712, 2
      %v3718 = vxor.u32 %v3708, 2147483648
      %v3719 = vsel %vm3717, %v3718, %v3709
      %v3720 = vsel %vm3713, %v3716, %v3719
      %v3721 = vsel %vm3710, nan, %v3720
      %v3722 = vand.u32 2147483647, %v2993
      %vm3723 = vcmp.le.f32.partialorder %v3722, 0.7853982
      %vm3724 = vcmp.lt.s32.totalorder %v2993, 0
      %v3725 = vand.u32 %v2993, 2139095040
      %v3726 = vshrl.u32 %v3725, 23
      %v3727 = vsub.s32 %v3726, 127
      %v3728 = vand.u32 2147483647, %v2993
      %v3729 = vand.u32 %v3728, 8388607
      %v3730 = vor.u32 %v3729, 8388608
      %v3731 = vsub.s32 0, %v3730
      %v3732 = vadd.s32 %v3727, 1
      %vm3733 = vcmp.gt.s32.totalorder %v3732, 0
      %v3734 = vsel %vm3733, %v3732, 0
      %v3735 = vshrl.u32 %v3734, 5
      %v3736 = vand.u32 %v3734, 31
      %v3737 = vsub.s32 32, %v3736
      %v3738 = vshrl.u32 683565275, %v3737
      %v3739 = vshll.u32 683565275, %v3736
      %v3740 = vshrl.u32 2475754826, %v3737
      %v3741 = vor.u32 %v3739, %v3740
      %v3742 = vshll.u32 2475754826, %v3736
      %v3743 = vshrl.u32 2131351028, %v3737
      %v3744 = vor.u32 %v3742, %v3743
      %v3745 = vshll.u32 2131351028, %v3736
      %v3746 = vshrl.u32 2102212464, %v3737
      %v3747 = vor.u32 %v3745, %v3746
      %v3748 = vshll.u32 2102212464, %v3736
      %v3749 = vshrl.u32 920167782, %v3737
      %v3750 = vor.u32 %v3748, %v3749
      %v3751 = vshll.u32 920167782, %v3736
      %v3752 = vshrl.u32 1326507024, %v3737
      %v3753 = vor.u32 %v3751, %v3752
      %vm3754 = vcmp.lt.s32.totalorder %v3735, 1
      %vm3755 = vcmp.lt.s32.totalorder %v3735, 2
      %vm3756 = vcmp.lt.s32.totalorder %v3735, 3
      %vm3757 = vcmp.lt.s32.totalorder %v3735, 4
      %v3758 = vsel %vm3754, %v3738, %v3741
      %v3759 = vsel %vm3757, %v3747, 2102212464
      %v3760 = vsel %vm3756, %v3744, %v3759
      %v3761 = vsel %vm3755, %v3758, %v3760
      %v3762 = vsel %vm3754, %v3741, %v3744
      %v3763 = vsel %vm3757, %v3750, 920167782
      %v3764 = vsel %vm3756, %v3747, %v3763
      %v3765 = vsel %vm3755, %v3762, %v3764
      %v3766 = vsel %vm3754, %v3744, %v3747
      %v3767 = vsel %vm3757, %v3753, 1326507024
      %v3768 = vsel %vm3756, %v3750, %v3767
      %v3769 = vsel %vm3755, %v3766, %v3768
      %v3770 = vshll.u32 %v3730, 8
      %v3771 = vmul.u32.u64.compose %v3770, %v3769
      %v3772 = vextract.low.u32 %v3771
      %v3773 = vextract.high.u32 %v3771
      %v3774 = vmul.u32.u64.compose %v3770, %v3765
      %v3775 = vextract.low.u32 %v3774
      %v3776 = vextract.high.u32 %v3774
      %v3777 = vmul.u32 %v3770, %v3761
      %v3778 = vadd.s32 %v3773, %v3775
      %vm3779 = vc.u32 %v3773, %v3775
      %v3780 = vadd.s32 %v3776, 1
      %v3781 = vsel %vm3779, %v3780, %v3776
      %v3782 = vadd.s32 %v3777, %v3781
      %v3783 = vadd.s32 %v3782, 536870912
      %v3784 = vshrl.u32 %v3783, 30
      %v3785 = vshll.u32 %v3784, 30
      %v3786 = vsub.s32 %v3782, %v3785
      %vm3787 = vcmp.lt.s32.totalorder %v3786, 0
      %v3788 = vsub.s32 0, %v3786
      %v3789 = vsel %vm3787, %v3788, %v3786
      %v3790 = vclz %v3789
      %v3791 = vsub.s32 %v3790, 2
      %vm3792 = vcmp.gt.s32.totalorder 0, %v3791
      %v3793 = vsel %vm3792, 0, %v3791
      %v3794 = vsub.s32 32, %v3793
      %v3795 = vshll.u32 %v3786, %v3793
      %v3796 = vshrl.u32 %v3778, %v3794
      %v3797 = vor.u32 %v3795, %v3796
      %v3798 = vsub.s32 4294967266, %v3793
      %v3799 = vadd.s32 %v3798, 127
      %v3800 = vshll.u32 %v3799, 23
      %v3801 = vor.u32 4788187, %v3800
      %v3802 = vand.u32 2147483647, %v3801
      %v3804 = vcvt.s32.f32 %v3797
      %v3805 = vmul.f32 %v3804, %v3802
      %v3806 = vxor.u32 %v3805, 2147483648
      %v3807 = vsel %vm3724, %v3806, %v3805
      %v3808 = vsub.s32 4, %v3784
      %v3809 = vsel %vm3724, %v3808, %v3784
      %v3810 = vsel %vm3723, %v2993, %v3807
      %v3811 = vsel %vm3723, 0, %v3809
      %v3812 = vcosq.f32.pop %v3810
      %v3813 = vsinq.f32.pop %v3810
      %vm3814 = vweird.f32 %v2993
      %v3815 = vadd.s32 %v3811, 3
      %v3816 = vand.u32 %v3815, 3
      %vm3817 = vcmp.lt.s32.totalorder %v3816, 2
      %vm3818 = vcmp.eq.s32.totalorder %v3816, 0
      %v3819 = vxor.u32 %v3813, 2147483648
      %v3820 = vsel %vm3818, %v3812, %v3819
      %vm3821 = vcmp.eq.s32.totalorder %v3816, 2
      %v3822 = vxor.u32 %v3812, 2147483648
      %v3823 = vsel %vm3821, %v3822, %v3813
      %v3824 = vsel %vm3817, %v3820, %v3823
      %v3825 = vsel %vm3814, nan, %v3824
      %v3826 = vld [vmem:[%s10] sm:$0x3]
      %v3827 = vpack.c.bf16 %v3305, %v3097
      %v3828 = vpack.c.bf16 %v3409, %v3201
      %v3829 = vpack.c.bf16 %v3721, %v3513
      %v3830 = vpack.c.bf16 %v3825, %v3617
      %v3831 = vld [vmem:[%s11] sm:$0x7]
      %3833 = vset.pattern.permute.xlu0 0
      %3834 = vperm.xlu0 %3833, %v3831
      %v3835 = vpop.permute.xlu0 %3834
      %v3838 = vsel %vm1856, %v3826, 0
      %3840 = vmatprep.subr.bf16.mxu0 %v3828
      %3841 = vmatpush1.bf16.msra.mxu0 %v3827
      %3842 = vmatprep.subr.bf16.mxu0 %v3830
      %3843 = vmatpush1.bf16.msra.mxu0 %v3829
      %3844 = vmatprep.subr.bf16.mxu0 0
      %3845 = vmatpush1.bf16.msra.mxu0 0
      %3846 = vmatprep.subr.bf16.mxu0 0
      %3847 = vmatpush1.bf16.msra.mxu0 0
      %3848 = vmatprep.subr.bf16.mxu0 0
      %3849 = vmatpush1.bf16.msra.mxu0 0
      %3850 = vmatprep.subr.bf16.mxu0 0
      %3851 = vmatpush1.bf16.msra.mxu0 0
      %3852 = vmatprep.subr.bf16.mxu0 0
      %3853 = vmatpush1.bf16.msra.mxu0 0
      %3854 = vmatprep.subr.bf16.mxu0 0
      %3855 = vmatpush1.bf16.msra.mxu0 0
      %3856 = vmatprep.subr.bf16.mxu0 0
      %3857 = vmatpush1.bf16.msra.mxu0 0
      %3858 = vmatprep.subr.bf16.mxu0 0
      %3859 = vmatpush1.bf16.msra.mxu0 0
      %3860 = vmatprep.subr.bf16.mxu0 0
      %3861 = vmatpush1.bf16.msra.mxu0 0
      %3862 = vmatprep.subr.bf16.mxu0 0
      %3863 = vmatpush1.bf16.msra.mxu0 0
      %3864 = vmatprep.subr.bf16.mxu0 0
      %3865 = vmatpush1.bf16.msra.mxu0 0
      %3866 = vmatprep.subr.bf16.mxu0 0
      %3867 = vmatpush1.bf16.msra.mxu0 0
      %3868 = vmatprep.subr.bf16.mxu0 0
      %3869 = vmatpush1.bf16.msra.mxu0 0
      %3870 = vmatprep.subr.bf16.mxu0 0
      %3871 = vmatpush1.bf16.msra.mxu0 0
      %3872 = vmatprep.mubr.bf16.mxu0 0
      %3873 = vmatmul.mubr.bf16.gmra.mrb[0].mxu0 %v3838
      %v3874 = vpop.f32.mrb[0].mxu0
      %v3875 = vadd.f32 %v3835, %v3874
      %v3876 = vpop.f32.mrb[0].mxu0
      %v3877 = vadd.f32 %v3835, %v3876
      %v3878 = vpop.f32.mrb[0].mxu0
      %v3879 = vpop.f32.mrb[0].mxu0
      %3880 = vdwg.mxu0
      %v3883 = vcombine.low %v3875, %v3877
      %3885 = vst [vmem:[%s487] sm:$0x77] %v3883
      %s3886 = smul.u32 2, %s28
      %p3887 = scmp.lt.s32.totalorder %s27, 1
      %s3888 = scalar_select %p3887, %s27, 1
      %p3889 = scmp.lt.s32.totalorder %s3886, 1
      %s3890 = scalar_select %p3889, %s3886, 1
      %s3891 = smul.addr %s3888, 2
      %s3892 = sadd.s32 %s3890, %s3891
      %s3893 = smul.addr %s3892, 4
      %s3894 = scalar_lea.vmem %s12, %s3893
      // Predicated region
      $region69: #{tpu_custom_call.1} parent=67 // pred_check
        %p3895 = pneg %p321
      $region70: #{tpu_custom_call.1} parent=67 // pred_check_branch
        %3897 = sbr.rel (%p3895) target = $region72
      $region71: #{tpu_custom_call.1} parent=67 // pred_region
        %s3898 = smul.u32 2, %s28
      $region72: #{tpu_custom_call.1} parent=67 // pred_fallthru
        _
    $region68: #{tpu_custom_call.1} parent=5 // pred_fallthru
      _
    %p3899 = scmp.le.s32.totalorder 2, %s18
    // Predicated region
    $region73: #{tpu_custom_call.1} parent=5 // pred_check
      %p3900 = pneg %p3899
    $region74: #{tpu_custom_call.1} parent=5 // pred_check_branch
      %3902 = sbr.rel (%p3900) target = $region76
    $region75: #{tpu_custom_call.1} parent=5 // pred_region
      %s3903 = ssub.s32 %s18, 2
      // Predicated region
      $region77: #{tpu_custom_call.1} parent=75 // pred_check
        %p3904 = pneg %p327
      $region78: #{tpu_custom_call.1} parent=75 // pred_check_branch
        %3906 = sbr.rel (%p3904) target = $region80
      $region79: #{tpu_custom_call.1} parent=75 // pred_region
        %s3907 = smul.u32 2, %s30
        %p3908 = scmp.lt.s32.totalorder %s29, 1
        %s3909 = scalar_select %p3908, %s29, 1
        %p3910 = scmp.lt.s32.totalorder %s3907, 1
        %s3911 = scalar_select %p3910, %s3907, 1
        %s3912 = smul.addr %s3909, 2
        %s3913 = sadd.s32 %s3911, %s3912
        %s3914 = smul.addr %s3913, 4
        %s3915 = scalar_lea.vmem %s12, %s3914
      $region80: #{tpu_custom_call.1} parent=75 // pred_fallthru
        _
    $region76: #{tpu_custom_call.1} parent=5 // pred_fallthru
      _
  $region6: #{tpu_custom_call.1} parent=0 // loop_footer
    %s22 = sadd.s32 1, %s18
  $region7: #{tpu_custom_call.1} parent=0 // loop_footer_branch
    %17 = sbr.rel target = $region3
  $region8: #{tpu_custom_call.1} parent=0 // loop_exit
    _

</llo_original>
